<compile_context>
chip_gen: v5e
topology: v5e:2x2
jax: 0.10.0
libtpu: 0.0.40
codegen_flags: <defaults>
</compile_context>

<pallas_src>
import functools

import jax
import jax.numpy as jnp
from jax.experimental import pallas as pl
from jax.experimental.pallas import tpu as pltpu


def _pad_to(n, m):
    return ((n + m - 1) // m) * m


def _make_kernel(num_layers, hidden_pad, seq_len, b_block):
    Hp = hidden_pad
    T = seq_len
    Bb = b_block

    def kernel(emb_ref, *rest):
        # rest = [w_x_l, w_h_l, bias_l] * num_layers, w_lin, b_lin,
        #        out_ref, h_seq (scratch)
        idx = 0
        layers = []
        for _ in range(num_layers):
            layers.append((rest[idx], rest[idx + 1], rest[idx + 2]))
            idx += 3
        w_lin_ref = rest[idx]
        b_lin_ref = rest[idx + 1]
        out_ref = rest[idx + 2]
        h_seq = rest[idx + 3]           # (T*Bb, Hp) bf16 scratch, persists over v

        # ---------- Phase 1: LSTM recurrence (once per batch block) ----------
        @pl.when(pl.program_id(1) == 0)
        def _():
            # Hoist bias broadcasts out of the time loop (JAX does not CSE them).
            biases = [jnp.broadcast_to(b_ref[...], (Bb, 4 * Hp))
                      for (_, _, b_ref) in layers]

            def sigmoid(x):  # single-EUP-op tanh form
                return 0.5 * jnp.tanh(0.5 * x) + 0.5

            def step(t, carry):
                hs, cs = carry
                x = emb_ref[t]                            # (Bb, Ep) bf16
                new_hs, new_cs = [], []
                for l, (wx_ref, wh_ref, _) in enumerate(layers):
                    h_prev, c_prev = hs[l], cs[l]         # (Bb, Hp) f32
                    gates = (jnp.dot(x.astype(jnp.bfloat16), wx_ref[...],
                                     preferred_element_type=jnp.float32)
                             + jnp.dot(h_prev.astype(jnp.bfloat16), wh_ref[...],
                                       preferred_element_type=jnp.float32)
                             + biases[l])                 # (Bb, 4Hp) f32, i,f,g,o
                    i_g = sigmoid(gates[:, 0 * Hp:1 * Hp])
                    f_g = sigmoid(gates[:, 1 * Hp:2 * Hp])
                    g_g = jnp.tanh(gates[:, 2 * Hp:3 * Hp])
                    o_g = sigmoid(gates[:, 3 * Hp:4 * Hp])
                    c_new = f_g * c_prev + i_g * g_g
                    h_new = o_g * jnp.tanh(c_new)
                    new_hs.append(h_new)
                    new_cs.append(c_new)
                    x = h_new                             # input to next layer
                # Cache top-layer h for the batched projection phase.
                row = pl.multiple_of(t * Bb, Bb)
                h_seq[pl.ds(row, Bb), :] = x.astype(jnp.bfloat16)
                return tuple(new_hs), tuple(new_cs)

            zeros = tuple(jnp.zeros((Bb, Hp), jnp.float32)
                          for _ in range(num_layers))
            jax.lax.fori_loop(0, T, step, (zeros, zeros), unroll=True)

        # ---------- Phase 2: batched vocab projection for this V tile ----------
        Vt = out_ref.shape[2]
        logits = jnp.dot(h_seq[...], w_lin_ref[...],
                         preferred_element_type=jnp.float32) + b_lin_ref[...]
        out_ref[...] = logits.reshape(T, Bb, Vt).astype(out_ref.dtype)

    return kernel


def decoder_rnn_forward(features, captions, params, *, num_layers, hidden_size,
                        vocab_size):
    """Forward pass matching DecoderRNN.forward (eval-mode dropout)."""
    embed_tbl = params["embed"]                       # (V, E)
    E = embed_tbl.shape[1]
    B = features.shape[0]
    H = hidden_size
    V = vocab_size

    # --- JAX glue: embedding lookup + dropout (identity in eval) + concat ---
    emb = jnp.take(embed_tbl, captions, axis=0)                  # (S, B, E)
    emb = jnp.concatenate([features[None, :, :], emb], axis=0)   # (T, B, E)
    T = emb.shape[0]

    # --- padding: batch to x16 (bf16 sublane packing), lanes to x128 ---
    Bp = _pad_to(max(B, 16), 16)
    B_BLOCK = Bp if Bp <= 64 else 64
    Bp = _pad_to(Bp, B_BLOCK)
    nb = Bp // B_BLOCK

    Ep = _pad_to(E, 128)
    Hp = _pad_to(H, 128)

    V_TILE = min(512, _pad_to(V, 128))
    Vp = _pad_to(V, V_TILE)
    nv = Vp // V_TILE

    emb_p = jnp.zeros((T, Bp, Ep), jnp.float32).at[:, :B, :E].set(emb)
    emb_p = emb_p.astype(jnp.bfloat16)

    kernel_inputs = [emb_p]
    in_specs = [pl.BlockSpec((T, B_BLOCK, Ep), lambda b, v: (0, b, 0))]

    # --- per-layer weights: W_x (in_lp, 4Hp), W_h (Hp, 4Hp), bias (1, 4Hp) ---
    # Each of the 4 gates (PyTorch order i, f, g, o) is padded to Hp lanes so
    # in-kernel gate slices are lane-aligned views.
    for l in range(num_layers):
        in_l = E if l == 0 else H
        in_lp = Ep if l == 0 else Hp
        w_ih_T = params[f"w_ih_{l}"].T                # (in_l, 4H)
        w_hh_T = params[f"w_hh_{l}"].T                # (H, 4H)
        bias = params[f"b_ih_{l}"] + params[f"b_hh_{l}"]          # (4H,)
        w_x = jnp.zeros((in_lp, 4 * Hp), jnp.float32)
        w_h = jnp.zeros((Hp, 4 * Hp), jnp.float32)
        bias_p = jnp.zeros((1, 4 * Hp), jnp.float32)
        for g in range(4):
            w_x = w_x.at[:in_l, g * Hp:g * Hp + H].set(w_ih_T[:, g * H:(g + 1) * H])
            w_h = w_h.at[:H, g * Hp:g * Hp + H].set(w_hh_T[:, g * H:(g + 1) * H])
            bias_p = bias_p.at[0, g * Hp:g * Hp + H].set(bias[g * H:(g + 1) * H])
        kernel_inputs += [w_x.astype(jnp.bfloat16), w_h.astype(jnp.bfloat16),
                          bias_p]
        in_specs += [
            pl.BlockSpec((in_lp, 4 * Hp), lambda b, v: (0, 0)),
            pl.BlockSpec((Hp, 4 * Hp), lambda b, v: (0, 0)),
            pl.BlockSpec((1, 4 * Hp), lambda b, v: (0, 0)),
        ]

    # Output projection: V-tiled weight (bf16) + bias (f32).
    w_lin_T = params["w_lin"].T                       # (H, V)
    w_lin_p = jnp.zeros((Hp, Vp), jnp.float32).at[:H, :V].set(w_lin_T)
    b_lin_p = jnp.zeros((1, Vp), jnp.float32).at[0, :V].set(params["b_lin"])
    kernel_inputs += [w_lin_p.astype(jnp.bfloat16), b_lin_p]
    in_specs += [
        pl.BlockSpec((Hp, V_TILE), lambda b, v: (0, v)),
        pl.BlockSpec((1, V_TILE), lambda b, v: (0, v)),
    ]

    grid_spec = pltpu.PrefetchScalarGridSpec(
        num_scalar_prefetch=0,
        grid=(nb, nv),
        in_specs=in_specs,
        out_specs=pl.BlockSpec((T, B_BLOCK, V_TILE), lambda b, v: (0, b, v)),
        scratch_shapes=[
            pltpu.VMEM((T * B_BLOCK, Hp), jnp.bfloat16),  # top-layer h per step
        ],
    )

    out_p = pl.pallas_call(
        _make_kernel(num_layers, Hp, T, B_BLOCK),
        out_shape=jax.ShapeDtypeStruct((T, Bp, Vp), jnp.float32),
        grid_spec=grid_spec,
        compiler_params=pltpu.CompilerParams(
            # batch blocks independent (megacore on v7x); V tiles reuse h_seq.
            dimension_semantics=("parallel", "arbitrary"),
            # Tile sizes chosen so (emb + weights + out tile x2 + h_seq) stays
            # well under this on all generations (<=48 MiB fits v7x's 64 MiB VMEM).
            vmem_limit_bytes=48 * 1024 * 1024,
        ),
    )(*kernel_inputs)

    return out_p[:, :B, :V]


# --------------------- pure-JAX reference (for checking) ---------------------
def decoder_rnn_reference(features, captions, params, *, num_layers,
                          hidden_size, vocab_size):
    H = hidden_size
    emb = jnp.take(params["embed"], captions, axis=0)
    emb = jnp.concatenate([features[None, :, :], emb], axis=0)
    T, B, _ = emb.shape
    h = [jnp.zeros((B, H), jnp.float32) for _ in range(num_layers)]
    c = [jnp.zeros((B, H), jnp.float32) for _ in range(num_layers)]
    outs = []
    for t in range(T):
        x = emb[t]
        for l in range(num_layers):
            gates = (x @ params[f"w_ih_{l}"].T + h[l] @ params[f"w_hh_{l}"].T
                     + params[f"b_ih_{l}"] + params[f"b_hh_{l}"])
            i_g = jax.nn.sigmoid(gates[:, 0 * H:1 * H])
            f_g = jax.nn.sigmoid(gates[:, 1 * H:2 * H])
            g_g = jnp.tanh(gates[:, 2 * H:3 * H])
            o_g = jax.nn.sigmoid(gates[:, 3 * H:4 * H])
            c[l] = f_g * c[l] + i_g * g_g
            h[l] = o_g * jnp.tanh(c[l])
            x = h[l]
        outs.append(x @ params["w_lin"].T + params["b_lin"])
    return jnp.stack(outs, axis=0)


if __name__ == "__main__":
    # Small shapes consistent with the module.
    embed_size = 32
    hidden_size = 32
    vocab_size = 64
    num_layers = 2
    batch = 2
    seq_len = 8

    key = jax.random.PRNGKey(0)
    keys = jax.random.split(key, 16)
    k = iter(keys)

    params = {
        "embed": jax.random.normal(next(k), (vocab_size, embed_size),
                                   jnp.float32) * 0.1,
        "w_lin": jax.random.normal(next(k), (vocab_size, hidden_size),
                                   jnp.float32) * 0.1,
        "b_lin": jax.random.normal(next(k), (vocab_size,), jnp.float32) * 0.1,
    }
    for l in range(num_layers):
        in_l = embed_size if l == 0 else hidden_size
        params[f"w_ih_{l}"] = jax.random.normal(
            next(k), (4 * hidden_size, in_l), jnp.float32) * 0.1
        params[f"w_hh_{l}"] = jax.random.normal(
            next(k), (4 * hidden_size, hidden_size), jnp.float32) * 0.1
        params[f"b_ih_{l}"] = jax.random.normal(
            next(k), (4 * hidden_size,), jnp.float32) * 0.1
        params[f"b_hh_{l}"] = jax.random.normal(
            next(k), (4 * hidden_size,), jnp.float32) * 0.1

    features = jax.random.normal(next(k), (batch, embed_size), jnp.float32)
    captions = jax.random.randint(next(k), (seq_len, batch), 0, vocab_size,
                                  jnp.int32)

    fwd = functools.partial(decoder_rnn_forward, num_layers=num_layers,
                            hidden_size=hidden_size, vocab_size=vocab_size)
    out = jax.block_until_ready(fwd(features, captions, params))

    ref = decoder_rnn_reference(features, captions, params,
                                num_layers=num_layers,
                                hidden_size=hidden_size,
                                vocab_size=vocab_size)

    assert out.shape == (seq_len + 1, batch, vocab_size), out.shape
    # bf16 MXU operands -> looser tolerance vs the f32 reference.
    # NOTE: re-validate drift at realistic T (20+) / H (512+); bf16 h compounds.
    assert jnp.allclose(out, ref, atol=5e-2, rtol=5e-2), \
        float(jnp.max(jnp.abs(out - ref)))
    print("KERNEL_OK")
</pallas_src>

<mosaic_0001>
module attributes {stable_mosaic.version = 11 : i64} {
  func.func @kernel(%arg0: i32, %arg1: i32, %arg2: memref<9x16x128xbf16, #tpu.memory_space<vmem>>, %arg3: memref<128x512xbf16, #tpu.memory_space<vmem>>, %arg4: memref<128x512xbf16, #tpu.memory_space<vmem>>, %arg5: memref<1x512xf32, #tpu.memory_space<vmem>>, %arg6: memref<128x512xbf16, #tpu.memory_space<vmem>>, %arg7: memref<128x512xbf16, #tpu.memory_space<vmem>>, %arg8: memref<1x512xf32, #tpu.memory_space<vmem>>, %arg9: memref<128x128xbf16, #tpu.memory_space<vmem>>, %arg10: memref<1x128xf32, #tpu.memory_space<vmem>>, %arg11: memref<9x16x128xf32, #tpu.memory_space<vmem>>, %arg12: memref<144x128xbf16, #tpu.memory_space<vmem>>) attributes {dimension_semantics = [#tpu.dimension_semantics<parallel>, #tpu.dimension_semantics<arbitrary>], iteration_bounds = array<i64: 1, 1>, scalar_prefetch = 0 : i64, scratch_operands = 1 : i64, tpu.core_type = #tpu.core_type<tc>, window_params = [{transform_indices = @transform_0, window_bounds = array<i64: 9, 16, 128>}, {pipeline_mode = #tpu.pipeline_mode<synchronous>, transform_indices = @transform_1, window_bounds = array<i64: 128, 512>}, {pipeline_mode = #tpu.pipeline_mode<synchronous>, transform_indices = @transform_2, window_bounds = array<i64: 128, 512>}, {pipeline_mode = #tpu.pipeline_mode<synchronous>, transform_indices = @transform_3, window_bounds = array<i64: 1, 512>}, {pipeline_mode = #tpu.pipeline_mode<synchronous>, transform_indices = @transform_4, window_bounds = array<i64: 128, 512>}, {pipeline_mode = #tpu.pipeline_mode<synchronous>, transform_indices = @transform_5, window_bounds = array<i64: 128, 512>}, {pipeline_mode = #tpu.pipeline_mode<synchronous>, transform_indices = @transform_6, window_bounds = array<i64: 1, 512>}, {transform_indices = @transform_7, window_bounds = array<i64: 128, 128>}, {transform_indices = @transform_8, window_bounds = array<i64: 1, 128>}, {transform_indices = @transform_9, window_bounds = array<i64: 9, 16, 128>}]} {
    %c0_i32 = arith.constant 0 : i32
    %0 = arith.cmpi eq, %arg1, %c0_i32 : i32
    %1 = arith.extui %0 : i1 to i32
    %c0_i32_0 = arith.constant 0 : i32
    %2 = arith.cmpi ne, %1, %c0_i32_0 : i32
    scf.if %2 {
      %c0_9 = arith.constant 0 : index
      %c0_10 = arith.constant 0 : index
      %11 = vector.load %arg5[%c0_9, %c0_10] : memref<1x512xf32, #tpu.memory_space<vmem>>, vector<1x512xf32>
      %12 = vector.shape_cast %11 : vector<1x512xf32> to vector<1x512xf32>
      %13 = vector.broadcast %12 : vector<1x512xf32> to vector<16x512xf32>
      %c0_11 = arith.constant 0 : index
      %c0_12 = arith.constant 0 : index
      %14 = vector.load %arg8[%c0_11, %c0_12] : memref<1x512xf32, #tpu.memory_space<vmem>>, vector<1x512xf32>
      %15 = vector.shape_cast %14 : vector<1x512xf32> to vector<1x512xf32>
      %16 = vector.broadcast %15 : vector<1x512xf32> to vector<16x512xf32>
      %cst_13 = arith.constant 0.000000e+00 : f32
      %17 = vector.broadcast %cst_13 : f32 to vector<16x128xf32>
      %cst_14 = arith.constant 0.000000e+00 : f32
      %18 = vector.broadcast %cst_14 : f32 to vector<16x128xf32>
      %c0_i32_15 = arith.constant 0 : i32
      %19 = arith.index_cast %c0_i32_15 : i32 to index
      %c0_16 = arith.constant 0 : index
      %c0_17 = arith.constant 0 : index
      %20 = vector.load %arg2[%19, %c0_16, %c0_17] : memref<9x16x128xbf16, #tpu.memory_space<vmem>>, vector<1x16x128xbf16>
      %21 = vector.shape_cast %20 : vector<1x16x128xbf16> to vector<16x128xbf16>
      %c0_18 = arith.constant 0 : index
      %c0_19 = arith.constant 0 : index
      %22 = vector.load %arg3[%c0_18, %c0_19] : memref<128x512xbf16, #tpu.memory_space<vmem>>, vector<128x512xbf16>
      %cst_20 = arith.constant dense<0.000000e+00> : vector<16x512xf32>
      %23 = tpu.matmul %21, %22, %cst_20 {dimension_numbers = #tpu.dot_dimension_numbers<[1], [0], [0], [1], [0, 0, 1, 1], [], []>} : vector<16x128xbf16>, vector<128x512xbf16>, vector<16x512xf32> -> vector<16x512xf32>
      %24 = arith.truncf %17 : vector<16x128xf32> to vector<16x128xbf16>
      %c0_21 = arith.constant 0 : index
      %c0_22 = arith.constant 0 : index
      %25 = vector.load %arg4[%c0_21, %c0_22] : memref<128x512xbf16, #tpu.memory_space<vmem>>, vector<128x512xbf16>
      %cst_23 = arith.constant dense<0.000000e+00> : vector<16x512xf32>
      %26 = tpu.matmul %24, %25, %cst_23 {dimension_numbers = #tpu.dot_dimension_numbers<[1], [0], [0], [1], [0, 0, 1, 1], [], []>} : vector<16x128xbf16>, vector<128x512xbf16>, vector<16x512xf32> -> vector<16x512xf32>
      %27 = arith.addf %23, %26 : vector<16x512xf32>
      %28 = arith.addf %27, %13 : vector<16x512xf32>
      %29 = vector.extract_strided_slice %28 {offsets = [0, 0], sizes = [16, 128], strides = [1, 1]} : vector<16x512xf32> to vector<16x128xf32>
      %cst_24 = arith.constant 5.000000e-01 : f32
      %30 = vector.broadcast %cst_24 : f32 to vector<16x128xf32>
      %31 = arith.mulf %30, %29 : vector<16x128xf32>
      %32 = math.tanh %31 : vector<16x128xf32>
      %cst_25 = arith.constant 5.000000e-01 : f32
      %33 = vector.broadcast %cst_25 : f32 to vector<16x128xf32>
      %34 = arith.mulf %33, %32 : vector<16x128xf32>
      %cst_26 = arith.constant 5.000000e-01 : f32
      %35 = vector.broadcast %cst_26 : f32 to vector<16x128xf32>
      %36 = arith.addf %34, %35 : vector<16x128xf32>
      %37 = vector.extract_strided_slice %28 {offsets = [0, 128], sizes = [16, 128], strides = [1, 1]} : vector<16x512xf32> to vector<16x128xf32>
      %cst_27 = arith.constant 5.000000e-01 : f32
      %38 = vector.broadcast %cst_27 : f32 to vector<16x128xf32>
      %39 = arith.mulf %38, %37 : vector<16x128xf32>
      %40 = math.tanh %39 : vector<16x128xf32>
      %cst_28 = arith.constant 5.000000e-01 : f32
      %41 = vector.broadcast %cst_28 : f32 to vector<16x128xf32>
      %42 = arith.mulf %41, %40 : vector<16x128xf32>
      %cst_29 = arith.constant 5.000000e-01 : f32
      %43 = vector.broadcast %cst_29 : f32 to vector<16x128xf32>
      %44 = arith.addf %42, %43 : vector<16x128xf32>
      %45 = vector.extract_strided_slice %28 {offsets = [0, 256], sizes = [16, 128], strides = [1, 1]} : vector<16x512xf32> to vector<16x128xf32>
      %46 = math.tanh %45 : vector<16x128xf32>
      %47 = vector.extract_strided_slice %28 {offsets = [0, 384], sizes = [16, 128], strides = [1, 1]} : vector<16x512xf32> to vector<16x128xf32>
      %cst_30 = arith.constant 5.000000e-01 : f32
      %48 = vector.broadcast %cst_30 : f32 to vector<16x128xf32>
      %49 = arith.mulf %48, %47 : vector<16x128xf32>
      %50 = math.tanh %49 : vector<16x128xf32>
      %cst_31 = arith.constant 5.000000e-01 : f32
      %51 = vector.broadcast %cst_31 : f32 to vector<16x128xf32>
      %52 = arith.mulf %51, %50 : vector<16x128xf32>
      %cst_32 = arith.constant 5.000000e-01 : f32
      %53 = vector.broadcast %cst_32 : f32 to vector<16x128xf32>
      %54 = arith.addf %52, %53 : vector<16x128xf32>
      %55 = arith.mulf %44, %17 : vector<16x128xf32>
      %56 = arith.mulf %36, %46 : vector<16x128xf32>
      %57 = arith.addf %55, %56 : vector<16x128xf32>
      %58 = math.tanh %57 : vector<16x128xf32>
      %59 = arith.mulf %54, %58 : vector<16x128xf32>
      %60 = arith.truncf %59 : vector<16x128xf32> to vector<16x128xbf16>
      %c0_33 = arith.constant 0 : index
      %c0_34 = arith.constant 0 : index
      %61 = vector.load %arg6[%c0_33, %c0_34] : memref<128x512xbf16, #tpu.memory_space<vmem>>, vector<128x512xbf16>
      %cst_35 = arith.constant dense<0.000000e+00> : vector<16x512xf32>
      %62 = tpu.matmul %60, %61, %cst_35 {dimension_numbers = #tpu.dot_dimension_numbers<[1], [0], [0], [1], [0, 0, 1, 1], [], []>} : vector<16x128xbf16>, vector<128x512xbf16>, vector<16x512xf32> -> vector<16x512xf32>
      %63 = arith.truncf %18 : vector<16x128xf32> to vector<16x128xbf16>
      %c0_36 = arith.constant 0 : index
      %c0_37 = arith.constant 0 : index
      %64 = vector.load %arg7[%c0_36, %c0_37] : memref<128x512xbf16, #tpu.memory_space<vmem>>, vector<128x512xbf16>
      %cst_38 = arith.constant dense<0.000000e+00> : vector<16x512xf32>
      %65 = tpu.matmul %63, %64, %cst_38 {dimension_numbers = #tpu.dot_dimension_numbers<[1], [0], [0], [1], [0, 0, 1, 1], [], []>} : vector<16x128xbf16>, vector<128x512xbf16>, vector<16x512xf32> -> vector<16x512xf32>
      %66 = arith.addf %62, %65 : vector<16x512xf32>
      %67 = arith.addf %66, %16 : vector<16x512xf32>
      %68 = vector.extract_strided_slice %67 {offsets = [0, 0], sizes = [16, 128], strides = [1, 1]} : vector<16x512xf32> to vector<16x128xf32>
      %cst_39 = arith.constant 5.000000e-01 : f32
      %69 = vector.broadcast %cst_39 : f32 to vector<16x128xf32>
      %70 = arith.mulf %69, %68 : vector<16x128xf32>
      %71 = math.tanh %70 : vector<16x128xf32>
      %cst_40 = arith.constant 5.000000e-01 : f32
      %72 = vector.broadcast %cst_40 : f32 to vector<16x128xf32>
      %73 = arith.mulf %72, %71 : vector<16x128xf32>
      %cst_41 = arith.constant 5.000000e-01 : f32
      %74 = vector.broadcast %cst_41 : f32 to vector<16x128xf32>
      %75 = arith.addf %73, %74 : vector<16x128xf32>
      %76 = vector.extract_strided_slice %67 {offsets = [0, 128], sizes = [16, 128], strides = [1, 1]} : vector<16x512xf32> to vector<16x128xf32>
      %cst_42 = arith.constant 5.000000e-01 : f32
      %77 = vector.broadcast %cst_42 : f32 to vector<16x128xf32>
      %78 = arith.mulf %77, %76 : vector<16x128xf32>
      %79 = math.tanh %78 : vector<16x128xf32>
      %cst_43 = arith.constant 5.000000e-01 : f32
      %80 = vector.broadcast %cst_43 : f32 to vector<16x128xf32>
      %81 = arith.mulf %80, %79 : vector<16x128xf32>
      %cst_44 = arith.constant 5.000000e-01 : f32
      %82 = vector.broadcast %cst_44 : f32 to vector<16x128xf32>
      %83 = arith.addf %81, %82 : vector<16x128xf32>
      %84 = vector.extract_strided_slice %67 {offsets = [0, 256], sizes = [16, 128], strides = [1, 1]} : vector<16x512xf32> to vector<16x128xf32>
      %85 = math.tanh %84 : vector<16x128xf32>
      %86 = vector.extract_strided_slice %67 {offsets = [0, 384], sizes = [16, 128], strides = [1, 1]} : vector<16x512xf32> to vector<16x128xf32>
      %cst_45 = arith.constant 5.000000e-01 : f32
      %87 = vector.broadcast %cst_45 : f32 to vector<16x128xf32>
      %88 = arith.mulf %87, %86 : vector<16x128xf32>
      %89 = math.tanh %88 : vector<16x128xf32>
      %cst_46 = arith.constant 5.000000e-01 : f32
      %90 = vector.broadcast %cst_46 : f32 to vector<16x128xf32>
      %91 = arith.mulf %90, %89 : vector<16x128xf32>
      %cst_47 = arith.constant 5.000000e-01 : f32
      %92 = vector.broadcast %cst_47 : f32 to vector<16x128xf32>
      %93 = arith.addf %91, %92 : vector<16x128xf32>
      %94 = arith.mulf %83, %18 : vector<16x128xf32>
      %95 = arith.mulf %75, %85 : vector<16x128xf32>
      %96 = arith.addf %94, %95 : vector<16x128xf32>
      %97 = math.tanh %96 : vector<16x128xf32>
      %98 = arith.mulf %93, %97 : vector<16x128xf32>
      %c16_i32 = arith.constant 16 : i32
      %99 = arith.muli %c0_i32_15, %c16_i32 : i32
      %100 = tpu.assume_multiple %99, 16 : i32
      %101 = arith.truncf %98 : vector<16x128xf32> to vector<16x128xbf16>
      %102 = arith.index_cast %100 : i32 to index
      %c0_48 = arith.constant 0 : index
      %103 = vector.load %arg12[%102, %c0_48] : memref<144x128xbf16, #tpu.memory_space<vmem>>, vector<16x128xbf16>
      tpu.vector_store %arg12[%102, %c0_48], %101 {strides = array<i32>} : memref<144x128xbf16, #tpu.memory_space<vmem>>, vector<16x128xbf16>,
      %c1_i32 = arith.constant 1 : i32
      %104 = arith.index_cast %c1_i32 : i32 to index
      %c0_49 = arith.constant 0 : index
      %c0_50 = arith.constant 0 : index
      %105 = vector.load %arg2[%104, %c0_49, %c0_50] : memref<9x16x128xbf16, #tpu.memory_space<vmem>>, vector<1x16x128xbf16>
      %106 = vector.shape_cast %105 : vector<1x16x128xbf16> to vector<16x128xbf16>
      %c0_51 = arith.constant 0 : index
      %c0_52 = arith.constant 0 : index
      %107 = vector.load %arg3[%c0_51, %c0_52] : memref<128x512xbf16, #tpu.memory_space<vmem>>, vector<128x512xbf16>
      %cst_53 = arith.constant dense<0.000000e+00> : vector<16x512xf32>
      %108 = tpu.matmul %106, %107, %cst_53 {dimension_numbers = #tpu.dot_dimension_numbers<[1], [0], [0], [1], [0, 0, 1, 1], [], []>} : vector<16x128xbf16>, vector<128x512xbf16>, vector<16x512xf32> -> vector<16x512xf32>
      %109 = arith.truncf %59 : vector<16x128xf32> to vector<16x128xbf16>
      %c0_54 = arith.constant 0 : index
      %c0_55 = arith.constant 0 : index
      %110 = vector.load %arg4[%c0_54, %c0_55] : memref<128x512xbf16, #tpu.memory_space<vmem>>, vector<128x512xbf16>
      %cst_56 = arith.constant dense<0.000000e+00> : vector<16x512xf32>
      %111 = tpu.matmul %109, %110, %cst_56 {dimension_numbers = #tpu.dot_dimension_numbers<[1], [0], [0], [1], [0, 0, 1, 1], [], []>} : vector<16x128xbf16>, vector<128x512xbf16>, vector<16x512xf32> -> vector<16x512xf32>
      %112 = arith.addf %108, %111 : vector<16x512xf32>
      %113 = arith.addf %112, %13 : vector<16x512xf32>
      %114 = vector.extract_strided_slice %113 {offsets = [0, 0], sizes = [16, 128], strides = [1, 1]} : vector<16x512xf32> to vector<16x128xf32>
      %cst_57 = arith.constant 5.000000e-01 : f32
      %115 = vector.broadcast %cst_57 : f32 to vector<16x128xf32>
      %116 = arith.mulf %115, %114 : vector<16x128xf32>
      %117 = math.tanh %116 : vector<16x128xf32>
      %cst_58 = arith.constant 5.000000e-01 : f32
      %118 = vector.broadcast %cst_58 : f32 to vector<16x128xf32>
      %119 = arith.mulf %118, %117 : vector<16x128xf32>
      %cst_59 = arith.constant 5.000000e-01 : f32
      %120 = vector.broadcast %cst_59 : f32 to vector<16x128xf32>
      %121 = arith.addf %119, %120 : vector<16x128xf32>
      %122 = vector.extract_strided_slice %113 {offsets = [0, 128], sizes = [16, 128], strides = [1, 1]} : vector<16x512xf32> to vector<16x128xf32>
      %cst_60 = arith.constant 5.000000e-01 : f32
      %123 = vector.broadcast %cst_60 : f32 to vector<16x128xf32>
      %124 = arith.mulf %123, %122 : vector<16x128xf32>
      %125 = math.tanh %124 : vector<16x128xf32>
      %cst_61 = arith.constant 5.000000e-01 : f32
      %126 = vector.broadcast %cst_61 : f32 to vector<16x128xf32>
      %127 = arith.mulf %126, %125 : vector<16x128xf32>
      %cst_62 = arith.constant 5.000000e-01 : f32
      %128 = vector.broadcast %cst_62 : f32 to vector<16x128xf32>
      %129 = arith.addf %127, %128 : vector<16x128xf32>
      %130 = vector.extract_strided_slice %113 {offsets = [0, 256], sizes = [16, 128], strides = [1, 1]} : vector<16x512xf32> to vector<16x128xf32>
      %131 = math.tanh %130 : vector<16x128xf32>
      %132 = vector.extract_strided_slice %113 {offsets = [0, 384], sizes = [16, 128], strides = [1, 1]} : vector<16x512xf32> to vector<16x128xf32>
      %cst_63 = arith.constant 5.000000e-01 : f32
      %133 = vector.broadcast %cst_63 : f32 to vector<16x128xf32>
      %134 = arith.mulf %133, %132 : vector<16x128xf32>
      %135 = math.tanh %134 : vector<16x128xf32>
      %cst_64 = arith.constant 5.000000e-01 : f32
      %136 = vector.broadcast %cst_64 : f32 to vector<16x128xf32>
      %137 = arith.mulf %136, %135 : vector<16x128xf32>
      %cst_65 = arith.constant 5.000000e-01 : f32
      %138 = vector.broadcast %cst_65 : f32 to vector<16x128xf32>
      %139 = arith.addf %137, %138 : vector<16x128xf32>
      %140 = arith.mulf %129, %57 : vector<16x128xf32>
      %141 = arith.mulf %121, %131 : vector<16x128xf32>
      %142 = arith.addf %140, %141 : vector<16x128xf32>
      %143 = math.tanh %142 : vector<16x128xf32>
      %144 = arith.mulf %139, %143 : vector<16x128xf32>
      %145 = arith.truncf %144 : vector<16x128xf32> to vector<16x128xbf16>
      %c0_66 = arith.constant 0 : index
      %c0_67 = arith.constant 0 : index
      %146 = vector.load %arg6[%c0_66, %c0_67] : memref<128x512xbf16, #tpu.memory_space<vmem>>, vector<128x512xbf16>
      %cst_68 = arith.constant dense<0.000000e+00> : vector<16x512xf32>
      %147 = tpu.matmul %145, %146, %cst_68 {dimension_numbers = #tpu.dot_dimension_numbers<[1], [0], [0], [1], [0, 0, 1, 1], [], []>} : vector<16x128xbf16>, vector<128x512xbf16>, vector<16x512xf32> -> vector<16x512xf32>
      %148 = arith.truncf %98 : vector<16x128xf32> to vector<16x128xbf16>
      %c0_69 = arith.constant 0 : index
      %c0_70 = arith.constant 0 : index
      %149 = vector.load %arg7[%c0_69, %c0_70] : memref<128x512xbf16, #tpu.memory_space<vmem>>, vector<128x512xbf16>
      %cst_71 = arith.constant dense<0.000000e+00> : vector<16x512xf32>
      %150 = tpu.matmul %148, %149, %cst_71 {dimension_numbers = #tpu.dot_dimension_numbers<[1], [0], [0], [1], [0, 0, 1, 1], [], []>} : vector<16x128xbf16>, vector<128x512xbf16>, vector<16x512xf32> -> vector<16x512xf32>
      %151 = arith.addf %147, %150 : vector<16x512xf32>
      %152 = arith.addf %151, %16 : vector<16x512xf32>
      %153 = vector.extract_strided_slice %152 {offsets = [0, 0], sizes = [16, 128], strides = [1, 1]} : vector<16x512xf32> to vector<16x128xf32>
      %cst_72 = arith.constant 5.000000e-01 : f32
      %154 = vector.broadcast %cst_72 : f32 to vector<16x128xf32>
      %155 = arith.mulf %154, %153 : vector<16x128xf32>
      %156 = math.tanh %155 : vector<16x128xf32>
      %cst_73 = arith.constant 5.000000e-01 : f32
      %157 = vector.broadcast %cst_73 : f32 to vector<16x128xf32>
      %158 = arith.mulf %157, %156 : vector<16x128xf32>
      %cst_74 = arith.constant 5.000000e-01 : f32
      %159 = vector.broadcast %cst_74 : f32 to vector<16x128xf32>
      %160 = arith.addf %158, %159 : vector<16x128xf32>
      %161 = vector.extract_strided_slice %152 {offsets = [0, 128], sizes = [16, 128], strides = [1, 1]} : vector<16x512xf32> to vector<16x128xf32>
      %cst_75 = arith.constant 5.000000e-01 : f32
      %162 = vector.broadcast %cst_75 : f32 to vector<16x128xf32>
      %163 = arith.mulf %162, %161 : vector<16x128xf32>
      %164 = math.tanh %163 : vector<16x128xf32>
      %cst_76 = arith.constant 5.000000e-01 : f32
      %165 = vector.broadcast %cst_76 : f32 to vector<16x128xf32>
      %166 = arith.mulf %165, %164 : vector<16x128xf32>
      %cst_77 = arith.constant 5.000000e-01 : f32
      %167 = vector.broadcast %cst_77 : f32 to vector<16x128xf32>
      %168 = arith.addf %166, %167 : vector<16x128xf32>
      %169 = vector.extract_strided_slice %152 {offsets = [0, 256], sizes = [16, 128], strides = [1, 1]} : vector<16x512xf32> to vector<16x128xf32>
      %170 = math.tanh %169 : vector<16x128xf32>
      %171 = vector.extract_strided_slice %152 {offsets = [0, 384], sizes = [16, 128], strides = [1, 1]} : vector<16x512xf32> to vector<16x128xf32>
      %cst_78 = arith.constant 5.000000e-01 : f32
      %172 = vector.broadcast %cst_78 : f32 to vector<16x128xf32>
      %173 = arith.mulf %172, %171 : vector<16x128xf32>
      %174 = math.tanh %173 : vector<16x128xf32>
      %cst_79 = arith.constant 5.000000e-01 : f32
      %175 = vector.broadcast %cst_79 : f32 to vector<16x128xf32>
      %176 = arith.mulf %175, %174 : vector<16x128xf32>
      %cst_80 = arith.constant 5.000000e-01 : f32
      %177 = vector.broadcast %cst_80 : f32 to vector<16x128xf32>
      %178 = arith.addf %176, %177 : vector<16x128xf32>
      %179 = arith.mulf %168, %96 : vector<16x128xf32>
      %180 = arith.mulf %160, %170 : vector<16x128xf32>
      %181 = arith.addf %179, %180 : vector<16x128xf32>
      %182 = math.tanh %181 : vector<16x128xf32>
      %183 = arith.mulf %178, %182 : vector<16x128xf32>
      %c16_i32_81 = arith.constant 16 : i32
      %184 = arith.muli %c1_i32, %c16_i32_81 : i32
      %185 = tpu.assume_multiple %184, 16 : i32
      %186 = arith.truncf %183 : vector<16x128xf32> to vector<16x128xbf16>
      %187 = arith.index_cast %185 : i32 to index
      %c0_82 = arith.constant 0 : index
      %188 = vector.load %arg12[%187, %c0_82] : memref<144x128xbf16, #tpu.memory_space<vmem>>, vector<16x128xbf16>
      tpu.vector_store %arg12[%187, %c0_82], %186 {strides = array<i32>} : memref<144x128xbf16, #tpu.memory_space<vmem>>, vector<16x128xbf16>,
      %c2_i32 = arith.constant 2 : i32
      %189 = arith.index_cast %c2_i32 : i32 to index
      %c0_83 = arith.constant 0 : index
      %c0_84 = arith.constant 0 : index
      %190 = vector.load %arg2[%189, %c0_83, %c0_84] : memref<9x16x128xbf16, #tpu.memory_space<vmem>>, vector<1x16x128xbf16>
      %191 = vector.shape_cast %190 : vector<1x16x128xbf16> to vector<16x128xbf16>
      %c0_85 = arith.constant 0 : index
      %c0_86 = arith.constant 0 : index
      %192 = vector.load %arg3[%c0_85, %c0_86] : memref<128x512xbf16, #tpu.memory_space<vmem>>, vector<128x512xbf16>
      %cst_87 = arith.constant dense<0.000000e+00> : vector<16x512xf32>
      %193 = tpu.matmul %191, %192, %cst_87 {dimension_numbers = #tpu.dot_dimension_numbers<[1], [0], [0], [1], [0, 0, 1, 1], [], []>} : vector<16x128xbf16>, vector<128x512xbf16>, vector<16x512xf32> -> vector<16x512xf32>
      %194 = arith.truncf %144 : vector<16x128xf32> to vector<16x128xbf16>
      %c0_88 = arith.constant 0 : index
      %c0_89 = arith.constant 0 : index
      %195 = vector.load %arg4[%c0_88, %c0_89] : memref<128x512xbf16, #tpu.memory_space<vmem>>, vector<128x512xbf16>
      %cst_90 = arith.constant dense<0.000000e+00> : vector<16x512xf32>
      %196 = tpu.matmul %194, %195, %cst_90 {dimension_numbers = #tpu.dot_dimension_numbers<[1], [0], [0], [1], [0, 0, 1, 1], [], []>} : vector<16x128xbf16>, vector<128x512xbf16>, vector<16x512xf32> -> vector<16x512xf32>
      %197 = arith.addf %193, %196 : vector<16x512xf32>
      %198 = arith.addf %197, %13 : vector<16x512xf32>
      %199 = vector.extract_strided_slice %198 {offsets = [0, 0], sizes = [16, 128], strides = [1, 1]} : vector<16x512xf32> to vector<16x128xf32>
      %cst_91 = arith.constant 5.000000e-01 : f32
      %200 = vector.broadcast %cst_91 : f32 to vector<16x128xf32>
      %201 = arith.mulf %200, %199 : vector<16x128xf32>
      %202 = math.tanh %201 : vector<16x128xf32>
      %cst_92 = arith.constant 5.000000e-01 : f32
      %203 = vector.broadcast %cst_92 : f32 to vector<16x128xf32>
      %204 = arith.mulf %203, %202 : vector<16x128xf32>
      %cst_93 = arith.constant 5.000000e-01 : f32
      %205 = vector.broadcast %cst_93 : f32 to vector<16x128xf32>
      %206 = arith.addf %204, %205 : vector<16x128xf32>
      %207 = vector.extract_strided_slice %198 {offsets = [0, 128], sizes = [16, 128], strides = [1, 1]} : vector<16x512xf32> to vector<16x128xf32>
      %cst_94 = arith.constant 5.000000e-01 : f32
      %208 = vector.broadcast %cst_94 : f32 to vector<16x128xf32>
      %209 = arith.mulf %208, %207 : vector<16x128xf32>
      %210 = math.tanh %209 : vector<16x128xf32>
      %cst_95 = arith.constant 5.000000e-01 : f32
      %211 = vector.broadcast %cst_95 : f32 to vector<16x128xf32>
      %212 = arith.mulf %211, %210 : vector<16x128xf32>
      %cst_96 = arith.constant 5.000000e-01 : f32
      %213 = vector.broadcast %cst_96 : f32 to vector<16x128xf32>
      %214 = arith.addf %212, %213 : vector<16x128xf32>
      %215 = vector.extract_strided_slice %198 {offsets = [0, 256], sizes = [16, 128], strides = [1, 1]} : vector<16x512xf32> to vector<16x128xf32>
      %216 = math.tanh %215 : vector<16x128xf32>
      %217 = vector.extract_strided_slice %198 {offsets = [0, 384], sizes = [16, 128], strides = [1, 1]} : vector<16x512xf32> to vector<16x128xf32>
      %cst_97 = arith.constant 5.000000e-01 : f32
      %218 = vector.broadcast %cst_97 : f32 to vector<16x128xf32>
      %219 = arith.mulf %218, %217 : vector<16x128xf32>
      %220 = math.tanh %219 : vector<16x128xf32>
      %cst_98 = arith.constant 5.000000e-01 : f32
      %221 = vector.broadcast %cst_98 : f32 to vector<16x128xf32>
      %222 = arith.mulf %221, %220 : vector<16x128xf32>
      %cst_99 = arith.constant 5.000000e-01 : f32
      %223 = vector.broadcast %cst_99 : f32 to vector<16x128xf32>
      %224 = arith.addf %222, %223 : vector<16x128xf32>
      %225 = arith.mulf %214, %142 : vector<16x128xf32>
      %226 = arith.mulf %206, %216 : vector<16x128xf32>
      %227 = arith.addf %225, %226 : vector<16x128xf32>
      %228 = math.tanh %227 : vector<16x128xf32>
      %229 = arith.mulf %224, %228 : vector<16x128xf32>
      %230 = arith.truncf %229 : vector<16x128xf32> to vector<16x128xbf16>
      %c0_100 = arith.constant 0 : index
      %c0_101 = arith.constant 0 : index
      %231 = vector.load %arg6[%c0_100, %c0_101] : memref<128x512xbf16, #tpu.memory_space<vmem>>, vector<128x512xbf16>
      %cst_102 = arith.constant dense<0.000000e+00> : vector<16x512xf32>
      %232 = tpu.matmul %230, %231, %cst_102 {dimension_numbers = #tpu.dot_dimension_numbers<[1], [0], [0], [1], [0, 0, 1, 1], [], []>} : vector<16x128xbf16>, vector<128x512xbf16>, vector<16x512xf32> -> vector<16x512xf32>
      %233 = arith.truncf %183 : vector<16x128xf32> to vector<16x128xbf16>
      %c0_103 = arith.constant 0 : index
      %c0_104 = arith.constant 0 : index
      %234 = vector.load %arg7[%c0_103, %c0_104] : memref<128x512xbf16, #tpu.memory_space<vmem>>, vector<128x512xbf16>
      %cst_105 = arith.constant dense<0.000000e+00> : vector<16x512xf32>
      %235 = tpu.matmul %233, %234, %cst_105 {dimension_numbers = #tpu.dot_dimension_numbers<[1], [0], [0], [1], [0, 0, 1, 1], [], []>} : vector<16x128xbf16>, vector<128x512xbf16>, vector<16x512xf32> -> vector<16x512xf32>
      %236 = arith.addf %232, %235 : vector<16x512xf32>
      %237 = arith.addf %236, %16 : vector<16x512xf32>
      %238 = vector.extract_strided_slice %237 {offsets = [0, 0], sizes = [16, 128], strides = [1, 1]} : vector<16x512xf32> to vector<16x128xf32>
      %cst_106 = arith.constant 5.000000e-01 : f32
      %239 = vector.broadcast %cst_106 : f32 to vector<16x128xf32>
      %240 = arith.mulf %239, %238 : vector<16x128xf32>
      %241 = math.tanh %240 : vector<16x128xf32>
      %cst_107 = arith.constant 5.000000e-01 : f32
      %242 = vector.broadcast %cst_107 : f32 to vector<16x128xf32>
      %243 = arith.mulf %242, %241 : vector<16x128xf32>
      %cst_108 = arith.constant 5.000000e-01 : f32
      %244 = vector.broadcast %cst_108 : f32 to vector<16x128xf32>
      %245 = arith.addf %243, %244 : vector<16x128xf32>
      %246 = vector.extract_strided_slice %237 {offsets = [0, 128], sizes = [16, 128], strides = [1, 1]} : vector<16x512xf32> to vector<16x128xf32>
      %cst_109 = arith.constant 5.000000e-01 : f32
      %247 = vector.broadcast %cst_109 : f32 to vector<16x128xf32>
      %248 = arith.mulf %247, %246 : vector<16x128xf32>
      %249 = math.tanh %248 : vector<16x128xf32>
      %cst_110 = arith.constant 5.000000e-01 : f32
      %250 = vector.broadcast %cst_110 : f32 to vector<16x128xf32>
      %251 = arith.mulf %250, %249 : vector<16x128xf32>
      %cst_111 = arith.constant 5.000000e-01 : f32
      %252 = vector.broadcast %cst_111 : f32 to vector<16x128xf32>
      %253 = arith.addf %251, %252 : vector<16x128xf32>
      %254 = vector.extract_strided_slice %237 {offsets = [0, 256], sizes = [16, 128], strides = [1, 1]} : vector<16x512xf32> to vector<16x128xf32>
      %255 = math.tanh %254 : vector<16x128xf32>
      %256 = vector.extract_strided_slice %237 {offsets = [0, 384], sizes = [16, 128], strides = [1, 1]} : vector<16x512xf32> to vector<16x128xf32>
      %cst_112 = arith.constant 5.000000e-01 : f32
      %257 = vector.broadcast %cst_112 : f32 to vector<16x128xf32>
      %258 = arith.mulf %257, %256 : vector<16x128xf32>
      %259 = math.tanh %258 : vector<16x128xf32>
      %cst_113 = arith.constant 5.000000e-01 : f32
      %260 = vector.broadcast %cst_113 : f32 to vector<16x128xf32>
      %261 = arith.mulf %260, %259 : vector<16x128xf32>
      %cst_114 = arith.constant 5.000000e-01 : f32
      %262 = vector.broadcast %cst_114 : f32 to vector<16x128xf32>
      %263 = arith.addf %261, %262 : vector<16x128xf32>
      %264 = arith.mulf %253, %181 : vector<16x128xf32>
      %265 = arith.mulf %245, %255 : vector<16x128xf32>
      %266 = arith.addf %264, %265 : vector<16x128xf32>
      %267 = math.tanh %266 : vector<16x128xf32>
      %268 = arith.mulf %263, %267 : vector<16x128xf32>
      %c16_i32_115 = arith.constant 16 : i32
      %269 = arith.muli %c2_i32, %c16_i32_115 : i32
      %270 = tpu.assume_multiple %269, 16 : i32
      %271 = arith.truncf %268 : vector<16x128xf32> to vector<16x128xbf16>
      %272 = arith.index_cast %270 : i32 to index
      %c0_116 = arith.constant 0 : index
      %273 = vector.load %arg12[%272, %c0_116] : memref<144x128xbf16, #tpu.memory_space<vmem>>, vector<16x128xbf16>
      tpu.vector_store %arg12[%272, %c0_116], %271 {strides = array<i32>} : memref<144x128xbf16, #tpu.memory_space<vmem>>, vector<16x128xbf16>,
      %c3_i32 = arith.constant 3 : i32
      %274 = arith.index_cast %c3_i32 : i32 to index
      %c0_117 = arith.constant 0 : index
      %c0_118 = arith.constant 0 : index
      %275 = vector.load %arg2[%274, %c0_117, %c0_118] : memref<9x16x128xbf16, #tpu.memory_space<vmem>>, vector<1x16x128xbf16>
      %276 = vector.shape_cast %275 : vector<1x16x128xbf16> to vector<16x128xbf16>
      %c0_119 = arith.constant 0 : index
      %c0_120 = arith.constant 0 : index
      %277 = vector.load %arg3[%c0_119, %c0_120] : memref<128x512xbf16, #tpu.memory_space<vmem>>, vector<128x512xbf16>
      %cst_121 = arith.constant dense<0.000000e+00> : vector<16x512xf32>
      %278 = tpu.matmul %276, %277, %cst_121 {dimension_numbers = #tpu.dot_dimension_numbers<[1], [0], [0], [1], [0, 0, 1, 1], [], []>} : vector<16x128xbf16>, vector<128x512xbf16>, vector<16x512xf32> -> vector<16x512xf32>
      %279 = arith.truncf %229 : vector<16x128xf32> to vector<16x128xbf16>
      %c0_122 = arith.constant 0 : index
      %c0_123 = arith.constant 0 : index
      %280 = vector.load %arg4[%c0_122, %c0_123] : memref<128x512xbf16, #tpu.memory_space<vmem>>, vector<128x512xbf16>
      %cst_124 = arith.constant dense<0.000000e+00> : vector<16x512xf32>
      %281 = tpu.matmul %279, %280, %cst_124 {dimension_numbers = #tpu.dot_dimension_numbers<[1], [0], [0], [1], [0, 0, 1, 1], [], []>} : vector<16x128xbf16>, vector<128x512xbf16>, vector<16x512xf32> -> vector<16x512xf32>
      %282 = arith.addf %278, %281 : vector<16x512xf32>
      %283 = arith.addf %282, %13 : vector<16x512xf32>
      %284 = vector.extract_strided_slice %283 {offsets = [0, 0], sizes = [16, 128], strides = [1, 1]} : vector<16x512xf32> to vector<16x128xf32>
      %cst_125 = arith.constant 5.000000e-01 : f32
      %285 = vector.broadcast %cst_125 : f32 to vector<16x128xf32>
      %286 = arith.mulf %285, %284 : vector<16x128xf32>
      %287 = math.tanh %286 : vector<16x128xf32>
      %cst_126 = arith.constant 5.000000e-01 : f32
      %288 = vector.broadcast %cst_126 : f32 to vector<16x128xf32>
      %289 = arith.mulf %288, %287 : vector<16x128xf32>
      %cst_127 = arith.constant 5.000000e-01 : f32
      %290 = vector.broadcast %cst_127 : f32 to vector<16x128xf32>
      %291 = arith.addf %289, %290 : vector<16x128xf32>
      %292 = vector.extract_strided_slice %283 {offsets = [0, 128], sizes = [16, 128], strides = [1, 1]} : vector<16x512xf32> to vector<16x128xf32>
      %cst_128 = arith.constant 5.000000e-01 : f32
      %293 = vector.broadcast %cst_128 : f32 to vector<16x128xf32>
      %294 = arith.mulf %293, %292 : vector<16x128xf32>
      %295 = math.tanh %294 : vector<16x128xf32>
      %cst_129 = arith.constant 5.000000e-01 : f32
      %296 = vector.broadcast %cst_129 : f32 to vector<16x128xf32>
      %297 = arith.mulf %296, %295 : vector<16x128xf32>
      %cst_130 = arith.constant 5.000000e-01 : f32
      %298 = vector.broadcast %cst_130 : f32 to vector<16x128xf32>
      %299 = arith.addf %297, %298 : vector<16x128xf32>
      %300 = vector.extract_strided_slice %283 {offsets = [0, 256], sizes = [16, 128], strides = [1, 1]} : vector<16x512xf32> to vector<16x128xf32>
      %301 = math.tanh %300 : vector<16x128xf32>
      %302 = vector.extract_strided_slice %283 {offsets = [0, 384], sizes = [16, 128], strides = [1, 1]} : vector<16x512xf32> to vector<16x128xf32>
      %cst_131 = arith.constant 5.000000e-01 : f32
      %303 = vector.broadcast %cst_131 : f32 to vector<16x128xf32>
      %304 = arith.mulf %303, %302 : vector<16x128xf32>
      %305 = math.tanh %304 : vector<16x128xf32>
      %cst_132 = arith.constant 5.000000e-01 : f32
      %306 = vector.broadcast %cst_132 : f32 to vector<16x128xf32>
      %307 = arith.mulf %306, %305 : vector<16x128xf32>
      %cst_133 = arith.constant 5.000000e-01 : f32
      %308 = vector.broadcast %cst_133 : f32 to vector<16x128xf32>
      %309 = arith.addf %307, %308 : vector<16x128xf32>
      %310 = arith.mulf %299, %227 : vector<16x128xf32>
      %311 = arith.mulf %291, %301 : vector<16x128xf32>
      %312 = arith.addf %310, %311 : vector<16x128xf32>
      %313 = math.tanh %312 : vector<16x128xf32>
      %314 = arith.mulf %309, %313 : vector<16x128xf32>
      %315 = arith.truncf %314 : vector<16x128xf32> to vector<16x128xbf16>
      %c0_134 = arith.constant 0 : index
      %c0_135 = arith.constant 0 : index
      %316 = vector.load %arg6[%c0_134, %c0_135] : memref<128x512xbf16, #tpu.memory_space<vmem>>, vector<128x512xbf16>
      %cst_136 = arith.constant dense<0.000000e+00> : vector<16x512xf32>
      %317 = tpu.matmul %315, %316, %cst_136 {dimension_numbers = #tpu.dot_dimension_numbers<[1], [0], [0], [1], [0, 0, 1, 1], [], []>} : vector<16x128xbf16>, vector<128x512xbf16>, vector<16x512xf32> -> vector<16x512xf32>
      %318 = arith.truncf %268 : vector<16x128xf32> to vector<16x128xbf16>
      %c0_137 = arith.constant 0 : index
      %c0_138 = arith.constant 0 : index
      %319 = vector.load %arg7[%c0_137, %c0_138] : memref<128x512xbf16, #tpu.memory_space<vmem>>, vector<128x512xbf16>
      %cst_139 = arith.constant dense<0.000000e+00> : vector<16x512xf32>
      %320 = tpu.matmul %318, %319, %cst_139 {dimension_numbers = #tpu.dot_dimension_numbers<[1], [0], [0], [1], [0, 0, 1, 1], [], []>} : vector<16x128xbf16>, vector<128x512xbf16>, vector<16x512xf32> -> vector<16x512xf32>
      %321 = arith.addf %317, %320 : vector<16x512xf32>
      %322 = arith.addf %321, %16 : vector<16x512xf32>
      %323 = vector.extract_strided_slice %322 {offsets = [0, 0], sizes = [16, 128], strides = [1, 1]} : vector<16x512xf32> to vector<16x128xf32>
      %cst_140 = arith.constant 5.000000e-01 : f32
      %324 = vector.broadcast %cst_140 : f32 to vector<16x128xf32>
      %325 = arith.mulf %324, %323 : vector<16x128xf32>
      %326 = math.tanh %325 : vector<16x128xf32>
      %cst_141 = arith.constant 5.000000e-01 : f32
      %327 = vector.broadcast %cst_141 : f32 to vector<16x128xf32>
      %328 = arith.mulf %327, %326 : vector<16x128xf32>
      %cst_142 = arith.constant 5.000000e-01 : f32
      %329 = vector.broadcast %cst_142 : f32 to vector<16x128xf32>
      %330 = arith.addf %328, %329 : vector<16x128xf32>
      %331 = vector.extract_strided_slice %322 {offsets = [0, 128], sizes = [16, 128], strides = [1, 1]} : vector<16x512xf32> to vector<16x128xf32>
      %cst_143 = arith.constant 5.000000e-01 : f32
      %332 = vector.broadcast %cst_143 : f32 to vector<16x128xf32>
      %333 = arith.mulf %332, %331 : vector<16x128xf32>
      %334 = math.tanh %333 : vector<16x128xf32>
      %cst_144 = arith.constant 5.000000e-01 : f32
      %335 = vector.broadcast %cst_144 : f32 to vector<16x128xf32>
      %336 = arith.mulf %335, %334 : vector<16x128xf32>
      %cst_145 = arith.constant 5.000000e-01 : f32
      %337 = vector.broadcast %cst_145 : f32 to vector<16x128xf32>
      %338 = arith.addf %336, %337 : vector<16x128xf32>
      %339 = vector.extract_strided_slice %322 {offsets = [0, 256], sizes = [16, 128], strides = [1, 1]} : vector<16x512xf32> to vector<16x128xf32>
      %340 = math.tanh %339 : vector<16x128xf32>
      %341 = vector.extract_strided_slice %322 {offsets = [0, 384], sizes = [16, 128], strides = [1, 1]} : vector<16x512xf32> to vector<16x128xf32>
      %cst_146 = arith.constant 5.000000e-01 : f32
      %342 = vector.broadcast %cst_146 : f32 to vector<16x128xf32>
      %343 = arith.mulf %342, %341 : vector<16x128xf32>
      %344 = math.tanh %343 : vector<16x128xf32>
      %cst_147 = arith.constant 5.000000e-01 : f32
      %345 = vector.broadcast %cst_147 : f32 to vector<16x128xf32>
      %346 = arith.mulf %345, %344 : vector<16x128xf32>
      %cst_148 = arith.constant 5.000000e-01 : f32
      %347 = vector.broadcast %cst_148 : f32 to vector<16x128xf32>
      %348 = arith.addf %346, %347 : vector<16x128xf32>
      %349 = arith.mulf %338, %266 : vector<16x128xf32>
      %350 = arith.mulf %330, %340 : vector<16x128xf32>
      %351 = arith.addf %349, %350 : vector<16x128xf32>
      %352 = math.tanh %351 : vector<16x128xf32>
      %353 = arith.mulf %348, %352 : vector<16x128xf32>
      %c16_i32_149 = arith.constant 16 : i32
      %354 = arith.muli %c3_i32, %c16_i32_149 : i32
      %355 = tpu.assume_multiple %354, 16 : i32
      %356 = arith.truncf %353 : vector<16x128xf32> to vector<16x128xbf16>
      %357 = arith.index_cast %355 : i32 to index
      %c0_150 = arith.constant 0 : index
      %358 = vector.load %arg12[%357, %c0_150] : memref<144x128xbf16, #tpu.memory_space<vmem>>, vector<16x128xbf16>
      tpu.vector_store %arg12[%357, %c0_150], %356 {strides = array<i32>} : memref<144x128xbf16, #tpu.memory_space<vmem>>, vector<16x128xbf16>,
      %c4_i32 = arith.constant 4 : i32
      %359 = arith.index_cast %c4_i32 : i32 to index
      %c0_151 = arith.constant 0 : index
      %c0_152 = arith.constant 0 : index
      %360 = vector.load %arg2[%359, %c0_151, %c0_152] : memref<9x16x128xbf16, #tpu.memory_space<vmem>>, vector<1x16x128xbf16>
      %361 = vector.shape_cast %360 : vector<1x16x128xbf16> to vector<16x128xbf16>
      %c0_153 = arith.constant 0 : index
      %c0_154 = arith.constant 0 : index
      %362 = vector.load %arg3[%c0_153, %c0_154] : memref<128x512xbf16, #tpu.memory_space<vmem>>, vector<128x512xbf16>
      %cst_155 = arith.constant dense<0.000000e+00> : vector<16x512xf32>
      %363 = tpu.matmul %361, %362, %cst_155 {dimension_numbers = #tpu.dot_dimension_numbers<[1], [0], [0], [1], [0, 0, 1, 1], [], []>} : vector<16x128xbf16>, vector<128x512xbf16>, vector<16x512xf32> -> vector<16x512xf32>
      %364 = arith.truncf %314 : vector<16x128xf32> to vector<16x128xbf16>
      %c0_156 = arith.constant 0 : index
      %c0_157 = arith.constant 0 : index
      %365 = vector.load %arg4[%c0_156, %c0_157] : memref<128x512xbf16, #tpu.memory_space<vmem>>, vector<128x512xbf16>
      %cst_158 = arith.constant dense<0.000000e+00> : vector<16x512xf32>
      %366 = tpu.matmul %364, %365, %cst_158 {dimension_numbers = #tpu.dot_dimension_numbers<[1], [0], [0], [1], [0, 0, 1, 1], [], []>} : vector<16x128xbf16>, vector<128x512xbf16>, vector<16x512xf32> -> vector<16x512xf32>
      %367 = arith.addf %363, %366 : vector<16x512xf32>
      %368 = arith.addf %367, %13 : vector<16x512xf32>
      %369 = vector.extract_strided_slice %368 {offsets = [0, 0], sizes = [16, 128], strides = [1, 1]} : vector<16x512xf32> to vector<16x128xf32>
      %cst_159 = arith.constant 5.000000e-01 : f32
      %370 = vector.broadcast %cst_159 : f32 to vector<16x128xf32>
      %371 = arith.mulf %370, %369 : vector<16x128xf32>
      %372 = math.tanh %371 : vector<16x128xf32>
      %cst_160 = arith.constant 5.000000e-01 : f32
      %373 = vector.broadcast %cst_160 : f32 to vector<16x128xf32>
      %374 = arith.mulf %373, %372 : vector<16x128xf32>
      %cst_161 = arith.constant 5.000000e-01 : f32
      %375 = vector.broadcast %cst_161 : f32 to vector<16x128xf32>
      %376 = arith.addf %374, %375 : vector<16x128xf32>
      %377 = vector.extract_strided_slice %368 {offsets = [0, 128], sizes = [16, 128], strides = [1, 1]} : vector<16x512xf32> to vector<16x128xf32>
      %cst_162 = arith.constant 5.000000e-01 : f32
      %378 = vector.broadcast %cst_162 : f32 to vector<16x128xf32>
      %379 = arith.mulf %378, %377 : vector<16x128xf32>
      %380 = math.tanh %379 : vector<16x128xf32>
      %cst_163 = arith.constant 5.000000e-01 : f32
      %381 = vector.broadcast %cst_163 : f32 to vector<16x128xf32>
      %382 = arith.mulf %381, %380 : vector<16x128xf32>
      %cst_164 = arith.constant 5.000000e-01 : f32
      %383 = vector.broadcast %cst_164 : f32 to vector<16x128xf32>
      %384 = arith.addf %382, %383 : vector<16x128xf32>
      %385 = vector.extract_strided_slice %368 {offsets = [0, 256], sizes = [16, 128], strides = [1, 1]} : vector<16x512xf32> to vector<16x128xf32>
      %386 = math.tanh %385 : vector<16x128xf32>
      %387 = vector.extract_strided_slice %368 {offsets = [0, 384], sizes = [16, 128], strides = [1, 1]} : vector<16x512xf32> to vector<16x128xf32>
      %cst_165 = arith.constant 5.000000e-01 : f32
      %388 = vector.broadcast %cst_165 : f32 to vector<16x128xf32>
      %389 = arith.mulf %388, %387 : vector<16x128xf32>
      %390 = math.tanh %389 : vector<16x128xf32>
      %cst_166 = arith.constant 5.000000e-01 : f32
      %391 = vector.broadcast %cst_166 : f32 to vector<16x128xf32>
      %392 = arith.mulf %391, %390 : vector<16x128xf32>
      %cst_167 = arith.constant 5.000000e-01 : f32
      %393 = vector.broadcast %cst_167 : f32 to vector<16x128xf32>
      %394 = arith.addf %392, %393 : vector<16x128xf32>
      %395 = arith.mulf %384, %312 : vector<16x128xf32>
      %396 = arith.mulf %376, %386 : vector<16x128xf32>
      %397 = arith.addf %395, %396 : vector<16x128xf32>
      %398 = math.tanh %397 : vector<16x128xf32>
      %399 = arith.mulf %394, %398 : vector<16x128xf32>
      %400 = arith.truncf %399 : vector<16x128xf32> to vector<16x128xbf16>
      %c0_168 = arith.constant 0 : index
      %c0_169 = arith.constant 0 : index
      %401 = vector.load %arg6[%c0_168, %c0_169] : memref<128x512xbf16, #tpu.memory_space<vmem>>, vector<128x512xbf16>
      %cst_170 = arith.constant dense<0.000000e+00> : vector<16x512xf32>
      %402 = tpu.matmul %400, %401, %cst_170 {dimension_numbers = #tpu.dot_dimension_numbers<[1], [0], [0], [1], [0, 0, 1, 1], [], []>} : vector<16x128xbf16>, vector<128x512xbf16>, vector<16x512xf32> -> vector<16x512xf32>
      %403 = arith.truncf %353 : vector<16x128xf32> to vector<16x128xbf16>
      %c0_171 = arith.constant 0 : index
      %c0_172 = arith.constant 0 : index
      %404 = vector.load %arg7[%c0_171, %c0_172] : memref<128x512xbf16, #tpu.memory_space<vmem>>, vector<128x512xbf16>
      %cst_173 = arith.constant dense<0.000000e+00> : vector<16x512xf32>
      %405 = tpu.matmul %403, %404, %cst_173 {dimension_numbers = #tpu.dot_dimension_numbers<[1], [0], [0], [1], [0, 0, 1, 1], [], []>} : vector<16x128xbf16>, vector<128x512xbf16>, vector<16x512xf32> -> vector<16x512xf32>
      %406 = arith.addf %402, %405 : vector<16x512xf32>
      %407 = arith.addf %406, %16 : vector<16x512xf32>
      %408 = vector.extract_strided_slice %407 {offsets = [0, 0], sizes = [16, 128], strides = [1, 1]} : vector<16x512xf32> to vector<16x128xf32>
      %cst_174 = arith.constant 5.000000e-01 : f32
      %409 = vector.broadcast %cst_174 : f32 to vector<16x128xf32>
      %410 = arith.mulf %409, %408 : vector<16x128xf32>
      %411 = math.tanh %410 : vector<16x128xf32>
      %cst_175 = arith.constant 5.000000e-01 : f32
      %412 = vector.broadcast %cst_175 : f32 to vector<16x128xf32>
      %413 = arith.mulf %412, %411 : vector<16x128xf32>
      %cst_176 = arith.constant 5.000000e-01 : f32
      %414 = vector.broadcast %cst_176 : f32 to vector<16x128xf32>
      %415 = arith.addf %413, %414 : vector<16x128xf32>
      %416 = vector.extract_strided_slice %407 {offsets = [0, 128], sizes = [16, 128], strides = [1, 1]} : vector<16x512xf32> to vector<16x128xf32>
      %cst_177 = arith.constant 5.000000e-01 : f32
      %417 = vector.broadcast %cst_177 : f32 to vector<16x128xf32>
      %418 = arith.mulf %417, %416 : vector<16x128xf32>
      %419 = math.tanh %418 : vector<16x128xf32>
      %cst_178 = arith.constant 5.000000e-01 : f32
      %420 = vector.broadcast %cst_178 : f32 to vector<16x128xf32>
      %421 = arith.mulf %420, %419 : vector<16x128xf32>
      %cst_179 = arith.constant 5.000000e-01 : f32
      %422 = vector.broadcast %cst_179 : f32 to vector<16x128xf32>
      %423 = arith.addf %421, %422 : vector<16x128xf32>
      %424 = vector.extract_strided_slice %407 {offsets = [0, 256], sizes = [16, 128], strides = [1, 1]} : vector<16x512xf32> to vector<16x128xf32>
      %425 = math.tanh %424 : vector<16x128xf32>
      %426 = vector.extract_strided_slice %407 {offsets = [0, 384], sizes = [16, 128], strides = [1, 1]} : vector<16x512xf32> to vector<16x128xf32>
      %cst_180 = arith.constant 5.000000e-01 : f32
      %427 = vector.broadcast %cst_180 : f32 to vector<16x128xf32>
      %428 = arith.mulf %427, %426 : vector<16x128xf32>
      %429 = math.tanh %428 : vector<16x128xf32>
      %cst_181 = arith.constant 5.000000e-01 : f32
      %430 = vector.broadcast %cst_181 : f32 to vector<16x128xf32>
      %431 = arith.mulf %430, %429 : vector<16x128xf32>
      %cst_182 = arith.constant 5.000000e-01 : f32
      %432 = vector.broadcast %cst_182 : f32 to vector<16x128xf32>
      %433 = arith.addf %431, %432 : vector<16x128xf32>
      %434 = arith.mulf %423, %351 : vector<16x128xf32>
      %435 = arith.mulf %415, %425 : vector<16x128xf32>
      %436 = arith.addf %434, %435 : vector<16x128xf32>
      %437 = math.tanh %436 : vector<16x128xf32>
      %438 = arith.mulf %433, %437 : vector<16x128xf32>
      %c16_i32_183 = arith.constant 16 : i32
      %439 = arith.muli %c4_i32, %c16_i32_183 : i32
      %440 = tpu.assume_multiple %439, 16 : i32
      %441 = arith.truncf %438 : vector<16x128xf32> to vector<16x128xbf16>
      %442 = arith.index_cast %440 : i32 to index
      %c0_184 = arith.constant 0 : index
      %443 = vector.load %arg12[%442, %c0_184] : memref<144x128xbf16, #tpu.memory_space<vmem>>, vector<16x128xbf16>
      tpu.vector_store %arg12[%442, %c0_184], %441 {strides = array<i32>} : memref<144x128xbf16, #tpu.memory_space<vmem>>, vector<16x128xbf16>,
      %c5_i32 = arith.constant 5 : i32
      %444 = arith.index_cast %c5_i32 : i32 to index
      %c0_185 = arith.constant 0 : index
      %c0_186 = arith.constant 0 : index
      %445 = vector.load %arg2[%444, %c0_185, %c0_186] : memref<9x16x128xbf16, #tpu.memory_space<vmem>>, vector<1x16x128xbf16>
      %446 = vector.shape_cast %445 : vector<1x16x128xbf16> to vector<16x128xbf16>
      %c0_187 = arith.constant 0 : index
      %c0_188 = arith.constant 0 : index
      %447 = vector.load %arg3[%c0_187, %c0_188] : memref<128x512xbf16, #tpu.memory_space<vmem>>, vector<128x512xbf16>
      %cst_189 = arith.constant dense<0.000000e+00> : vector<16x512xf32>
      %448 = tpu.matmul %446, %447, %cst_189 {dimension_numbers = #tpu.dot_dimension_numbers<[1], [0], [0], [1], [0, 0, 1, 1], [], []>} : vector<16x128xbf16>, vector<128x512xbf16>, vector<16x512xf32> -> vector<16x512xf32>
      %449 = arith.truncf %399 : vector<16x128xf32> to vector<16x128xbf16>
      %c0_190 = arith.constant 0 : index
      %c0_191 = arith.constant 0 : index
      %450 = vector.load %arg4[%c0_190, %c0_191] : memref<128x512xbf16, #tpu.memory_space<vmem>>, vector<128x512xbf16>
      %cst_192 = arith.constant dense<0.000000e+00> : vector<16x512xf32>
      %451 = tpu.matmul %449, %450, %cst_192 {dimension_numbers = #tpu.dot_dimension_numbers<[1], [0], [0], [1], [0, 0, 1, 1], [], []>} : vector<16x128xbf16>, vector<128x512xbf16>, vector<16x512xf32> -> vector<16x512xf32>
      %452 = arith.addf %448, %451 : vector<16x512xf32>
      %453 = arith.addf %452, %13 : vector<16x512xf32>
      %454 = vector.extract_strided_slice %453 {offsets = [0, 0], sizes = [16, 128], strides = [1, 1]} : vector<16x512xf32> to vector<16x128xf32>
      %cst_193 = arith.constant 5.000000e-01 : f32
      %455 = vector.broadcast %cst_193 : f32 to vector<16x128xf32>
      %456 = arith.mulf %455, %454 : vector<16x128xf32>
      %457 = math.tanh %456 : vector<16x128xf32>
      %cst_194 = arith.constant 5.000000e-01 : f32
      %458 = vector.broadcast %cst_194 : f32 to vector<16x128xf32>
      %459 = arith.mulf %458, %457 : vector<16x128xf32>
      %cst_195 = arith.constant 5.000000e-01 : f32
      %460 = vector.broadcast %cst_195 : f32 to vector<16x128xf32>
      %461 = arith.addf %459, %460 : vector<16x128xf32>
      %462 = vector.extract_strided_slice %453 {offsets = [0, 128], sizes = [16, 128], strides = [1, 1]} : vector<16x512xf32> to vector<16x128xf32>
      %cst_196 = arith.constant 5.000000e-01 : f32
      %463 = vector.broadcast %cst_196 : f32 to vector<16x128xf32>
      %464 = arith.mulf %463, %462 : vector<16x128xf32>
      %465 = math.tanh %464 : vector<16x128xf32>
      %cst_197 = arith.constant 5.000000e-01 : f32
      %466 = vector.broadcast %cst_197 : f32 to vector<16x128xf32>
      %467 = arith.mulf %466, %465 : vector<16x128xf32>
      %cst_198 = arith.constant 5.000000e-01 : f32
      %468 = vector.broadcast %cst_198 : f32 to vector<16x128xf32>
      %469 = arith.addf %467, %468 : vector<16x128xf32>
      %470 = vector.extract_strided_slice %453 {offsets = [0, 256], sizes = [16, 128], strides = [1, 1]} : vector<16x512xf32> to vector<16x128xf32>
      %471 = math.tanh %470 : vector<16x128xf32>
      %472 = vector.extract_strided_slice %453 {offsets = [0, 384], sizes = [16, 128], strides = [1, 1]} : vector<16x512xf32> to vector<16x128xf32>
      %cst_199 = arith.constant 5.000000e-01 : f32
      %473 = vector.broadcast %cst_199 : f32 to vector<16x128xf32>
      %474 = arith.mulf %473, %472 : vector<16x128xf32>
      %475 = math.tanh %474 : vector<16x128xf32>
      %cst_200 = arith.constant 5.000000e-01 : f32
      %476 = vector.broadcast %cst_200 : f32 to vector<16x128xf32>
      %477 = arith.mulf %476, %475 : vector<16x128xf32>
      %cst_201 = arith.constant 5.000000e-01 : f32
      %478 = vector.broadcast %cst_201 : f32 to vector<16x128xf32>
      %479 = arith.addf %477, %478 : vector<16x128xf32>
      %480 = arith.mulf %469, %397 : vector<16x128xf32>
      %481 = arith.mulf %461, %471 : vector<16x128xf32>
      %482 = arith.addf %480, %481 : vector<16x128xf32>
      %483 = math.tanh %482 : vector<16x128xf32>
      %484 = arith.mulf %479, %483 : vector<16x128xf32>
      %485 = arith.truncf %484 : vector<16x128xf32> to vector<16x128xbf16>
      %c0_202 = arith.constant 0 : index
      %c0_203 = arith.constant 0 : index
      %486 = vector.load %arg6[%c0_202, %c0_203] : memref<128x512xbf16, #tpu.memory_space<vmem>>, vector<128x512xbf16>
      %cst_204 = arith.constant dense<0.000000e+00> : vector<16x512xf32>
      %487 = tpu.matmul %485, %486, %cst_204 {dimension_numbers = #tpu.dot_dimension_numbers<[1], [0], [0], [1], [0, 0, 1, 1], [], []>} : vector<16x128xbf16>, vector<128x512xbf16>, vector<16x512xf32> -> vector<16x512xf32>
      %488 = arith.truncf %438 : vector<16x128xf32> to vector<16x128xbf16>
      %c0_205 = arith.constant 0 : index
      %c0_206 = arith.constant 0 : index
      %489 = vector.load %arg7[%c0_205, %c0_206] : memref<128x512xbf16, #tpu.memory_space<vmem>>, vector<128x512xbf16>
      %cst_207 = arith.constant dense<0.000000e+00> : vector<16x512xf32>
      %490 = tpu.matmul %488, %489, %cst_207 {dimension_numbers = #tpu.dot_dimension_numbers<[1], [0], [0], [1], [0, 0, 1, 1], [], []>} : vector<16x128xbf16>, vector<128x512xbf16>, vector<16x512xf32> -> vector<16x512xf32>
      %491 = arith.addf %487, %490 : vector<16x512xf32>
      %492 = arith.addf %491, %16 : vector<16x512xf32>
      %493 = vector.extract_strided_slice %492 {offsets = [0, 0], sizes = [16, 128], strides = [1, 1]} : vector<16x512xf32> to vector<16x128xf32>
      %cst_208 = arith.constant 5.000000e-01 : f32
      %494 = vector.broadcast %cst_208 : f32 to vector<16x128xf32>
      %495 = arith.mulf %494, %493 : vector<16x128xf32>
      %496 = math.tanh %495 : vector<16x128xf32>
      %cst_209 = arith.constant 5.000000e-01 : f32
      %497 = vector.broadcast %cst_209 : f32 to vector<16x128xf32>
      %498 = arith.mulf %497, %496 : vector<16x128xf32>
      %cst_210 = arith.constant 5.000000e-01 : f32
      %499 = vector.broadcast %cst_210 : f32 to vector<16x128xf32>
      %500 = arith.addf %498, %499 : vector<16x128xf32>
      %501 = vector.extract_strided_slice %492 {offsets = [0, 128], sizes = [16, 128], strides = [1, 1]} : vector<16x512xf32> to vector<16x128xf32>
      %cst_211 = arith.constant 5.000000e-01 : f32
      %502 = vector.broadcast %cst_211 : f32 to vector<16x128xf32>
      %503 = arith.mulf %502, %501 : vector<16x128xf32>
      %504 = math.tanh %503 : vector<16x128xf32>
      %cst_212 = arith.constant 5.000000e-01 : f32
      %505 = vector.broadcast %cst_212 : f32 to vector<16x128xf32>
      %506 = arith.mulf %505, %504 : vector<16x128xf32>
      %cst_213 = arith.constant 5.000000e-01 : f32
      %507 = vector.broadcast %cst_213 : f32 to vector<16x128xf32>
      %508 = arith.addf %506, %507 : vector<16x128xf32>
      %509 = vector.extract_strided_slice %492 {offsets = [0, 256], sizes = [16, 128], strides = [1, 1]} : vector<16x512xf32> to vector<16x128xf32>
      %510 = math.tanh %509 : vector<16x128xf32>
      %511 = vector.extract_strided_slice %492 {offsets = [0, 384], sizes = [16, 128], strides = [1, 1]} : vector<16x512xf32> to vector<16x128xf32>
      %cst_214 = arith.constant 5.000000e-01 : f32
      %512 = vector.broadcast %cst_214 : f32 to vector<16x128xf32>
      %513 = arith.mulf %512, %511 : vector<16x128xf32>
      %514 = math.tanh %513 : vector<16x128xf32>
      %cst_215 = arith.constant 5.000000e-01 : f32
      %515 = vector.broadcast %cst_215 : f32 to vector<16x128xf32>
      %516 = arith.mulf %515, %514 : vector<16x128xf32>
      %cst_216 = arith.constant 5.000000e-01 : f32
      %517 = vector.broadcast %cst_216 : f32 to vector<16x128xf32>
      %518 = arith.addf %516, %517 : vector<16x128xf32>
      %519 = arith.mulf %508, %436 : vector<16x128xf32>
      %520 = arith.mulf %500, %510 : vector<16x128xf32>
      %521 = arith.addf %519, %520 : vector<16x128xf32>
      %522 = math.tanh %521 : vector<16x128xf32>
      %523 = arith.mulf %518, %522 : vector<16x128xf32>
      %c16_i32_217 = arith.constant 16 : i32
      %524 = arith.muli %c5_i32, %c16_i32_217 : i32
      %525 = tpu.assume_multiple %524, 16 : i32
      %526 = arith.truncf %523 : vector<16x128xf32> to vector<16x128xbf16>
      %527 = arith.index_cast %525 : i32 to index
      %c0_218 = arith.constant 0 : index
      %528 = vector.load %arg12[%527, %c0_218] : memref<144x128xbf16, #tpu.memory_space<vmem>>, vector<16x128xbf16>
      tpu.vector_store %arg12[%527, %c0_218], %526 {strides = array<i32>} : memref<144x128xbf16, #tpu.memory_space<vmem>>, vector<16x128xbf16>,
      %c6_i32 = arith.constant 6 : i32
      %529 = arith.index_cast %c6_i32 : i32 to index
      %c0_219 = arith.constant 0 : index
      %c0_220 = arith.constant 0 : index
      %530 = vector.load %arg2[%529, %c0_219, %c0_220] : memref<9x16x128xbf16, #tpu.memory_space<vmem>>, vector<1x16x128xbf16>
      %531 = vector.shape_cast %530 : vector<1x16x128xbf16> to vector<16x128xbf16>
      %c0_221 = arith.constant 0 : index
      %c0_222 = arith.constant 0 : index
      %532 = vector.load %arg3[%c0_221, %c0_222] : memref<128x512xbf16, #tpu.memory_space<vmem>>, vector<128x512xbf16>
      %cst_223 = arith.constant dense<0.000000e+00> : vector<16x512xf32>
      %533 = tpu.matmul %531, %532, %cst_223 {dimension_numbers = #tpu.dot_dimension_numbers<[1], [0], [0], [1], [0, 0, 1, 1], [], []>} : vector<16x128xbf16>, vector<128x512xbf16>, vector<16x512xf32> -> vector<16x512xf32>
      %534 = arith.truncf %484 : vector<16x128xf32> to vector<16x128xbf16>
      %c0_224 = arith.constant 0 : index
      %c0_225 = arith.constant 0 : index
      %535 = vector.load %arg4[%c0_224, %c0_225] : memref<128x512xbf16, #tpu.memory_space<vmem>>, vector<128x512xbf16>
      %cst_226 = arith.constant dense<0.000000e+00> : vector<16x512xf32>
      %536 = tpu.matmul %534, %535, %cst_226 {dimension_numbers = #tpu.dot_dimension_numbers<[1], [0], [0], [1], [0, 0, 1, 1], [], []>} : vector<16x128xbf16>, vector<128x512xbf16>, vector<16x512xf32> -> vector<16x512xf32>
      %537 = arith.addf %533, %536 : vector<16x512xf32>
      %538 = arith.addf %537, %13 : vector<16x512xf32>
      %539 = vector.extract_strided_slice %538 {offsets = [0, 0], sizes = [16, 128], strides = [1, 1]} : vector<16x512xf32> to vector<16x128xf32>
      %cst_227 = arith.constant 5.000000e-01 : f32
      %540 = vector.broadcast %cst_227 : f32 to vector<16x128xf32>
      %541 = arith.mulf %540, %539 : vector<16x128xf32>
      %542 = math.tanh %541 : vector<16x128xf32>
      %cst_228 = arith.constant 5.000000e-01 : f32
      %543 = vector.broadcast %cst_228 : f32 to vector<16x128xf32>
      %544 = arith.mulf %543, %542 : vector<16x128xf32>
      %cst_229 = arith.constant 5.000000e-01 : f32
      %545 = vector.broadcast %cst_229 : f32 to vector<16x128xf32>
      %546 = arith.addf %544, %545 : vector<16x128xf32>
      %547 = vector.extract_strided_slice %538 {offsets = [0, 128], sizes = [16, 128], strides = [1, 1]} : vector<16x512xf32> to vector<16x128xf32>
      %cst_230 = arith.constant 5.000000e-01 : f32
      %548 = vector.broadcast %cst_230 : f32 to vector<16x128xf32>
      %549 = arith.mulf %548, %547 : vector<16x128xf32>
      %550 = math.tanh %549 : vector<16x128xf32>
      %cst_231 = arith.constant 5.000000e-01 : f32
      %551 = vector.broadcast %cst_231 : f32 to vector<16x128xf32>
      %552 = arith.mulf %551, %550 : vector<16x128xf32>
      %cst_232 = arith.constant 5.000000e-01 : f32
      %553 = vector.broadcast %cst_232 : f32 to vector<16x128xf32>
      %554 = arith.addf %552, %553 : vector<16x128xf32>
      %555 = vector.extract_strided_slice %538 {offsets = [0, 256], sizes = [16, 128], strides = [1, 1]} : vector<16x512xf32> to vector<16x128xf32>
      %556 = math.tanh %555 : vector<16x128xf32>
      %557 = vector.extract_strided_slice %538 {offsets = [0, 384], sizes = [16, 128], strides = [1, 1]} : vector<16x512xf32> to vector<16x128xf32>
      %cst_233 = arith.constant 5.000000e-01 : f32
      %558 = vector.broadcast %cst_233 : f32 to vector<16x128xf32>
      %559 = arith.mulf %558, %557 : vector<16x128xf32>
      %560 = math.tanh %559 : vector<16x128xf32>
      %cst_234 = arith.constant 5.000000e-01 : f32
      %561 = vector.broadcast %cst_234 : f32 to vector<16x128xf32>
      %562 = arith.mulf %561, %560 : vector<16x128xf32>
      %cst_235 = arith.constant 5.000000e-01 : f32
      %563 = vector.broadcast %cst_235 : f32 to vector<16x128xf32>
      %564 = arith.addf %562, %563 : vector<16x128xf32>
      %565 = arith.mulf %554, %482 : vector<16x128xf32>
      %566 = arith.mulf %546, %556 : vector<16x128xf32>
      %567 = arith.addf %565, %566 : vector<16x128xf32>
      %568 = math.tanh %567 : vector<16x128xf32>
      %569 = arith.mulf %564, %568 : vector<16x128xf32>
      %570 = arith.truncf %569 : vector<16x128xf32> to vector<16x128xbf16>
      %c0_236 = arith.constant 0 : index
      %c0_237 = arith.constant 0 : index
      %571 = vector.load %arg6[%c0_236, %c0_237] : memref<128x512xbf16, #tpu.memory_space<vmem>>, vector<128x512xbf16>
      %cst_238 = arith.constant dense<0.000000e+00> : vector<16x512xf32>
      %572 = tpu.matmul %570, %571, %cst_238 {dimension_numbers = #tpu.dot_dimension_numbers<[1], [0], [0], [1], [0, 0, 1, 1], [], []>} : vector<16x128xbf16>, vector<128x512xbf16>, vector<16x512xf32> -> vector<16x512xf32>
      %573 = arith.truncf %523 : vector<16x128xf32> to vector<16x128xbf16>
      %c0_239 = arith.constant 0 : index
      %c0_240 = arith.constant 0 : index
      %574 = vector.load %arg7[%c0_239, %c0_240] : memref<128x512xbf16, #tpu.memory_space<vmem>>, vector<128x512xbf16>
      %cst_241 = arith.constant dense<0.000000e+00> : vector<16x512xf32>
      %575 = tpu.matmul %573, %574, %cst_241 {dimension_numbers = #tpu.dot_dimension_numbers<[1], [0], [0], [1], [0, 0, 1, 1], [], []>} : vector<16x128xbf16>, vector<128x512xbf16>, vector<16x512xf32> -> vector<16x512xf32>
      %576 = arith.addf %572, %575 : vector<16x512xf32>
      %577 = arith.addf %576, %16 : vector<16x512xf32>
      %578 = vector.extract_strided_slice %577 {offsets = [0, 0], sizes = [16, 128], strides = [1, 1]} : vector<16x512xf32> to vector<16x128xf32>
      %cst_242 = arith.constant 5.000000e-01 : f32
      %579 = vector.broadcast %cst_242 : f32 to vector<16x128xf32>
      %580 = arith.mulf %579, %578 : vector<16x128xf32>
      %581 = math.tanh %580 : vector<16x128xf32>
      %cst_243 = arith.constant 5.000000e-01 : f32
      %582 = vector.broadcast %cst_243 : f32 to vector<16x128xf32>
      %583 = arith.mulf %582, %581 : vector<16x128xf32>
      %cst_244 = arith.constant 5.000000e-01 : f32
      %584 = vector.broadcast %cst_244 : f32 to vector<16x128xf32>
      %585 = arith.addf %583, %584 : vector<16x128xf32>
      %586 = vector.extract_strided_slice %577 {offsets = [0, 128], sizes = [16, 128], strides = [1, 1]} : vector<16x512xf32> to vector<16x128xf32>
      %cst_245 = arith.constant 5.000000e-01 : f32
      %587 = vector.broadcast %cst_245 : f32 to vector<16x128xf32>
      %588 = arith.mulf %587, %586 : vector<16x128xf32>
      %589 = math.tanh %588 : vector<16x128xf32>
      %cst_246 = arith.constant 5.000000e-01 : f32
      %590 = vector.broadcast %cst_246 : f32 to vector<16x128xf32>
      %591 = arith.mulf %590, %589 : vector<16x128xf32>
      %cst_247 = arith.constant 5.000000e-01 : f32
      %592 = vector.broadcast %cst_247 : f32 to vector<16x128xf32>
      %593 = arith.addf %591, %592 : vector<16x128xf32>
      %594 = vector.extract_strided_slice %577 {offsets = [0, 256], sizes = [16, 128], strides = [1, 1]} : vector<16x512xf32> to vector<16x128xf32>
      %595 = math.tanh %594 : vector<16x128xf32>
      %596 = vector.extract_strided_slice %577 {offsets = [0, 384], sizes = [16, 128], strides = [1, 1]} : vector<16x512xf32> to vector<16x128xf32>
      %cst_248 = arith.constant 5.000000e-01 : f32
      %597 = vector.broadcast %cst_248 : f32 to vector<16x128xf32>
      %598 = arith.mulf %597, %596 : vector<16x128xf32>
      %599 = math.tanh %598 : vector<16x128xf32>
      %cst_249 = arith.constant 5.000000e-01 : f32
      %600 = vector.broadcast %cst_249 : f32 to vector<16x128xf32>
      %601 = arith.mulf %600, %599 : vector<16x128xf32>
      %cst_250 = arith.constant 5.000000e-01 : f32
      %602 = vector.broadcast %cst_250 : f32 to vector<16x128xf32>
      %603 = arith.addf %601, %602 : vector<16x128xf32>
      %604 = arith.mulf %593, %521 : vector<16x128xf32>
      %605 = arith.mulf %585, %595 : vector<16x128xf32>
      %606 = arith.addf %604, %605 : vector<16x128xf32>
      %607 = math.tanh %606 : vector<16x128xf32>
      %608 = arith.mulf %603, %607 : vector<16x128xf32>
      %c16_i32_251 = arith.constant 16 : i32
      %609 = arith.muli %c6_i32, %c16_i32_251 : i32
      %610 = tpu.assume_multiple %609, 16 : i32
      %611 = arith.truncf %608 : vector<16x128xf32> to vector<16x128xbf16>
      %612 = arith.index_cast %610 : i32 to index
      %c0_252 = arith.constant 0 : index
      %613 = vector.load %arg12[%612, %c0_252] : memref<144x128xbf16, #tpu.memory_space<vmem>>, vector<16x128xbf16>
      tpu.vector_store %arg12[%612, %c0_252], %611 {strides = array<i32>} : memref<144x128xbf16, #tpu.memory_space<vmem>>, vector<16x128xbf16>,
      %c7_i32 = arith.constant 7 : i32
      %614 = arith.index_cast %c7_i32 : i32 to index
      %c0_253 = arith.constant 0 : index
      %c0_254 = arith.constant 0 : index
      %615 = vector.load %arg2[%614, %c0_253, %c0_254] : memref<9x16x128xbf16, #tpu.memory_space<vmem>>, vector<1x16x128xbf16>
      %616 = vector.shape_cast %615 : vector<1x16x128xbf16> to vector<16x128xbf16>
      %c0_255 = arith.constant 0 : index
      %c0_256 = arith.constant 0 : index
      %617 = vector.load %arg3[%c0_255, %c0_256] : memref<128x512xbf16, #tpu.memory_space<vmem>>, vector<128x512xbf16>
      %cst_257 = arith.constant dense<0.000000e+00> : vector<16x512xf32>
      %618 = tpu.matmul %616, %617, %cst_257 {dimension_numbers = #tpu.dot_dimension_numbers<[1], [0], [0], [1], [0, 0, 1, 1], [], []>} : vector<16x128xbf16>, vector<128x512xbf16>, vector<16x512xf32> -> vector<16x512xf32>
      %619 = arith.truncf %569 : vector<16x128xf32> to vector<16x128xbf16>
      %c0_258 = arith.constant 0 : index
      %c0_259 = arith.constant 0 : index
      %620 = vector.load %arg4[%c0_258, %c0_259] : memref<128x512xbf16, #tpu.memory_space<vmem>>, vector<128x512xbf16>
      %cst_260 = arith.constant dense<0.000000e+00> : vector<16x512xf32>
      %621 = tpu.matmul %619, %620, %cst_260 {dimension_numbers = #tpu.dot_dimension_numbers<[1], [0], [0], [1], [0, 0, 1, 1], [], []>} : vector<16x128xbf16>, vector<128x512xbf16>, vector<16x512xf32> -> vector<16x512xf32>
      %622 = arith.addf %618, %621 : vector<16x512xf32>
      %623 = arith.addf %622, %13 : vector<16x512xf32>
      %624 = vector.extract_strided_slice %623 {offsets = [0, 0], sizes = [16, 128], strides = [1, 1]} : vector<16x512xf32> to vector<16x128xf32>
      %cst_261 = arith.constant 5.000000e-01 : f32
      %625 = vector.broadcast %cst_261 : f32 to vector<16x128xf32>
      %626 = arith.mulf %625, %624 : vector<16x128xf32>
      %627 = math.tanh %626 : vector<16x128xf32>
      %cst_262 = arith.constant 5.000000e-01 : f32
      %628 = vector.broadcast %cst_262 : f32 to vector<16x128xf32>
      %629 = arith.mulf %628, %627 : vector<16x128xf32>
      %cst_263 = arith.constant 5.000000e-01 : f32
      %630 = vector.broadcast %cst_263 : f32 to vector<16x128xf32>
      %631 = arith.addf %629, %630 : vector<16x128xf32>
      %632 = vector.extract_strided_slice %623 {offsets = [0, 128], sizes = [16, 128], strides = [1, 1]} : vector<16x512xf32> to vector<16x128xf32>
      %cst_264 = arith.constant 5.000000e-01 : f32
      %633 = vector.broadcast %cst_264 : f32 to vector<16x128xf32>
      %634 = arith.mulf %633, %632 : vector<16x128xf32>
      %635 = math.tanh %634 : vector<16x128xf32>
      %cst_265 = arith.constant 5.000000e-01 : f32
      %636 = vector.broadcast %cst_265 : f32 to vector<16x128xf32>
      %637 = arith.mulf %636, %635 : vector<16x128xf32>
      %cst_266 = arith.constant 5.000000e-01 : f32
      %638 = vector.broadcast %cst_266 : f32 to vector<16x128xf32>
      %639 = arith.addf %637, %638 : vector<16x128xf32>
      %640 = vector.extract_strided_slice %623 {offsets = [0, 256], sizes = [16, 128], strides = [1, 1]} : vector<16x512xf32> to vector<16x128xf32>
      %641 = math.tanh %640 : vector<16x128xf32>
      %642 = vector.extract_strided_slice %623 {offsets = [0, 384], sizes = [16, 128], strides = [1, 1]} : vector<16x512xf32> to vector<16x128xf32>
      %cst_267 = arith.constant 5.000000e-01 : f32
      %643 = vector.broadcast %cst_267 : f32 to vector<16x128xf32>
      %644 = arith.mulf %643, %642 : vector<16x128xf32>
      %645 = math.tanh %644 : vector<16x128xf32>
      %cst_268 = arith.constant 5.000000e-01 : f32
      %646 = vector.broadcast %cst_268 : f32 to vector<16x128xf32>
      %647 = arith.mulf %646, %645 : vector<16x128xf32>
      %cst_269 = arith.constant 5.000000e-01 : f32
      %648 = vector.broadcast %cst_269 : f32 to vector<16x128xf32>
      %649 = arith.addf %647, %648 : vector<16x128xf32>
      %650 = arith.mulf %639, %567 : vector<16x128xf32>
      %651 = arith.mulf %631, %641 : vector<16x128xf32>
      %652 = arith.addf %650, %651 : vector<16x128xf32>
      %653 = math.tanh %652 : vector<16x128xf32>
      %654 = arith.mulf %649, %653 : vector<16x128xf32>
      %655 = arith.truncf %654 : vector<16x128xf32> to vector<16x128xbf16>
      %c0_270 = arith.constant 0 : index
      %c0_271 = arith.constant 0 : index
      %656 = vector.load %arg6[%c0_270, %c0_271] : memref<128x512xbf16, #tpu.memory_space<vmem>>, vector<128x512xbf16>
      %cst_272 = arith.constant dense<0.000000e+00> : vector<16x512xf32>
      %657 = tpu.matmul %655, %656, %cst_272 {dimension_numbers = #tpu.dot_dimension_numbers<[1], [0], [0], [1], [0, 0, 1, 1], [], []>} : vector<16x128xbf16>, vector<128x512xbf16>, vector<16x512xf32> -> vector<16x512xf32>
      %658 = arith.truncf %608 : vector<16x128xf32> to vector<16x128xbf16>
      %c0_273 = arith.constant 0 : index
      %c0_274 = arith.constant 0 : index
      %659 = vector.load %arg7[%c0_273, %c0_274] : memref<128x512xbf16, #tpu.memory_space<vmem>>, vector<128x512xbf16>
      %cst_275 = arith.constant dense<0.000000e+00> : vector<16x512xf32>
      %660 = tpu.matmul %658, %659, %cst_275 {dimension_numbers = #tpu.dot_dimension_numbers<[1], [0], [0], [1], [0, 0, 1, 1], [], []>} : vector<16x128xbf16>, vector<128x512xbf16>, vector<16x512xf32> -> vector<16x512xf32>
      %661 = arith.addf %657, %660 : vector<16x512xf32>
      %662 = arith.addf %661, %16 : vector<16x512xf32>
      %663 = vector.extract_strided_slice %662 {offsets = [0, 0], sizes = [16, 128], strides = [1, 1]} : vector<16x512xf32> to vector<16x128xf32>
      %cst_276 = arith.constant 5.000000e-01 : f32
      %664 = vector.broadcast %cst_276 : f32 to vector<16x128xf32>
      %665 = arith.mulf %664, %663 : vector<16x128xf32>
      %666 = math.tanh %665 : vector<16x128xf32>
      %cst_277 = arith.constant 5.000000e-01 : f32
      %667 = vector.broadcast %cst_277 : f32 to vector<16x128xf32>
      %668 = arith.mulf %667, %666 : vector<16x128xf32>
      %cst_278 = arith.constant 5.000000e-01 : f32
      %669 = vector.broadcast %cst_278 : f32 to vector<16x128xf32>
      %670 = arith.addf %668, %669 : vector<16x128xf32>
      %671 = vector.extract_strided_slice %662 {offsets = [0, 128], sizes = [16, 128], strides = [1, 1]} : vector<16x512xf32> to vector<16x128xf32>
      %cst_279 = arith.constant 5.000000e-01 : f32
      %672 = vector.broadcast %cst_279 : f32 to vector<16x128xf32>
      %673 = arith.mulf %672, %671 : vector<16x128xf32>
      %674 = math.tanh %673 : vector<16x128xf32>
      %cst_280 = arith.constant 5.000000e-01 : f32
      %675 = vector.broadcast %cst_280 : f32 to vector<16x128xf32>
      %676 = arith.mulf %675, %674 : vector<16x128xf32>
      %cst_281 = arith.constant 5.000000e-01 : f32
      %677 = vector.broadcast %cst_281 : f32 to vector<16x128xf32>
      %678 = arith.addf %676, %677 : vector<16x128xf32>
      %679 = vector.extract_strided_slice %662 {offsets = [0, 256], sizes = [16, 128], strides = [1, 1]} : vector<16x512xf32> to vector<16x128xf32>
      %680 = math.tanh %679 : vector<16x128xf32>
      %681 = vector.extract_strided_slice %662 {offsets = [0, 384], sizes = [16, 128], strides = [1, 1]} : vector<16x512xf32> to vector<16x128xf32>
      %cst_282 = arith.constant 5.000000e-01 : f32
      %682 = vector.broadcast %cst_282 : f32 to vector<16x128xf32>
      %683 = arith.mulf %682, %681 : vector<16x128xf32>
      %684 = math.tanh %683 : vector<16x128xf32>
      %cst_283 = arith.constant 5.000000e-01 : f32
      %685 = vector.broadcast %cst_283 : f32 to vector<16x128xf32>
      %686 = arith.mulf %685, %684 : vector<16x128xf32>
      %cst_284 = arith.constant 5.000000e-01 : f32
      %687 = vector.broadcast %cst_284 : f32 to vector<16x128xf32>
      %688 = arith.addf %686, %687 : vector<16x128xf32>
      %689 = arith.mulf %678, %606 : vector<16x128xf32>
      %690 = arith.mulf %670, %680 : vector<16x128xf32>
      %691 = arith.addf %689, %690 : vector<16x128xf32>
      %692 = math.tanh %691 : vector<16x128xf32>
      %693 = arith.mulf %688, %692 : vector<16x128xf32>
      %c16_i32_285 = arith.constant 16 : i32
      %694 = arith.muli %c7_i32, %c16_i32_285 : i32
      %695 = tpu.assume_multiple %694, 16 : i32
      %696 = arith.truncf %693 : vector<16x128xf32> to vector<16x128xbf16>
      %697 = arith.index_cast %695 : i32 to index
      %c0_286 = arith.constant 0 : index
      %698 = vector.load %arg12[%697, %c0_286] : memref<144x128xbf16, #tpu.memory_space<vmem>>, vector<16x128xbf16>
      tpu.vector_store %arg12[%697, %c0_286], %696 {strides = array<i32>} : memref<144x128xbf16, #tpu.memory_space<vmem>>, vector<16x128xbf16>,
      %c8_i32 = arith.constant 8 : i32
      %699 = arith.index_cast %c8_i32 : i32 to index
      %c0_287 = arith.constant 0 : index
      %c0_288 = arith.constant 0 : index
      %700 = vector.load %arg2[%699, %c0_287, %c0_288] : memref<9x16x128xbf16, #tpu.memory_space<vmem>>, vector<1x16x128xbf16>
      %701 = vector.shape_cast %700 : vector<1x16x128xbf16> to vector<16x128xbf16>
      %c0_289 = arith.constant 0 : index
      %c0_290 = arith.constant 0 : index
      %702 = vector.load %arg3[%c0_289, %c0_290] : memref<128x512xbf16, #tpu.memory_space<vmem>>, vector<128x512xbf16>
      %cst_291 = arith.constant dense<0.000000e+00> : vector<16x512xf32>
      %703 = tpu.matmul %701, %702, %cst_291 {dimension_numbers = #tpu.dot_dimension_numbers<[1], [0], [0], [1], [0, 0, 1, 1], [], []>} : vector<16x128xbf16>, vector<128x512xbf16>, vector<16x512xf32> -> vector<16x512xf32>
      %704 = arith.truncf %654 : vector<16x128xf32> to vector<16x128xbf16>
      %c0_292 = arith.constant 0 : index
      %c0_293 = arith.constant 0 : index
      %705 = vector.load %arg4[%c0_292, %c0_293] : memref<128x512xbf16, #tpu.memory_space<vmem>>, vector<128x512xbf16>
      %cst_294 = arith.constant dense<0.000000e+00> : vector<16x512xf32>
      %706 = tpu.matmul %704, %705, %cst_294 {dimension_numbers = #tpu.dot_dimension_numbers<[1], [0], [0], [1], [0, 0, 1, 1], [], []>} : vector<16x128xbf16>, vector<128x512xbf16>, vector<16x512xf32> -> vector<16x512xf32>
      %707 = arith.addf %703, %706 : vector<16x512xf32>
      %708 = arith.addf %707, %13 : vector<16x512xf32>
      %709 = vector.extract_strided_slice %708 {offsets = [0, 0], sizes = [16, 128], strides = [1, 1]} : vector<16x512xf32> to vector<16x128xf32>
      %cst_295 = arith.constant 5.000000e-01 : f32
      %710 = vector.broadcast %cst_295 : f32 to vector<16x128xf32>
      %711 = arith.mulf %710, %709 : vector<16x128xf32>
      %712 = math.tanh %711 : vector<16x128xf32>
      %cst_296 = arith.constant 5.000000e-01 : f32
      %713 = vector.broadcast %cst_296 : f32 to vector<16x128xf32>
      %714 = arith.mulf %713, %712 : vector<16x128xf32>
      %cst_297 = arith.constant 5.000000e-01 : f32
      %715 = vector.broadcast %cst_297 : f32 to vector<16x128xf32>
      %716 = arith.addf %714, %715 : vector<16x128xf32>
      %717 = vector.extract_strided_slice %708 {offsets = [0, 128], sizes = [16, 128], strides = [1, 1]} : vector<16x512xf32> to vector<16x128xf32>
      %cst_298 = arith.constant 5.000000e-01 : f32
      %718 = vector.broadcast %cst_298 : f32 to vector<16x128xf32>
      %719 = arith.mulf %718, %717 : vector<16x128xf32>
      %720 = math.tanh %719 : vector<16x128xf32>
      %cst_299 = arith.constant 5.000000e-01 : f32
      %721 = vector.broadcast %cst_299 : f32 to vector<16x128xf32>
      %722 = arith.mulf %721, %720 : vector<16x128xf32>
      %cst_300 = arith.constant 5.000000e-01 : f32
      %723 = vector.broadcast %cst_300 : f32 to vector<16x128xf32>
      %724 = arith.addf %722, %723 : vector<16x128xf32>
      %725 = vector.extract_strided_slice %708 {offsets = [0, 256], sizes = [16, 128], strides = [1, 1]} : vector<16x512xf32> to vector<16x128xf32>
      %726 = math.tanh %725 : vector<16x128xf32>
      %727 = vector.extract_strided_slice %708 {offsets = [0, 384], sizes = [16, 128], strides = [1, 1]} : vector<16x512xf32> to vector<16x128xf32>
      %cst_301 = arith.constant 5.000000e-01 : f32
      %728 = vector.broadcast %cst_301 : f32 to vector<16x128xf32>
      %729 = arith.mulf %728, %727 : vector<16x128xf32>
      %730 = math.tanh %729 : vector<16x128xf32>
      %cst_302 = arith.constant 5.000000e-01 : f32
      %731 = vector.broadcast %cst_302 : f32 to vector<16x128xf32>
      %732 = arith.mulf %731, %730 : vector<16x128xf32>
      %cst_303 = arith.constant 5.000000e-01 : f32
      %733 = vector.broadcast %cst_303 : f32 to vector<16x128xf32>
      %734 = arith.addf %732, %733 : vector<16x128xf32>
      %735 = arith.mulf %724, %652 : vector<16x128xf32>
      %736 = arith.mulf %716, %726 : vector<16x128xf32>
      %737 = arith.addf %735, %736 : vector<16x128xf32>
      %738 = math.tanh %737 : vector<16x128xf32>
      %739 = arith.mulf %734, %738 : vector<16x128xf32>
      %740 = arith.truncf %739 : vector<16x128xf32> to vector<16x128xbf16>
      %c0_304 = arith.constant 0 : index
      %c0_305 = arith.constant 0 : index
      %741 = vector.load %arg6[%c0_304, %c0_305] : memref<128x512xbf16, #tpu.memory_space<vmem>>, vector<128x512xbf16>
      %cst_306 = arith.constant dense<0.000000e+00> : vector<16x512xf32>
      %742 = tpu.matmul %740, %741, %cst_306 {dimension_numbers = #tpu.dot_dimension_numbers<[1], [0], [0], [1], [0, 0, 1, 1], [], []>} : vector<16x128xbf16>, vector<128x512xbf16>, vector<16x512xf32> -> vector<16x512xf32>
      %743 = arith.truncf %693 : vector<16x128xf32> to vector<16x128xbf16>
      %c0_307 = arith.constant 0 : index
      %c0_308 = arith.constant 0 : index
      %744 = vector.load %arg7[%c0_307, %c0_308] : memref<128x512xbf16, #tpu.memory_space<vmem>>, vector<128x512xbf16>
      %cst_309 = arith.constant dense<0.000000e+00> : vector<16x512xf32>
      %745 = tpu.matmul %743, %744, %cst_309 {dimension_numbers = #tpu.dot_dimension_numbers<[1], [0], [0], [1], [0, 0, 1, 1], [], []>} : vector<16x128xbf16>, vector<128x512xbf16>, vector<16x512xf32> -> vector<16x512xf32>
      %746 = arith.addf %742, %745 : vector<16x512xf32>
      %747 = arith.addf %746, %16 : vector<16x512xf32>
      %748 = vector.extract_strided_slice %747 {offsets = [0, 0], sizes = [16, 128], strides = [1, 1]} : vector<16x512xf32> to vector<16x128xf32>
      %cst_310 = arith.constant 5.000000e-01 : f32
      %749 = vector.broadcast %cst_310 : f32 to vector<16x128xf32>
      %750 = arith.mulf %749, %748 : vector<16x128xf32>
      %751 = math.tanh %750 : vector<16x128xf32>
      %cst_311 = arith.constant 5.000000e-01 : f32
      %752 = vector.broadcast %cst_311 : f32 to vector<16x128xf32>
      %753 = arith.mulf %752, %751 : vector<16x128xf32>
      %cst_312 = arith.constant 5.000000e-01 : f32
      %754 = vector.broadcast %cst_312 : f32 to vector<16x128xf32>
      %755 = arith.addf %753, %754 : vector<16x128xf32>
      %756 = vector.extract_strided_slice %747 {offsets = [0, 128], sizes = [16, 128], strides = [1, 1]} : vector<16x512xf32> to vector<16x128xf32>
      %cst_313 = arith.constant 5.000000e-01 : f32
      %757 = vector.broadcast %cst_313 : f32 to vector<16x128xf32>
      %758 = arith.mulf %757, %756 : vector<16x128xf32>
      %759 = math.tanh %758 : vector<16x128xf32>
      %cst_314 = arith.constant 5.000000e-01 : f32
      %760 = vector.broadcast %cst_314 : f32 to vector<16x128xf32>
      %761 = arith.mulf %760, %759 : vector<16x128xf32>
      %cst_315 = arith.constant 5.000000e-01 : f32
      %762 = vector.broadcast %cst_315 : f32 to vector<16x128xf32>
      %763 = arith.addf %761, %762 : vector<16x128xf32>
      %764 = vector.extract_strided_slice %747 {offsets = [0, 256], sizes = [16, 128], strides = [1, 1]} : vector<16x512xf32> to vector<16x128xf32>
      %765 = math.tanh %764 : vector<16x128xf32>
      %766 = vector.extract_strided_slice %747 {offsets = [0, 384], sizes = [16, 128], strides = [1, 1]} : vector<16x512xf32> to vector<16x128xf32>
      %cst_316 = arith.constant 5.000000e-01 : f32
      %767 = vector.broadcast %cst_316 : f32 to vector<16x128xf32>
      %768 = arith.mulf %767, %766 : vector<16x128xf32>
      %769 = math.tanh %768 : vector<16x128xf32>
      %cst_317 = arith.constant 5.000000e-01 : f32
      %770 = vector.broadcast %cst_317 : f32 to vector<16x128xf32>
      %771 = arith.mulf %770, %769 : vector<16x128xf32>
      %cst_318 = arith.constant 5.000000e-01 : f32
      %772 = vector.broadcast %cst_318 : f32 to vector<16x128xf32>
      %773 = arith.addf %771, %772 : vector<16x128xf32>
      %774 = arith.mulf %763, %691 : vector<16x128xf32>
      %775 = arith.mulf %755, %765 : vector<16x128xf32>
      %776 = arith.addf %774, %775 : vector<16x128xf32>
      %777 = math.tanh %776 : vector<16x128xf32>
      %778 = arith.mulf %773, %777 : vector<16x128xf32>
      %c16_i32_319 = arith.constant 16 : i32
      %779 = arith.muli %c8_i32, %c16_i32_319 : i32
      %780 = tpu.assume_multiple %779, 16 : i32
      %781 = arith.truncf %778 : vector<16x128xf32> to vector<16x128xbf16>
      %782 = arith.index_cast %780 : i32 to index
      %c0_320 = arith.constant 0 : index
      %783 = vector.load %arg12[%782, %c0_320] : memref<144x128xbf16, #tpu.memory_space<vmem>>, vector<16x128xbf16>
      tpu.vector_store %arg12[%782, %c0_320], %781 {strides = array<i32>} : memref<144x128xbf16, #tpu.memory_space<vmem>>, vector<16x128xbf16>,
      %c9_i32 = arith.constant 9 : i32
    } else {
    }
    %c0 = arith.constant 0 : index
    %c0_1 = arith.constant 0 : index
    %3 = vector.load %arg12[%c0, %c0_1] : memref<144x128xbf16, #tpu.memory_space<vmem>>, vector<144x128xbf16>
    %c0_2 = arith.constant 0 : index
    %c0_3 = arith.constant 0 : index
    %4 = vector.load %arg9[%c0_2, %c0_3] : memref<128x128xbf16, #tpu.memory_space<vmem>>, vector<128x128xbf16>
    %cst = arith.constant dense<0.000000e+00> : vector<144x128xf32>
    %5 = tpu.matmul %3, %4, %cst {dimension_numbers = #tpu.dot_dimension_numbers<[1], [0], [0], [1], [0, 0, 1, 1], [], []>} : vector<144x128xbf16>, vector<128x128xbf16>, vector<144x128xf32> -> vector<144x128xf32>
    %c0_4 = arith.constant 0 : index
    %c0_5 = arith.constant 0 : index
    %6 = vector.load %arg10[%c0_4, %c0_5] : memref<1x128xf32, #tpu.memory_space<vmem>>, vector<1x128xf32>
    %7 = vector.broadcast %6 : vector<1x128xf32> to vector<144x128xf32>
    %8 = arith.addf %5, %7 : vector<144x128xf32>
    %9 = vector.shape_cast %8 : vector<144x128xf32> to vector<9x16x128xf32>
    %c0_6 = arith.constant 0 : index
    %c0_7 = arith.constant 0 : index
    %c0_8 = arith.constant 0 : index
    %10 = vector.load %arg11[%c0_6, %c0_7, %c0_8] : memref<9x16x128xf32, #tpu.memory_space<vmem>>, vector<9x16x128xf32>
    tpu.vector_store %arg11[%c0_6, %c0_7, %c0_8], %9 {strides = array<i32>} : memref<9x16x128xf32, #tpu.memory_space<vmem>>, vector<9x16x128xf32>,
    return
  }
  func.func @transform_0(%arg0: i32, %arg1: i32) -> (i32, i32, i32) {
    %c0_i32 = arith.constant 0 : i32
    %c0_i32_0 = arith.constant 0 : i32
    %c0_i32_1 = arith.constant 0 : i32
    return %c0_i32, %arg0, %c0_i32_0 : i32, i32, i32
  }
  func.func @transform_1(%arg0: i32, %arg1: i32) -> (i32, i32) {
    %c0_i32 = arith.constant 0 : i32
    %c0_i32_0 = arith.constant 0 : i32
    %c0_i32_1 = arith.constant 0 : i32
    return %c0_i32, %c0_i32_0 : i32, i32
  }
  func.func @transform_2(%arg0: i32, %arg1: i32) -> (i32, i32) {
    %c0_i32 = arith.constant 0 : i32
    %c0_i32_0 = arith.constant 0 : i32
    %c0_i32_1 = arith.constant 0 : i32
    return %c0_i32, %c0_i32_0 : i32, i32
  }
  func.func @transform_3(%arg0: i32, %arg1: i32) -> (i32, i32) {
    %c0_i32 = arith.constant 0 : i32
    %c0_i32_0 = arith.constant 0 : i32
    %c0_i32_1 = arith.constant 0 : i32
    return %c0_i32, %c0_i32_0 : i32, i32
  }
  func.func @transform_4(%arg0: i32, %arg1: i32) -> (i32, i32) {
    %c0_i32 = arith.constant 0 : i32
    %c0_i32_0 = arith.constant 0 : i32
    %c0_i32_1 = arith.constant 0 : i32
    return %c0_i32, %c0_i32_0 : i32, i32
  }
  func.func @transform_5(%arg0: i32, %arg1: i32) -> (i32, i32) {
    %c0_i32 = arith.constant 0 : i32
    %c0_i32_0 = arith.constant 0 : i32
    %c0_i32_1 = arith.constant 0 : i32
    return %c0_i32, %c0_i32_0 : i32, i32
  }
  func.func @transform_6(%arg0: i32, %arg1: i32) -> (i32, i32) {
    %c0_i32 = arith.constant 0 : i32
    %c0_i32_0 = arith.constant 0 : i32
    %c0_i32_1 = arith.constant 0 : i32
    return %c0_i32, %c0_i32_0 : i32, i32
  }
  func.func @transform_7(%arg0: i32, %arg1: i32) -> (i32, i32) {
    %c0_i32 = arith.constant 0 : i32
    %c0_i32_0 = arith.constant 0 : i32
    return %c0_i32, %arg1 : i32, i32
  }
  func.func @transform_8(%arg0: i32, %arg1: i32) -> (i32, i32) {
    %c0_i32 = arith.constant 0 : i32
    %c0_i32_0 = arith.constant 0 : i32
    return %c0_i32, %arg1 : i32, i32
  }
  func.func @transform_9(%arg0: i32, %arg1: i32) -> (i32, i32, i32) {
    %c0_i32 = arith.constant 0 : i32
    %c0_i32_0 = arith.constant 0 : i32
    return %c0_i32, %arg0, %arg1 : i32, i32, i32
  }
}

</mosaic_0001>

<llo_original>
// kernel: tpu_custom_call.1
$region0: #{tpu_custom_call.1}
  #allocation0 [shape = 'u32[]', space=smem, size = 0x4, offset = 0x4, fixed_abs, tag = 'smem constant byte address 0x4 - core index']
  #allocation1 [shape = 'u32[72,128]{1,0:T(1,128)}', space=vmem, size = 0x9000, scoped, tag = 'internal scratch']
  #allocation2 [shape = 'bf16[144,128]{1,0:T(8,128)(2,1)}', space=vmem, size = 0x9000, scoped, tag = 'scratch operand']
  %s0 = inlined_call_operand.hbm [shape: bf16[9,16,128], index: 0, kind: input, shape index: {}]
  %s1 = inlined_call_operand.hbm [shape: bf16[128,512], index: 1, kind: input, shape index: {}]
  %s2 = inlined_call_operand.hbm [shape: bf16[128,512], index: 2, kind: input, shape index: {}]
  %s3 = inlined_call_operand.hbm [shape: f32[1,512], index: 3, kind: input, shape index: {}]
  %s4 = inlined_call_operand.hbm [shape: bf16[128,512], index: 4, kind: input, shape index: {}]
  %s5 = inlined_call_operand.hbm [shape: bf16[128,512], index: 5, kind: input, shape index: {}]
  %s6 = inlined_call_operand.vmem [shape: f32[1,512], index: 6, kind: input, shape index: {}]
  %s7 = inlined_call_operand.hbm [shape: bf16[128,128], index: 7, kind: input, shape index: {}]
  %s8 = inlined_call_operand.vmem [shape: f32[1,128], index: 8, kind: input, shape index: {}]
  %s9 = inlined_call_operand.hbm [shape: f32[9,16,128], index: 9, kind: output, shape index: {}]
  %s10 = sld [smem:[#allocation0]]
  $region78: #{tpu_custom_call.1} parent=0
    _
  %s12 = ssub.s32 1, %s10
  %s13 = scalar_select 0, %s12, %s10
  $region1: #{tpu_custom_call.1} parent=0
    #allocation3 [shape = 'u8[36864]{0}', space=vmem, size = 0x9000, scoped, tag = 'input window, operand 0, single buffered']
    #allocation4 [shape = 's32[1]{0}', space=sflag, size = 0x4, scoped, tag = 'scoped memory for tpu_custom_call.1']
    #allocation5 [shape = 's32[1]{0}', space=sflag, size = 0x4, scoped, tag = 'scoped memory for tpu_custom_call.1']
    #allocation6 [shape = 'u8[131072]{0}', space=vmem, size = 0x20000, scoped, tag = 'input window, operand 1, single buffered']
    #allocation7 [shape = 's32[1]{0}', space=sflag, size = 0x4, scoped, tag = 'scoped memory for tpu_custom_call.1']
    #allocation8 [shape = 'u8[131072]{0}', space=vmem, size = 0x20000, scoped, tag = 'input window, operand 2, single buffered']
    #allocation9 [shape = 'u8[2048]{0}', space=vmem, size = 0x800, scoped, tag = 'input window, operand 3, single buffered']
    #allocation10 [shape = 's32[1]{0}', space=sflag, size = 0x4, scoped, tag = 'scoped memory for tpu_custom_call.1']
    #allocation11 [shape = 'u8[131072]{0}', space=vmem, size = 0x20000, scoped, tag = 'input window, operand 4, single buffered']
    #allocation12 [shape = 'u8[131072]{0}', space=vmem, size = 0x20000, scoped, tag = 'input window, operand 5, single buffered']
    #allocation13 [shape = 's32[1]{0}', space=sflag, size = 0x4, scoped, tag = 'scoped memory for tpu_custom_call.1']
    #allocation14 [shape = 'u8[32768]{0}', space=vmem, size = 0x8000, scoped, tag = 'input window, operand 7, single buffered']
    #allocation15 [shape = 'u8[73728]{0}', space=vmem, size = 0x12000, scoped, tag = 'output window, operand 0, single buffered']
    %14 = vsyncpa [#allocation4], 0
    %15 = vsyncpa [#allocation7], 0
    %16 = vsyncpa [#allocation10], 0
    %17 = vsyncpa [#allocation13], 0
    %18 = vsyncpa [#allocation5], 0
    // Predicated region
    $region2: #{tpu_custom_call.1} parent=1 // pred_check
      _
    $region3: #{tpu_custom_call.1} parent=1 // pred_check_branch
      %20 = sbr.rel (0) target = $region5
    $region4: #{tpu_custom_call.1} parent=1 // pred_region
      %22 = vsyncadd [#allocation4], 0
      %s23 = sshll.u32 %s0, 4
      %s24 = int_to_ptr.hbm [resolvable:$true] %s23
      %s25 = sshll.u32 [#allocation3], 4
      %s26 = int_to_ptr.vmem [resolvable:$true] %s25
      %31 = dma.hbm_to_vmem [thread:$0]  %s24, 1152, %s26, [#allocation4], 64, 64, 4
    $region5: #{tpu_custom_call.1} parent=1 // pred_fallthru
      _
    // Predicated region
    $region6: #{tpu_custom_call.1} parent=1 // pred_check
      _
    $region7: #{tpu_custom_call.1} parent=1 // pred_check_branch
      %33 = sbr.rel (0) target = $region9
    $region8: #{tpu_custom_call.1} parent=1 // pred_region
      %35 = vsyncadd [#allocation7], 0
      %s36 = sshll.u32 %s1, 4
      %s37 = int_to_ptr.hbm [resolvable:$true] %s36
      %s38 = sshll.u32 [#allocation6], 4
      %s39 = int_to_ptr.vmem [resolvable:$true] %s38
      %44 = dma.hbm_to_vmem [thread:$0]  %s37, 4096, %s39, [#allocation7], 256, 256, 16
    $region9: #{tpu_custom_call.1} parent=1 // pred_fallthru
      _
    // Predicated region
    $region10: #{tpu_custom_call.1} parent=1 // pred_check
      _
    $region11: #{tpu_custom_call.1} parent=1 // pred_check_branch
      %46 = sbr.rel (0) target = $region13
    $region12: #{tpu_custom_call.1} parent=1 // pred_region
      %48 = vsyncadd [#allocation7], 0
      %s49 = sshll.u32 %s2, 4
      %s50 = int_to_ptr.hbm [resolvable:$true] %s49
      %s51 = sshll.u32 [#allocation8], 4
      %s52 = int_to_ptr.vmem [resolvable:$true] %s51
      %57 = dma.hbm_to_vmem [thread:$0]  %s50, 4096, %s52, [#allocation7], 256, 256, 16
    $region13: #{tpu_custom_call.1} parent=1 // pred_fallthru
      _
    // Predicated region
    $region14: #{tpu_custom_call.1} parent=1 // pred_check
      _
    $region15: #{tpu_custom_call.1} parent=1 // pred_check_branch
      %59 = sbr.rel (0) target = $region17
    $region16: #{tpu_custom_call.1} parent=1 // pred_region
      %61 = vsyncadd [#allocation10], 0
      %s63 = sshll.u32 %s3, 4
      %s64 = int_to_ptr.hbm [resolvable:$true] %s63
      %s65 = sshll.u32 [#allocation9], 4
      %s66 = int_to_ptr.vmem [resolvable:$true] %s65
      %68 = dma.hbm_to_vmem [thread:$0]  %s64, 64, %s66, [#allocation10]
    $region17: #{tpu_custom_call.1} parent=1 // pred_fallthru
      _
    // Predicated region
    $region18: #{tpu_custom_call.1} parent=1 // pred_check
      _
    $region19: #{tpu_custom_call.1} parent=1 // pred_check_branch
      %70 = sbr.rel (0) target = $region21
    $region20: #{tpu_custom_call.1} parent=1 // pred_region
      %72 = vsyncadd [#allocation10], 0
      %s73 = sshll.u32 %s4, 4
      %s74 = int_to_ptr.hbm [resolvable:$true] %s73
      %s75 = sshll.u32 [#allocation11], 4
      %s76 = int_to_ptr.vmem [resolvable:$true] %s75
      %81 = dma.hbm_to_vmem [thread:$0]  %s74, 4096, %s76, [#allocation10], 256, 256, 16
    $region21: #{tpu_custom_call.1} parent=1 // pred_fallthru
      _
    // Predicated region
    $region22: #{tpu_custom_call.1} parent=1 // pred_check
      _
    $region23: #{tpu_custom_call.1} parent=1 // pred_check_branch
      %83 = sbr.rel (0) target = $region25
    $region24: #{tpu_custom_call.1} parent=1 // pred_region
      %85 = vsyncadd [#allocation13], 0
      %s86 = sshll.u32 %s5, 4
      %s87 = int_to_ptr.hbm [resolvable:$true] %s86
      %s88 = sshll.u32 [#allocation12], 4
      %s89 = int_to_ptr.vmem [resolvable:$true] %s88
      %94 = dma.hbm_to_vmem [thread:$0]  %s87, 4096, %s89, [#allocation13], 256, 256, 16
    $region25: #{tpu_custom_call.1} parent=1 // pred_fallthru
      _
    // Predicated region
    $region26: #{tpu_custom_call.1} parent=1 // pred_check
      _
    $region27: #{tpu_custom_call.1} parent=1 // pred_check_branch
      %96 = sbr.rel (0) target = $region29
    $region28: #{tpu_custom_call.1} parent=1 // pred_region
      _
    $region29: #{tpu_custom_call.1} parent=1 // pred_fallthru
      _
    // Predicated region
    $region30: #{tpu_custom_call.1} parent=1 // pred_check
      _
    $region31: #{tpu_custom_call.1} parent=1 // pred_check_branch
      %98 = sbr.rel (0) target = $region33
    $region32: #{tpu_custom_call.1} parent=1 // pred_region
      %100 = vsyncadd [#allocation13], 0
      %s101 = sshll.u32 %s7, 4
      %s102 = int_to_ptr.hbm [resolvable:$true] %s101
      %s103 = sshll.u32 [#allocation14], 4
      %s104 = int_to_ptr.vmem [resolvable:$true] %s103
      %109 = dma.hbm_to_vmem [thread:$0]  %s102, 1024, %s104, [#allocation13], 64, 64, 4
    $region33: #{tpu_custom_call.1} parent=1 // pred_fallthru
      _
    // Predicated region
    $region34: #{tpu_custom_call.1} parent=1 // pred_check
      _
    $region35: #{tpu_custom_call.1} parent=1 // pred_check_branch
      %111 = sbr.rel (0) target = $region37
    $region36: #{tpu_custom_call.1} parent=1 // pred_region
      _
    $region37: #{tpu_custom_call.1} parent=1 // pred_fallthru
      _
    // Predicated region
    $region38: #{tpu_custom_call.1} parent=1 // pred_check
      _
    $region39: #{tpu_custom_call.1} parent=1 // pred_check_branch
      %113 = sbr.rel (0) target = $region41
    $region40: #{tpu_custom_call.1} parent=1 // pred_region
      %115 = dma.done [#allocation4], 1152
    $region41: #{tpu_custom_call.1} parent=1 // pred_fallthru
      _
    // Predicated region
    $region42: #{tpu_custom_call.1} parent=1 // pred_check
      _
    $region43: #{tpu_custom_call.1} parent=1 // pred_check_branch
      %117 = sbr.rel (0) target = $region45
    $region44: #{tpu_custom_call.1} parent=1 // pred_region
      %119 = dma.done [#allocation7], 4096
    $region45: #{tpu_custom_call.1} parent=1 // pred_fallthru
      _
    // Predicated region
    $region46: #{tpu_custom_call.1} parent=1 // pred_check
      _
    $region47: #{tpu_custom_call.1} parent=1 // pred_check_branch
      %121 = sbr.rel (0) target = $region49
    $region48: #{tpu_custom_call.1} parent=1 // pred_region
      %123 = dma.done [#allocation7], 4096
    $region49: #{tpu_custom_call.1} parent=1 // pred_fallthru
      _
    // Predicated region
    $region50: #{tpu_custom_call.1} parent=1 // pred_check
      _
    $region51: #{tpu_custom_call.1} parent=1 // pred_check_branch
      %125 = sbr.rel (0) target = $region53
    $region52: #{tpu_custom_call.1} parent=1 // pred_region
      %127 = dma.done [#allocation10], 64
    $region53: #{tpu_custom_call.1} parent=1 // pred_fallthru
      _
    // Predicated region
    $region54: #{tpu_custom_call.1} parent=1 // pred_check
      _
    $region55: #{tpu_custom_call.1} parent=1 // pred_check_branch
      %129 = sbr.rel (0) target = $region57
    $region56: #{tpu_custom_call.1} parent=1 // pred_region
      %131 = dma.done [#allocation10], 4096
    $region57: #{tpu_custom_call.1} parent=1 // pred_fallthru
      _
    // Predicated region
    $region58: #{tpu_custom_call.1} parent=1 // pred_check
      _
    $region59: #{tpu_custom_call.1} parent=1 // pred_check_branch
      %133 = sbr.rel (0) target = $region61
    $region60: #{tpu_custom_call.1} parent=1 // pred_region
      %135 = dma.done [#allocation13], 4096
    $region61: #{tpu_custom_call.1} parent=1 // pred_fallthru
      _
    // Predicated region
    $region62: #{tpu_custom_call.1} parent=1 // pred_check
      _
    $region63: #{tpu_custom_call.1} parent=1 // pred_check_branch
      %137 = sbr.rel (0) target = $region65
    $region64: #{tpu_custom_call.1} parent=1 // pred_region
      %139 = dma.done [#allocation13], 1024
    $region65: #{tpu_custom_call.1} parent=1 // pred_fallthru
      _
    %p141 = scmp.eq.s32.totalorder 0, 0
    // Predicated region
    $region66: #{tpu_custom_call.1} parent=1 // pred_check
      %p142 = pneg %p141
    $region67: #{tpu_custom_call.1} parent=1 // pred_check_branch
      %144 = sbr.rel (%p142) target = $region69
    $region68: #{tpu_custom_call.1} parent=1 // pred_region
      %v145 = vld [vmem:[#allocation9] sm:$0xf]
      %v147 = vperm.slane %v145, 0
      %v148 = vperm.slane %v145, 1
      %v149 = vperm.slane %v145, 2
      %v150 = vperm.slane %v145, 3
      %v155 = vld [vmem:[%s6] sm:$0xf]
      %v157 = vperm.slane %v155, 0
      %v158 = vperm.slane %v155, 1
      %v159 = vperm.slane %v155, 2
      %v160 = vperm.slane %v155, 3
      %v165 = vld [vmem:[#allocation3] sm:$0xf]
      %v166 = vld [vmem:[#allocation3 + $0x4] sm:$0xf]
      %v167 = vld [vmem:[#allocation6] sm:$0xff]
      %v168 = vld [vmem:[#allocation6 + $0x8] sm:$0xff]
      %v169 = vld [vmem:[#allocation6 + $0x10] sm:$0xff]
      %v170 = vld [vmem:[#allocation6 + $0x18] sm:$0xff]
      %v171 = vld [vmem:[#allocation6 + $0x20] sm:$0xff]
      %v172 = vld [vmem:[#allocation6 + $0x28] sm:$0xff]
      %v173 = vld [vmem:[#allocation6 + $0x30] sm:$0xff]
      %v174 = vld [vmem:[#allocation6 + $0x38] sm:$0xff]
      %v175 = vld [vmem:[#allocation6 + $0x40] sm:$0xff]
      %v176 = vld [vmem:[#allocation6 + $0x48] sm:$0xff]
      %v177 = vld [vmem:[#allocation6 + $0x50] sm:$0xff]
      %v178 = vld [vmem:[#allocation6 + $0x58] sm:$0xff]
      %v179 = vld [vmem:[#allocation6 + $0x60] sm:$0xff]
      %v180 = vld [vmem:[#allocation6 + $0x68] sm:$0xff]
      %v181 = vld [vmem:[#allocation6 + $0x70] sm:$0xff]
      %v182 = vld [vmem:[#allocation6 + $0x78] sm:$0xff]
      %v183 = vld [vmem:[#allocation6 + $0x80] sm:$0xff]
      %v184 = vld [vmem:[#allocation6 + $0x88] sm:$0xff]
      %v185 = vld [vmem:[#allocation6 + $0x90] sm:$0xff]
      %v186 = vld [vmem:[#allocation6 + $0x98] sm:$0xff]
      %v187 = vld [vmem:[#allocation6 + $0xa0] sm:$0xff]
      %v188 = vld [vmem:[#allocation6 + $0xa8] sm:$0xff]
      %v189 = vld [vmem:[#allocation6 + $0xb0] sm:$0xff]
      %v190 = vld [vmem:[#allocation6 + $0xb8] sm:$0xff]
      %v191 = vld [vmem:[#allocation6 + $0xc0] sm:$0xff]
      %v192 = vld [vmem:[#allocation6 + $0xc8] sm:$0xff]
      %v193 = vld [vmem:[#allocation6 + $0xd0] sm:$0xff]
      %v194 = vld [vmem:[#allocation6 + $0xd8] sm:$0xff]
      %v195 = vld [vmem:[#allocation6 + $0xe0] sm:$0xff]
      %v196 = vld [vmem:[#allocation6 + $0xe8] sm:$0xff]
      %v197 = vld [vmem:[#allocation6 + $0xf0] sm:$0xff]
      %v198 = vld [vmem:[#allocation6 + $0xf8] sm:$0xff]
      %v199 = vld [vmem:[#allocation8] sm:$0xff]
      %v200 = vld [vmem:[#allocation8 + $0x8] sm:$0xff]
      %v201 = vld [vmem:[#allocation8 + $0x10] sm:$0xff]
      %v202 = vld [vmem:[#allocation8 + $0x18] sm:$0xff]
      %v203 = vld [vmem:[#allocation8 + $0x20] sm:$0xff]
      %v204 = vld [vmem:[#allocation8 + $0x28] sm:$0xff]
      %v205 = vld [vmem:[#allocation8 + $0x30] sm:$0xff]
      %v206 = vld [vmem:[#allocation8 + $0x38] sm:$0xff]
      %v207 = vld [vmem:[#allocation8 + $0x40] sm:$0xff]
      %v208 = vld [vmem:[#allocation8 + $0x48] sm:$0xff]
      %v209 = vld [vmem:[#allocation8 + $0x50] sm:$0xff]
      %v210 = vld [vmem:[#allocation8 + $0x58] sm:$0xff]
      %v211 = vld [vmem:[#allocation8 + $0x60] sm:$0xff]
      %v212 = vld [vmem:[#allocation8 + $0x68] sm:$0xff]
      %v213 = vld [vmem:[#allocation8 + $0x70] sm:$0xff]
      %v214 = vld [vmem:[#allocation8 + $0x78] sm:$0xff]
      %v215 = vld [vmem:[#allocation8 + $0x80] sm:$0xff]
      %v216 = vld [vmem:[#allocation8 + $0x88] sm:$0xff]
      %v217 = vld [vmem:[#allocation8 + $0x90] sm:$0xff]
      %v218 = vld [vmem:[#allocation8 + $0x98] sm:$0xff]
      %v219 = vld [vmem:[#allocation8 + $0xa0] sm:$0xff]
      %v220 = vld [vmem:[#allocation8 + $0xa8] sm:$0xff]
      %v221 = vld [vmem:[#allocation8 + $0xb0] sm:$0xff]
      %v222 = vld [vmem:[#allocation8 + $0xb8] sm:$0xff]
      %v223 = vld [vmem:[#allocation8 + $0xc0] sm:$0xff]
      %v224 = vld [vmem:[#allocation8 + $0xc8] sm:$0xff]
      %v225 = vld [vmem:[#allocation8 + $0xd0] sm:$0xff]
      %v226 = vld [vmem:[#allocation8 + $0xd8] sm:$0xff]
      %v227 = vld [vmem:[#allocation8 + $0xe0] sm:$0xff]
      %v228 = vld [vmem:[#allocation8 + $0xe8] sm:$0xff]
      %v229 = vld [vmem:[#allocation8 + $0xf0] sm:$0xff]
      %v230 = vld [vmem:[#allocation8 + $0xf8] sm:$0xff]
      %v263 = vunpack.c.l.b16 %v199
      %v264 = vunpack.c.h.b16 %v199
      %v265 = vunpack.c.l.b16 %v200
      %v266 = vunpack.c.h.b16 %v200
      %v267 = vunpack.c.l.b16 %v201
      %v268 = vunpack.c.h.b16 %v201
      %v269 = vunpack.c.l.b16 %v202
      %v270 = vunpack.c.h.b16 %v202
      %v271 = vunpack.c.l.b16 %v203
      %v272 = vunpack.c.h.b16 %v203
      %v273 = vunpack.c.l.b16 %v204
      %v274 = vunpack.c.h.b16 %v204
      %v275 = vunpack.c.l.b16 %v205
      %v276 = vunpack.c.h.b16 %v205
      %v277 = vunpack.c.l.b16 %v206
      %v278 = vunpack.c.h.b16 %v206
      %v279 = vunpack.c.l.b16 %v207
      %v280 = vunpack.c.h.b16 %v207
      %v281 = vunpack.c.l.b16 %v208
      %v282 = vunpack.c.h.b16 %v208
      %v283 = vunpack.c.l.b16 %v209
      %v284 = vunpack.c.h.b16 %v209
      %v285 = vunpack.c.l.b16 %v210
      %v286 = vunpack.c.h.b16 %v210
      %v287 = vunpack.c.l.b16 %v211
      %v288 = vunpack.c.h.b16 %v211
      %v289 = vunpack.c.l.b16 %v212
      %v290 = vunpack.c.h.b16 %v212
      %v291 = vunpack.c.l.b16 %v213
      %v292 = vunpack.c.h.b16 %v213
      %v293 = vunpack.c.l.b16 %v214
      %v294 = vunpack.c.h.b16 %v214
      %v295 = vunpack.c.l.b16 %v215
      %v296 = vunpack.c.h.b16 %v215
      %v297 = vunpack.c.l.b16 %v216
      %v298 = vunpack.c.h.b16 %v216
      %v299 = vunpack.c.l.b16 %v217
      %v300 = vunpack.c.h.b16 %v217
      %v301 = vunpack.c.l.b16 %v218
      %v302 = vunpack.c.h.b16 %v218
      %v303 = vunpack.c.l.b16 %v219
      %v304 = vunpack.c.h.b16 %v219
      %v305 = vunpack.c.l.b16 %v220
      %v306 = vunpack.c.h.b16 %v220
      %v307 = vunpack.c.l.b16 %v221
      %v308 = vunpack.c.h.b16 %v221
      %v309 = vunpack.c.l.b16 %v222
      %v310 = vunpack.c.h.b16 %v222
      %v311 = vunpack.c.l.b16 %v223
      %v312 = vunpack.c.h.b16 %v223
      %v313 = vunpack.c.l.b16 %v224
      %v314 = vunpack.c.h.b16 %v224
      %v315 = vunpack.c.l.b16 %v225
      %v316 = vunpack.c.h.b16 %v225
      %v317 = vunpack.c.l.b16 %v226
      %v318 = vunpack.c.h.b16 %v226
      %v319 = vunpack.c.l.b16 %v227
      %v320 = vunpack.c.h.b16 %v227
      %v321 = vunpack.c.l.b16 %v228
      %v322 = vunpack.c.h.b16 %v228
      %v323 = vunpack.c.l.b16 %v229
      %v324 = vunpack.c.h.b16 %v229
      %v325 = vunpack.c.l.b16 %v230
      %v326 = vunpack.c.h.b16 %v230
      %v327 = vpack.c.b16 %v267, %v263
      %v328 = vpack.c.b16 %v268, %v264
      %v329 = vpack.c.b16 %v269, %v265
      %v330 = vpack.c.b16 %v270, %v266
      %v331 = vpack.c.b16 %v275, %v271
      %v332 = vpack.c.b16 %v276, %v272
      %v333 = vpack.c.b16 %v277, %v273
      %v334 = vpack.c.b16 %v278, %v274
      %v335 = vpack.c.b16 %v283, %v279
      %v336 = vpack.c.b16 %v284, %v280
      %v337 = vpack.c.b16 %v285, %v281
      %v338 = vpack.c.b16 %v286, %v282
      %v339 = vpack.c.b16 %v291, %v287
      %v340 = vpack.c.b16 %v292, %v288
      %v341 = vpack.c.b16 %v293, %v289
      %v342 = vpack.c.b16 %v294, %v290
      %v343 = vpack.c.b16 %v299, %v295
      %v344 = vpack.c.b16 %v300, %v296
      %v345 = vpack.c.b16 %v301, %v297
      %v346 = vpack.c.b16 %v302, %v298
      %v347 = vpack.c.b16 %v307, %v303
      %v348 = vpack.c.b16 %v308, %v304
      %v349 = vpack.c.b16 %v309, %v305
      %v350 = vpack.c.b16 %v310, %v306
      %v351 = vpack.c.b16 %v315, %v311
      %v352 = vpack.c.b16 %v316, %v312
      %v353 = vpack.c.b16 %v317, %v313
      %v354 = vpack.c.b16 %v318, %v314
      %v355 = vpack.c.b16 %v323, %v319
      %v356 = vpack.c.b16 %v324, %v320
      %v357 = vpack.c.b16 %v325, %v321
      %v358 = vpack.c.b16 %v326, %v322
      %391 = vmatpush.bf16.msra.mxu0 %v355
      %392 = vmatpush.bf16.msra.mxu0 %v351
      %393 = vmatpush.bf16.msra.mxu0 %v347
      %394 = vmatpush.bf16.msra.mxu0 %v343
      %395 = vmatpush.bf16.msra.mxu0 %v339
      %396 = vmatpush.bf16.msra.mxu0 %v335
      %397 = vmatpush.bf16.msra.mxu0 %v331
      %398 = vmatpush.bf16.msra.mxu0 %v327
      %399 = vmatmul.bf16.gmra.mxu0 0
      %v400 = vpop.f32.mrf.mxu0
      %v401 = vadd.f32 0.0, %v400
      %v402 = vpop.f32.mrf.mxu0
      %v403 = vadd.f32 0.0, %v402
      %404 = vdwg.mxu0
      %405 = vmatpush.bf16.msra.mxu0 %v356
      %406 = vmatpush.bf16.msra.mxu0 %v352
      %407 = vmatpush.bf16.msra.mxu0 %v348
      %408 = vmatpush.bf16.msra.mxu0 %v344
      %409 = vmatpush.bf16.msra.mxu0 %v340
      %410 = vmatpush.bf16.msra.mxu0 %v336
      %411 = vmatpush.bf16.msra.mxu0 %v332
      %412 = vmatpush.bf16.msra.mxu0 %v328
      %413 = vmatmul.bf16.gmra.mxu0 0
      %v414 = vpop.f32.mrf.mxu0
      %v415 = vadd.f32 0.0, %v414
      %v416 = vpop.f32.mrf.mxu0
      %v417 = vadd.f32 0.0, %v416
      %418 = vdwg.mxu0
      %419 = vmatpush.bf16.msra.mxu0 %v357
      %420 = vmatpush.bf16.msra.mxu0 %v353
      %421 = vmatpush.bf16.msra.mxu0 %v349
      %422 = vmatpush.bf16.msra.mxu0 %v345
      %423 = vmatpush.bf16.msra.mxu0 %v341
      %424 = vmatpush.bf16.msra.mxu0 %v337
      %425 = vmatpush.bf16.msra.mxu0 %v333
      %426 = vmatpush.bf16.msra.mxu0 %v329
      %427 = vmatmul.bf16.gmra.mxu0 0
      %v428 = vpop.f32.mrf.mxu0
      %v429 = vadd.f32 0.0, %v428
      %v430 = vpop.f32.mrf.mxu0
      %v431 = vadd.f32 0.0, %v430
      %432 = vdwg.mxu0
      %433 = vmatpush.bf16.msra.mxu0 %v358
      %434 = vmatpush.bf16.msra.mxu0 %v354
      %435 = vmatpush.bf16.msra.mxu0 %v350
      %436 = vmatpush.bf16.msra.mxu0 %v346
      %437 = vmatpush.bf16.msra.mxu0 %v342
      %438 = vmatpush.bf16.msra.mxu0 %v338
      %439 = vmatpush.bf16.msra.mxu0 %v334
      %440 = vmatpush.bf16.msra.mxu0 %v330
      %441 = vmatmul.bf16.gmra.mxu0 0
      %v442 = vpop.f32.mrf.mxu0
      %v443 = vadd.f32 0.0, %v442
      %v444 = vpop.f32.mrf.mxu0
      %v445 = vadd.f32 0.0, %v444
      %446 = vdwg.mxu0
      %v449 = vunpack.c.l.b16 %v165
      %v450 = vunpack.c.l.b16 %v166
      %v451 = vpack.c.b16 %v450, %v449
      %v485 = vunpack.c.l.b16 %v167
      %v486 = vunpack.c.h.b16 %v167
      %v487 = vunpack.c.l.b16 %v168
      %v488 = vunpack.c.h.b16 %v168
      %v489 = vunpack.c.l.b16 %v169
      %v490 = vunpack.c.h.b16 %v169
      %v491 = vunpack.c.l.b16 %v170
      %v492 = vunpack.c.h.b16 %v170
      %v493 = vunpack.c.l.b16 %v171
      %v494 = vunpack.c.h.b16 %v171
      %v495 = vunpack.c.l.b16 %v172
      %v496 = vunpack.c.h.b16 %v172
      %v497 = vunpack.c.l.b16 %v173
      %v498 = vunpack.c.h.b16 %v173
      %v499 = vunpack.c.l.b16 %v174
      %v500 = vunpack.c.h.b16 %v174
      %v501 = vunpack.c.l.b16 %v175
      %v502 = vunpack.c.h.b16 %v175
      %v503 = vunpack.c.l.b16 %v176
      %v504 = vunpack.c.h.b16 %v176
      %v505 = vunpack.c.l.b16 %v177
      %v506 = vunpack.c.h.b16 %v177
      %v507 = vunpack.c.l.b16 %v178
      %v508 = vunpack.c.h.b16 %v178
      %v509 = vunpack.c.l.b16 %v179
      %v510 = vunpack.c.h.b16 %v179
      %v511 = vunpack.c.l.b16 %v180
      %v512 = vunpack.c.h.b16 %v180
      %v513 = vunpack.c.l.b16 %v181
      %v514 = vunpack.c.h.b16 %v181
      %v515 = vunpack.c.l.b16 %v182
      %v516 = vunpack.c.h.b16 %v182
      %v517 = vunpack.c.l.b16 %v183
      %v518 = vunpack.c.h.b16 %v183
      %v519 = vunpack.c.l.b16 %v184
      %v520 = vunpack.c.h.b16 %v184
      %v521 = vunpack.c.l.b16 %v185
      %v522 = vunpack.c.h.b16 %v185
      %v523 = vunpack.c.l.b16 %v186
      %v524 = vunpack.c.h.b16 %v186
      %v525 = vunpack.c.l.b16 %v187
      %v526 = vunpack.c.h.b16 %v187
      %v527 = vunpack.c.l.b16 %v188
      %v528 = vunpack.c.h.b16 %v188
      %v529 = vunpack.c.l.b16 %v189
      %v530 = vunpack.c.h.b16 %v189
      %v531 = vunpack.c.l.b16 %v190
      %v532 = vunpack.c.h.b16 %v190
      %v533 = vunpack.c.l.b16 %v191
      %v534 = vunpack.c.h.b16 %v191
      %v535 = vunpack.c.l.b16 %v192
      %v536 = vunpack.c.h.b16 %v192
      %v537 = vunpack.c.l.b16 %v193
      %v538 = vunpack.c.h.b16 %v193
      %v539 = vunpack.c.l.b16 %v194
      %v540 = vunpack.c.h.b16 %v194
      %v541 = vunpack.c.l.b16 %v195
      %v542 = vunpack.c.h.b16 %v195
      %v543 = vunpack.c.l.b16 %v196
      %v544 = vunpack.c.h.b16 %v196
      %v545 = vunpack.c.l.b16 %v197
      %v546 = vunpack.c.h.b16 %v197
      %v547 = vunpack.c.l.b16 %v198
      %v548 = vunpack.c.h.b16 %v198
      %v549 = vpack.c.b16 %v489, %v485
      %v550 = vpack.c.b16 %v490, %v486
      %v551 = vpack.c.b16 %v491, %v487
      %v552 = vpack.c.b16 %v492, %v488
      %v553 = vpack.c.b16 %v497, %v493
      %v554 = vpack.c.b16 %v498, %v494
      %v555 = vpack.c.b16 %v499, %v495
      %v556 = vpack.c.b16 %v500, %v496
      %v557 = vpack.c.b16 %v505, %v501
      %v558 = vpack.c.b16 %v506, %v502
      %v559 = vpack.c.b16 %v507, %v503
      %v560 = vpack.c.b16 %v508, %v504
      %v561 = vpack.c.b16 %v513, %v509
      %v562 = vpack.c.b16 %v514, %v510
      %v563 = vpack.c.b16 %v515, %v511
      %v564 = vpack.c.b16 %v516, %v512
      %v565 = vpack.c.b16 %v521, %v517
      %v566 = vpack.c.b16 %v522, %v518
      %v567 = vpack.c.b16 %v523, %v519
      %v568 = vpack.c.b16 %v524, %v520
      %v569 = vpack.c.b16 %v529, %v525
      %v570 = vpack.c.b16 %v530, %v526
      %v571 = vpack.c.b16 %v531, %v527
      %v572 = vpack.c.b16 %v532, %v528
      %v573 = vpack.c.b16 %v537, %v533
      %v574 = vpack.c.b16 %v538, %v534
      %v575 = vpack.c.b16 %v539, %v535
      %v576 = vpack.c.b16 %v540, %v536
      %v577 = vpack.c.b16 %v545, %v541
      %v578 = vpack.c.b16 %v546, %v542
      %v579 = vpack.c.b16 %v547, %v543
      %v580 = vpack.c.b16 %v548, %v544
      %613 = vmatpush.bf16.msra.mxu0 %v577
      %614 = vmatpush.bf16.msra.mxu0 %v573
      %615 = vmatpush.bf16.msra.mxu0 %v569
      %616 = vmatpush.bf16.msra.mxu0 %v565
      %617 = vmatpush.bf16.msra.mxu0 %v561
      %618 = vmatpush.bf16.msra.mxu0 %v557
      %619 = vmatpush.bf16.msra.mxu0 %v553
      %620 = vmatpush.bf16.msra.mxu0 %v549
      %621 = vmatmul.bf16.gmra.mxu0 %v451
      %v622 = vpop.f32.mrf.mxu0
      %v623 = vadd.f32 %v401, %v622
      %v624 = vpop.f32.mrf.mxu0
      %v625 = vadd.f32 %v403, %v624
      %626 = vdwg.mxu0
      %627 = vmatpush.bf16.msra.mxu0 %v578
      %628 = vmatpush.bf16.msra.mxu0 %v574
      %629 = vmatpush.bf16.msra.mxu0 %v570
      %630 = vmatpush.bf16.msra.mxu0 %v566
      %631 = vmatpush.bf16.msra.mxu0 %v562
      %632 = vmatpush.bf16.msra.mxu0 %v558
      %633 = vmatpush.bf16.msra.mxu0 %v554
      %634 = vmatpush.bf16.msra.mxu0 %v550
      %635 = vmatmul.bf16.gmra.mxu0 %v451
      %v636 = vpop.f32.mrf.mxu0
      %v637 = vadd.f32 %v415, %v636
      %v638 = vpop.f32.mrf.mxu0
      %v639 = vadd.f32 %v417, %v638
      %640 = vdwg.mxu0
      %641 = vmatpush.bf16.msra.mxu0 %v579
      %642 = vmatpush.bf16.msra.mxu0 %v575
      %643 = vmatpush.bf16.msra.mxu0 %v571
      %644 = vmatpush.bf16.msra.mxu0 %v567
      %645 = vmatpush.bf16.msra.mxu0 %v563
      %646 = vmatpush.bf16.msra.mxu0 %v559
      %647 = vmatpush.bf16.msra.mxu0 %v555
      %648 = vmatpush.bf16.msra.mxu0 %v551
      %649 = vmatmul.bf16.gmra.mxu0 %v451
      %v650 = vpop.f32.mrf.mxu0
      %v651 = vadd.f32 %v429, %v650
      %v652 = vpop.f32.mrf.mxu0
      %v653 = vadd.f32 %v431, %v652
      %654 = vdwg.mxu0
      %655 = vmatpush.bf16.msra.mxu0 %v580
      %656 = vmatpush.bf16.msra.mxu0 %v576
      %657 = vmatpush.bf16.msra.mxu0 %v572
      %658 = vmatpush.bf16.msra.mxu0 %v568
      %659 = vmatpush.bf16.msra.mxu0 %v564
      %660 = vmatpush.bf16.msra.mxu0 %v560
      %661 = vmatpush.bf16.msra.mxu0 %v556
      %662 = vmatpush.bf16.msra.mxu0 %v552
      %663 = vmatmul.bf16.gmra.mxu0 %v451
      %v664 = vpop.f32.mrf.mxu0
      %v665 = vadd.f32 %v443, %v664
      %v666 = vpop.f32.mrf.mxu0
      %v667 = vadd.f32 %v445, %v666
      %668 = vdwg.mxu0
      %v669 = vadd.f32 %v623, %v147
      %v670 = vadd.f32 %v637, %v148
      %v671 = vadd.f32 %v651, %v149
      %v672 = vadd.f32 %v665, %v150
      %v673 = vadd.f32 %v625, %v147
      %v674 = vadd.f32 %v639, %v148
      %v675 = vadd.f32 %v653, %v149
      %v676 = vadd.f32 %v667, %v150
      %v677 = vmul.f32 %v669, 0.5
      %v678 = vmul.f32 %v673, 0.5
      %v679 = vtanh.pop %v677
      %v680 = vtanh.pop %v678
      %v681 = vmul.f32 %v679, 0.5
      %v682 = vmul.f32 %v680, 0.5
      %v683 = vadd.f32 %v681, 0.5
      %v684 = vadd.f32 %v682, 0.5
      %v685 = vmul.f32 %v670, 0.5
      %v686 = vmul.f32 %v674, 0.5
      %v687 = vtanh.pop %v685
      %v688 = vtanh.pop %v686
      %v689 = vmul.f32 %v687, 0.5
      %v690 = vmul.f32 %v688, 0.5
      %v691 = vadd.f32 %v689, 0.5
      %v692 = vadd.f32 %v690, 0.5
      %v693 = vtanh.pop %v671
      %v694 = vtanh.pop %v675
      %v695 = vmul.f32 %v672, 0.5
      %v696 = vmul.f32 %v676, 0.5
      %v697 = vtanh.pop %v695
      %v698 = vtanh.pop %v696
      %v699 = vmul.f32 %v697, 0.5
      %v700 = vmul.f32 %v698, 0.5
      %v701 = vadd.f32 %v699, 0.5
      %v702 = vadd.f32 %v700, 0.5
      %v703 = vmul.f32 %v691, 0.0
      %v704 = vmul.f32 %v692, 0.0
      %v705 = vmul.f32 %v683, %v693
      %v706 = vmul.f32 %v684, %v694
      %v707 = vadd.f32 %v703, %v705
      %v708 = vadd.f32 %v704, %v706
      %v709 = vtanh.pop %v707
      %v710 = vtanh.pop %v708
      %v711 = vmul.f32 %v701, %v709
      %v712 = vmul.f32 %v702, %v710
      %v713 = vpack.c.bf16 %v712, %v711
      %v714 = vld [vmem:[#allocation11] sm:$0xff]
      %v715 = vld [vmem:[#allocation11 + $0x8] sm:$0xff]
      %v716 = vld [vmem:[#allocation11 + $0x10] sm:$0xff]
      %v717 = vld [vmem:[#allocation11 + $0x18] sm:$0xff]
      %v718 = vld [vmem:[#allocation11 + $0x20] sm:$0xff]
      %v719 = vld [vmem:[#allocation11 + $0x28] sm:$0xff]
      %v720 = vld [vmem:[#allocation11 + $0x30] sm:$0xff]
      %v721 = vld [vmem:[#allocation11 + $0x38] sm:$0xff]
      %v722 = vld [vmem:[#allocation11 + $0x40] sm:$0xff]
      %v723 = vld [vmem:[#allocation11 + $0x48] sm:$0xff]
      %v724 = vld [vmem:[#allocation11 + $0x50] sm:$0xff]
      %v725 = vld [vmem:[#allocation11 + $0x58] sm:$0xff]
      %v726 = vld [vmem:[#allocation11 + $0x60] sm:$0xff]
      %v727 = vld [vmem:[#allocation11 + $0x68] sm:$0xff]
      %v728 = vld [vmem:[#allocation11 + $0x70] sm:$0xff]
      %v729 = vld [vmem:[#allocation11 + $0x78] sm:$0xff]
      %v730 = vld [vmem:[#allocation11 + $0x80] sm:$0xff]
      %v731 = vld [vmem:[#allocation11 + $0x88] sm:$0xff]
      %v732 = vld [vmem:[#allocation11 + $0x90] sm:$0xff]
      %v733 = vld [vmem:[#allocation11 + $0x98] sm:$0xff]
      %v734 = vld [vmem:[#allocation11 + $0xa0] sm:$0xff]
      %v735 = vld [vmem:[#allocation11 + $0xa8] sm:$0xff]
      %v736 = vld [vmem:[#allocation11 + $0xb0] sm:$0xff]
      %v737 = vld [vmem:[#allocation11 + $0xb8] sm:$0xff]
      %v738 = vld [vmem:[#allocation11 + $0xc0] sm:$0xff]
      %v739 = vld [vmem:[#allocation11 + $0xc8] sm:$0xff]
      %v740 = vld [vmem:[#allocation11 + $0xd0] sm:$0xff]
      %v741 = vld [vmem:[#allocation11 + $0xd8] sm:$0xff]
      %v742 = vld [vmem:[#allocation11 + $0xe0] sm:$0xff]
      %v743 = vld [vmem:[#allocation11 + $0xe8] sm:$0xff]
      %v744 = vld [vmem:[#allocation11 + $0xf0] sm:$0xff]
      %v745 = vld [vmem:[#allocation11 + $0xf8] sm:$0xff]
      %v746 = vld [vmem:[#allocation12] sm:$0xff]
      %v747 = vld [vmem:[#allocation12 + $0x8] sm:$0xff]
      %v748 = vld [vmem:[#allocation12 + $0x10] sm:$0xff]
      %v749 = vld [vmem:[#allocation12 + $0x18] sm:$0xff]
      %v750 = vld [vmem:[#allocation12 + $0x20] sm:$0xff]
      %v751 = vld [vmem:[#allocation12 + $0x28] sm:$0xff]
      %v752 = vld [vmem:[#allocation12 + $0x30] sm:$0xff]
      %v753 = vld [vmem:[#allocation12 + $0x38] sm:$0xff]
      %v754 = vld [vmem:[#allocation12 + $0x40] sm:$0xff]
      %v755 = vld [vmem:[#allocation12 + $0x48] sm:$0xff]
      %v756 = vld [vmem:[#allocation12 + $0x50] sm:$0xff]
      %v757 = vld [vmem:[#allocation12 + $0x58] sm:$0xff]
      %v758 = vld [vmem:[#allocation12 + $0x60] sm:$0xff]
      %v759 = vld [vmem:[#allocation12 + $0x68] sm:$0xff]
      %v760 = vld [vmem:[#allocation12 + $0x70] sm:$0xff]
      %v761 = vld [vmem:[#allocation12 + $0x78] sm:$0xff]
      %v762 = vld [vmem:[#allocation12 + $0x80] sm:$0xff]
      %v763 = vld [vmem:[#allocation12 + $0x88] sm:$0xff]
      %v764 = vld [vmem:[#allocation12 + $0x90] sm:$0xff]
      %v765 = vld [vmem:[#allocation12 + $0x98] sm:$0xff]
      %v766 = vld [vmem:[#allocation12 + $0xa0] sm:$0xff]
      %v767 = vld [vmem:[#allocation12 + $0xa8] sm:$0xff]
      %v768 = vld [vmem:[#allocation12 + $0xb0] sm:$0xff]
      %v769 = vld [vmem:[#allocation12 + $0xb8] sm:$0xff]
      %v770 = vld [vmem:[#allocation12 + $0xc0] sm:$0xff]
      %v771 = vld [vmem:[#allocation12 + $0xc8] sm:$0xff]
      %v772 = vld [vmem:[#allocation12 + $0xd0] sm:$0xff]
      %v773 = vld [vmem:[#allocation12 + $0xd8] sm:$0xff]
      %v774 = vld [vmem:[#allocation12 + $0xe0] sm:$0xff]
      %v775 = vld [vmem:[#allocation12 + $0xe8] sm:$0xff]
      %v776 = vld [vmem:[#allocation12 + $0xf0] sm:$0xff]
      %v777 = vld [vmem:[#allocation12 + $0xf8] sm:$0xff]
      %v810 = vunpack.c.l.b16 %v746
      %v811 = vunpack.c.h.b16 %v746
      %v812 = vunpack.c.l.b16 %v747
      %v813 = vunpack.c.h.b16 %v747
      %v814 = vunpack.c.l.b16 %v748
      %v815 = vunpack.c.h.b16 %v748
      %v816 = vunpack.c.l.b16 %v749
      %v817 = vunpack.c.h.b16 %v749
      %v818 = vunpack.c.l.b16 %v750
      %v819 = vunpack.c.h.b16 %v750
      %v820 = vunpack.c.l.b16 %v751
      %v821 = vunpack.c.h.b16 %v751
      %v822 = vunpack.c.l.b16 %v752
      %v823 = vunpack.c.h.b16 %v752
      %v824 = vunpack.c.l.b16 %v753
      %v825 = vunpack.c.h.b16 %v753
      %v826 = vunpack.c.l.b16 %v754
      %v827 = vunpack.c.h.b16 %v754
      %v828 = vunpack.c.l.b16 %v755
      %v829 = vunpack.c.h.b16 %v755
      %v830 = vunpack.c.l.b16 %v756
      %v831 = vunpack.c.h.b16 %v756
      %v832 = vunpack.c.l.b16 %v757
      %v833 = vunpack.c.h.b16 %v757
      %v834 = vunpack.c.l.b16 %v758
      %v835 = vunpack.c.h.b16 %v758
      %v836 = vunpack.c.l.b16 %v759
      %v837 = vunpack.c.h.b16 %v759
      %v838 = vunpack.c.l.b16 %v760
      %v839 = vunpack.c.h.b16 %v760
      %v840 = vunpack.c.l.b16 %v761
      %v841 = vunpack.c.h.b16 %v761
      %v842 = vunpack.c.l.b16 %v762
      %v843 = vunpack.c.h.b16 %v762
      %v844 = vunpack.c.l.b16 %v763
      %v845 = vunpack.c.h.b16 %v763
      %v846 = vunpack.c.l.b16 %v764
      %v847 = vunpack.c.h.b16 %v764
      %v848 = vunpack.c.l.b16 %v765
      %v849 = vunpack.c.h.b16 %v765
      %v850 = vunpack.c.l.b16 %v766
      %v851 = vunpack.c.h.b16 %v766
      %v852 = vunpack.c.l.b16 %v767
      %v853 = vunpack.c.h.b16 %v767
      %v854 = vunpack.c.l.b16 %v768
      %v855 = vunpack.c.h.b16 %v768
      %v856 = vunpack.c.l.b16 %v769
      %v857 = vunpack.c.h.b16 %v769
      %v858 = vunpack.c.l.b16 %v770
      %v859 = vunpack.c.h.b16 %v770
      %v860 = vunpack.c.l.b16 %v771
      %v861 = vunpack.c.h.b16 %v771
      %v862 = vunpack.c.l.b16 %v772
      %v863 = vunpack.c.h.b16 %v772
      %v864 = vunpack.c.l.b16 %v773
      %v865 = vunpack.c.h.b16 %v773
      %v866 = vunpack.c.l.b16 %v774
      %v867 = vunpack.c.h.b16 %v774
      %v868 = vunpack.c.l.b16 %v775
      %v869 = vunpack.c.h.b16 %v775
      %v870 = vunpack.c.l.b16 %v776
      %v871 = vunpack.c.h.b16 %v776
      %v872 = vunpack.c.l.b16 %v777
      %v873 = vunpack.c.h.b16 %v777
      %v874 = vpack.c.b16 %v814, %v810
      %v875 = vpack.c.b16 %v815, %v811
      %v876 = vpack.c.b16 %v816, %v812
      %v877 = vpack.c.b16 %v817, %v813
      %v878 = vpack.c.b16 %v822, %v818
      %v879 = vpack.c.b16 %v823, %v819
      %v880 = vpack.c.b16 %v824, %v820
      %v881 = vpack.c.b16 %v825, %v821
      %v882 = vpack.c.b16 %v830, %v826
      %v883 = vpack.c.b16 %v831, %v827
      %v884 = vpack.c.b16 %v832, %v828
      %v885 = vpack.c.b16 %v833, %v829
      %v886 = vpack.c.b16 %v838, %v834
      %v887 = vpack.c.b16 %v839, %v835
      %v888 = vpack.c.b16 %v840, %v836
      %v889 = vpack.c.b16 %v841, %v837
      %v890 = vpack.c.b16 %v846, %v842
      %v891 = vpack.c.b16 %v847, %v843
      %v892 = vpack.c.b16 %v848, %v844
      %v893 = vpack.c.b16 %v849, %v845
      %v894 = vpack.c.b16 %v854, %v850
      %v895 = vpack.c.b16 %v855, %v851
      %v896 = vpack.c.b16 %v856, %v852
      %v897 = vpack.c.b16 %v857, %v853
      %v898 = vpack.c.b16 %v862, %v858
      %v899 = vpack.c.b16 %v863, %v859
      %v900 = vpack.c.b16 %v864, %v860
      %v901 = vpack.c.b16 %v865, %v861
      %v902 = vpack.c.b16 %v870, %v866
      %v903 = vpack.c.b16 %v871, %v867
      %v904 = vpack.c.b16 %v872, %v868
      %v905 = vpack.c.b16 %v873, %v869
      %938 = vmatpush.bf16.msra.mxu0 %v902
      %939 = vmatpush.bf16.msra.mxu0 %v898
      %940 = vmatpush.bf16.msra.mxu0 %v894
      %941 = vmatpush.bf16.msra.mxu0 %v890
      %942 = vmatpush.bf16.msra.mxu0 %v886
      %943 = vmatpush.bf16.msra.mxu0 %v882
      %944 = vmatpush.bf16.msra.mxu0 %v878
      %945 = vmatpush.bf16.msra.mxu0 %v874
      %946 = vmatmul.bf16.gmra.mxu0 0
      %v947 = vpop.f32.mrf.mxu0
      %v948 = vadd.f32 0.0, %v947
      %v949 = vpop.f32.mrf.mxu0
      %v950 = vadd.f32 0.0, %v949
      %951 = vdwg.mxu0
      %952 = vmatpush.bf16.msra.mxu0 %v903
      %953 = vmatpush.bf16.msra.mxu0 %v899
      %954 = vmatpush.bf16.msra.mxu0 %v895
      %955 = vmatpush.bf16.msra.mxu0 %v891
      %956 = vmatpush.bf16.msra.mxu0 %v887
      %957 = vmatpush.bf16.msra.mxu0 %v883
      %958 = vmatpush.bf16.msra.mxu0 %v879
      %959 = vmatpush.bf16.msra.mxu0 %v875
      %960 = vmatmul.bf16.gmra.mxu0 0
      %v961 = vpop.f32.mrf.mxu0
      %v962 = vadd.f32 0.0, %v961
      %v963 = vpop.f32.mrf.mxu0
      %v964 = vadd.f32 0.0, %v963
      %965 = vdwg.mxu0
      %966 = vmatpush.bf16.msra.mxu0 %v904
      %967 = vmatpush.bf16.msra.mxu0 %v900
      %968 = vmatpush.bf16.msra.mxu0 %v896
      %969 = vmatpush.bf16.msra.mxu0 %v892
      %970 = vmatpush.bf16.msra.mxu0 %v888
      %971 = vmatpush.bf16.msra.mxu0 %v884
      %972 = vmatpush.bf16.msra.mxu0 %v880
      %973 = vmatpush.bf16.msra.mxu0 %v876
      %974 = vmatmul.bf16.gmra.mxu0 0
      %v975 = vpop.f32.mrf.mxu0
      %v976 = vadd.f32 0.0, %v975
      %v977 = vpop.f32.mrf.mxu0
      %v978 = vadd.f32 0.0, %v977
      %979 = vdwg.mxu0
      %980 = vmatpush.bf16.msra.mxu0 %v905
      %981 = vmatpush.bf16.msra.mxu0 %v901
      %982 = vmatpush.bf16.msra.mxu0 %v897
      %983 = vmatpush.bf16.msra.mxu0 %v893
      %984 = vmatpush.bf16.msra.mxu0 %v889
      %985 = vmatpush.bf16.msra.mxu0 %v885
      %986 = vmatpush.bf16.msra.mxu0 %v881
      %987 = vmatpush.bf16.msra.mxu0 %v877
      %988 = vmatmul.bf16.gmra.mxu0 0
      %v989 = vpop.f32.mrf.mxu0
      %v990 = vadd.f32 0.0, %v989
      %v991 = vpop.f32.mrf.mxu0
      %v992 = vadd.f32 0.0, %v991
      %993 = vdwg.mxu0
      %v1026 = vunpack.c.l.b16 %v714
      %v1027 = vunpack.c.h.b16 %v714
      %v1028 = vunpack.c.l.b16 %v715
      %v1029 = vunpack.c.h.b16 %v715
      %v1030 = vunpack.c.l.b16 %v716
      %v1031 = vunpack.c.h.b16 %v716
      %v1032 = vunpack.c.l.b16 %v717
      %v1033 = vunpack.c.h.b16 %v717
      %v1034 = vunpack.c.l.b16 %v718
      %v1035 = vunpack.c.h.b16 %v718
      %v1036 = vunpack.c.l.b16 %v719
      %v1037 = vunpack.c.h.b16 %v719
      %v1038 = vunpack.c.l.b16 %v720
      %v1039 = vunpack.c.h.b16 %v720
      %v1040 = vunpack.c.l.b16 %v721
      %v1041 = vunpack.c.h.b16 %v721
      %v1042 = vunpack.c.l.b16 %v722
      %v1043 = vunpack.c.h.b16 %v722
      %v1044 = vunpack.c.l.b16 %v723
      %v1045 = vunpack.c.h.b16 %v723
      %v1046 = vunpack.c.l.b16 %v724
      %v1047 = vunpack.c.h.b16 %v724
      %v1048 = vunpack.c.l.b16 %v725
      %v1049 = vunpack.c.h.b16 %v725
      %v1050 = vunpack.c.l.b16 %v726
      %v1051 = vunpack.c.h.b16 %v726
      %v1052 = vunpack.c.l.b16 %v727
      %v1053 = vunpack.c.h.b16 %v727
      %v1054 = vunpack.c.l.b16 %v728
      %v1055 = vunpack.c.h.b16 %v728
      %v1056 = vunpack.c.l.b16 %v729
      %v1057 = vunpack.c.h.b16 %v729
      %v1058 = vunpack.c.l.b16 %v730
      %v1059 = vunpack.c.h.b16 %v730
      %v1060 = vunpack.c.l.b16 %v731
      %v1061 = vunpack.c.h.b16 %v731
      %v1062 = vunpack.c.l.b16 %v732
      %v1063 = vunpack.c.h.b16 %v732
      %v1064 = vunpack.c.l.b16 %v733
      %v1065 = vunpack.c.h.b16 %v733
      %v1066 = vunpack.c.l.b16 %v734
      %v1067 = vunpack.c.h.b16 %v734
      %v1068 = vunpack.c.l.b16 %v735
      %v1069 = vunpack.c.h.b16 %v735
      %v1070 = vunpack.c.l.b16 %v736
      %v1071 = vunpack.c.h.b16 %v736
      %v1072 = vunpack.c.l.b16 %v737
      %v1073 = vunpack.c.h.b16 %v737
      %v1074 = vunpack.c.l.b16 %v738
      %v1075 = vunpack.c.h.b16 %v738
      %v1076 = vunpack.c.l.b16 %v739
      %v1077 = vunpack.c.h.b16 %v739
      %v1078 = vunpack.c.l.b16 %v740
      %v1079 = vunpack.c.h.b16 %v740
      %v1080 = vunpack.c.l.b16 %v741
      %v1081 = vunpack.c.h.b16 %v741
      %v1082 = vunpack.c.l.b16 %v742
      %v1083 = vunpack.c.h.b16 %v742
      %v1084 = vunpack.c.l.b16 %v743
      %v1085 = vunpack.c.h.b16 %v743
      %v1086 = vunpack.c.l.b16 %v744
      %v1087 = vunpack.c.h.b16 %v744
      %v1088 = vunpack.c.l.b16 %v745
      %v1089 = vunpack.c.h.b16 %v745
      %v1090 = vpack.c.b16 %v1030, %v1026
      %v1091 = vpack.c.b16 %v1031, %v1027
      %v1092 = vpack.c.b16 %v1032, %v1028
      %v1093 = vpack.c.b16 %v1033, %v1029
      %v1094 = vpack.c.b16 %v1038, %v1034
      %v1095 = vpack.c.b16 %v1039, %v1035
      %v1096 = vpack.c.b16 %v1040, %v1036
      %v1097 = vpack.c.b16 %v1041, %v1037
      %v1098 = vpack.c.b16 %v1046, %v1042
      %v1099 = vpack.c.b16 %v1047, %v1043
      %v1100 = vpack.c.b16 %v1048, %v1044
      %v1101 = vpack.c.b16 %v1049, %v1045
      %v1102 = vpack.c.b16 %v1054, %v1050
      %v1103 = vpack.c.b16 %v1055, %v1051
      %v1104 = vpack.c.b16 %v1056, %v1052
      %v1105 = vpack.c.b16 %v1057, %v1053
      %v1106 = vpack.c.b16 %v1062, %v1058
      %v1107 = vpack.c.b16 %v1063, %v1059
      %v1108 = vpack.c.b16 %v1064, %v1060
      %v1109 = vpack.c.b16 %v1065, %v1061
      %v1110 = vpack.c.b16 %v1070, %v1066
      %v1111 = vpack.c.b16 %v1071, %v1067
      %v1112 = vpack.c.b16 %v1072, %v1068
      %v1113 = vpack.c.b16 %v1073, %v1069
      %v1114 = vpack.c.b16 %v1078, %v1074
      %v1115 = vpack.c.b16 %v1079, %v1075
      %v1116 = vpack.c.b16 %v1080, %v1076
      %v1117 = vpack.c.b16 %v1081, %v1077
      %v1118 = vpack.c.b16 %v1086, %v1082
      %v1119 = vpack.c.b16 %v1087, %v1083
      %v1120 = vpack.c.b16 %v1088, %v1084
      %v1121 = vpack.c.b16 %v1089, %v1085
      %1154 = vmatpush.bf16.msra.mxu0 %v1118
      %1155 = vmatpush.bf16.msra.mxu0 %v1114
      %1156 = vmatpush.bf16.msra.mxu0 %v1110
      %1157 = vmatpush.bf16.msra.mxu0 %v1106
      %1158 = vmatpush.bf16.msra.mxu0 %v1102
      %1159 = vmatpush.bf16.msra.mxu0 %v1098
      %1160 = vmatpush.bf16.msra.mxu0 %v1094
      %1161 = vmatpush.bf16.msra.mxu0 %v1090
      %1162 = vmatmul.bf16.gmra.mxu0 %v713
      %v1163 = vpop.f32.mrf.mxu0
      %v1164 = vadd.f32 %v948, %v1163
      %v1165 = vpop.f32.mrf.mxu0
      %v1166 = vadd.f32 %v950, %v1165
      %1167 = vdwg.mxu0
      %1168 = vmatpush.bf16.msra.mxu0 %v1119
      %1169 = vmatpush.bf16.msra.mxu0 %v1115
      %1170 = vmatpush.bf16.msra.mxu0 %v1111
      %1171 = vmatpush.bf16.msra.mxu0 %v1107
      %1172 = vmatpush.bf16.msra.mxu0 %v1103
      %1173 = vmatpush.bf16.msra.mxu0 %v1099
      %1174 = vmatpush.bf16.msra.mxu0 %v1095
      %1175 = vmatpush.bf16.msra.mxu0 %v1091
      %1176 = vmatmul.bf16.gmra.mxu0 %v713
      %v1177 = vpop.f32.mrf.mxu0
      %v1178 = vadd.f32 %v962, %v1177
      %v1179 = vpop.f32.mrf.mxu0
      %v1180 = vadd.f32 %v964, %v1179
      %1181 = vdwg.mxu0
      %1182 = vmatpush.bf16.msra.mxu0 %v1120
      %1183 = vmatpush.bf16.msra.mxu0 %v1116
      %1184 = vmatpush.bf16.msra.mxu0 %v1112
      %1185 = vmatpush.bf16.msra.mxu0 %v1108
      %1186 = vmatpush.bf16.msra.mxu0 %v1104
      %1187 = vmatpush.bf16.msra.mxu0 %v1100
      %1188 = vmatpush.bf16.msra.mxu0 %v1096
      %1189 = vmatpush.bf16.msra.mxu0 %v1092
      %1190 = vmatmul.bf16.gmra.mxu0 %v713
      %v1191 = vpop.f32.mrf.mxu0
      %v1192 = vadd.f32 %v976, %v1191
      %v1193 = vpop.f32.mrf.mxu0
      %v1194 = vadd.f32 %v978, %v1193
      %1195 = vdwg.mxu0
      %1196 = vmatpush.bf16.msra.mxu0 %v1121
      %1197 = vmatpush.bf16.msra.mxu0 %v1117
      %1198 = vmatpush.bf16.msra.mxu0 %v1113
      %1199 = vmatpush.bf16.msra.mxu0 %v1109
      %1200 = vmatpush.bf16.msra.mxu0 %v1105
      %1201 = vmatpush.bf16.msra.mxu0 %v1101
      %1202 = vmatpush.bf16.msra.mxu0 %v1097
      %1203 = vmatpush.bf16.msra.mxu0 %v1093
      %1204 = vmatmul.bf16.gmra.mxu0 %v713
      %v1205 = vpop.f32.mrf.mxu0
      %v1206 = vadd.f32 %v990, %v1205
      %v1207 = vpop.f32.mrf.mxu0
      %v1208 = vadd.f32 %v992, %v1207
      %1209 = vdwg.mxu0
      %v1210 = vadd.f32 %v1164, %v157
      %v1211 = vadd.f32 %v1178, %v158
      %v1212 = vadd.f32 %v1192, %v159
      %v1213 = vadd.f32 %v1206, %v160
      %v1214 = vadd.f32 %v1166, %v157
      %v1215 = vadd.f32 %v1180, %v158
      %v1216 = vadd.f32 %v1194, %v159
      %v1217 = vadd.f32 %v1208, %v160
      %v1218 = vmul.f32 %v1210, 0.5
      %v1219 = vmul.f32 %v1214, 0.5
      %v1220 = vtanh.pop %v1218
      %v1221 = vtanh.pop %v1219
      %v1222 = vmul.f32 %v1220, 0.5
      %v1223 = vmul.f32 %v1221, 0.5
      %v1224 = vadd.f32 %v1222, 0.5
      %v1225 = vadd.f32 %v1223, 0.5
      %v1226 = vmul.f32 %v1211, 0.5
      %v1227 = vmul.f32 %v1215, 0.5
      %v1228 = vtanh.pop %v1226
      %v1229 = vtanh.pop %v1227
      %v1230 = vmul.f32 %v1228, 0.5
      %v1231 = vmul.f32 %v1229, 0.5
      %v1232 = vadd.f32 %v1230, 0.5
      %v1233 = vadd.f32 %v1231, 0.5
      %v1234 = vtanh.pop %v1212
      %v1235 = vtanh.pop %v1216
      %v1236 = vmul.f32 %v1213, 0.5
      %v1237 = vmul.f32 %v1217, 0.5
      %v1238 = vtanh.pop %v1236
      %v1239 = vtanh.pop %v1237
      %v1240 = vmul.f32 %v1238, 0.5
      %v1241 = vmul.f32 %v1239, 0.5
      %v1242 = vadd.f32 %v1240, 0.5
      %v1243 = vadd.f32 %v1241, 0.5
      %v1244 = vmul.f32 %v1232, 0.0
      %v1245 = vmul.f32 %v1233, 0.0
      %v1246 = vmul.f32 %v1224, %v1234
      %v1247 = vmul.f32 %v1225, %v1235
      %v1248 = vadd.f32 %v1244, %v1246
      %v1249 = vadd.f32 %v1245, %v1247
      %v1250 = vtanh.pop %v1248
      %v1251 = vtanh.pop %v1249
      %v1252 = vmul.f32 %v1242, %v1250
      %v1253 = vmul.f32 %v1243, %v1251
      %v1254 = vpack.c.bf16 %v1252, %v1252
      %v1255 = vpack.c.bf16 %v1253, %v1253
      %1256 = vst [vmem:[#allocation2] sm:$0xf] %v1254
      %1257 = vst [vmem:[#allocation2 + $0x4] sm:$0xf] %v1255
      %s1258 = scalar_lea.vmem [#allocation3], 8
      %v1259 = vld [vmem:[%s1258] sm:$0xf]
      %v1260 = vld [vmem:[%s1258 + $0x4] sm:$0xf]
      %v1261 = vld [vmem:[#allocation6] sm:$0xff]
      %v1262 = vld [vmem:[#allocation6 + $0x8] sm:$0xff]
      %v1263 = vld [vmem:[#allocation6 + $0x10] sm:$0xff]
      %v1264 = vld [vmem:[#allocation6 + $0x18] sm:$0xff]
      %v1265 = vld [vmem:[#allocation6 + $0x20] sm:$0xff]
      %v1266 = vld [vmem:[#allocation6 + $0x28] sm:$0xff]
      %v1267 = vld [vmem:[#allocation6 + $0x30] sm:$0xff]
      %v1268 = vld [vmem:[#allocation6 + $0x38] sm:$0xff]
      %v1269 = vld [vmem:[#allocation6 + $0x40] sm:$0xff]
      %v1270 = vld [vmem:[#allocation6 + $0x48] sm:$0xff]
      %v1271 = vld [vmem:[#allocation6 + $0x50] sm:$0xff]
      %v1272 = vld [vmem:[#allocation6 + $0x58] sm:$0xff]
      %v1273 = vld [vmem:[#allocation6 + $0x60] sm:$0xff]
      %v1274 = vld [vmem:[#allocation6 + $0x68] sm:$0xff]
      %v1275 = vld [vmem:[#allocation6 + $0x70] sm:$0xff]
      %v1276 = vld [vmem:[#allocation6 + $0x78] sm:$0xff]
      %v1277 = vld [vmem:[#allocation6 + $0x80] sm:$0xff]
      %v1278 = vld [vmem:[#allocation6 + $0x88] sm:$0xff]
      %v1279 = vld [vmem:[#allocation6 + $0x90] sm:$0xff]
      %v1280 = vld [vmem:[#allocation6 + $0x98] sm:$0xff]
      %v1281 = vld [vmem:[#allocation6 + $0xa0] sm:$0xff]
      %v1282 = vld [vmem:[#allocation6 + $0xa8] sm:$0xff]
      %v1283 = vld [vmem:[#allocation6 + $0xb0] sm:$0xff]
      %v1284 = vld [vmem:[#allocation6 + $0xb8] sm:$0xff]
      %v1285 = vld [vmem:[#allocation6 + $0xc0] sm:$0xff]
      %v1286 = vld [vmem:[#allocation6 + $0xc8] sm:$0xff]
      %v1287 = vld [vmem:[#allocation6 + $0xd0] sm:$0xff]
      %v1288 = vld [vmem:[#allocation6 + $0xd8] sm:$0xff]
      %v1289 = vld [vmem:[#allocation6 + $0xe0] sm:$0xff]
      %v1290 = vld [vmem:[#allocation6 + $0xe8] sm:$0xff]
      %v1291 = vld [vmem:[#allocation6 + $0xf0] sm:$0xff]
      %v1292 = vld [vmem:[#allocation6 + $0xf8] sm:$0xff]
      %v1293 = vld [vmem:[#allocation8] sm:$0xff]
      %v1294 = vld [vmem:[#allocation8 + $0x8] sm:$0xff]
      %v1295 = vld [vmem:[#allocation8 + $0x10] sm:$0xff]
      %v1296 = vld [vmem:[#allocation8 + $0x18] sm:$0xff]
      %v1297 = vld [vmem:[#allocation8 + $0x20] sm:$0xff]
      %v1298 = vld [vmem:[#allocation8 + $0x28] sm:$0xff]
      %v1299 = vld [vmem:[#allocation8 + $0x30] sm:$0xff]
      %v1300 = vld [vmem:[#allocation8 + $0x38] sm:$0xff]
      %v1301 = vld [vmem:[#allocation8 + $0x40] sm:$0xff]
      %v1302 = vld [vmem:[#allocation8 + $0x48] sm:$0xff]
      %v1303 = vld [vmem:[#allocation8 + $0x50] sm:$0xff]
      %v1304 = vld [vmem:[#allocation8 + $0x58] sm:$0xff]
      %v1305 = vld [vmem:[#allocation8 + $0x60] sm:$0xff]
      %v1306 = vld [vmem:[#allocation8 + $0x68] sm:$0xff]
      %v1307 = vld [vmem:[#allocation8 + $0x70] sm:$0xff]
      %v1308 = vld [vmem:[#allocation8 + $0x78] sm:$0xff]
      %v1309 = vld [vmem:[#allocation8 + $0x80] sm:$0xff]
      %v1310 = vld [vmem:[#allocation8 + $0x88] sm:$0xff]
      %v1311 = vld [vmem:[#allocation8 + $0x90] sm:$0xff]
      %v1312 = vld [vmem:[#allocation8 + $0x98] sm:$0xff]
      %v1313 = vld [vmem:[#allocation8 + $0xa0] sm:$0xff]
      %v1314 = vld [vmem:[#allocation8 + $0xa8] sm:$0xff]
      %v1315 = vld [vmem:[#allocation8 + $0xb0] sm:$0xff]
      %v1316 = vld [vmem:[#allocation8 + $0xb8] sm:$0xff]
      %v1317 = vld [vmem:[#allocation8 + $0xc0] sm:$0xff]
      %v1318 = vld [vmem:[#allocation8 + $0xc8] sm:$0xff]
      %v1319 = vld [vmem:[#allocation8 + $0xd0] sm:$0xff]
      %v1320 = vld [vmem:[#allocation8 + $0xd8] sm:$0xff]
      %v1321 = vld [vmem:[#allocation8 + $0xe0] sm:$0xff]
      %v1322 = vld [vmem:[#allocation8 + $0xe8] sm:$0xff]
      %v1323 = vld [vmem:[#allocation8 + $0xf0] sm:$0xff]
      %v1324 = vld [vmem:[#allocation8 + $0xf8] sm:$0xff]
      %v1357 = vunpack.c.l.b16 %v1293
      %v1358 = vunpack.c.h.b16 %v1293
      %v1359 = vunpack.c.l.b16 %v1294
      %v1360 = vunpack.c.h.b16 %v1294
      %v1361 = vunpack.c.l.b16 %v1295
      %v1362 = vunpack.c.h.b16 %v1295
      %v1363 = vunpack.c.l.b16 %v1296
      %v1364 = vunpack.c.h.b16 %v1296
      %v1365 = vunpack.c.l.b16 %v1297
      %v1366 = vunpack.c.h.b16 %v1297
      %v1367 = vunpack.c.l.b16 %v1298
      %v1368 = vunpack.c.h.b16 %v1298
      %v1369 = vunpack.c.l.b16 %v1299
      %v1370 = vunpack.c.h.b16 %v1299
      %v1371 = vunpack.c.l.b16 %v1300
      %v1372 = vunpack.c.h.b16 %v1300
      %v1373 = vunpack.c.l.b16 %v1301
      %v1374 = vunpack.c.h.b16 %v1301
      %v1375 = vunpack.c.l.b16 %v1302
      %v1376 = vunpack.c.h.b16 %v1302
      %v1377 = vunpack.c.l.b16 %v1303
      %v1378 = vunpack.c.h.b16 %v1303
      %v1379 = vunpack.c.l.b16 %v1304
      %v1380 = vunpack.c.h.b16 %v1304
      %v1381 = vunpack.c.l.b16 %v1305
      %v1382 = vunpack.c.h.b16 %v1305
      %v1383 = vunpack.c.l.b16 %v1306
      %v1384 = vunpack.c.h.b16 %v1306
      %v1385 = vunpack.c.l.b16 %v1307
      %v1386 = vunpack.c.h.b16 %v1307
      %v1387 = vunpack.c.l.b16 %v1308
      %v1388 = vunpack.c.h.b16 %v1308
      %v1389 = vunpack.c.l.b16 %v1309
      %v1390 = vunpack.c.h.b16 %v1309
      %v1391 = vunpack.c.l.b16 %v1310
      %v1392 = vunpack.c.h.b16 %v1310
      %v1393 = vunpack.c.l.b16 %v1311
      %v1394 = vunpack.c.h.b16 %v1311
      %v1395 = vunpack.c.l.b16 %v1312
      %v1396 = vunpack.c.h.b16 %v1312
      %v1397 = vunpack.c.l.b16 %v1313
      %v1398 = vunpack.c.h.b16 %v1313
      %v1399 = vunpack.c.l.b16 %v1314
      %v1400 = vunpack.c.h.b16 %v1314
      %v1401 = vunpack.c.l.b16 %v1315
      %v1402 = vunpack.c.h.b16 %v1315
      %v1403 = vunpack.c.l.b16 %v1316
      %v1404 = vunpack.c.h.b16 %v1316
      %v1405 = vunpack.c.l.b16 %v1317
      %v1406 = vunpack.c.h.b16 %v1317
      %v1407 = vunpack.c.l.b16 %v1318
      %v1408 = vunpack.c.h.b16 %v1318
      %v1409 = vunpack.c.l.b16 %v1319
      %v1410 = vunpack.c.h.b16 %v1319
      %v1411 = vunpack.c.l.b16 %v1320
      %v1412 = vunpack.c.h.b16 %v1320
      %v1413 = vunpack.c.l.b16 %v1321
      %v1414 = vunpack.c.h.b16 %v1321
      %v1415 = vunpack.c.l.b16 %v1322
      %v1416 = vunpack.c.h.b16 %v1322
      %v1417 = vunpack.c.l.b16 %v1323
      %v1418 = vunpack.c.h.b16 %v1323
      %v1419 = vunpack.c.l.b16 %v1324
      %v1420 = vunpack.c.h.b16 %v1324
      %v1421 = vpack.c.b16 %v1361, %v1357
      %v1422 = vpack.c.b16 %v1362, %v1358
      %v1423 = vpack.c.b16 %v1363, %v1359
      %v1424 = vpack.c.b16 %v1364, %v1360
      %v1425 = vpack.c.b16 %v1369, %v1365
      %v1426 = vpack.c.b16 %v1370, %v1366
      %v1427 = vpack.c.b16 %v1371, %v1367
      %v1428 = vpack.c.b16 %v1372, %v1368
      %v1429 = vpack.c.b16 %v1377, %v1373
      %v1430 = vpack.c.b16 %v1378, %v1374
      %v1431 = vpack.c.b16 %v1379, %v1375
      %v1432 = vpack.c.b16 %v1380, %v1376
      %v1433 = vpack.c.b16 %v1385, %v1381
      %v1434 = vpack.c.b16 %v1386, %v1382
      %v1435 = vpack.c.b16 %v1387, %v1383
      %v1436 = vpack.c.b16 %v1388, %v1384
      %v1437 = vpack.c.b16 %v1393, %v1389
      %v1438 = vpack.c.b16 %v1394, %v1390
      %v1439 = vpack.c.b16 %v1395, %v1391
      %v1440 = vpack.c.b16 %v1396, %v1392
      %v1441 = vpack.c.b16 %v1401, %v1397
      %v1442 = vpack.c.b16 %v1402, %v1398
      %v1443 = vpack.c.b16 %v1403, %v1399
      %v1444 = vpack.c.b16 %v1404, %v1400
      %v1445 = vpack.c.b16 %v1409, %v1405
      %v1446 = vpack.c.b16 %v1410, %v1406
      %v1447 = vpack.c.b16 %v1411, %v1407
      %v1448 = vpack.c.b16 %v1412, %v1408
      %v1449 = vpack.c.b16 %v1417, %v1413
      %v1450 = vpack.c.b16 %v1418, %v1414
      %v1451 = vpack.c.b16 %v1419, %v1415
      %v1452 = vpack.c.b16 %v1420, %v1416
      %1485 = vmatpush.bf16.msra.mxu0 %v1449
      %1486 = vmatpush.bf16.msra.mxu0 %v1445
      %1487 = vmatpush.bf16.msra.mxu0 %v1441
      %1488 = vmatpush.bf16.msra.mxu0 %v1437
      %1489 = vmatpush.bf16.msra.mxu0 %v1433
      %1490 = vmatpush.bf16.msra.mxu0 %v1429
      %1491 = vmatpush.bf16.msra.mxu0 %v1425
      %1492 = vmatpush.bf16.msra.mxu0 %v1421
      %1493 = vmatmul.bf16.gmra.mxu0 %v713
      %v1494 = vpop.f32.mrf.mxu0
      %v1495 = vadd.f32 0.0, %v1494
      %v1496 = vpop.f32.mrf.mxu0
      %v1497 = vadd.f32 0.0, %v1496
      %1498 = vdwg.mxu0
      %1499 = vmatpush.bf16.msra.mxu0 %v1450
      %1500 = vmatpush.bf16.msra.mxu0 %v1446
      %1501 = vmatpush.bf16.msra.mxu0 %v1442
      %1502 = vmatpush.bf16.msra.mxu0 %v1438
      %1503 = vmatpush.bf16.msra.mxu0 %v1434
      %1504 = vmatpush.bf16.msra.mxu0 %v1430
      %1505 = vmatpush.bf16.msra.mxu0 %v1426
      %1506 = vmatpush.bf16.msra.mxu0 %v1422
      %1507 = vmatmul.bf16.gmra.mxu0 %v713
      %v1508 = vpop.f32.mrf.mxu0
      %v1509 = vadd.f32 0.0, %v1508
      %v1510 = vpop.f32.mrf.mxu0
      %v1511 = vadd.f32 0.0, %v1510
      %1512 = vdwg.mxu0
      %1513 = vmatpush.bf16.msra.mxu0 %v1451
      %1514 = vmatpush.bf16.msra.mxu0 %v1447
      %1515 = vmatpush.bf16.msra.mxu0 %v1443
      %1516 = vmatpush.bf16.msra.mxu0 %v1439
      %1517 = vmatpush.bf16.msra.mxu0 %v1435
      %1518 = vmatpush.bf16.msra.mxu0 %v1431
      %1519 = vmatpush.bf16.msra.mxu0 %v1427
      %1520 = vmatpush.bf16.msra.mxu0 %v1423
      %1521 = vmatmul.bf16.gmra.mxu0 %v713
      %v1522 = vpop.f32.mrf.mxu0
      %v1523 = vadd.f32 0.0, %v1522
      %v1524 = vpop.f32.mrf.mxu0
      %v1525 = vadd.f32 0.0, %v1524
      %1526 = vdwg.mxu0
      %1527 = vmatpush.bf16.msra.mxu0 %v1452
      %1528 = vmatpush.bf16.msra.mxu0 %v1448
      %1529 = vmatpush.bf16.msra.mxu0 %v1444
      %1530 = vmatpush.bf16.msra.mxu0 %v1440
      %1531 = vmatpush.bf16.msra.mxu0 %v1436
      %1532 = vmatpush.bf16.msra.mxu0 %v1432
      %1533 = vmatpush.bf16.msra.mxu0 %v1428
      %1534 = vmatpush.bf16.msra.mxu0 %v1424
      %1535 = vmatmul.bf16.gmra.mxu0 %v713
      %v1536 = vpop.f32.mrf.mxu0
      %v1537 = vadd.f32 0.0, %v1536
      %v1538 = vpop.f32.mrf.mxu0
      %v1539 = vadd.f32 0.0, %v1538
      %1540 = vdwg.mxu0
      %v1543 = vunpack.c.l.b16 %v1259
      %v1544 = vunpack.c.l.b16 %v1260
      %v1545 = vpack.c.b16 %v1544, %v1543
      %v1579 = vunpack.c.l.b16 %v1261
      %v1580 = vunpack.c.h.b16 %v1261
      %v1581 = vunpack.c.l.b16 %v1262
      %v1582 = vunpack.c.h.b16 %v1262
      %v1583 = vunpack.c.l.b16 %v1263
      %v1584 = vunpack.c.h.b16 %v1263
      %v1585 = vunpack.c.l.b16 %v1264
      %v1586 = vunpack.c.h.b16 %v1264
      %v1587 = vunpack.c.l.b16 %v1265
      %v1588 = vunpack.c.h.b16 %v1265
      %v1589 = vunpack.c.l.b16 %v1266
      %v1590 = vunpack.c.h.b16 %v1266
      %v1591 = vunpack.c.l.b16 %v1267
      %v1592 = vunpack.c.h.b16 %v1267
      %v1593 = vunpack.c.l.b16 %v1268
      %v1594 = vunpack.c.h.b16 %v1268
      %v1595 = vunpack.c.l.b16 %v1269
      %v1596 = vunpack.c.h.b16 %v1269
      %v1597 = vunpack.c.l.b16 %v1270
      %v1598 = vunpack.c.h.b16 %v1270
      %v1599 = vunpack.c.l.b16 %v1271
      %v1600 = vunpack.c.h.b16 %v1271
      %v1601 = vunpack.c.l.b16 %v1272
      %v1602 = vunpack.c.h.b16 %v1272
      %v1603 = vunpack.c.l.b16 %v1273
      %v1604 = vunpack.c.h.b16 %v1273
      %v1605 = vunpack.c.l.b16 %v1274
      %v1606 = vunpack.c.h.b16 %v1274
      %v1607 = vunpack.c.l.b16 %v1275
      %v1608 = vunpack.c.h.b16 %v1275
      %v1609 = vunpack.c.l.b16 %v1276
      %v1610 = vunpack.c.h.b16 %v1276
      %v1611 = vunpack.c.l.b16 %v1277
      %v1612 = vunpack.c.h.b16 %v1277
      %v1613 = vunpack.c.l.b16 %v1278
      %v1614 = vunpack.c.h.b16 %v1278
      %v1615 = vunpack.c.l.b16 %v1279
      %v1616 = vunpack.c.h.b16 %v1279
      %v1617 = vunpack.c.l.b16 %v1280
      %v1618 = vunpack.c.h.b16 %v1280
      %v1619 = vunpack.c.l.b16 %v1281
      %v1620 = vunpack.c.h.b16 %v1281
      %v1621 = vunpack.c.l.b16 %v1282
      %v1622 = vunpack.c.h.b16 %v1282
      %v1623 = vunpack.c.l.b16 %v1283
      %v1624 = vunpack.c.h.b16 %v1283
      %v1625 = vunpack.c.l.b16 %v1284
      %v1626 = vunpack.c.h.b16 %v1284
      %v1627 = vunpack.c.l.b16 %v1285
      %v1628 = vunpack.c.h.b16 %v1285
      %v1629 = vunpack.c.l.b16 %v1286
      %v1630 = vunpack.c.h.b16 %v1286
      %v1631 = vunpack.c.l.b16 %v1287
      %v1632 = vunpack.c.h.b16 %v1287
      %v1633 = vunpack.c.l.b16 %v1288
      %v1634 = vunpack.c.h.b16 %v1288
      %v1635 = vunpack.c.l.b16 %v1289
      %v1636 = vunpack.c.h.b16 %v1289
      %v1637 = vunpack.c.l.b16 %v1290
      %v1638 = vunpack.c.h.b16 %v1290
      %v1639 = vunpack.c.l.b16 %v1291
      %v1640 = vunpack.c.h.b16 %v1291
      %v1641 = vunpack.c.l.b16 %v1292
      %v1642 = vunpack.c.h.b16 %v1292
      %v1643 = vpack.c.b16 %v1583, %v1579
      %v1644 = vpack.c.b16 %v1584, %v1580
      %v1645 = vpack.c.b16 %v1585, %v1581
      %v1646 = vpack.c.b16 %v1586, %v1582
      %v1647 = vpack.c.b16 %v1591, %v1587
      %v1648 = vpack.c.b16 %v1592, %v1588
      %v1649 = vpack.c.b16 %v1593, %v1589
      %v1650 = vpack.c.b16 %v1594, %v1590
      %v1651 = vpack.c.b16 %v1599, %v1595
      %v1652 = vpack.c.b16 %v1600, %v1596
      %v1653 = vpack.c.b16 %v1601, %v1597
      %v1654 = vpack.c.b16 %v1602, %v1598
      %v1655 = vpack.c.b16 %v1607, %v1603
      %v1656 = vpack.c.b16 %v1608, %v1604
      %v1657 = vpack.c.b16 %v1609, %v1605
      %v1658 = vpack.c.b16 %v1610, %v1606
      %v1659 = vpack.c.b16 %v1615, %v1611
      %v1660 = vpack.c.b16 %v1616, %v1612
      %v1661 = vpack.c.b16 %v1617, %v1613
      %v1662 = vpack.c.b16 %v1618, %v1614
      %v1663 = vpack.c.b16 %v1623, %v1619
      %v1664 = vpack.c.b16 %v1624, %v1620
      %v1665 = vpack.c.b16 %v1625, %v1621
      %v1666 = vpack.c.b16 %v1626, %v1622
      %v1667 = vpack.c.b16 %v1631, %v1627
      %v1668 = vpack.c.b16 %v1632, %v1628
      %v1669 = vpack.c.b16 %v1633, %v1629
      %v1670 = vpack.c.b16 %v1634, %v1630
      %v1671 = vpack.c.b16 %v1639, %v1635
      %v1672 = vpack.c.b16 %v1640, %v1636
      %v1673 = vpack.c.b16 %v1641, %v1637
      %v1674 = vpack.c.b16 %v1642, %v1638
      %1707 = vmatpush.bf16.msra.mxu0 %v1671
      %1708 = vmatpush.bf16.msra.mxu0 %v1667
      %1709 = vmatpush.bf16.msra.mxu0 %v1663
      %1710 = vmatpush.bf16.msra.mxu0 %v1659
      %1711 = vmatpush.bf16.msra.mxu0 %v1655
      %1712 = vmatpush.bf16.msra.mxu0 %v1651
      %1713 = vmatpush.bf16.msra.mxu0 %v1647
      %1714 = vmatpush.bf16.msra.mxu0 %v1643
      %1715 = vmatmul.bf16.gmra.mxu0 %v1545
      %v1716 = vpop.f32.mrf.mxu0
      %v1717 = vadd.f32 %v1495, %v1716
      %v1718 = vpop.f32.mrf.mxu0
      %v1719 = vadd.f32 %v1497, %v1718
      %1720 = vdwg.mxu0
      %1721 = vmatpush.bf16.msra.mxu0 %v1672
      %1722 = vmatpush.bf16.msra.mxu0 %v1668
      %1723 = vmatpush.bf16.msra.mxu0 %v1664
      %1724 = vmatpush.bf16.msra.mxu0 %v1660
      %1725 = vmatpush.bf16.msra.mxu0 %v1656
      %1726 = vmatpush.bf16.msra.mxu0 %v1652
      %1727 = vmatpush.bf16.msra.mxu0 %v1648
      %1728 = vmatpush.bf16.msra.mxu0 %v1644
      %1729 = vmatmul.bf16.gmra.mxu0 %v1545
      %v1730 = vpop.f32.mrf.mxu0
      %v1731 = vadd.f32 %v1509, %v1730
      %v1732 = vpop.f32.mrf.mxu0
      %v1733 = vadd.f32 %v1511, %v1732
      %1734 = vdwg.mxu0
      %1735 = vmatpush.bf16.msra.mxu0 %v1673
      %1736 = vmatpush.bf16.msra.mxu0 %v1669
      %1737 = vmatpush.bf16.msra.mxu0 %v1665
      %1738 = vmatpush.bf16.msra.mxu0 %v1661
      %1739 = vmatpush.bf16.msra.mxu0 %v1657
      %1740 = vmatpush.bf16.msra.mxu0 %v1653
      %1741 = vmatpush.bf16.msra.mxu0 %v1649
      %1742 = vmatpush.bf16.msra.mxu0 %v1645
      %1743 = vmatmul.bf16.gmra.mxu0 %v1545
      %v1744 = vpop.f32.mrf.mxu0
      %v1745 = vadd.f32 %v1523, %v1744
      %v1746 = vpop.f32.mrf.mxu0
      %v1747 = vadd.f32 %v1525, %v1746
      %1748 = vdwg.mxu0
      %1749 = vmatpush.bf16.msra.mxu0 %v1674
      %1750 = vmatpush.bf16.msra.mxu0 %v1670
      %1751 = vmatpush.bf16.msra.mxu0 %v1666
      %1752 = vmatpush.bf16.msra.mxu0 %v1662
      %1753 = vmatpush.bf16.msra.mxu0 %v1658
      %1754 = vmatpush.bf16.msra.mxu0 %v1654
      %1755 = vmatpush.bf16.msra.mxu0 %v1650
      %1756 = vmatpush.bf16.msra.mxu0 %v1646
      %1757 = vmatmul.bf16.gmra.mxu0 %v1545
      %v1758 = vpop.f32.mrf.mxu0
      %v1759 = vadd.f32 %v1537, %v1758
      %v1760 = vpop.f32.mrf.mxu0
      %v1761 = vadd.f32 %v1539, %v1760
      %1762 = vdwg.mxu0
      %v1763 = vadd.f32 %v1717, %v147
      %v1764 = vadd.f32 %v1731, %v148
      %v1765 = vadd.f32 %v1745, %v149
      %v1766 = vadd.f32 %v1759, %v150
      %v1767 = vadd.f32 %v1719, %v147
      %v1768 = vadd.f32 %v1733, %v148
      %v1769 = vadd.f32 %v1747, %v149
      %v1770 = vadd.f32 %v1761, %v150
      %v1771 = vmul.f32 %v1763, 0.5
      %v1772 = vmul.f32 %v1767, 0.5
      %v1773 = vtanh.pop %v1771
      %v1774 = vtanh.pop %v1772
      %v1775 = vmul.f32 %v1773, 0.5
      %v1776 = vmul.f32 %v1774, 0.5
      %v1777 = vadd.f32 %v1775, 0.5
      %v1778 = vadd.f32 %v1776, 0.5
      %v1779 = vmul.f32 %v1764, 0.5
      %v1780 = vmul.f32 %v1768, 0.5
      %v1781 = vtanh.pop %v1779
      %v1782 = vtanh.pop %v1780
      %v1783 = vmul.f32 %v1781, 0.5
      %v1784 = vmul.f32 %v1782, 0.5
      %v1785 = vadd.f32 %v1783, 0.5
      %v1786 = vadd.f32 %v1784, 0.5
      %v1787 = vtanh.pop %v1765
      %v1788 = vtanh.pop %v1769
      %v1789 = vmul.f32 %v1766, 0.5
      %v1790 = vmul.f32 %v1770, 0.5
      %v1791 = vtanh.pop %v1789
      %v1792 = vtanh.pop %v1790
      %v1793 = vmul.f32 %v1791, 0.5
      %v1794 = vmul.f32 %v1792, 0.5
      %v1795 = vadd.f32 %v1793, 0.5
      %v1796 = vadd.f32 %v1794, 0.5
      %v1797 = vmul.f32 %v1785, %v707
      %v1798 = vmul.f32 %v1786, %v708
      %v1799 = vmul.f32 %v1777, %v1787
      %v1800 = vmul.f32 %v1778, %v1788
      %v1801 = vadd.f32 %v1797, %v1799
      %v1802 = vadd.f32 %v1798, %v1800
      %v1803 = vtanh.pop %v1801
      %v1804 = vtanh.pop %v1802
      %v1805 = vmul.f32 %v1795, %v1803
      %v1806 = vmul.f32 %v1796, %v1804
      %v1807 = vpack.c.bf16 %v1806, %v1805
      %v1808 = vld [vmem:[#allocation11] sm:$0xff]
      %v1809 = vld [vmem:[#allocation11 + $0x8] sm:$0xff]
      %v1810 = vld [vmem:[#allocation11 + $0x10] sm:$0xff]
      %v1811 = vld [vmem:[#allocation11 + $0x18] sm:$0xff]
      %v1812 = vld [vmem:[#allocation11 + $0x20] sm:$0xff]
      %v1813 = vld [vmem:[#allocation11 + $0x28] sm:$0xff]
      %v1814 = vld [vmem:[#allocation11 + $0x30] sm:$0xff]
      %v1815 = vld [vmem:[#allocation11 + $0x38] sm:$0xff]
      %v1816 = vld [vmem:[#allocation11 + $0x40] sm:$0xff]
      %v1817 = vld [vmem:[#allocation11 + $0x48] sm:$0xff]
      %v1818 = vld [vmem:[#allocation11 + $0x50] sm:$0xff]
      %v1819 = vld [vmem:[#allocation11 + $0x58] sm:$0xff]
      %v1820 = vld [vmem:[#allocation11 + $0x60] sm:$0xff]
      %v1821 = vld [vmem:[#allocation11 + $0x68] sm:$0xff]
      %v1822 = vld [vmem:[#allocation11 + $0x70] sm:$0xff]
      %v1823 = vld [vmem:[#allocation11 + $0x78] sm:$0xff]
      %v1824 = vld [vmem:[#allocation11 + $0x80] sm:$0xff]
      %v1825 = vld [vmem:[#allocation11 + $0x88] sm:$0xff]
      %v1826 = vld [vmem:[#allocation11 + $0x90] sm:$0xff]
      %v1827 = vld [vmem:[#allocation11 + $0x98] sm:$0xff]
      %v1828 = vld [vmem:[#allocation11 + $0xa0] sm:$0xff]
      %v1829 = vld [vmem:[#allocation11 + $0xa8] sm:$0xff]
      %v1830 = vld [vmem:[#allocation11 + $0xb0] sm:$0xff]
      %v1831 = vld [vmem:[#allocation11 + $0xb8] sm:$0xff]
      %v1832 = vld [vmem:[#allocation11 + $0xc0] sm:$0xff]
      %v1833 = vld [vmem:[#allocation11 + $0xc8] sm:$0xff]
      %v1834 = vld [vmem:[#allocation11 + $0xd0] sm:$0xff]
      %v1835 = vld [vmem:[#allocation11 + $0xd8] sm:$0xff]
      %v1836 = vld [vmem:[#allocation11 + $0xe0] sm:$0xff]
      %v1837 = vld [vmem:[#allocation11 + $0xe8] sm:$0xff]
      %v1838 = vld [vmem:[#allocation11 + $0xf0] sm:$0xff]
      %v1839 = vld [vmem:[#allocation11 + $0xf8] sm:$0xff]
      %v1840 = vld [vmem:[#allocation12] sm:$0xff]
      %v1841 = vld [vmem:[#allocation12 + $0x8] sm:$0xff]
      %v1842 = vld [vmem:[#allocation12 + $0x10] sm:$0xff]
      %v1843 = vld [vmem:[#allocation12 + $0x18] sm:$0xff]
      %v1844 = vld [vmem:[#allocation12 + $0x20] sm:$0xff]
      %v1845 = vld [vmem:[#allocation12 + $0x28] sm:$0xff]
      %v1846 = vld [vmem:[#allocation12 + $0x30] sm:$0xff]
      %v1847 = vld [vmem:[#allocation12 + $0x38] sm:$0xff]
      %v1848 = vld [vmem:[#allocation12 + $0x40] sm:$0xff]
      %v1849 = vld [vmem:[#allocation12 + $0x48] sm:$0xff]
      %v1850 = vld [vmem:[#allocation12 + $0x50] sm:$0xff]
      %v1851 = vld [vmem:[#allocation12 + $0x58] sm:$0xff]
      %v1852 = vld [vmem:[#allocation12 + $0x60] sm:$0xff]
      %v1853 = vld [vmem:[#allocation12 + $0x68] sm:$0xff]
      %v1854 = vld [vmem:[#allocation12 + $0x70] sm:$0xff]
      %v1855 = vld [vmem:[#allocation12 + $0x78] sm:$0xff]
      %v1856 = vld [vmem:[#allocation12 + $0x80] sm:$0xff]
      %v1857 = vld [vmem:[#allocation12 + $0x88] sm:$0xff]
      %v1858 = vld [vmem:[#allocation12 + $0x90] sm:$0xff]
      %v1859 = vld [vmem:[#allocation12 + $0x98] sm:$0xff]
      %v1860 = vld [vmem:[#allocation12 + $0xa0] sm:$0xff]
      %v1861 = vld [vmem:[#allocation12 + $0xa8] sm:$0xff]
      %v1862 = vld [vmem:[#allocation12 + $0xb0] sm:$0xff]
      %v1863 = vld [vmem:[#allocation12 + $0xb8] sm:$0xff]
      %v1864 = vld [vmem:[#allocation12 + $0xc0] sm:$0xff]
      %v1865 = vld [vmem:[#allocation12 + $0xc8] sm:$0xff]
      %v1866 = vld [vmem:[#allocation12 + $0xd0] sm:$0xff]
      %v1867 = vld [vmem:[#allocation12 + $0xd8] sm:$0xff]
      %v1868 = vld [vmem:[#allocation12 + $0xe0] sm:$0xff]
      %v1869 = vld [vmem:[#allocation12 + $0xe8] sm:$0xff]
      %v1870 = vld [vmem:[#allocation12 + $0xf0] sm:$0xff]
      %v1871 = vld [vmem:[#allocation12 + $0xf8] sm:$0xff]
      %v1874 = vunpack.c.l.b16 %v1254
      %v1875 = vunpack.c.l.b16 %v1255
      %v1876 = vpack.c.b16 %v1875, %v1874
      %v1910 = vunpack.c.l.b16 %v1840
      %v1911 = vunpack.c.h.b16 %v1840
      %v1912 = vunpack.c.l.b16 %v1841
      %v1913 = vunpack.c.h.b16 %v1841
      %v1914 = vunpack.c.l.b16 %v1842
      %v1915 = vunpack.c.h.b16 %v1842
      %v1916 = vunpack.c.l.b16 %v1843
      %v1917 = vunpack.c.h.b16 %v1843
      %v1918 = vunpack.c.l.b16 %v1844
      %v1919 = vunpack.c.h.b16 %v1844
      %v1920 = vunpack.c.l.b16 %v1845
      %v1921 = vunpack.c.h.b16 %v1845
      %v1922 = vunpack.c.l.b16 %v1846
      %v1923 = vunpack.c.h.b16 %v1846
      %v1924 = vunpack.c.l.b16 %v1847
      %v1925 = vunpack.c.h.b16 %v1847
      %v1926 = vunpack.c.l.b16 %v1848
      %v1927 = vunpack.c.h.b16 %v1848
      %v1928 = vunpack.c.l.b16 %v1849
      %v1929 = vunpack.c.h.b16 %v1849
      %v1930 = vunpack.c.l.b16 %v1850
      %v1931 = vunpack.c.h.b16 %v1850
      %v1932 = vunpack.c.l.b16 %v1851
      %v1933 = vunpack.c.h.b16 %v1851
      %v1934 = vunpack.c.l.b16 %v1852
      %v1935 = vunpack.c.h.b16 %v1852
      %v1936 = vunpack.c.l.b16 %v1853
      %v1937 = vunpack.c.h.b16 %v1853
      %v1938 = vunpack.c.l.b16 %v1854
      %v1939 = vunpack.c.h.b16 %v1854
      %v1940 = vunpack.c.l.b16 %v1855
      %v1941 = vunpack.c.h.b16 %v1855
      %v1942 = vunpack.c.l.b16 %v1856
      %v1943 = vunpack.c.h.b16 %v1856
      %v1944 = vunpack.c.l.b16 %v1857
      %v1945 = vunpack.c.h.b16 %v1857
      %v1946 = vunpack.c.l.b16 %v1858
      %v1947 = vunpack.c.h.b16 %v1858
      %v1948 = vunpack.c.l.b16 %v1859
      %v1949 = vunpack.c.h.b16 %v1859
      %v1950 = vunpack.c.l.b16 %v1860
      %v1951 = vunpack.c.h.b16 %v1860
      %v1952 = vunpack.c.l.b16 %v1861
      %v1953 = vunpack.c.h.b16 %v1861
      %v1954 = vunpack.c.l.b16 %v1862
      %v1955 = vunpack.c.h.b16 %v1862
      %v1956 = vunpack.c.l.b16 %v1863
      %v1957 = vunpack.c.h.b16 %v1863
      %v1958 = vunpack.c.l.b16 %v1864
      %v1959 = vunpack.c.h.b16 %v1864
      %v1960 = vunpack.c.l.b16 %v1865
      %v1961 = vunpack.c.h.b16 %v1865
      %v1962 = vunpack.c.l.b16 %v1866
      %v1963 = vunpack.c.h.b16 %v1866
      %v1964 = vunpack.c.l.b16 %v1867
      %v1965 = vunpack.c.h.b16 %v1867
      %v1966 = vunpack.c.l.b16 %v1868
      %v1967 = vunpack.c.h.b16 %v1868
      %v1968 = vunpack.c.l.b16 %v1869
      %v1969 = vunpack.c.h.b16 %v1869
      %v1970 = vunpack.c.l.b16 %v1870
      %v1971 = vunpack.c.h.b16 %v1870
      %v1972 = vunpack.c.l.b16 %v1871
      %v1973 = vunpack.c.h.b16 %v1871
      %v1974 = vpack.c.b16 %v1914, %v1910
      %v1975 = vpack.c.b16 %v1915, %v1911
      %v1976 = vpack.c.b16 %v1916, %v1912
      %v1977 = vpack.c.b16 %v1917, %v1913
      %v1978 = vpack.c.b16 %v1922, %v1918
      %v1979 = vpack.c.b16 %v1923, %v1919
      %v1980 = vpack.c.b16 %v1924, %v1920
      %v1981 = vpack.c.b16 %v1925, %v1921
      %v1982 = vpack.c.b16 %v1930, %v1926
      %v1983 = vpack.c.b16 %v1931, %v1927
      %v1984 = vpack.c.b16 %v1932, %v1928
      %v1985 = vpack.c.b16 %v1933, %v1929
      %v1986 = vpack.c.b16 %v1938, %v1934
      %v1987 = vpack.c.b16 %v1939, %v1935
      %v1988 = vpack.c.b16 %v1940, %v1936
      %v1989 = vpack.c.b16 %v1941, %v1937
      %v1990 = vpack.c.b16 %v1946, %v1942
      %v1991 = vpack.c.b16 %v1947, %v1943
      %v1992 = vpack.c.b16 %v1948, %v1944
      %v1993 = vpack.c.b16 %v1949, %v1945
      %v1994 = vpack.c.b16 %v1954, %v1950
      %v1995 = vpack.c.b16 %v1955, %v1951
      %v1996 = vpack.c.b16 %v1956, %v1952
      %v1997 = vpack.c.b16 %v1957, %v1953
      %v1998 = vpack.c.b16 %v1962, %v1958
      %v1999 = vpack.c.b16 %v1963, %v1959
      %v2000 = vpack.c.b16 %v1964, %v1960
      %v2001 = vpack.c.b16 %v1965, %v1961
      %v2002 = vpack.c.b16 %v1970, %v1966
      %v2003 = vpack.c.b16 %v1971, %v1967
      %v2004 = vpack.c.b16 %v1972, %v1968
      %v2005 = vpack.c.b16 %v1973, %v1969
      %2038 = vmatpush.bf16.msra.mxu0 %v2002
      %2039 = vmatpush.bf16.msra.mxu0 %v1998
      %2040 = vmatpush.bf16.msra.mxu0 %v1994
      %2041 = vmatpush.bf16.msra.mxu0 %v1990
      %2042 = vmatpush.bf16.msra.mxu0 %v1986
      %2043 = vmatpush.bf16.msra.mxu0 %v1982
      %2044 = vmatpush.bf16.msra.mxu0 %v1978
      %2045 = vmatpush.bf16.msra.mxu0 %v1974
      %2046 = vmatmul.bf16.gmra.mxu0 %v1876
      %v2047 = vpop.f32.mrf.mxu0
      %v2048 = vadd.f32 0.0, %v2047
      %v2049 = vpop.f32.mrf.mxu0
      %v2050 = vadd.f32 0.0, %v2049
      %2051 = vdwg.mxu0
      %2052 = vmatpush.bf16.msra.mxu0 %v2003
      %2053 = vmatpush.bf16.msra.mxu0 %v1999
      %2054 = vmatpush.bf16.msra.mxu0 %v1995
      %2055 = vmatpush.bf16.msra.mxu0 %v1991
      %2056 = vmatpush.bf16.msra.mxu0 %v1987
      %2057 = vmatpush.bf16.msra.mxu0 %v1983
      %2058 = vmatpush.bf16.msra.mxu0 %v1979
      %2059 = vmatpush.bf16.msra.mxu0 %v1975
      %2060 = vmatmul.bf16.gmra.mxu0 %v1876
      %v2061 = vpop.f32.mrf.mxu0
      %v2062 = vadd.f32 0.0, %v2061
      %v2063 = vpop.f32.mrf.mxu0
      %v2064 = vadd.f32 0.0, %v2063
      %2065 = vdwg.mxu0
      %2066 = vmatpush.bf16.msra.mxu0 %v2004
      %2067 = vmatpush.bf16.msra.mxu0 %v2000
      %2068 = vmatpush.bf16.msra.mxu0 %v1996
      %2069 = vmatpush.bf16.msra.mxu0 %v1992
      %2070 = vmatpush.bf16.msra.mxu0 %v1988
      %2071 = vmatpush.bf16.msra.mxu0 %v1984
      %2072 = vmatpush.bf16.msra.mxu0 %v1980
      %2073 = vmatpush.bf16.msra.mxu0 %v1976
      %2074 = vmatmul.bf16.gmra.mxu0 %v1876
      %v2075 = vpop.f32.mrf.mxu0
      %v2076 = vadd.f32 0.0, %v2075
      %v2077 = vpop.f32.mrf.mxu0
      %v2078 = vadd.f32 0.0, %v2077
      %2079 = vdwg.mxu0
      %2080 = vmatpush.bf16.msra.mxu0 %v2005
      %2081 = vmatpush.bf16.msra.mxu0 %v2001
      %2082 = vmatpush.bf16.msra.mxu0 %v1997
      %2083 = vmatpush.bf16.msra.mxu0 %v1993
      %2084 = vmatpush.bf16.msra.mxu0 %v1989
      %2085 = vmatpush.bf16.msra.mxu0 %v1985
      %2086 = vmatpush.bf16.msra.mxu0 %v1981
      %2087 = vmatpush.bf16.msra.mxu0 %v1977
      %2088 = vmatmul.bf16.gmra.mxu0 %v1876
      %v2089 = vpop.f32.mrf.mxu0
      %v2090 = vadd.f32 0.0, %v2089
      %v2091 = vpop.f32.mrf.mxu0
      %v2092 = vadd.f32 0.0, %v2091
      %2093 = vdwg.mxu0
      %v2126 = vunpack.c.l.b16 %v1808
      %v2127 = vunpack.c.h.b16 %v1808
      %v2128 = vunpack.c.l.b16 %v1809
      %v2129 = vunpack.c.h.b16 %v1809
      %v2130 = vunpack.c.l.b16 %v1810
      %v2131 = vunpack.c.h.b16 %v1810
      %v2132 = vunpack.c.l.b16 %v1811
      %v2133 = vunpack.c.h.b16 %v1811
      %v2134 = vunpack.c.l.b16 %v1812
      %v2135 = vunpack.c.h.b16 %v1812
      %v2136 = vunpack.c.l.b16 %v1813
      %v2137 = vunpack.c.h.b16 %v1813
      %v2138 = vunpack.c.l.b16 %v1814
      %v2139 = vunpack.c.h.b16 %v1814
      %v2140 = vunpack.c.l.b16 %v1815
      %v2141 = vunpack.c.h.b16 %v1815
      %v2142 = vunpack.c.l.b16 %v1816
      %v2143 = vunpack.c.h.b16 %v1816
      %v2144 = vunpack.c.l.b16 %v1817
      %v2145 = vunpack.c.h.b16 %v1817
      %v2146 = vunpack.c.l.b16 %v1818
      %v2147 = vunpack.c.h.b16 %v1818
      %v2148 = vunpack.c.l.b16 %v1819
      %v2149 = vunpack.c.h.b16 %v1819
      %v2150 = vunpack.c.l.b16 %v1820
      %v2151 = vunpack.c.h.b16 %v1820
      %v2152 = vunpack.c.l.b16 %v1821
      %v2153 = vunpack.c.h.b16 %v1821
      %v2154 = vunpack.c.l.b16 %v1822
      %v2155 = vunpack.c.h.b16 %v1822
      %v2156 = vunpack.c.l.b16 %v1823
      %v2157 = vunpack.c.h.b16 %v1823
      %v2158 = vunpack.c.l.b16 %v1824
      %v2159 = vunpack.c.h.b16 %v1824
      %v2160 = vunpack.c.l.b16 %v1825
      %v2161 = vunpack.c.h.b16 %v1825
      %v2162 = vunpack.c.l.b16 %v1826
      %v2163 = vunpack.c.h.b16 %v1826
      %v2164 = vunpack.c.l.b16 %v1827
      %v2165 = vunpack.c.h.b16 %v1827
      %v2166 = vunpack.c.l.b16 %v1828
      %v2167 = vunpack.c.h.b16 %v1828
      %v2168 = vunpack.c.l.b16 %v1829
      %v2169 = vunpack.c.h.b16 %v1829
      %v2170 = vunpack.c.l.b16 %v1830
      %v2171 = vunpack.c.h.b16 %v1830
      %v2172 = vunpack.c.l.b16 %v1831
      %v2173 = vunpack.c.h.b16 %v1831
      %v2174 = vunpack.c.l.b16 %v1832
      %v2175 = vunpack.c.h.b16 %v1832
      %v2176 = vunpack.c.l.b16 %v1833
      %v2177 = vunpack.c.h.b16 %v1833
      %v2178 = vunpack.c.l.b16 %v1834
      %v2179 = vunpack.c.h.b16 %v1834
      %v2180 = vunpack.c.l.b16 %v1835
      %v2181 = vunpack.c.h.b16 %v1835
      %v2182 = vunpack.c.l.b16 %v1836
      %v2183 = vunpack.c.h.b16 %v1836
      %v2184 = vunpack.c.l.b16 %v1837
      %v2185 = vunpack.c.h.b16 %v1837
      %v2186 = vunpack.c.l.b16 %v1838
      %v2187 = vunpack.c.h.b16 %v1838
      %v2188 = vunpack.c.l.b16 %v1839
      %v2189 = vunpack.c.h.b16 %v1839
      %v2190 = vpack.c.b16 %v2130, %v2126
      %v2191 = vpack.c.b16 %v2131, %v2127
      %v2192 = vpack.c.b16 %v2132, %v2128
      %v2193 = vpack.c.b16 %v2133, %v2129
      %v2194 = vpack.c.b16 %v2138, %v2134
      %v2195 = vpack.c.b16 %v2139, %v2135
      %v2196 = vpack.c.b16 %v2140, %v2136
      %v2197 = vpack.c.b16 %v2141, %v2137
      %v2198 = vpack.c.b16 %v2146, %v2142
      %v2199 = vpack.c.b16 %v2147, %v2143
      %v2200 = vpack.c.b16 %v2148, %v2144
      %v2201 = vpack.c.b16 %v2149, %v2145
      %v2202 = vpack.c.b16 %v2154, %v2150
      %v2203 = vpack.c.b16 %v2155, %v2151
      %v2204 = vpack.c.b16 %v2156, %v2152
      %v2205 = vpack.c.b16 %v2157, %v2153
      %v2206 = vpack.c.b16 %v2162, %v2158
      %v2207 = vpack.c.b16 %v2163, %v2159
      %v2208 = vpack.c.b16 %v2164, %v2160
      %v2209 = vpack.c.b16 %v2165, %v2161
      %v2210 = vpack.c.b16 %v2170, %v2166
      %v2211 = vpack.c.b16 %v2171, %v2167
      %v2212 = vpack.c.b16 %v2172, %v2168
      %v2213 = vpack.c.b16 %v2173, %v2169
      %v2214 = vpack.c.b16 %v2178, %v2174
      %v2215 = vpack.c.b16 %v2179, %v2175
      %v2216 = vpack.c.b16 %v2180, %v2176
      %v2217 = vpack.c.b16 %v2181, %v2177
      %v2218 = vpack.c.b16 %v2186, %v2182
      %v2219 = vpack.c.b16 %v2187, %v2183
      %v2220 = vpack.c.b16 %v2188, %v2184
      %v2221 = vpack.c.b16 %v2189, %v2185
      %2254 = vmatpush.bf16.msra.mxu0 %v2218
      %2255 = vmatpush.bf16.msra.mxu0 %v2214
      %2256 = vmatpush.bf16.msra.mxu0 %v2210
      %2257 = vmatpush.bf16.msra.mxu0 %v2206
      %2258 = vmatpush.bf16.msra.mxu0 %v2202
      %2259 = vmatpush.bf16.msra.mxu0 %v2198
      %2260 = vmatpush.bf16.msra.mxu0 %v2194
      %2261 = vmatpush.bf16.msra.mxu0 %v2190
      %2262 = vmatmul.bf16.gmra.mxu0 %v1807
      %v2263 = vpop.f32.mrf.mxu0
      %v2264 = vadd.f32 %v2048, %v2263
      %v2265 = vpop.f32.mrf.mxu0
      %v2266 = vadd.f32 %v2050, %v2265
      %2267 = vdwg.mxu0
      %2268 = vmatpush.bf16.msra.mxu0 %v2219
      %2269 = vmatpush.bf16.msra.mxu0 %v2215
      %2270 = vmatpush.bf16.msra.mxu0 %v2211
      %2271 = vmatpush.bf16.msra.mxu0 %v2207
      %2272 = vmatpush.bf16.msra.mxu0 %v2203
      %2273 = vmatpush.bf16.msra.mxu0 %v2199
      %2274 = vmatpush.bf16.msra.mxu0 %v2195
      %2275 = vmatpush.bf16.msra.mxu0 %v2191
      %2276 = vmatmul.bf16.gmra.mxu0 %v1807
      %v2277 = vpop.f32.mrf.mxu0
      %v2278 = vadd.f32 %v2062, %v2277
      %v2279 = vpop.f32.mrf.mxu0
      %v2280 = vadd.f32 %v2064, %v2279
      %2281 = vdwg.mxu0
      %2282 = vmatpush.bf16.msra.mxu0 %v2220
      %2283 = vmatpush.bf16.msra.mxu0 %v2216
      %2284 = vmatpush.bf16.msra.mxu0 %v2212
      %2285 = vmatpush.bf16.msra.mxu0 %v2208
      %2286 = vmatpush.bf16.msra.mxu0 %v2204
      %2287 = vmatpush.bf16.msra.mxu0 %v2200
      %2288 = vmatpush.bf16.msra.mxu0 %v2196
      %2289 = vmatpush.bf16.msra.mxu0 %v2192
      %2290 = vmatmul.bf16.gmra.mxu0 %v1807
      %v2291 = vpop.f32.mrf.mxu0
      %v2292 = vadd.f32 %v2076, %v2291
      %v2293 = vpop.f32.mrf.mxu0
      %v2294 = vadd.f32 %v2078, %v2293
      %2295 = vdwg.mxu0
      %2296 = vmatpush.bf16.msra.mxu0 %v2221
      %2297 = vmatpush.bf16.msra.mxu0 %v2217
      %2298 = vmatpush.bf16.msra.mxu0 %v2213
      %2299 = vmatpush.bf16.msra.mxu0 %v2209
      %2300 = vmatpush.bf16.msra.mxu0 %v2205
      %2301 = vmatpush.bf16.msra.mxu0 %v2201
      %2302 = vmatpush.bf16.msra.mxu0 %v2197
      %2303 = vmatpush.bf16.msra.mxu0 %v2193
      %2304 = vmatmul.bf16.gmra.mxu0 %v1807
      %v2305 = vpop.f32.mrf.mxu0
      %v2306 = vadd.f32 %v2090, %v2305
      %v2307 = vpop.f32.mrf.mxu0
      %v2308 = vadd.f32 %v2092, %v2307
      %2309 = vdwg.mxu0
      %v2310 = vadd.f32 %v2264, %v157
      %v2311 = vadd.f32 %v2278, %v158
      %v2312 = vadd.f32 %v2292, %v159
      %v2313 = vadd.f32 %v2306, %v160
      %v2314 = vadd.f32 %v2266, %v157
      %v2315 = vadd.f32 %v2280, %v158
      %v2316 = vadd.f32 %v2294, %v159
      %v2317 = vadd.f32 %v2308, %v160
      %v2318 = vmul.f32 %v2310, 0.5
      %v2319 = vmul.f32 %v2314, 0.5
      %v2320 = vtanh.pop %v2318
      %v2321 = vtanh.pop %v2319
      %v2322 = vmul.f32 %v2320, 0.5
      %v2323 = vmul.f32 %v2321, 0.5
      %v2324 = vadd.f32 %v2322, 0.5
      %v2325 = vadd.f32 %v2323, 0.5
      %v2326 = vmul.f32 %v2311, 0.5
      %v2327 = vmul.f32 %v2315, 0.5
      %v2328 = vtanh.pop %v2326
      %v2329 = vtanh.pop %v2327
      %v2330 = vmul.f32 %v2328, 0.5
      %v2331 = vmul.f32 %v2329, 0.5
      %v2332 = vadd.f32 %v2330, 0.5
      %v2333 = vadd.f32 %v2331, 0.5
      %v2334 = vtanh.pop %v2312
      %v2335 = vtanh.pop %v2316
      %v2336 = vmul.f32 %v2313, 0.5
      %v2337 = vmul.f32 %v2317, 0.5
      %v2338 = vtanh.pop %v2336
      %v2339 = vtanh.pop %v2337
      %v2340 = vmul.f32 %v2338, 0.5
      %v2341 = vmul.f32 %v2339, 0.5
      %v2342 = vadd.f32 %v2340, 0.5
      %v2343 = vadd.f32 %v2341, 0.5
      %v2344 = vmul.f32 %v2332, %v1248
      %v2345 = vmul.f32 %v2333, %v1249
      %v2346 = vmul.f32 %v2324, %v2334
      %v2347 = vmul.f32 %v2325, %v2335
      %v2348 = vadd.f32 %v2344, %v2346
      %v2349 = vadd.f32 %v2345, %v2347
      %v2350 = vtanh.pop %v2348
      %v2351 = vtanh.pop %v2349
      %v2352 = vmul.f32 %v2342, %v2350
      %v2353 = vmul.f32 %v2343, %v2351
      %v2354 = vpack.c.bf16 %v2352, %v2352
      %v2355 = vpack.c.bf16 %v2353, %v2353
      %s2356 = scalar_lea.vmem [#allocation2], 8
      %2357 = vst [vmem:[%s2356] sm:$0xf] %v2354
      %2358 = vst [vmem:[%s2356 + $0x4] sm:$0xf] %v2355
      %s2359 = scalar_lea.vmem [#allocation3], 16
      %v2360 = vld [vmem:[%s2359] sm:$0xf]
      %v2361 = vld [vmem:[%s2359 + $0x4] sm:$0xf]
      %v2362 = vld [vmem:[#allocation6] sm:$0xff]
      %v2363 = vld [vmem:[#allocation6 + $0x8] sm:$0xff]
      %v2364 = vld [vmem:[#allocation6 + $0x10] sm:$0xff]
      %v2365 = vld [vmem:[#allocation6 + $0x18] sm:$0xff]
      %v2366 = vld [vmem:[#allocation6 + $0x20] sm:$0xff]
      %v2367 = vld [vmem:[#allocation6 + $0x28] sm:$0xff]
      %v2368 = vld [vmem:[#allocation6 + $0x30] sm:$0xff]
      %v2369 = vld [vmem:[#allocation6 + $0x38] sm:$0xff]
      %v2370 = vld [vmem:[#allocation6 + $0x40] sm:$0xff]
      %v2371 = vld [vmem:[#allocation6 + $0x48] sm:$0xff]
      %v2372 = vld [vmem:[#allocation6 + $0x50] sm:$0xff]
      %v2373 = vld [vmem:[#allocation6 + $0x58] sm:$0xff]
      %v2374 = vld [vmem:[#allocation6 + $0x60] sm:$0xff]
      %v2375 = vld [vmem:[#allocation6 + $0x68] sm:$0xff]
      %v2376 = vld [vmem:[#allocation6 + $0x70] sm:$0xff]
      %v2377 = vld [vmem:[#allocation6 + $0x78] sm:$0xff]
      %v2378 = vld [vmem:[#allocation6 + $0x80] sm:$0xff]
      %v2379 = vld [vmem:[#allocation6 + $0x88] sm:$0xff]
      %v2380 = vld [vmem:[#allocation6 + $0x90] sm:$0xff]
      %v2381 = vld [vmem:[#allocation6 + $0x98] sm:$0xff]
      %v2382 = vld [vmem:[#allocation6 + $0xa0] sm:$0xff]
      %v2383 = vld [vmem:[#allocation6 + $0xa8] sm:$0xff]
      %v2384 = vld [vmem:[#allocation6 + $0xb0] sm:$0xff]
      %v2385 = vld [vmem:[#allocation6 + $0xb8] sm:$0xff]
      %v2386 = vld [vmem:[#allocation6 + $0xc0] sm:$0xff]
      %v2387 = vld [vmem:[#allocation6 + $0xc8] sm:$0xff]
      %v2388 = vld [vmem:[#allocation6 + $0xd0] sm:$0xff]
      %v2389 = vld [vmem:[#allocation6 + $0xd8] sm:$0xff]
      %v2390 = vld [vmem:[#allocation6 + $0xe0] sm:$0xff]
      %v2391 = vld [vmem:[#allocation6 + $0xe8] sm:$0xff]
      %v2392 = vld [vmem:[#allocation6 + $0xf0] sm:$0xff]
      %v2393 = vld [vmem:[#allocation6 + $0xf8] sm:$0xff]
      %v2394 = vld [vmem:[#allocation8] sm:$0xff]
      %v2395 = vld [vmem:[#allocation8 + $0x8] sm:$0xff]
      %v2396 = vld [vmem:[#allocation8 + $0x10] sm:$0xff]
      %v2397 = vld [vmem:[#allocation8 + $0x18] sm:$0xff]
      %v2398 = vld [vmem:[#allocation8 + $0x20] sm:$0xff]
      %v2399 = vld [vmem:[#allocation8 + $0x28] sm:$0xff]
      %v2400 = vld [vmem:[#allocation8 + $0x30] sm:$0xff]
      %v2401 = vld [vmem:[#allocation8 + $0x38] sm:$0xff]
      %v2402 = vld [vmem:[#allocation8 + $0x40] sm:$0xff]
      %v2403 = vld [vmem:[#allocation8 + $0x48] sm:$0xff]
      %v2404 = vld [vmem:[#allocation8 + $0x50] sm:$0xff]
      %v2405 = vld [vmem:[#allocation8 + $0x58] sm:$0xff]
      %v2406 = vld [vmem:[#allocation8 + $0x60] sm:$0xff]
      %v2407 = vld [vmem:[#allocation8 + $0x68] sm:$0xff]
      %v2408 = vld [vmem:[#allocation8 + $0x70] sm:$0xff]
      %v2409 = vld [vmem:[#allocation8 + $0x78] sm:$0xff]
      %v2410 = vld [vmem:[#allocation8 + $0x80] sm:$0xff]
      %v2411 = vld [vmem:[#allocation8 + $0x88] sm:$0xff]
      %v2412 = vld [vmem:[#allocation8 + $0x90] sm:$0xff]
      %v2413 = vld [vmem:[#allocation8 + $0x98] sm:$0xff]
      %v2414 = vld [vmem:[#allocation8 + $0xa0] sm:$0xff]
      %v2415 = vld [vmem:[#allocation8 + $0xa8] sm:$0xff]
      %v2416 = vld [vmem:[#allocation8 + $0xb0] sm:$0xff]
      %v2417 = vld [vmem:[#allocation8 + $0xb8] sm:$0xff]
      %v2418 = vld [vmem:[#allocation8 + $0xc0] sm:$0xff]
      %v2419 = vld [vmem:[#allocation8 + $0xc8] sm:$0xff]
      %v2420 = vld [vmem:[#allocation8 + $0xd0] sm:$0xff]
      %v2421 = vld [vmem:[#allocation8 + $0xd8] sm:$0xff]
      %v2422 = vld [vmem:[#allocation8 + $0xe0] sm:$0xff]
      %v2423 = vld [vmem:[#allocation8 + $0xe8] sm:$0xff]
      %v2424 = vld [vmem:[#allocation8 + $0xf0] sm:$0xff]
      %v2425 = vld [vmem:[#allocation8 + $0xf8] sm:$0xff]
      %v2458 = vunpack.c.l.b16 %v2394
      %v2459 = vunpack.c.h.b16 %v2394
      %v2460 = vunpack.c.l.b16 %v2395
      %v2461 = vunpack.c.h.b16 %v2395
      %v2462 = vunpack.c.l.b16 %v2396
      %v2463 = vunpack.c.h.b16 %v2396
      %v2464 = vunpack.c.l.b16 %v2397
      %v2465 = vunpack.c.h.b16 %v2397
      %v2466 = vunpack.c.l.b16 %v2398
      %v2467 = vunpack.c.h.b16 %v2398
      %v2468 = vunpack.c.l.b16 %v2399
      %v2469 = vunpack.c.h.b16 %v2399
      %v2470 = vunpack.c.l.b16 %v2400
      %v2471 = vunpack.c.h.b16 %v2400
      %v2472 = vunpack.c.l.b16 %v2401
      %v2473 = vunpack.c.h.b16 %v2401
      %v2474 = vunpack.c.l.b16 %v2402
      %v2475 = vunpack.c.h.b16 %v2402
      %v2476 = vunpack.c.l.b16 %v2403
      %v2477 = vunpack.c.h.b16 %v2403
      %v2478 = vunpack.c.l.b16 %v2404
      %v2479 = vunpack.c.h.b16 %v2404
      %v2480 = vunpack.c.l.b16 %v2405
      %v2481 = vunpack.c.h.b16 %v2405
      %v2482 = vunpack.c.l.b16 %v2406
      %v2483 = vunpack.c.h.b16 %v2406
      %v2484 = vunpack.c.l.b16 %v2407
      %v2485 = vunpack.c.h.b16 %v2407
      %v2486 = vunpack.c.l.b16 %v2408
      %v2487 = vunpack.c.h.b16 %v2408
      %v2488 = vunpack.c.l.b16 %v2409
      %v2489 = vunpack.c.h.b16 %v2409
      %v2490 = vunpack.c.l.b16 %v2410
      %v2491 = vunpack.c.h.b16 %v2410
      %v2492 = vunpack.c.l.b16 %v2411
      %v2493 = vunpack.c.h.b16 %v2411
      %v2494 = vunpack.c.l.b16 %v2412
      %v2495 = vunpack.c.h.b16 %v2412
      %v2496 = vunpack.c.l.b16 %v2413
      %v2497 = vunpack.c.h.b16 %v2413
      %v2498 = vunpack.c.l.b16 %v2414
      %v2499 = vunpack.c.h.b16 %v2414
      %v2500 = vunpack.c.l.b16 %v2415
      %v2501 = vunpack.c.h.b16 %v2415
      %v2502 = vunpack.c.l.b16 %v2416
      %v2503 = vunpack.c.h.b16 %v2416
      %v2504 = vunpack.c.l.b16 %v2417
      %v2505 = vunpack.c.h.b16 %v2417
      %v2506 = vunpack.c.l.b16 %v2418
      %v2507 = vunpack.c.h.b16 %v2418
      %v2508 = vunpack.c.l.b16 %v2419
      %v2509 = vunpack.c.h.b16 %v2419
      %v2510 = vunpack.c.l.b16 %v2420
      %v2511 = vunpack.c.h.b16 %v2420
      %v2512 = vunpack.c.l.b16 %v2421
      %v2513 = vunpack.c.h.b16 %v2421
      %v2514 = vunpack.c.l.b16 %v2422
      %v2515 = vunpack.c.h.b16 %v2422
      %v2516 = vunpack.c.l.b16 %v2423
      %v2517 = vunpack.c.h.b16 %v2423
      %v2518 = vunpack.c.l.b16 %v2424
      %v2519 = vunpack.c.h.b16 %v2424
      %v2520 = vunpack.c.l.b16 %v2425
      %v2521 = vunpack.c.h.b16 %v2425
      %v2522 = vpack.c.b16 %v2462, %v2458
      %v2523 = vpack.c.b16 %v2463, %v2459
      %v2524 = vpack.c.b16 %v2464, %v2460
      %v2525 = vpack.c.b16 %v2465, %v2461
      %v2526 = vpack.c.b16 %v2470, %v2466
      %v2527 = vpack.c.b16 %v2471, %v2467
      %v2528 = vpack.c.b16 %v2472, %v2468
      %v2529 = vpack.c.b16 %v2473, %v2469
      %v2530 = vpack.c.b16 %v2478, %v2474
      %v2531 = vpack.c.b16 %v2479, %v2475
      %v2532 = vpack.c.b16 %v2480, %v2476
      %v2533 = vpack.c.b16 %v2481, %v2477
      %v2534 = vpack.c.b16 %v2486, %v2482
      %v2535 = vpack.c.b16 %v2487, %v2483
      %v2536 = vpack.c.b16 %v2488, %v2484
      %v2537 = vpack.c.b16 %v2489, %v2485
      %v2538 = vpack.c.b16 %v2494, %v2490
      %v2539 = vpack.c.b16 %v2495, %v2491
      %v2540 = vpack.c.b16 %v2496, %v2492
      %v2541 = vpack.c.b16 %v2497, %v2493
      %v2542 = vpack.c.b16 %v2502, %v2498
      %v2543 = vpack.c.b16 %v2503, %v2499
      %v2544 = vpack.c.b16 %v2504, %v2500
      %v2545 = vpack.c.b16 %v2505, %v2501
      %v2546 = vpack.c.b16 %v2510, %v2506
      %v2547 = vpack.c.b16 %v2511, %v2507
      %v2548 = vpack.c.b16 %v2512, %v2508
      %v2549 = vpack.c.b16 %v2513, %v2509
      %v2550 = vpack.c.b16 %v2518, %v2514
      %v2551 = vpack.c.b16 %v2519, %v2515
      %v2552 = vpack.c.b16 %v2520, %v2516
      %v2553 = vpack.c.b16 %v2521, %v2517
      %2586 = vmatpush.bf16.msra.mxu0 %v2550
      %2587 = vmatpush.bf16.msra.mxu0 %v2546
      %2588 = vmatpush.bf16.msra.mxu0 %v2542
      %2589 = vmatpush.bf16.msra.mxu0 %v2538
      %2590 = vmatpush.bf16.msra.mxu0 %v2534
      %2591 = vmatpush.bf16.msra.mxu0 %v2530
      %2592 = vmatpush.bf16.msra.mxu0 %v2526
      %2593 = vmatpush.bf16.msra.mxu0 %v2522
      %2594 = vmatmul.bf16.gmra.mxu0 %v1807
      %v2595 = vpop.f32.mrf.mxu0
      %v2596 = vadd.f32 0.0, %v2595
      %v2597 = vpop.f32.mrf.mxu0
      %v2598 = vadd.f32 0.0, %v2597
      %2599 = vdwg.mxu0
      %2600 = vmatpush.bf16.msra.mxu0 %v2551
      %2601 = vmatpush.bf16.msra.mxu0 %v2547
      %2602 = vmatpush.bf16.msra.mxu0 %v2543
      %2603 = vmatpush.bf16.msra.mxu0 %v2539
      %2604 = vmatpush.bf16.msra.mxu0 %v2535
      %2605 = vmatpush.bf16.msra.mxu0 %v2531
      %2606 = vmatpush.bf16.msra.mxu0 %v2527
      %2607 = vmatpush.bf16.msra.mxu0 %v2523
      %2608 = vmatmul.bf16.gmra.mxu0 %v1807
      %v2609 = vpop.f32.mrf.mxu0
      %v2610 = vadd.f32 0.0, %v2609
      %v2611 = vpop.f32.mrf.mxu0
      %v2612 = vadd.f32 0.0, %v2611
      %2613 = vdwg.mxu0
      %2614 = vmatpush.bf16.msra.mxu0 %v2552
      %2615 = vmatpush.bf16.msra.mxu0 %v2548
      %2616 = vmatpush.bf16.msra.mxu0 %v2544
      %2617 = vmatpush.bf16.msra.mxu0 %v2540
      %2618 = vmatpush.bf16.msra.mxu0 %v2536
      %2619 = vmatpush.bf16.msra.mxu0 %v2532
      %2620 = vmatpush.bf16.msra.mxu0 %v2528
      %2621 = vmatpush.bf16.msra.mxu0 %v2524
      %2622 = vmatmul.bf16.gmra.mxu0 %v1807
      %v2623 = vpop.f32.mrf.mxu0
      %v2624 = vadd.f32 0.0, %v2623
      %v2625 = vpop.f32.mrf.mxu0
      %v2626 = vadd.f32 0.0, %v2625
      %2627 = vdwg.mxu0
      %2628 = vmatpush.bf16.msra.mxu0 %v2553
      %2629 = vmatpush.bf16.msra.mxu0 %v2549
      %2630 = vmatpush.bf16.msra.mxu0 %v2545
      %2631 = vmatpush.bf16.msra.mxu0 %v2541
      %2632 = vmatpush.bf16.msra.mxu0 %v2537
      %2633 = vmatpush.bf16.msra.mxu0 %v2533
      %2634 = vmatpush.bf16.msra.mxu0 %v2529
      %2635 = vmatpush.bf16.msra.mxu0 %v2525
      %2636 = vmatmul.bf16.gmra.mxu0 %v1807
      %v2637 = vpop.f32.mrf.mxu0
      %v2638 = vadd.f32 0.0, %v2637
      %v2639 = vpop.f32.mrf.mxu0
      %v2640 = vadd.f32 0.0, %v2639
      %2641 = vdwg.mxu0
      %v2644 = vunpack.c.l.b16 %v2360
      %v2645 = vunpack.c.l.b16 %v2361
      %v2646 = vpack.c.b16 %v2645, %v2644
      %v2680 = vunpack.c.l.b16 %v2362
      %v2681 = vunpack.c.h.b16 %v2362
      %v2682 = vunpack.c.l.b16 %v2363
      %v2683 = vunpack.c.h.b16 %v2363
      %v2684 = vunpack.c.l.b16 %v2364
      %v2685 = vunpack.c.h.b16 %v2364
      %v2686 = vunpack.c.l.b16 %v2365
      %v2687 = vunpack.c.h.b16 %v2365
      %v2688 = vunpack.c.l.b16 %v2366
      %v2689 = vunpack.c.h.b16 %v2366
      %v2690 = vunpack.c.l.b16 %v2367
      %v2691 = vunpack.c.h.b16 %v2367
      %v2692 = vunpack.c.l.b16 %v2368
      %v2693 = vunpack.c.h.b16 %v2368
      %v2694 = vunpack.c.l.b16 %v2369
      %v2695 = vunpack.c.h.b16 %v2369
      %v2696 = vunpack.c.l.b16 %v2370
      %v2697 = vunpack.c.h.b16 %v2370
      %v2698 = vunpack.c.l.b16 %v2371
      %v2699 = vunpack.c.h.b16 %v2371
      %v2700 = vunpack.c.l.b16 %v2372
      %v2701 = vunpack.c.h.b16 %v2372
      %v2702 = vunpack.c.l.b16 %v2373
      %v2703 = vunpack.c.h.b16 %v2373
      %v2704 = vunpack.c.l.b16 %v2374
      %v2705 = vunpack.c.h.b16 %v2374
      %v2706 = vunpack.c.l.b16 %v2375
      %v2707 = vunpack.c.h.b16 %v2375
      %v2708 = vunpack.c.l.b16 %v2376
      %v2709 = vunpack.c.h.b16 %v2376
      %v2710 = vunpack.c.l.b16 %v2377
      %v2711 = vunpack.c.h.b16 %v2377
      %v2712 = vunpack.c.l.b16 %v2378
      %v2713 = vunpack.c.h.b16 %v2378
      %v2714 = vunpack.c.l.b16 %v2379
      %v2715 = vunpack.c.h.b16 %v2379
      %v2716 = vunpack.c.l.b16 %v2380
      %v2717 = vunpack.c.h.b16 %v2380
      %v2718 = vunpack.c.l.b16 %v2381
      %v2719 = vunpack.c.h.b16 %v2381
      %v2720 = vunpack.c.l.b16 %v2382
      %v2721 = vunpack.c.h.b16 %v2382
      %v2722 = vunpack.c.l.b16 %v2383
      %v2723 = vunpack.c.h.b16 %v2383
      %v2724 = vunpack.c.l.b16 %v2384
      %v2725 = vunpack.c.h.b16 %v2384
      %v2726 = vunpack.c.l.b16 %v2385
      %v2727 = vunpack.c.h.b16 %v2385
      %v2728 = vunpack.c.l.b16 %v2386
      %v2729 = vunpack.c.h.b16 %v2386
      %v2730 = vunpack.c.l.b16 %v2387
      %v2731 = vunpack.c.h.b16 %v2387
      %v2732 = vunpack.c.l.b16 %v2388
      %v2733 = vunpack.c.h.b16 %v2388
      %v2734 = vunpack.c.l.b16 %v2389
      %v2735 = vunpack.c.h.b16 %v2389
      %v2736 = vunpack.c.l.b16 %v2390
      %v2737 = vunpack.c.h.b16 %v2390
      %v2738 = vunpack.c.l.b16 %v2391
      %v2739 = vunpack.c.h.b16 %v2391
      %v2740 = vunpack.c.l.b16 %v2392
      %v2741 = vunpack.c.h.b16 %v2392
      %v2742 = vunpack.c.l.b16 %v2393
      %v2743 = vunpack.c.h.b16 %v2393
      %v2744 = vpack.c.b16 %v2684, %v2680
      %v2745 = vpack.c.b16 %v2685, %v2681
      %v2746 = vpack.c.b16 %v2686, %v2682
      %v2747 = vpack.c.b16 %v2687, %v2683
      %v2748 = vpack.c.b16 %v2692, %v2688
      %v2749 = vpack.c.b16 %v2693, %v2689
      %v2750 = vpack.c.b16 %v2694, %v2690
      %v2751 = vpack.c.b16 %v2695, %v2691
      %v2752 = vpack.c.b16 %v2700, %v2696
      %v2753 = vpack.c.b16 %v2701, %v2697
      %v2754 = vpack.c.b16 %v2702, %v2698
      %v2755 = vpack.c.b16 %v2703, %v2699
      %v2756 = vpack.c.b16 %v2708, %v2704
      %v2757 = vpack.c.b16 %v2709, %v2705
      %v2758 = vpack.c.b16 %v2710, %v2706
      %v2759 = vpack.c.b16 %v2711, %v2707
      %v2760 = vpack.c.b16 %v2716, %v2712
      %v2761 = vpack.c.b16 %v2717, %v2713
      %v2762 = vpack.c.b16 %v2718, %v2714
      %v2763 = vpack.c.b16 %v2719, %v2715
      %v2764 = vpack.c.b16 %v2724, %v2720
      %v2765 = vpack.c.b16 %v2725, %v2721
      %v2766 = vpack.c.b16 %v2726, %v2722
      %v2767 = vpack.c.b16 %v2727, %v2723
      %v2768 = vpack.c.b16 %v2732, %v2728
      %v2769 = vpack.c.b16 %v2733, %v2729
      %v2770 = vpack.c.b16 %v2734, %v2730
      %v2771 = vpack.c.b16 %v2735, %v2731
      %v2772 = vpack.c.b16 %v2740, %v2736
      %v2773 = vpack.c.b16 %v2741, %v2737
      %v2774 = vpack.c.b16 %v2742, %v2738
      %v2775 = vpack.c.b16 %v2743, %v2739
      %2808 = vmatpush.bf16.msra.mxu0 %v2772
      %2809 = vmatpush.bf16.msra.mxu0 %v2768
      %2810 = vmatpush.bf16.msra.mxu0 %v2764
      %2811 = vmatpush.bf16.msra.mxu0 %v2760
      %2812 = vmatpush.bf16.msra.mxu0 %v2756
      %2813 = vmatpush.bf16.msra.mxu0 %v2752
      %2814 = vmatpush.bf16.msra.mxu0 %v2748
      %2815 = vmatpush.bf16.msra.mxu0 %v2744
      %2816 = vmatmul.bf16.gmra.mxu0 %v2646
      %v2817 = vpop.f32.mrf.mxu0
      %v2818 = vadd.f32 %v2596, %v2817
      %v2819 = vpop.f32.mrf.mxu0
      %v2820 = vadd.f32 %v2598, %v2819
      %2821 = vdwg.mxu0
      %2822 = vmatpush.bf16.msra.mxu0 %v2773
      %2823 = vmatpush.bf16.msra.mxu0 %v2769
      %2824 = vmatpush.bf16.msra.mxu0 %v2765
      %2825 = vmatpush.bf16.msra.mxu0 %v2761
      %2826 = vmatpush.bf16.msra.mxu0 %v2757
      %2827 = vmatpush.bf16.msra.mxu0 %v2753
      %2828 = vmatpush.bf16.msra.mxu0 %v2749
      %2829 = vmatpush.bf16.msra.mxu0 %v2745
      %2830 = vmatmul.bf16.gmra.mxu0 %v2646
      %v2831 = vpop.f32.mrf.mxu0
      %v2832 = vadd.f32 %v2610, %v2831
      %v2833 = vpop.f32.mrf.mxu0
      %v2834 = vadd.f32 %v2612, %v2833
      %2835 = vdwg.mxu0
      %2836 = vmatpush.bf16.msra.mxu0 %v2774
      %2837 = vmatpush.bf16.msra.mxu0 %v2770
      %2838 = vmatpush.bf16.msra.mxu0 %v2766
      %2839 = vmatpush.bf16.msra.mxu0 %v2762
      %2840 = vmatpush.bf16.msra.mxu0 %v2758
      %2841 = vmatpush.bf16.msra.mxu0 %v2754
      %2842 = vmatpush.bf16.msra.mxu0 %v2750
      %2843 = vmatpush.bf16.msra.mxu0 %v2746
      %2844 = vmatmul.bf16.gmra.mxu0 %v2646
      %v2845 = vpop.f32.mrf.mxu0
      %v2846 = vadd.f32 %v2624, %v2845
      %v2847 = vpop.f32.mrf.mxu0
      %v2848 = vadd.f32 %v2626, %v2847
      %2849 = vdwg.mxu0
      %2850 = vmatpush.bf16.msra.mxu0 %v2775
      %2851 = vmatpush.bf16.msra.mxu0 %v2771
      %2852 = vmatpush.bf16.msra.mxu0 %v2767
      %2853 = vmatpush.bf16.msra.mxu0 %v2763
      %2854 = vmatpush.bf16.msra.mxu0 %v2759
      %2855 = vmatpush.bf16.msra.mxu0 %v2755
      %2856 = vmatpush.bf16.msra.mxu0 %v2751
      %2857 = vmatpush.bf16.msra.mxu0 %v2747
      %2858 = vmatmul.bf16.gmra.mxu0 %v2646
      %v2859 = vpop.f32.mrf.mxu0
      %v2860 = vadd.f32 %v2638, %v2859
      %v2861 = vpop.f32.mrf.mxu0
      %v2862 = vadd.f32 %v2640, %v2861
      %2863 = vdwg.mxu0
      %v2864 = vadd.f32 %v2818, %v147
      %v2865 = vadd.f32 %v2832, %v148
      %v2866 = vadd.f32 %v2846, %v149
      %v2867 = vadd.f32 %v2860, %v150
      %v2868 = vadd.f32 %v2820, %v147
      %v2869 = vadd.f32 %v2834, %v148
      %v2870 = vadd.f32 %v2848, %v149
      %v2871 = vadd.f32 %v2862, %v150
      %v2872 = vmul.f32 %v2864, 0.5
      %v2873 = vmul.f32 %v2868, 0.5
      %v2874 = vtanh.pop %v2872
      %v2875 = vtanh.pop %v2873
      %v2876 = vmul.f32 %v2874, 0.5
      %v2877 = vmul.f32 %v2875, 0.5
      %v2878 = vadd.f32 %v2876, 0.5
      %v2879 = vadd.f32 %v2877, 0.5
      %v2880 = vmul.f32 %v2865, 0.5
      %v2881 = vmul.f32 %v2869, 0.5
      %v2882 = vtanh.pop %v2880
      %v2883 = vtanh.pop %v2881
      %v2884 = vmul.f32 %v2882, 0.5
      %v2885 = vmul.f32 %v2883, 0.5
      %v2886 = vadd.f32 %v2884, 0.5
      %v2887 = vadd.f32 %v2885, 0.5
      %v2888 = vtanh.pop %v2866
      %v2889 = vtanh.pop %v2870
      %v2890 = vmul.f32 %v2867, 0.5
      %v2891 = vmul.f32 %v2871, 0.5
      %v2892 = vtanh.pop %v2890
      %v2893 = vtanh.pop %v2891
      %v2894 = vmul.f32 %v2892, 0.5
      %v2895 = vmul.f32 %v2893, 0.5
      %v2896 = vadd.f32 %v2894, 0.5
      %v2897 = vadd.f32 %v2895, 0.5
      %v2898 = vmul.f32 %v2886, %v1801
      %v2899 = vmul.f32 %v2887, %v1802
      %v2900 = vmul.f32 %v2878, %v2888
      %v2901 = vmul.f32 %v2879, %v2889
      %v2902 = vadd.f32 %v2898, %v2900
      %v2903 = vadd.f32 %v2899, %v2901
      %v2904 = vtanh.pop %v2902
      %v2905 = vtanh.pop %v2903
      %v2906 = vmul.f32 %v2896, %v2904
      %v2907 = vmul.f32 %v2897, %v2905
      %v2908 = vpack.c.bf16 %v2907, %v2906
      %v2909 = vld [vmem:[#allocation11] sm:$0xff]
      %v2910 = vld [vmem:[#allocation11 + $0x8] sm:$0xff]
      %v2911 = vld [vmem:[#allocation11 + $0x10] sm:$0xff]
      %v2912 = vld [vmem:[#allocation11 + $0x18] sm:$0xff]
      %v2913 = vld [vmem:[#allocation11 + $0x20] sm:$0xff]
      %v2914 = vld [vmem:[#allocation11 + $0x28] sm:$0xff]
      %v2915 = vld [vmem:[#allocation11 + $0x30] sm:$0xff]
      %v2916 = vld [vmem:[#allocation11 + $0x38] sm:$0xff]
      %v2917 = vld [vmem:[#allocation11 + $0x40] sm:$0xff]
      %v2918 = vld [vmem:[#allocation11 + $0x48] sm:$0xff]
      %v2919 = vld [vmem:[#allocation11 + $0x50] sm:$0xff]
      %v2920 = vld [vmem:[#allocation11 + $0x58] sm:$0xff]
      %v2921 = vld [vmem:[#allocation11 + $0x60] sm:$0xff]
      %v2922 = vld [vmem:[#allocation11 + $0x68] sm:$0xff]
      %v2923 = vld [vmem:[#allocation11 + $0x70] sm:$0xff]
      %v2924 = vld [vmem:[#allocation11 + $0x78] sm:$0xff]
      %v2925 = vld [vmem:[#allocation11 + $0x80] sm:$0xff]
      %v2926 = vld [vmem:[#allocation11 + $0x88] sm:$0xff]
      %v2927 = vld [vmem:[#allocation11 + $0x90] sm:$0xff]
      %v2928 = vld [vmem:[#allocation11 + $0x98] sm:$0xff]
      %v2929 = vld [vmem:[#allocation11 + $0xa0] sm:$0xff]
      %v2930 = vld [vmem:[#allocation11 + $0xa8] sm:$0xff]
      %v2931 = vld [vmem:[#allocation11 + $0xb0] sm:$0xff]
      %v2932 = vld [vmem:[#allocation11 + $0xb8] sm:$0xff]
      %v2933 = vld [vmem:[#allocation11 + $0xc0] sm:$0xff]
      %v2934 = vld [vmem:[#allocation11 + $0xc8] sm:$0xff]
      %v2935 = vld [vmem:[#allocation11 + $0xd0] sm:$0xff]
      %v2936 = vld [vmem:[#allocation11 + $0xd8] sm:$0xff]
      %v2937 = vld [vmem:[#allocation11 + $0xe0] sm:$0xff]
      %v2938 = vld [vmem:[#allocation11 + $0xe8] sm:$0xff]
      %v2939 = vld [vmem:[#allocation11 + $0xf0] sm:$0xff]
      %v2940 = vld [vmem:[#allocation11 + $0xf8] sm:$0xff]
      %v2941 = vld [vmem:[#allocation12] sm:$0xff]
      %v2942 = vld [vmem:[#allocation12 + $0x8] sm:$0xff]
      %v2943 = vld [vmem:[#allocation12 + $0x10] sm:$0xff]
      %v2944 = vld [vmem:[#allocation12 + $0x18] sm:$0xff]
      %v2945 = vld [vmem:[#allocation12 + $0x20] sm:$0xff]
      %v2946 = vld [vmem:[#allocation12 + $0x28] sm:$0xff]
      %v2947 = vld [vmem:[#allocation12 + $0x30] sm:$0xff]
      %v2948 = vld [vmem:[#allocation12 + $0x38] sm:$0xff]
      %v2949 = vld [vmem:[#allocation12 + $0x40] sm:$0xff]
      %v2950 = vld [vmem:[#allocation12 + $0x48] sm:$0xff]
      %v2951 = vld [vmem:[#allocation12 + $0x50] sm:$0xff]
      %v2952 = vld [vmem:[#allocation12 + $0x58] sm:$0xff]
      %v2953 = vld [vmem:[#allocation12 + $0x60] sm:$0xff]
      %v2954 = vld [vmem:[#allocation12 + $0x68] sm:$0xff]
      %v2955 = vld [vmem:[#allocation12 + $0x70] sm:$0xff]
      %v2956 = vld [vmem:[#allocation12 + $0x78] sm:$0xff]
      %v2957 = vld [vmem:[#allocation12 + $0x80] sm:$0xff]
      %v2958 = vld [vmem:[#allocation12 + $0x88] sm:$0xff]
      %v2959 = vld [vmem:[#allocation12 + $0x90] sm:$0xff]
      %v2960 = vld [vmem:[#allocation12 + $0x98] sm:$0xff]
      %v2961 = vld [vmem:[#allocation12 + $0xa0] sm:$0xff]
      %v2962 = vld [vmem:[#allocation12 + $0xa8] sm:$0xff]
      %v2963 = vld [vmem:[#allocation12 + $0xb0] sm:$0xff]
      %v2964 = vld [vmem:[#allocation12 + $0xb8] sm:$0xff]
      %v2965 = vld [vmem:[#allocation12 + $0xc0] sm:$0xff]
      %v2966 = vld [vmem:[#allocation12 + $0xc8] sm:$0xff]
      %v2967 = vld [vmem:[#allocation12 + $0xd0] sm:$0xff]
      %v2968 = vld [vmem:[#allocation12 + $0xd8] sm:$0xff]
      %v2969 = vld [vmem:[#allocation12 + $0xe0] sm:$0xff]
      %v2970 = vld [vmem:[#allocation12 + $0xe8] sm:$0xff]
      %v2971 = vld [vmem:[#allocation12 + $0xf0] sm:$0xff]
      %v2972 = vld [vmem:[#allocation12 + $0xf8] sm:$0xff]
      %v2975 = vunpack.c.l.b16 %v2354
      %v2976 = vunpack.c.l.b16 %v2355
      %v2977 = vpack.c.b16 %v2976, %v2975
      %v3011 = vunpack.c.l.b16 %v2941
      %v3012 = vunpack.c.h.b16 %v2941
      %v3013 = vunpack.c.l.b16 %v2942
      %v3014 = vunpack.c.h.b16 %v2942
      %v3015 = vunpack.c.l.b16 %v2943
      %v3016 = vunpack.c.h.b16 %v2943
      %v3017 = vunpack.c.l.b16 %v2944
      %v3018 = vunpack.c.h.b16 %v2944
      %v3019 = vunpack.c.l.b16 %v2945
      %v3020 = vunpack.c.h.b16 %v2945
      %v3021 = vunpack.c.l.b16 %v2946
      %v3022 = vunpack.c.h.b16 %v2946
      %v3023 = vunpack.c.l.b16 %v2947
      %v3024 = vunpack.c.h.b16 %v2947
      %v3025 = vunpack.c.l.b16 %v2948
      %v3026 = vunpack.c.h.b16 %v2948
      %v3027 = vunpack.c.l.b16 %v2949
      %v3028 = vunpack.c.h.b16 %v2949
      %v3029 = vunpack.c.l.b16 %v2950
      %v3030 = vunpack.c.h.b16 %v2950
      %v3031 = vunpack.c.l.b16 %v2951
      %v3032 = vunpack.c.h.b16 %v2951
      %v3033 = vunpack.c.l.b16 %v2952
      %v3034 = vunpack.c.h.b16 %v2952
      %v3035 = vunpack.c.l.b16 %v2953
      %v3036 = vunpack.c.h.b16 %v2953
      %v3037 = vunpack.c.l.b16 %v2954
      %v3038 = vunpack.c.h.b16 %v2954
      %v3039 = vunpack.c.l.b16 %v2955
      %v3040 = vunpack.c.h.b16 %v2955
      %v3041 = vunpack.c.l.b16 %v2956
      %v3042 = vunpack.c.h.b16 %v2956
      %v3043 = vunpack.c.l.b16 %v2957
      %v3044 = vunpack.c.h.b16 %v2957
      %v3045 = vunpack.c.l.b16 %v2958
      %v3046 = vunpack.c.h.b16 %v2958
      %v3047 = vunpack.c.l.b16 %v2959
      %v3048 = vunpack.c.h.b16 %v2959
      %v3049 = vunpack.c.l.b16 %v2960
      %v3050 = vunpack.c.h.b16 %v2960
      %v3051 = vunpack.c.l.b16 %v2961
      %v3052 = vunpack.c.h.b16 %v2961
      %v3053 = vunpack.c.l.b16 %v2962
      %v3054 = vunpack.c.h.b16 %v2962
      %v3055 = vunpack.c.l.b16 %v2963
      %v3056 = vunpack.c.h.b16 %v2963
      %v3057 = vunpack.c.l.b16 %v2964
      %v3058 = vunpack.c.h.b16 %v2964
      %v3059 = vunpack.c.l.b16 %v2965
      %v3060 = vunpack.c.h.b16 %v2965
      %v3061 = vunpack.c.l.b16 %v2966
      %v3062 = vunpack.c.h.b16 %v2966
      %v3063 = vunpack.c.l.b16 %v2967
      %v3064 = vunpack.c.h.b16 %v2967
      %v3065 = vunpack.c.l.b16 %v2968
      %v3066 = vunpack.c.h.b16 %v2968
      %v3067 = vunpack.c.l.b16 %v2969
      %v3068 = vunpack.c.h.b16 %v2969
      %v3069 = vunpack.c.l.b16 %v2970
      %v3070 = vunpack.c.h.b16 %v2970
      %v3071 = vunpack.c.l.b16 %v2971
      %v3072 = vunpack.c.h.b16 %v2971
      %v3073 = vunpack.c.l.b16 %v2972
      %v3074 = vunpack.c.h.b16 %v2972
      %v3075 = vpack.c.b16 %v3015, %v3011
      %v3076 = vpack.c.b16 %v3016, %v3012
      %v3077 = vpack.c.b16 %v3017, %v3013
      %v3078 = vpack.c.b16 %v3018, %v3014
      %v3079 = vpack.c.b16 %v3023, %v3019
      %v3080 = vpack.c.b16 %v3024, %v3020
      %v3081 = vpack.c.b16 %v3025, %v3021
      %v3082 = vpack.c.b16 %v3026, %v3022
      %v3083 = vpack.c.b16 %v3031, %v3027
      %v3084 = vpack.c.b16 %v3032, %v3028
      %v3085 = vpack.c.b16 %v3033, %v3029
      %v3086 = vpack.c.b16 %v3034, %v3030
      %v3087 = vpack.c.b16 %v3039, %v3035
      %v3088 = vpack.c.b16 %v3040, %v3036
      %v3089 = vpack.c.b16 %v3041, %v3037
      %v3090 = vpack.c.b16 %v3042, %v3038
      %v3091 = vpack.c.b16 %v3047, %v3043
      %v3092 = vpack.c.b16 %v3048, %v3044
      %v3093 = vpack.c.b16 %v3049, %v3045
      %v3094 = vpack.c.b16 %v3050, %v3046
      %v3095 = vpack.c.b16 %v3055, %v3051
      %v3096 = vpack.c.b16 %v3056, %v3052
      %v3097 = vpack.c.b16 %v3057, %v3053
      %v3098 = vpack.c.b16 %v3058, %v3054
      %v3099 = vpack.c.b16 %v3063, %v3059
      %v3100 = vpack.c.b16 %v3064, %v3060
      %v3101 = vpack.c.b16 %v3065, %v3061
      %v3102 = vpack.c.b16 %v3066, %v3062
      %v3103 = vpack.c.b16 %v3071, %v3067
      %v3104 = vpack.c.b16 %v3072, %v3068
      %v3105 = vpack.c.b16 %v3073, %v3069
      %v3106 = vpack.c.b16 %v3074, %v3070
      %3139 = vmatpush.bf16.msra.mxu0 %v3103
      %3140 = vmatpush.bf16.msra.mxu0 %v3099
      %3141 = vmatpush.bf16.msra.mxu0 %v3095
      %3142 = vmatpush.bf16.msra.mxu0 %v3091
      %3143 = vmatpush.bf16.msra.mxu0 %v3087
      %3144 = vmatpush.bf16.msra.mxu0 %v3083
      %3145 = vmatpush.bf16.msra.mxu0 %v3079
      %3146 = vmatpush.bf16.msra.mxu0 %v3075
      %3147 = vmatmul.bf16.gmra.mxu0 %v2977
      %v3148 = vpop.f32.mrf.mxu0
      %v3149 = vadd.f32 0.0, %v3148
      %v3150 = vpop.f32.mrf.mxu0
      %v3151 = vadd.f32 0.0, %v3150
      %3152 = vdwg.mxu0
      %3153 = vmatpush.bf16.msra.mxu0 %v3104
      %3154 = vmatpush.bf16.msra.mxu0 %v3100
      %3155 = vmatpush.bf16.msra.mxu0 %v3096
      %3156 = vmatpush.bf16.msra.mxu0 %v3092
      %3157 = vmatpush.bf16.msra.mxu0 %v3088
      %3158 = vmatpush.bf16.msra.mxu0 %v3084
      %3159 = vmatpush.bf16.msra.mxu0 %v3080
      %3160 = vmatpush.bf16.msra.mxu0 %v3076
      %3161 = vmatmul.bf16.gmra.mxu0 %v2977
      %v3162 = vpop.f32.mrf.mxu0
      %v3163 = vadd.f32 0.0, %v3162
      %v3164 = vpop.f32.mrf.mxu0
      %v3165 = vadd.f32 0.0, %v3164
      %3166 = vdwg.mxu0
      %3167 = vmatpush.bf16.msra.mxu0 %v3105
      %3168 = vmatpush.bf16.msra.mxu0 %v3101
      %3169 = vmatpush.bf16.msra.mxu0 %v3097
      %3170 = vmatpush.bf16.msra.mxu0 %v3093
      %3171 = vmatpush.bf16.msra.mxu0 %v3089
      %3172 = vmatpush.bf16.msra.mxu0 %v3085
      %3173 = vmatpush.bf16.msra.mxu0 %v3081
      %3174 = vmatpush.bf16.msra.mxu0 %v3077
      %3175 = vmatmul.bf16.gmra.mxu0 %v2977
      %v3176 = vpop.f32.mrf.mxu0
      %v3177 = vadd.f32 0.0, %v3176
      %v3178 = vpop.f32.mrf.mxu0
      %v3179 = vadd.f32 0.0, %v3178
      %3180 = vdwg.mxu0
      %3181 = vmatpush.bf16.msra.mxu0 %v3106
      %3182 = vmatpush.bf16.msra.mxu0 %v3102
      %3183 = vmatpush.bf16.msra.mxu0 %v3098
      %3184 = vmatpush.bf16.msra.mxu0 %v3094
      %3185 = vmatpush.bf16.msra.mxu0 %v3090
      %3186 = vmatpush.bf16.msra.mxu0 %v3086
      %3187 = vmatpush.bf16.msra.mxu0 %v3082
      %3188 = vmatpush.bf16.msra.mxu0 %v3078
      %3189 = vmatmul.bf16.gmra.mxu0 %v2977
      %v3190 = vpop.f32.mrf.mxu0
      %v3191 = vadd.f32 0.0, %v3190
      %v3192 = vpop.f32.mrf.mxu0
      %v3193 = vadd.f32 0.0, %v3192
      %3194 = vdwg.mxu0
      %v3227 = vunpack.c.l.b16 %v2909
      %v3228 = vunpack.c.h.b16 %v2909
      %v3229 = vunpack.c.l.b16 %v2910
      %v3230 = vunpack.c.h.b16 %v2910
      %v3231 = vunpack.c.l.b16 %v2911
      %v3232 = vunpack.c.h.b16 %v2911
      %v3233 = vunpack.c.l.b16 %v2912
      %v3234 = vunpack.c.h.b16 %v2912
      %v3235 = vunpack.c.l.b16 %v2913
      %v3236 = vunpack.c.h.b16 %v2913
      %v3237 = vunpack.c.l.b16 %v2914
      %v3238 = vunpack.c.h.b16 %v2914
      %v3239 = vunpack.c.l.b16 %v2915
      %v3240 = vunpack.c.h.b16 %v2915
      %v3241 = vunpack.c.l.b16 %v2916
      %v3242 = vunpack.c.h.b16 %v2916
      %v3243 = vunpack.c.l.b16 %v2917
      %v3244 = vunpack.c.h.b16 %v2917
      %v3245 = vunpack.c.l.b16 %v2918
      %v3246 = vunpack.c.h.b16 %v2918
      %v3247 = vunpack.c.l.b16 %v2919
      %v3248 = vunpack.c.h.b16 %v2919
      %v3249 = vunpack.c.l.b16 %v2920
      %v3250 = vunpack.c.h.b16 %v2920
      %v3251 = vunpack.c.l.b16 %v2921
      %v3252 = vunpack.c.h.b16 %v2921
      %v3253 = vunpack.c.l.b16 %v2922
      %v3254 = vunpack.c.h.b16 %v2922
      %v3255 = vunpack.c.l.b16 %v2923
      %v3256 = vunpack.c.h.b16 %v2923
      %v3257 = vunpack.c.l.b16 %v2924
      %v3258 = vunpack.c.h.b16 %v2924
      %v3259 = vunpack.c.l.b16 %v2925
      %v3260 = vunpack.c.h.b16 %v2925
      %v3261 = vunpack.c.l.b16 %v2926
      %v3262 = vunpack.c.h.b16 %v2926
      %v3263 = vunpack.c.l.b16 %v2927
      %v3264 = vunpack.c.h.b16 %v2927
      %v3265 = vunpack.c.l.b16 %v2928
      %v3266 = vunpack.c.h.b16 %v2928
      %v3267 = vunpack.c.l.b16 %v2929
      %v3268 = vunpack.c.h.b16 %v2929
      %v3269 = vunpack.c.l.b16 %v2930
      %v3270 = vunpack.c.h.b16 %v2930
      %v3271 = vunpack.c.l.b16 %v2931
      %v3272 = vunpack.c.h.b16 %v2931
      %v3273 = vunpack.c.l.b16 %v2932
      %v3274 = vunpack.c.h.b16 %v2932
      %v3275 = vunpack.c.l.b16 %v2933
      %v3276 = vunpack.c.h.b16 %v2933
      %v3277 = vunpack.c.l.b16 %v2934
      %v3278 = vunpack.c.h.b16 %v2934
      %v3279 = vunpack.c.l.b16 %v2935
      %v3280 = vunpack.c.h.b16 %v2935
      %v3281 = vunpack.c.l.b16 %v2936
      %v3282 = vunpack.c.h.b16 %v2936
      %v3283 = vunpack.c.l.b16 %v2937
      %v3284 = vunpack.c.h.b16 %v2937
      %v3285 = vunpack.c.l.b16 %v2938
      %v3286 = vunpack.c.h.b16 %v2938
      %v3287 = vunpack.c.l.b16 %v2939
      %v3288 = vunpack.c.h.b16 %v2939
      %v3289 = vunpack.c.l.b16 %v2940
      %v3290 = vunpack.c.h.b16 %v2940
      %v3291 = vpack.c.b16 %v3231, %v3227
      %v3292 = vpack.c.b16 %v3232, %v3228
      %v3293 = vpack.c.b16 %v3233, %v3229
      %v3294 = vpack.c.b16 %v3234, %v3230
      %v3295 = vpack.c.b16 %v3239, %v3235
      %v3296 = vpack.c.b16 %v3240, %v3236
      %v3297 = vpack.c.b16 %v3241, %v3237
      %v3298 = vpack.c.b16 %v3242, %v3238
      %v3299 = vpack.c.b16 %v3247, %v3243
      %v3300 = vpack.c.b16 %v3248, %v3244
      %v3301 = vpack.c.b16 %v3249, %v3245
      %v3302 = vpack.c.b16 %v3250, %v3246
      %v3303 = vpack.c.b16 %v3255, %v3251
      %v3304 = vpack.c.b16 %v3256, %v3252
      %v3305 = vpack.c.b16 %v3257, %v3253
      %v3306 = vpack.c.b16 %v3258, %v3254
      %v3307 = vpack.c.b16 %v3263, %v3259
      %v3308 = vpack.c.b16 %v3264, %v3260
      %v3309 = vpack.c.b16 %v3265, %v3261
      %v3310 = vpack.c.b16 %v3266, %v3262
      %v3311 = vpack.c.b16 %v3271, %v3267
      %v3312 = vpack.c.b16 %v3272, %v3268
      %v3313 = vpack.c.b16 %v3273, %v3269
      %v3314 = vpack.c.b16 %v3274, %v3270
      %v3315 = vpack.c.b16 %v3279, %v3275
      %v3316 = vpack.c.b16 %v3280, %v3276
      %v3317 = vpack.c.b16 %v3281, %v3277
      %v3318 = vpack.c.b16 %v3282, %v3278
      %v3319 = vpack.c.b16 %v3287, %v3283
      %v3320 = vpack.c.b16 %v3288, %v3284
      %v3321 = vpack.c.b16 %v3289, %v3285
      %v3322 = vpack.c.b16 %v3290, %v3286
      %3355 = vmatpush.bf16.msra.mxu0 %v3319
      %3356 = vmatpush.bf16.msra.mxu0 %v3315
      %3357 = vmatpush.bf16.msra.mxu0 %v3311
      %3358 = vmatpush.bf16.msra.mxu0 %v3307
      %3359 = vmatpush.bf16.msra.mxu0 %v3303
      %3360 = vmatpush.bf16.msra.mxu0 %v3299
      %3361 = vmatpush.bf16.msra.mxu0 %v3295
      %3362 = vmatpush.bf16.msra.mxu0 %v3291
      %3363 = vmatmul.bf16.gmra.mxu0 %v2908
      %v3364 = vpop.f32.mrf.mxu0
      %v3365 = vadd.f32 %v3149, %v3364
      %v3366 = vpop.f32.mrf.mxu0
      %v3367 = vadd.f32 %v3151, %v3366
      %3368 = vdwg.mxu0
      %3369 = vmatpush.bf16.msra.mxu0 %v3320
      %3370 = vmatpush.bf16.msra.mxu0 %v3316
      %3371 = vmatpush.bf16.msra.mxu0 %v3312
      %3372 = vmatpush.bf16.msra.mxu0 %v3308
      %3373 = vmatpush.bf16.msra.mxu0 %v3304
      %3374 = vmatpush.bf16.msra.mxu0 %v3300
      %3375 = vmatpush.bf16.msra.mxu0 %v3296
      %3376 = vmatpush.bf16.msra.mxu0 %v3292
      %3377 = vmatmul.bf16.gmra.mxu0 %v2908
      %v3378 = vpop.f32.mrf.mxu0
      %v3379 = vadd.f32 %v3163, %v3378
      %v3380 = vpop.f32.mrf.mxu0
      %v3381 = vadd.f32 %v3165, %v3380
      %3382 = vdwg.mxu0
      %3383 = vmatpush.bf16.msra.mxu0 %v3321
      %3384 = vmatpush.bf16.msra.mxu0 %v3317
      %3385 = vmatpush.bf16.msra.mxu0 %v3313
      %3386 = vmatpush.bf16.msra.mxu0 %v3309
      %3387 = vmatpush.bf16.msra.mxu0 %v3305
      %3388 = vmatpush.bf16.msra.mxu0 %v3301
      %3389 = vmatpush.bf16.msra.mxu0 %v3297
      %3390 = vmatpush.bf16.msra.mxu0 %v3293
      %3391 = vmatmul.bf16.gmra.mxu0 %v2908
      %v3392 = vpop.f32.mrf.mxu0
      %v3393 = vadd.f32 %v3177, %v3392
      %v3394 = vpop.f32.mrf.mxu0
      %v3395 = vadd.f32 %v3179, %v3394
      %3396 = vdwg.mxu0
      %3397 = vmatpush.bf16.msra.mxu0 %v3322
      %3398 = vmatpush.bf16.msra.mxu0 %v3318
      %3399 = vmatpush.bf16.msra.mxu0 %v3314
      %3400 = vmatpush.bf16.msra.mxu0 %v3310
      %3401 = vmatpush.bf16.msra.mxu0 %v3306
      %3402 = vmatpush.bf16.msra.mxu0 %v3302
      %3403 = vmatpush.bf16.msra.mxu0 %v3298
      %3404 = vmatpush.bf16.msra.mxu0 %v3294
      %3405 = vmatmul.bf16.gmra.mxu0 %v2908
      %v3406 = vpop.f32.mrf.mxu0
      %v3407 = vadd.f32 %v3191, %v3406
      %v3408 = vpop.f32.mrf.mxu0
      %v3409 = vadd.f32 %v3193, %v3408
      %3410 = vdwg.mxu0
      %v3411 = vadd.f32 %v3365, %v157
      %v3412 = vadd.f32 %v3379, %v158
      %v3413 = vadd.f32 %v3393, %v159
      %v3414 = vadd.f32 %v3407, %v160
      %v3415 = vadd.f32 %v3367, %v157
      %v3416 = vadd.f32 %v3381, %v158
      %v3417 = vadd.f32 %v3395, %v159
      %v3418 = vadd.f32 %v3409, %v160
      %v3419 = vmul.f32 %v3411, 0.5
      %v3420 = vmul.f32 %v3415, 0.5
      %v3421 = vtanh.pop %v3419
      %v3422 = vtanh.pop %v3420
      %v3423 = vmul.f32 %v3421, 0.5
      %v3424 = vmul.f32 %v3422, 0.5
      %v3425 = vadd.f32 %v3423, 0.5
      %v3426 = vadd.f32 %v3424, 0.5
      %v3427 = vmul.f32 %v3412, 0.5
      %v3428 = vmul.f32 %v3416, 0.5
      %v3429 = vtanh.pop %v3427
      %v3430 = vtanh.pop %v3428
      %v3431 = vmul.f32 %v3429, 0.5
      %v3432 = vmul.f32 %v3430, 0.5
      %v3433 = vadd.f32 %v3431, 0.5
      %v3434 = vadd.f32 %v3432, 0.5
      %v3435 = vtanh.pop %v3413
      %v3436 = vtanh.pop %v3417
      %v3437 = vmul.f32 %v3414, 0.5
      %v3438 = vmul.f32 %v3418, 0.5
      %v3439 = vtanh.pop %v3437
      %v3440 = vtanh.pop %v3438
      %v3441 = vmul.f32 %v3439, 0.5
      %v3442 = vmul.f32 %v3440, 0.5
      %v3443 = vadd.f32 %v3441, 0.5
      %v3444 = vadd.f32 %v3442, 0.5
      %v3445 = vmul.f32 %v3433, %v2348
      %v3446 = vmul.f32 %v3434, %v2349
      %v3447 = vmul.f32 %v3425, %v3435
      %v3448 = vmul.f32 %v3426, %v3436
      %v3449 = vadd.f32 %v3445, %v3447
      %v3450 = vadd.f32 %v3446, %v3448
      %v3451 = vtanh.pop %v3449
      %v3452 = vtanh.pop %v3450
      %v3453 = vmul.f32 %v3443, %v3451
      %v3454 = vmul.f32 %v3444, %v3452
      %v3455 = vpack.c.bf16 %v3453, %v3453
      %v3456 = vpack.c.bf16 %v3454, %v3454
      %s3457 = scalar_lea.vmem [#allocation2], 16
      %3458 = vst [vmem:[%s3457] sm:$0xf] %v3455
      %3459 = vst [vmem:[%s3457 + $0x4] sm:$0xf] %v3456
      %s3460 = scalar_lea.vmem [#allocation3], 24
      %v3461 = vld [vmem:[%s3460] sm:$0xf]
      %v3462 = vld [vmem:[%s3460 + $0x4] sm:$0xf]
      %v3463 = vld [vmem:[#allocation6] sm:$0xff]
      %v3464 = vld [vmem:[#allocation6 + $0x8] sm:$0xff]
      %v3465 = vld [vmem:[#allocation6 + $0x10] sm:$0xff]
      %v3466 = vld [vmem:[#allocation6 + $0x18] sm:$0xff]
      %v3467 = vld [vmem:[#allocation6 + $0x20] sm:$0xff]
      %v3468 = vld [vmem:[#allocation6 + $0x28] sm:$0xff]
      %v3469 = vld [vmem:[#allocation6 + $0x30] sm:$0xff]
      %v3470 = vld [vmem:[#allocation6 + $0x38] sm:$0xff]
      %v3471 = vld [vmem:[#allocation6 + $0x40] sm:$0xff]
      %v3472 = vld [vmem:[#allocation6 + $0x48] sm:$0xff]
      %v3473 = vld [vmem:[#allocation6 + $0x50] sm:$0xff]
      %v3474 = vld [vmem:[#allocation6 + $0x58] sm:$0xff]
      %v3475 = vld [vmem:[#allocation6 + $0x60] sm:$0xff]
      %v3476 = vld [vmem:[#allocation6 + $0x68] sm:$0xff]
      %v3477 = vld [vmem:[#allocation6 + $0x70] sm:$0xff]
      %v3478 = vld [vmem:[#allocation6 + $0x78] sm:$0xff]
      %v3479 = vld [vmem:[#allocation6 + $0x80] sm:$0xff]
      %v3480 = vld [vmem:[#allocation6 + $0x88] sm:$0xff]
      %v3481 = vld [vmem:[#allocation6 + $0x90] sm:$0xff]
      %v3482 = vld [vmem:[#allocation6 + $0x98] sm:$0xff]
      %v3483 = vld [vmem:[#allocation6 + $0xa0] sm:$0xff]
      %v3484 = vld [vmem:[#allocation6 + $0xa8] sm:$0xff]
      %v3485 = vld [vmem:[#allocation6 + $0xb0] sm:$0xff]
      %v3486 = vld [vmem:[#allocation6 + $0xb8] sm:$0xff]
      %v3487 = vld [vmem:[#allocation6 + $0xc0] sm:$0xff]
      %v3488 = vld [vmem:[#allocation6 + $0xc8] sm:$0xff]
      %v3489 = vld [vmem:[#allocation6 + $0xd0] sm:$0xff]
      %v3490 = vld [vmem:[#allocation6 + $0xd8] sm:$0xff]
      %v3491 = vld [vmem:[#allocation6 + $0xe0] sm:$0xff]
      %v3492 = vld [vmem:[#allocation6 + $0xe8] sm:$0xff]
      %v3493 = vld [vmem:[#allocation6 + $0xf0] sm:$0xff]
      %v3494 = vld [vmem:[#allocation6 + $0xf8] sm:$0xff]
      %v3495 = vld [vmem:[#allocation8] sm:$0xff]
      %v3496 = vld [vmem:[#allocation8 + $0x8] sm:$0xff]
      %v3497 = vld [vmem:[#allocation8 + $0x10] sm:$0xff]
      %v3498 = vld [vmem:[#allocation8 + $0x18] sm:$0xff]
      %v3499 = vld [vmem:[#allocation8 + $0x20] sm:$0xff]
      %v3500 = vld [vmem:[#allocation8 + $0x28] sm:$0xff]
      %v3501 = vld [vmem:[#allocation8 + $0x30] sm:$0xff]
      %v3502 = vld [vmem:[#allocation8 + $0x38] sm:$0xff]
      %v3503 = vld [vmem:[#allocation8 + $0x40] sm:$0xff]
      %v3504 = vld [vmem:[#allocation8 + $0x48] sm:$0xff]
      %v3505 = vld [vmem:[#allocation8 + $0x50] sm:$0xff]
      %v3506 = vld [vmem:[#allocation8 + $0x58] sm:$0xff]
      %v3507 = vld [vmem:[#allocation8 + $0x60] sm:$0xff]
      %v3508 = vld [vmem:[#allocation8 + $0x68] sm:$0xff]
      %v3509 = vld [vmem:[#allocation8 + $0x70] sm:$0xff]
      %v3510 = vld [vmem:[#allocation8 + $0x78] sm:$0xff]
      %v3511 = vld [vmem:[#allocation8 + $0x80] sm:$0xff]
      %v3512 = vld [vmem:[#allocation8 + $0x88] sm:$0xff]
      %v3513 = vld [vmem:[#allocation8 + $0x90] sm:$0xff]
      %v3514 = vld [vmem:[#allocation8 + $0x98] sm:$0xff]
      %v3515 = vld [vmem:[#allocation8 + $0xa0] sm:$0xff]
      %v3516 = vld [vmem:[#allocation8 + $0xa8] sm:$0xff]
      %v3517 = vld [vmem:[#allocation8 + $0xb0] sm:$0xff]
      %v3518 = vld [vmem:[#allocation8 + $0xb8] sm:$0xff]
      %v3519 = vld [vmem:[#allocation8 + $0xc0] sm:$0xff]
      %v3520 = vld [vmem:[#allocation8 + $0xc8] sm:$0xff]
      %v3521 = vld [vmem:[#allocation8 + $0xd0] sm:$0xff]
      %v3522 = vld [vmem:[#allocation8 + $0xd8] sm:$0xff]
      %v3523 = vld [vmem:[#allocation8 + $0xe0] sm:$0xff]
      %v3524 = vld [vmem:[#allocation8 + $0xe8] sm:$0xff]
      %v3525 = vld [vmem:[#allocation8 + $0xf0] sm:$0xff]
      %v3526 = vld [vmem:[#allocation8 + $0xf8] sm:$0xff]
      %v3559 = vunpack.c.l.b16 %v3495
      %v3560 = vunpack.c.h.b16 %v3495
      %v3561 = vunpack.c.l.b16 %v3496
      %v3562 = vunpack.c.h.b16 %v3496
      %v3563 = vunpack.c.l.b16 %v3497
      %v3564 = vunpack.c.h.b16 %v3497
      %v3565 = vunpack.c.l.b16 %v3498
      %v3566 = vunpack.c.h.b16 %v3498
      %v3567 = vunpack.c.l.b16 %v3499
      %v3568 = vunpack.c.h.b16 %v3499
      %v3569 = vunpack.c.l.b16 %v3500
      %v3570 = vunpack.c.h.b16 %v3500
      %v3571 = vunpack.c.l.b16 %v3501
      %v3572 = vunpack.c.h.b16 %v3501
      %v3573 = vunpack.c.l.b16 %v3502
      %v3574 = vunpack.c.h.b16 %v3502
      %v3575 = vunpack.c.l.b16 %v3503
      %v3576 = vunpack.c.h.b16 %v3503
      %v3577 = vunpack.c.l.b16 %v3504
      %v3578 = vunpack.c.h.b16 %v3504
      %v3579 = vunpack.c.l.b16 %v3505
      %v3580 = vunpack.c.h.b16 %v3505
      %v3581 = vunpack.c.l.b16 %v3506
      %v3582 = vunpack.c.h.b16 %v3506
      %v3583 = vunpack.c.l.b16 %v3507
      %v3584 = vunpack.c.h.b16 %v3507
      %v3585 = vunpack.c.l.b16 %v3508
      %v3586 = vunpack.c.h.b16 %v3508
      %v3587 = vunpack.c.l.b16 %v3509
      %v3588 = vunpack.c.h.b16 %v3509
      %v3589 = vunpack.c.l.b16 %v3510
      %v3590 = vunpack.c.h.b16 %v3510
      %v3591 = vunpack.c.l.b16 %v3511
      %v3592 = vunpack.c.h.b16 %v3511
      %v3593 = vunpack.c.l.b16 %v3512
      %v3594 = vunpack.c.h.b16 %v3512
      %v3595 = vunpack.c.l.b16 %v3513
      %v3596 = vunpack.c.h.b16 %v3513
      %v3597 = vunpack.c.l.b16 %v3514
      %v3598 = vunpack.c.h.b16 %v3514
      %v3599 = vunpack.c.l.b16 %v3515
      %v3600 = vunpack.c.h.b16 %v3515
      %v3601 = vunpack.c.l.b16 %v3516
      %v3602 = vunpack.c.h.b16 %v3516
      %v3603 = vunpack.c.l.b16 %v3517
      %v3604 = vunpack.c.h.b16 %v3517
      %v3605 = vunpack.c.l.b16 %v3518
      %v3606 = vunpack.c.h.b16 %v3518
      %v3607 = vunpack.c.l.b16 %v3519
      %v3608 = vunpack.c.h.b16 %v3519
      %v3609 = vunpack.c.l.b16 %v3520
      %v3610 = vunpack.c.h.b16 %v3520
      %v3611 = vunpack.c.l.b16 %v3521
      %v3612 = vunpack.c.h.b16 %v3521
      %v3613 = vunpack.c.l.b16 %v3522
      %v3614 = vunpack.c.h.b16 %v3522
      %v3615 = vunpack.c.l.b16 %v3523
      %v3616 = vunpack.c.h.b16 %v3523
      %v3617 = vunpack.c.l.b16 %v3524
      %v3618 = vunpack.c.h.b16 %v3524
      %v3619 = vunpack.c.l.b16 %v3525
      %v3620 = vunpack.c.h.b16 %v3525
      %v3621 = vunpack.c.l.b16 %v3526
      %v3622 = vunpack.c.h.b16 %v3526
      %v3623 = vpack.c.b16 %v3563, %v3559
      %v3624 = vpack.c.b16 %v3564, %v3560
      %v3625 = vpack.c.b16 %v3565, %v3561
      %v3626 = vpack.c.b16 %v3566, %v3562
      %v3627 = vpack.c.b16 %v3571, %v3567
      %v3628 = vpack.c.b16 %v3572, %v3568
      %v3629 = vpack.c.b16 %v3573, %v3569
      %v3630 = vpack.c.b16 %v3574, %v3570
      %v3631 = vpack.c.b16 %v3579, %v3575
      %v3632 = vpack.c.b16 %v3580, %v3576
      %v3633 = vpack.c.b16 %v3581, %v3577
      %v3634 = vpack.c.b16 %v3582, %v3578
      %v3635 = vpack.c.b16 %v3587, %v3583
      %v3636 = vpack.c.b16 %v3588, %v3584
      %v3637 = vpack.c.b16 %v3589, %v3585
      %v3638 = vpack.c.b16 %v3590, %v3586
      %v3639 = vpack.c.b16 %v3595, %v3591
      %v3640 = vpack.c.b16 %v3596, %v3592
      %v3641 = vpack.c.b16 %v3597, %v3593
      %v3642 = vpack.c.b16 %v3598, %v3594
      %v3643 = vpack.c.b16 %v3603, %v3599
      %v3644 = vpack.c.b16 %v3604, %v3600
      %v3645 = vpack.c.b16 %v3605, %v3601
      %v3646 = vpack.c.b16 %v3606, %v3602
      %v3647 = vpack.c.b16 %v3611, %v3607
      %v3648 = vpack.c.b16 %v3612, %v3608
      %v3649 = vpack.c.b16 %v3613, %v3609
      %v3650 = vpack.c.b16 %v3614, %v3610
      %v3651 = vpack.c.b16 %v3619, %v3615
      %v3652 = vpack.c.b16 %v3620, %v3616
      %v3653 = vpack.c.b16 %v3621, %v3617
      %v3654 = vpack.c.b16 %v3622, %v3618
      %3687 = vmatpush.bf16.msra.mxu0 %v3651
      %3688 = vmatpush.bf16.msra.mxu0 %v3647
      %3689 = vmatpush.bf16.msra.mxu0 %v3643
      %3690 = vmatpush.bf16.msra.mxu0 %v3639
      %3691 = vmatpush.bf16.msra.mxu0 %v3635
      %3692 = vmatpush.bf16.msra.mxu0 %v3631
      %3693 = vmatpush.bf16.msra.mxu0 %v3627
      %3694 = vmatpush.bf16.msra.mxu0 %v3623
      %3695 = vmatmul.bf16.gmra.mxu0 %v2908
      %v3696 = vpop.f32.mrf.mxu0
      %v3697 = vadd.f32 0.0, %v3696
      %v3698 = vpop.f32.mrf.mxu0
      %v3699 = vadd.f32 0.0, %v3698
      %3700 = vdwg.mxu0
      %3701 = vmatpush.bf16.msra.mxu0 %v3652
      %3702 = vmatpush.bf16.msra.mxu0 %v3648
      %3703 = vmatpush.bf16.msra.mxu0 %v3644
      %3704 = vmatpush.bf16.msra.mxu0 %v3640
      %3705 = vmatpush.bf16.msra.mxu0 %v3636
      %3706 = vmatpush.bf16.msra.mxu0 %v3632
      %3707 = vmatpush.bf16.msra.mxu0 %v3628
      %3708 = vmatpush.bf16.msra.mxu0 %v3624
      %3709 = vmatmul.bf16.gmra.mxu0 %v2908
      %v3710 = vpop.f32.mrf.mxu0
      %v3711 = vadd.f32 0.0, %v3710
      %v3712 = vpop.f32.mrf.mxu0
      %v3713 = vadd.f32 0.0, %v3712
      %3714 = vdwg.mxu0
      %3715 = vmatpush.bf16.msra.mxu0 %v3653
      %3716 = vmatpush.bf16.msra.mxu0 %v3649
      %3717 = vmatpush.bf16.msra.mxu0 %v3645
      %3718 = vmatpush.bf16.msra.mxu0 %v3641
      %3719 = vmatpush.bf16.msra.mxu0 %v3637
      %3720 = vmatpush.bf16.msra.mxu0 %v3633
      %3721 = vmatpush.bf16.msra.mxu0 %v3629
      %3722 = vmatpush.bf16.msra.mxu0 %v3625
      %3723 = vmatmul.bf16.gmra.mxu0 %v2908
      %v3724 = vpop.f32.mrf.mxu0
      %v3725 = vadd.f32 0.0, %v3724
      %v3726 = vpop.f32.mrf.mxu0
      %v3727 = vadd.f32 0.0, %v3726
      %3728 = vdwg.mxu0
      %3729 = vmatpush.bf16.msra.mxu0 %v3654
      %3730 = vmatpush.bf16.msra.mxu0 %v3650
      %3731 = vmatpush.bf16.msra.mxu0 %v3646
      %3732 = vmatpush.bf16.msra.mxu0 %v3642
      %3733 = vmatpush.bf16.msra.mxu0 %v3638
      %3734 = vmatpush.bf16.msra.mxu0 %v3634
      %3735 = vmatpush.bf16.msra.mxu0 %v3630
      %3736 = vmatpush.bf16.msra.mxu0 %v3626
      %3737 = vmatmul.bf16.gmra.mxu0 %v2908
      %v3738 = vpop.f32.mrf.mxu0
      %v3739 = vadd.f32 0.0, %v3738
      %v3740 = vpop.f32.mrf.mxu0
      %v3741 = vadd.f32 0.0, %v3740
      %3742 = vdwg.mxu0
      %v3745 = vunpack.c.l.b16 %v3461
      %v3746 = vunpack.c.l.b16 %v3462
      %v3747 = vpack.c.b16 %v3746, %v3745
      %v3781 = vunpack.c.l.b16 %v3463
      %v3782 = vunpack.c.h.b16 %v3463
      %v3783 = vunpack.c.l.b16 %v3464
      %v3784 = vunpack.c.h.b16 %v3464
      %v3785 = vunpack.c.l.b16 %v3465
      %v3786 = vunpack.c.h.b16 %v3465
      %v3787 = vunpack.c.l.b16 %v3466
      %v3788 = vunpack.c.h.b16 %v3466
      %v3789 = vunpack.c.l.b16 %v3467
      %v3790 = vunpack.c.h.b16 %v3467
      %v3791 = vunpack.c.l.b16 %v3468
      %v3792 = vunpack.c.h.b16 %v3468
      %v3793 = vunpack.c.l.b16 %v3469
      %v3794 = vunpack.c.h.b16 %v3469
      %v3795 = vunpack.c.l.b16 %v3470
      %v3796 = vunpack.c.h.b16 %v3470
      %v3797 = vunpack.c.l.b16 %v3471
      %v3798 = vunpack.c.h.b16 %v3471
      %v3799 = vunpack.c.l.b16 %v3472
      %v3800 = vunpack.c.h.b16 %v3472
      %v3801 = vunpack.c.l.b16 %v3473
      %v3802 = vunpack.c.h.b16 %v3473
      %v3803 = vunpack.c.l.b16 %v3474
      %v3804 = vunpack.c.h.b16 %v3474
      %v3805 = vunpack.c.l.b16 %v3475
      %v3806 = vunpack.c.h.b16 %v3475
      %v3807 = vunpack.c.l.b16 %v3476
      %v3808 = vunpack.c.h.b16 %v3476
      %v3809 = vunpack.c.l.b16 %v3477
      %v3810 = vunpack.c.h.b16 %v3477
      %v3811 = vunpack.c.l.b16 %v3478
      %v3812 = vunpack.c.h.b16 %v3478
      %v3813 = vunpack.c.l.b16 %v3479
      %v3814 = vunpack.c.h.b16 %v3479
      %v3815 = vunpack.c.l.b16 %v3480
      %v3816 = vunpack.c.h.b16 %v3480
      %v3817 = vunpack.c.l.b16 %v3481
      %v3818 = vunpack.c.h.b16 %v3481
      %v3819 = vunpack.c.l.b16 %v3482
      %v3820 = vunpack.c.h.b16 %v3482
      %v3821 = vunpack.c.l.b16 %v3483
      %v3822 = vunpack.c.h.b16 %v3483
      %v3823 = vunpack.c.l.b16 %v3484
      %v3824 = vunpack.c.h.b16 %v3484
      %v3825 = vunpack.c.l.b16 %v3485
      %v3826 = vunpack.c.h.b16 %v3485
      %v3827 = vunpack.c.l.b16 %v3486
      %v3828 = vunpack.c.h.b16 %v3486
      %v3829 = vunpack.c.l.b16 %v3487
      %v3830 = vunpack.c.h.b16 %v3487
      %v3831 = vunpack.c.l.b16 %v3488
      %v3832 = vunpack.c.h.b16 %v3488
      %v3833 = vunpack.c.l.b16 %v3489
      %v3834 = vunpack.c.h.b16 %v3489
      %v3835 = vunpack.c.l.b16 %v3490
      %v3836 = vunpack.c.h.b16 %v3490
      %v3837 = vunpack.c.l.b16 %v3491
      %v3838 = vunpack.c.h.b16 %v3491
      %v3839 = vunpack.c.l.b16 %v3492
      %v3840 = vunpack.c.h.b16 %v3492
      %v3841 = vunpack.c.l.b16 %v3493
      %v3842 = vunpack.c.h.b16 %v3493
      %v3843 = vunpack.c.l.b16 %v3494
      %v3844 = vunpack.c.h.b16 %v3494
      %v3845 = vpack.c.b16 %v3785, %v3781
      %v3846 = vpack.c.b16 %v3786, %v3782
      %v3847 = vpack.c.b16 %v3787, %v3783
      %v3848 = vpack.c.b16 %v3788, %v3784
      %v3849 = vpack.c.b16 %v3793, %v3789
      %v3850 = vpack.c.b16 %v3794, %v3790
      %v3851 = vpack.c.b16 %v3795, %v3791
      %v3852 = vpack.c.b16 %v3796, %v3792
      %v3853 = vpack.c.b16 %v3801, %v3797
      %v3854 = vpack.c.b16 %v3802, %v3798
      %v3855 = vpack.c.b16 %v3803, %v3799
      %v3856 = vpack.c.b16 %v3804, %v3800
      %v3857 = vpack.c.b16 %v3809, %v3805
      %v3858 = vpack.c.b16 %v3810, %v3806
      %v3859 = vpack.c.b16 %v3811, %v3807
      %v3860 = vpack.c.b16 %v3812, %v3808
      %v3861 = vpack.c.b16 %v3817, %v3813
      %v3862 = vpack.c.b16 %v3818, %v3814
      %v3863 = vpack.c.b16 %v3819, %v3815
      %v3864 = vpack.c.b16 %v3820, %v3816
      %v3865 = vpack.c.b16 %v3825, %v3821
      %v3866 = vpack.c.b16 %v3826, %v3822
      %v3867 = vpack.c.b16 %v3827, %v3823
      %v3868 = vpack.c.b16 %v3828, %v3824
      %v3869 = vpack.c.b16 %v3833, %v3829
      %v3870 = vpack.c.b16 %v3834, %v3830
      %v3871 = vpack.c.b16 %v3835, %v3831
      %v3872 = vpack.c.b16 %v3836, %v3832
      %v3873 = vpack.c.b16 %v3841, %v3837
      %v3874 = vpack.c.b16 %v3842, %v3838
      %v3875 = vpack.c.b16 %v3843, %v3839
      %v3876 = vpack.c.b16 %v3844, %v3840
      %3909 = vmatpush.bf16.msra.mxu0 %v3873
      %3910 = vmatpush.bf16.msra.mxu0 %v3869
      %3911 = vmatpush.bf16.msra.mxu0 %v3865
      %3912 = vmatpush.bf16.msra.mxu0 %v3861
      %3913 = vmatpush.bf16.msra.mxu0 %v3857
      %3914 = vmatpush.bf16.msra.mxu0 %v3853
      %3915 = vmatpush.bf16.msra.mxu0 %v3849
      %3916 = vmatpush.bf16.msra.mxu0 %v3845
      %3917 = vmatmul.bf16.gmra.mxu0 %v3747
      %v3918 = vpop.f32.mrf.mxu0
      %v3919 = vadd.f32 %v3697, %v3918
      %v3920 = vpop.f32.mrf.mxu0
      %v3921 = vadd.f32 %v3699, %v3920
      %3922 = vdwg.mxu0
      %3923 = vmatpush.bf16.msra.mxu0 %v3874
      %3924 = vmatpush.bf16.msra.mxu0 %v3870
      %3925 = vmatpush.bf16.msra.mxu0 %v3866
      %3926 = vmatpush.bf16.msra.mxu0 %v3862
      %3927 = vmatpush.bf16.msra.mxu0 %v3858
      %3928 = vmatpush.bf16.msra.mxu0 %v3854
      %3929 = vmatpush.bf16.msra.mxu0 %v3850
      %3930 = vmatpush.bf16.msra.mxu0 %v3846
      %3931 = vmatmul.bf16.gmra.mxu0 %v3747
      %v3932 = vpop.f32.mrf.mxu0
      %v3933 = vadd.f32 %v3711, %v3932
      %v3934 = vpop.f32.mrf.mxu0
      %v3935 = vadd.f32 %v3713, %v3934
      %3936 = vdwg.mxu0
      %3937 = vmatpush.bf16.msra.mxu0 %v3875
      %3938 = vmatpush.bf16.msra.mxu0 %v3871
      %3939 = vmatpush.bf16.msra.mxu0 %v3867
      %3940 = vmatpush.bf16.msra.mxu0 %v3863
      %3941 = vmatpush.bf16.msra.mxu0 %v3859
      %3942 = vmatpush.bf16.msra.mxu0 %v3855
      %3943 = vmatpush.bf16.msra.mxu0 %v3851
      %3944 = vmatpush.bf16.msra.mxu0 %v3847
      %3945 = vmatmul.bf16.gmra.mxu0 %v3747
      %v3946 = vpop.f32.mrf.mxu0
      %v3947 = vadd.f32 %v3725, %v3946
      %v3948 = vpop.f32.mrf.mxu0
      %v3949 = vadd.f32 %v3727, %v3948
      %3950 = vdwg.mxu0
      %3951 = vmatpush.bf16.msra.mxu0 %v3876
      %3952 = vmatpush.bf16.msra.mxu0 %v3872
      %3953 = vmatpush.bf16.msra.mxu0 %v3868
      %3954 = vmatpush.bf16.msra.mxu0 %v3864
      %3955 = vmatpush.bf16.msra.mxu0 %v3860
      %3956 = vmatpush.bf16.msra.mxu0 %v3856
      %3957 = vmatpush.bf16.msra.mxu0 %v3852
      %3958 = vmatpush.bf16.msra.mxu0 %v3848
      %3959 = vmatmul.bf16.gmra.mxu0 %v3747
      %v3960 = vpop.f32.mrf.mxu0
      %v3961 = vadd.f32 %v3739, %v3960
      %v3962 = vpop.f32.mrf.mxu0
      %v3963 = vadd.f32 %v3741, %v3962
      %3964 = vdwg.mxu0
      %v3965 = vadd.f32 %v3919, %v147
      %v3966 = vadd.f32 %v3933, %v148
      %v3967 = vadd.f32 %v3947, %v149
      %v3968 = vadd.f32 %v3961, %v150
      %v3969 = vadd.f32 %v3921, %v147
      %v3970 = vadd.f32 %v3935, %v148
      %v3971 = vadd.f32 %v3949, %v149
      %v3972 = vadd.f32 %v3963, %v150
      %v3973 = vmul.f32 %v3965, 0.5
      %v3974 = vmul.f32 %v3969, 0.5
      %v3975 = vtanh.pop %v3973
      %v3976 = vtanh.pop %v3974
      %v3977 = vmul.f32 %v3975, 0.5
      %v3978 = vmul.f32 %v3976, 0.5
      %v3979 = vadd.f32 %v3977, 0.5
      %v3980 = vadd.f32 %v3978, 0.5
      %v3981 = vmul.f32 %v3966, 0.5
      %v3982 = vmul.f32 %v3970, 0.5
      %v3983 = vtanh.pop %v3981
      %v3984 = vtanh.pop %v3982
      %v3985 = vmul.f32 %v3983, 0.5
      %v3986 = vmul.f32 %v3984, 0.5
      %v3987 = vadd.f32 %v3985, 0.5
      %v3988 = vadd.f32 %v3986, 0.5
      %v3989 = vtanh.pop %v3967
      %v3990 = vtanh.pop %v3971
      %v3991 = vmul.f32 %v3968, 0.5
      %v3992 = vmul.f32 %v3972, 0.5
      %v3993 = vtanh.pop %v3991
      %v3994 = vtanh.pop %v3992
      %v3995 = vmul.f32 %v3993, 0.5
      %v3996 = vmul.f32 %v3994, 0.5
      %v3997 = vadd.f32 %v3995, 0.5
      %v3998 = vadd.f32 %v3996, 0.5
      %v3999 = vmul.f32 %v3987, %v2902
      %v4000 = vmul.f32 %v3988, %v2903
      %v4001 = vmul.f32 %v3979, %v3989
      %v4002 = vmul.f32 %v3980, %v3990
      %v4003 = vadd.f32 %v3999, %v4001
      %v4004 = vadd.f32 %v4000, %v4002
      %v4005 = vtanh.pop %v4003
      %v4006 = vtanh.pop %v4004
      %v4007 = vmul.f32 %v3997, %v4005
      %v4008 = vmul.f32 %v3998, %v4006
      %v4009 = vpack.c.bf16 %v4008, %v4007
      %v4010 = vld [vmem:[#allocation11] sm:$0xff]
      %v4011 = vld [vmem:[#allocation11 + $0x8] sm:$0xff]
      %v4012 = vld [vmem:[#allocation11 + $0x10] sm:$0xff]
      %v4013 = vld [vmem:[#allocation11 + $0x18] sm:$0xff]
      %v4014 = vld [vmem:[#allocation11 + $0x20] sm:$0xff]
      %v4015 = vld [vmem:[#allocation11 + $0x28] sm:$0xff]
      %v4016 = vld [vmem:[#allocation11 + $0x30] sm:$0xff]
      %v4017 = vld [vmem:[#allocation11 + $0x38] sm:$0xff]
      %v4018 = vld [vmem:[#allocation11 + $0x40] sm:$0xff]
      %v4019 = vld [vmem:[#allocation11 + $0x48] sm:$0xff]
      %v4020 = vld [vmem:[#allocation11 + $0x50] sm:$0xff]
      %v4021 = vld [vmem:[#allocation11 + $0x58] sm:$0xff]
      %v4022 = vld [vmem:[#allocation11 + $0x60] sm:$0xff]
      %v4023 = vld [vmem:[#allocation11 + $0x68] sm:$0xff]
      %v4024 = vld [vmem:[#allocation11 + $0x70] sm:$0xff]
      %v4025 = vld [vmem:[#allocation11 + $0x78] sm:$0xff]
      %v4026 = vld [vmem:[#allocation11 + $0x80] sm:$0xff]
      %v4027 = vld [vmem:[#allocation11 + $0x88] sm:$0xff]
      %v4028 = vld [vmem:[#allocation11 + $0x90] sm:$0xff]
      %v4029 = vld [vmem:[#allocation11 + $0x98] sm:$0xff]
      %v4030 = vld [vmem:[#allocation11 + $0xa0] sm:$0xff]
      %v4031 = vld [vmem:[#allocation11 + $0xa8] sm:$0xff]
      %v4032 = vld [vmem:[#allocation11 + $0xb0] sm:$0xff]
      %v4033 = vld [vmem:[#allocation11 + $0xb8] sm:$0xff]
      %v4034 = vld [vmem:[#allocation11 + $0xc0] sm:$0xff]
      %v4035 = vld [vmem:[#allocation11 + $0xc8] sm:$0xff]
      %v4036 = vld [vmem:[#allocation11 + $0xd0] sm:$0xff]
      %v4037 = vld [vmem:[#allocation11 + $0xd8] sm:$0xff]
      %v4038 = vld [vmem:[#allocation11 + $0xe0] sm:$0xff]
      %v4039 = vld [vmem:[#allocation11 + $0xe8] sm:$0xff]
      %v4040 = vld [vmem:[#allocation11 + $0xf0] sm:$0xff]
      %v4041 = vld [vmem:[#allocation11 + $0xf8] sm:$0xff]
      %v4042 = vld [vmem:[#allocation12] sm:$0xff]
      %v4043 = vld [vmem:[#allocation12 + $0x8] sm:$0xff]
      %v4044 = vld [vmem:[#allocation12 + $0x10] sm:$0xff]
      %v4045 = vld [vmem:[#allocation12 + $0x18] sm:$0xff]
      %v4046 = vld [vmem:[#allocation12 + $0x20] sm:$0xff]
      %v4047 = vld [vmem:[#allocation12 + $0x28] sm:$0xff]
      %v4048 = vld [vmem:[#allocation12 + $0x30] sm:$0xff]
      %v4049 = vld [vmem:[#allocation12 + $0x38] sm:$0xff]
      %v4050 = vld [vmem:[#allocation12 + $0x40] sm:$0xff]
      %v4051 = vld [vmem:[#allocation12 + $0x48] sm:$0xff]
      %v4052 = vld [vmem:[#allocation12 + $0x50] sm:$0xff]
      %v4053 = vld [vmem:[#allocation12 + $0x58] sm:$0xff]
      %v4054 = vld [vmem:[#allocation12 + $0x60] sm:$0xff]
      %v4055 = vld [vmem:[#allocation12 + $0x68] sm:$0xff]
      %v4056 = vld [vmem:[#allocation12 + $0x70] sm:$0xff]
      %v4057 = vld [vmem:[#allocation12 + $0x78] sm:$0xff]
      %v4058 = vld [vmem:[#allocation12 + $0x80] sm:$0xff]
      %v4059 = vld [vmem:[#allocation12 + $0x88] sm:$0xff]
      %v4060 = vld [vmem:[#allocation12 + $0x90] sm:$0xff]
      %v4061 = vld [vmem:[#allocation12 + $0x98] sm:$0xff]
      %v4062 = vld [vmem:[#allocation12 + $0xa0] sm:$0xff]
      %v4063 = vld [vmem:[#allocation12 + $0xa8] sm:$0xff]
      %v4064 = vld [vmem:[#allocation12 + $0xb0] sm:$0xff]
      %v4065 = vld [vmem:[#allocation12 + $0xb8] sm:$0xff]
      %v4066 = vld [vmem:[#allocation12 + $0xc0] sm:$0xff]
      %v4067 = vld [vmem:[#allocation12 + $0xc8] sm:$0xff]
      %v4068 = vld [vmem:[#allocation12 + $0xd0] sm:$0xff]
      %v4069 = vld [vmem:[#allocation12 + $0xd8] sm:$0xff]
      %v4070 = vld [vmem:[#allocation12 + $0xe0] sm:$0xff]
      %v4071 = vld [vmem:[#allocation12 + $0xe8] sm:$0xff]
      %v4072 = vld [vmem:[#allocation12 + $0xf0] sm:$0xff]
      %v4073 = vld [vmem:[#allocation12 + $0xf8] sm:$0xff]
      %v4076 = vunpack.c.l.b16 %v3455
      %v4077 = vunpack.c.l.b16 %v3456
      %v4078 = vpack.c.b16 %v4077, %v4076
      %v4112 = vunpack.c.l.b16 %v4042
      %v4113 = vunpack.c.h.b16 %v4042
      %v4114 = vunpack.c.l.b16 %v4043
      %v4115 = vunpack.c.h.b16 %v4043
      %v4116 = vunpack.c.l.b16 %v4044
      %v4117 = vunpack.c.h.b16 %v4044
      %v4118 = vunpack.c.l.b16 %v4045
      %v4119 = vunpack.c.h.b16 %v4045
      %v4120 = vunpack.c.l.b16 %v4046
      %v4121 = vunpack.c.h.b16 %v4046
      %v4122 = vunpack.c.l.b16 %v4047
      %v4123 = vunpack.c.h.b16 %v4047
      %v4124 = vunpack.c.l.b16 %v4048
      %v4125 = vunpack.c.h.b16 %v4048
      %v4126 = vunpack.c.l.b16 %v4049
      %v4127 = vunpack.c.h.b16 %v4049
      %v4128 = vunpack.c.l.b16 %v4050
      %v4129 = vunpack.c.h.b16 %v4050
      %v4130 = vunpack.c.l.b16 %v4051
      %v4131 = vunpack.c.h.b16 %v4051
      %v4132 = vunpack.c.l.b16 %v4052
      %v4133 = vunpack.c.h.b16 %v4052
      %v4134 = vunpack.c.l.b16 %v4053
      %v4135 = vunpack.c.h.b16 %v4053
      %v4136 = vunpack.c.l.b16 %v4054
      %v4137 = vunpack.c.h.b16 %v4054
      %v4138 = vunpack.c.l.b16 %v4055
      %v4139 = vunpack.c.h.b16 %v4055
      %v4140 = vunpack.c.l.b16 %v4056
      %v4141 = vunpack.c.h.b16 %v4056
      %v4142 = vunpack.c.l.b16 %v4057
      %v4143 = vunpack.c.h.b16 %v4057
      %v4144 = vunpack.c.l.b16 %v4058
      %v4145 = vunpack.c.h.b16 %v4058
      %v4146 = vunpack.c.l.b16 %v4059
      %v4147 = vunpack.c.h.b16 %v4059
      %v4148 = vunpack.c.l.b16 %v4060
      %v4149 = vunpack.c.h.b16 %v4060
      %v4150 = vunpack.c.l.b16 %v4061
      %v4151 = vunpack.c.h.b16 %v4061
      %v4152 = vunpack.c.l.b16 %v4062
      %v4153 = vunpack.c.h.b16 %v4062
      %v4154 = vunpack.c.l.b16 %v4063
      %v4155 = vunpack.c.h.b16 %v4063
      %v4156 = vunpack.c.l.b16 %v4064
      %v4157 = vunpack.c.h.b16 %v4064
      %v4158 = vunpack.c.l.b16 %v4065
      %v4159 = vunpack.c.h.b16 %v4065
      %v4160 = vunpack.c.l.b16 %v4066
      %v4161 = vunpack.c.h.b16 %v4066
      %v4162 = vunpack.c.l.b16 %v4067
      %v4163 = vunpack.c.h.b16 %v4067
      %v4164 = vunpack.c.l.b16 %v4068
      %v4165 = vunpack.c.h.b16 %v4068
      %v4166 = vunpack.c.l.b16 %v4069
      %v4167 = vunpack.c.h.b16 %v4069
      %v4168 = vunpack.c.l.b16 %v4070
      %v4169 = vunpack.c.h.b16 %v4070
      %v4170 = vunpack.c.l.b16 %v4071
      %v4171 = vunpack.c.h.b16 %v4071
      %v4172 = vunpack.c.l.b16 %v4072
      %v4173 = vunpack.c.h.b16 %v4072
      %v4174 = vunpack.c.l.b16 %v4073
      %v4175 = vunpack.c.h.b16 %v4073
      %v4176 = vpack.c.b16 %v4116, %v4112
      %v4177 = vpack.c.b16 %v4117, %v4113
      %v4178 = vpack.c.b16 %v4118, %v4114
      %v4179 = vpack.c.b16 %v4119, %v4115
      %v4180 = vpack.c.b16 %v4124, %v4120
      %v4181 = vpack.c.b16 %v4125, %v4121
      %v4182 = vpack.c.b16 %v4126, %v4122
      %v4183 = vpack.c.b16 %v4127, %v4123
      %v4184 = vpack.c.b16 %v4132, %v4128
      %v4185 = vpack.c.b16 %v4133, %v4129
      %v4186 = vpack.c.b16 %v4134, %v4130
      %v4187 = vpack.c.b16 %v4135, %v4131
      %v4188 = vpack.c.b16 %v4140, %v4136
      %v4189 = vpack.c.b16 %v4141, %v4137
      %v4190 = vpack.c.b16 %v4142, %v4138
      %v4191 = vpack.c.b16 %v4143, %v4139
      %v4192 = vpack.c.b16 %v4148, %v4144
      %v4193 = vpack.c.b16 %v4149, %v4145
      %v4194 = vpack.c.b16 %v4150, %v4146
      %v4195 = vpack.c.b16 %v4151, %v4147
      %v4196 = vpack.c.b16 %v4156, %v4152
      %v4197 = vpack.c.b16 %v4157, %v4153
      %v4198 = vpack.c.b16 %v4158, %v4154
      %v4199 = vpack.c.b16 %v4159, %v4155
      %v4200 = vpack.c.b16 %v4164, %v4160
      %v4201 = vpack.c.b16 %v4165, %v4161
      %v4202 = vpack.c.b16 %v4166, %v4162
      %v4203 = vpack.c.b16 %v4167, %v4163
      %v4204 = vpack.c.b16 %v4172, %v4168
      %v4205 = vpack.c.b16 %v4173, %v4169
      %v4206 = vpack.c.b16 %v4174, %v4170
      %v4207 = vpack.c.b16 %v4175, %v4171
      %4240 = vmatpush.bf16.msra.mxu0 %v4204
      %4241 = vmatpush.bf16.msra.mxu0 %v4200
      %4242 = vmatpush.bf16.msra.mxu0 %v4196
      %4243 = vmatpush.bf16.msra.mxu0 %v4192
      %4244 = vmatpush.bf16.msra.mxu0 %v4188
      %4245 = vmatpush.bf16.msra.mxu0 %v4184
      %4246 = vmatpush.bf16.msra.mxu0 %v4180
      %4247 = vmatpush.bf16.msra.mxu0 %v4176
      %4248 = vmatmul.bf16.gmra.mxu0 %v4078
      %v4249 = vpop.f32.mrf.mxu0
      %v4250 = vadd.f32 0.0, %v4249
      %v4251 = vpop.f32.mrf.mxu0
      %v4252 = vadd.f32 0.0, %v4251
      %4253 = vdwg.mxu0
      %4254 = vmatpush.bf16.msra.mxu0 %v4205
      %4255 = vmatpush.bf16.msra.mxu0 %v4201
      %4256 = vmatpush.bf16.msra.mxu0 %v4197
      %4257 = vmatpush.bf16.msra.mxu0 %v4193
      %4258 = vmatpush.bf16.msra.mxu0 %v4189
      %4259 = vmatpush.bf16.msra.mxu0 %v4185
      %4260 = vmatpush.bf16.msra.mxu0 %v4181
      %4261 = vmatpush.bf16.msra.mxu0 %v4177
      %4262 = vmatmul.bf16.gmra.mxu0 %v4078
      %v4263 = vpop.f32.mrf.mxu0
      %v4264 = vadd.f32 0.0, %v4263
      %v4265 = vpop.f32.mrf.mxu0
      %v4266 = vadd.f32 0.0, %v4265
      %4267 = vdwg.mxu0
      %4268 = vmatpush.bf16.msra.mxu0 %v4206
      %4269 = vmatpush.bf16.msra.mxu0 %v4202
      %4270 = vmatpush.bf16.msra.mxu0 %v4198
      %4271 = vmatpush.bf16.msra.mxu0 %v4194
      %4272 = vmatpush.bf16.msra.mxu0 %v4190
      %4273 = vmatpush.bf16.msra.mxu0 %v4186
      %4274 = vmatpush.bf16.msra.mxu0 %v4182
      %4275 = vmatpush.bf16.msra.mxu0 %v4178
      %4276 = vmatmul.bf16.gmra.mxu0 %v4078
      %v4277 = vpop.f32.mrf.mxu0
      %v4278 = vadd.f32 0.0, %v4277
      %v4279 = vpop.f32.mrf.mxu0
      %v4280 = vadd.f32 0.0, %v4279
      %4281 = vdwg.mxu0
      %4282 = vmatpush.bf16.msra.mxu0 %v4207
      %4283 = vmatpush.bf16.msra.mxu0 %v4203
      %4284 = vmatpush.bf16.msra.mxu0 %v4199
      %4285 = vmatpush.bf16.msra.mxu0 %v4195
      %4286 = vmatpush.bf16.msra.mxu0 %v4191
      %4287 = vmatpush.bf16.msra.mxu0 %v4187
      %4288 = vmatpush.bf16.msra.mxu0 %v4183
      %4289 = vmatpush.bf16.msra.mxu0 %v4179
      %4290 = vmatmul.bf16.gmra.mxu0 %v4078
      %v4291 = vpop.f32.mrf.mxu0
      %v4292 = vadd.f32 0.0, %v4291
      %v4293 = vpop.f32.mrf.mxu0
      %v4294 = vadd.f32 0.0, %v4293
      %4295 = vdwg.mxu0
      %v4328 = vunpack.c.l.b16 %v4010
      %v4329 = vunpack.c.h.b16 %v4010
      %v4330 = vunpack.c.l.b16 %v4011
      %v4331 = vunpack.c.h.b16 %v4011
      %v4332 = vunpack.c.l.b16 %v4012
      %v4333 = vunpack.c.h.b16 %v4012
      %v4334 = vunpack.c.l.b16 %v4013
      %v4335 = vunpack.c.h.b16 %v4013
      %v4336 = vunpack.c.l.b16 %v4014
      %v4337 = vunpack.c.h.b16 %v4014
      %v4338 = vunpack.c.l.b16 %v4015
      %v4339 = vunpack.c.h.b16 %v4015
      %v4340 = vunpack.c.l.b16 %v4016
      %v4341 = vunpack.c.h.b16 %v4016
      %v4342 = vunpack.c.l.b16 %v4017
      %v4343 = vunpack.c.h.b16 %v4017
      %v4344 = vunpack.c.l.b16 %v4018
      %v4345 = vunpack.c.h.b16 %v4018
      %v4346 = vunpack.c.l.b16 %v4019
      %v4347 = vunpack.c.h.b16 %v4019
      %v4348 = vunpack.c.l.b16 %v4020
      %v4349 = vunpack.c.h.b16 %v4020
      %v4350 = vunpack.c.l.b16 %v4021
      %v4351 = vunpack.c.h.b16 %v4021
      %v4352 = vunpack.c.l.b16 %v4022
      %v4353 = vunpack.c.h.b16 %v4022
      %v4354 = vunpack.c.l.b16 %v4023
      %v4355 = vunpack.c.h.b16 %v4023
      %v4356 = vunpack.c.l.b16 %v4024
      %v4357 = vunpack.c.h.b16 %v4024
      %v4358 = vunpack.c.l.b16 %v4025
      %v4359 = vunpack.c.h.b16 %v4025
      %v4360 = vunpack.c.l.b16 %v4026
      %v4361 = vunpack.c.h.b16 %v4026
      %v4362 = vunpack.c.l.b16 %v4027
      %v4363 = vunpack.c.h.b16 %v4027
      %v4364 = vunpack.c.l.b16 %v4028
      %v4365 = vunpack.c.h.b16 %v4028
      %v4366 = vunpack.c.l.b16 %v4029
      %v4367 = vunpack.c.h.b16 %v4029
      %v4368 = vunpack.c.l.b16 %v4030
      %v4369 = vunpack.c.h.b16 %v4030
      %v4370 = vunpack.c.l.b16 %v4031
      %v4371 = vunpack.c.h.b16 %v4031
      %v4372 = vunpack.c.l.b16 %v4032
      %v4373 = vunpack.c.h.b16 %v4032
      %v4374 = vunpack.c.l.b16 %v4033
      %v4375 = vunpack.c.h.b16 %v4033
      %v4376 = vunpack.c.l.b16 %v4034
      %v4377 = vunpack.c.h.b16 %v4034
      %v4378 = vunpack.c.l.b16 %v4035
      %v4379 = vunpack.c.h.b16 %v4035
      %v4380 = vunpack.c.l.b16 %v4036
      %v4381 = vunpack.c.h.b16 %v4036
      %v4382 = vunpack.c.l.b16 %v4037
      %v4383 = vunpack.c.h.b16 %v4037
      %v4384 = vunpack.c.l.b16 %v4038
      %v4385 = vunpack.c.h.b16 %v4038
      %v4386 = vunpack.c.l.b16 %v4039
      %v4387 = vunpack.c.h.b16 %v4039
      %v4388 = vunpack.c.l.b16 %v4040
      %v4389 = vunpack.c.h.b16 %v4040
      %v4390 = vunpack.c.l.b16 %v4041
      %v4391 = vunpack.c.h.b16 %v4041
      %v4392 = vpack.c.b16 %v4332, %v4328
      %v4393 = vpack.c.b16 %v4333, %v4329
      %v4394 = vpack.c.b16 %v4334, %v4330
      %v4395 = vpack.c.b16 %v4335, %v4331
      %v4396 = vpack.c.b16 %v4340, %v4336
      %v4397 = vpack.c.b16 %v4341, %v4337
      %v4398 = vpack.c.b16 %v4342, %v4338
      %v4399 = vpack.c.b16 %v4343, %v4339
      %v4400 = vpack.c.b16 %v4348, %v4344
      %v4401 = vpack.c.b16 %v4349, %v4345
      %v4402 = vpack.c.b16 %v4350, %v4346
      %v4403 = vpack.c.b16 %v4351, %v4347
      %v4404 = vpack.c.b16 %v4356, %v4352
      %v4405 = vpack.c.b16 %v4357, %v4353
      %v4406 = vpack.c.b16 %v4358, %v4354
      %v4407 = vpack.c.b16 %v4359, %v4355
      %v4408 = vpack.c.b16 %v4364, %v4360
      %v4409 = vpack.c.b16 %v4365, %v4361
      %v4410 = vpack.c.b16 %v4366, %v4362
      %v4411 = vpack.c.b16 %v4367, %v4363
      %v4412 = vpack.c.b16 %v4372, %v4368
      %v4413 = vpack.c.b16 %v4373, %v4369
      %v4414 = vpack.c.b16 %v4374, %v4370
      %v4415 = vpack.c.b16 %v4375, %v4371
      %v4416 = vpack.c.b16 %v4380, %v4376
      %v4417 = vpack.c.b16 %v4381, %v4377
      %v4418 = vpack.c.b16 %v4382, %v4378
      %v4419 = vpack.c.b16 %v4383, %v4379
      %v4420 = vpack.c.b16 %v4388, %v4384
      %v4421 = vpack.c.b16 %v4389, %v4385
      %v4422 = vpack.c.b16 %v4390, %v4386
      %v4423 = vpack.c.b16 %v4391, %v4387
      %4456 = vmatpush.bf16.msra.mxu0 %v4420
      %4457 = vmatpush.bf16.msra.mxu0 %v4416
      %4458 = vmatpush.bf16.msra.mxu0 %v4412
      %4459 = vmatpush.bf16.msra.mxu0 %v4408
      %4460 = vmatpush.bf16.msra.mxu0 %v4404
      %4461 = vmatpush.bf16.msra.mxu0 %v4400
      %4462 = vmatpush.bf16.msra.mxu0 %v4396
      %4463 = vmatpush.bf16.msra.mxu0 %v4392
      %4464 = vmatmul.bf16.gmra.mxu0 %v4009
      %v4465 = vpop.f32.mrf.mxu0
      %v4466 = vadd.f32 %v4250, %v4465
      %v4467 = vpop.f32.mrf.mxu0
      %v4468 = vadd.f32 %v4252, %v4467
      %4469 = vdwg.mxu0
      %4470 = vmatpush.bf16.msra.mxu0 %v4421
      %4471 = vmatpush.bf16.msra.mxu0 %v4417
      %4472 = vmatpush.bf16.msra.mxu0 %v4413
      %4473 = vmatpush.bf16.msra.mxu0 %v4409
      %4474 = vmatpush.bf16.msra.mxu0 %v4405
      %4475 = vmatpush.bf16.msra.mxu0 %v4401
      %4476 = vmatpush.bf16.msra.mxu0 %v4397
      %4477 = vmatpush.bf16.msra.mxu0 %v4393
      %4478 = vmatmul.bf16.gmra.mxu0 %v4009
      %v4479 = vpop.f32.mrf.mxu0
      %v4480 = vadd.f32 %v4264, %v4479
      %v4481 = vpop.f32.mrf.mxu0
      %v4482 = vadd.f32 %v4266, %v4481
      %4483 = vdwg.mxu0
      %4484 = vmatpush.bf16.msra.mxu0 %v4422
      %4485 = vmatpush.bf16.msra.mxu0 %v4418
      %4486 = vmatpush.bf16.msra.mxu0 %v4414
      %4487 = vmatpush.bf16.msra.mxu0 %v4410
      %4488 = vmatpush.bf16.msra.mxu0 %v4406
      %4489 = vmatpush.bf16.msra.mxu0 %v4402
      %4490 = vmatpush.bf16.msra.mxu0 %v4398
      %4491 = vmatpush.bf16.msra.mxu0 %v4394
      %4492 = vmatmul.bf16.gmra.mxu0 %v4009
      %v4493 = vpop.f32.mrf.mxu0
      %v4494 = vadd.f32 %v4278, %v4493
      %v4495 = vpop.f32.mrf.mxu0
      %v4496 = vadd.f32 %v4280, %v4495
      %4497 = vdwg.mxu0
      %4498 = vmatpush.bf16.msra.mxu0 %v4423
      %4499 = vmatpush.bf16.msra.mxu0 %v4419
      %4500 = vmatpush.bf16.msra.mxu0 %v4415
      %4501 = vmatpush.bf16.msra.mxu0 %v4411
      %4502 = vmatpush.bf16.msra.mxu0 %v4407
      %4503 = vmatpush.bf16.msra.mxu0 %v4403
      %4504 = vmatpush.bf16.msra.mxu0 %v4399
      %4505 = vmatpush.bf16.msra.mxu0 %v4395
      %4506 = vmatmul.bf16.gmra.mxu0 %v4009
      %v4507 = vpop.f32.mrf.mxu0
      %v4508 = vadd.f32 %v4292, %v4507
      %v4509 = vpop.f32.mrf.mxu0
      %v4510 = vadd.f32 %v4294, %v4509
      %4511 = vdwg.mxu0
      %v4512 = vadd.f32 %v4466, %v157
      %v4513 = vadd.f32 %v4480, %v158
      %v4514 = vadd.f32 %v4494, %v159
      %v4515 = vadd.f32 %v4508, %v160
      %v4516 = vadd.f32 %v4468, %v157
      %v4517 = vadd.f32 %v4482, %v158
      %v4518 = vadd.f32 %v4496, %v159
      %v4519 = vadd.f32 %v4510, %v160
      %v4520 = vmul.f32 %v4512, 0.5
      %v4521 = vmul.f32 %v4516, 0.5
      %v4522 = vtanh.pop %v4520
      %v4523 = vtanh.pop %v4521
      %v4524 = vmul.f32 %v4522, 0.5
      %v4525 = vmul.f32 %v4523, 0.5
      %v4526 = vadd.f32 %v4524, 0.5
      %v4527 = vadd.f32 %v4525, 0.5
      %v4528 = vmul.f32 %v4513, 0.5
      %v4529 = vmul.f32 %v4517, 0.5
      %v4530 = vtanh.pop %v4528
      %v4531 = vtanh.pop %v4529
      %v4532 = vmul.f32 %v4530, 0.5
      %v4533 = vmul.f32 %v4531, 0.5
      %v4534 = vadd.f32 %v4532, 0.5
      %v4535 = vadd.f32 %v4533, 0.5
      %v4536 = vtanh.pop %v4514
      %v4537 = vtanh.pop %v4518
      %v4538 = vmul.f32 %v4515, 0.5
      %v4539 = vmul.f32 %v4519, 0.5
      %v4540 = vtanh.pop %v4538
      %v4541 = vtanh.pop %v4539
      %v4542 = vmul.f32 %v4540, 0.5
      %v4543 = vmul.f32 %v4541, 0.5
      %v4544 = vadd.f32 %v4542, 0.5
      %v4545 = vadd.f32 %v4543, 0.5
      %v4546 = vmul.f32 %v4534, %v3449
      %v4547 = vmul.f32 %v4535, %v3450
      %v4548 = vmul.f32 %v4526, %v4536
      %v4549 = vmul.f32 %v4527, %v4537
      %v4550 = vadd.f32 %v4546, %v4548
      %v4551 = vadd.f32 %v4547, %v4549
      %v4552 = vtanh.pop %v4550
      %v4553 = vtanh.pop %v4551
      %v4554 = vmul.f32 %v4544, %v4552
      %v4555 = vmul.f32 %v4545, %v4553
      %v4556 = vpack.c.bf16 %v4554, %v4554
      %v4557 = vpack.c.bf16 %v4555, %v4555
      %s4558 = scalar_lea.vmem [#allocation2], 24
      %4559 = vst [vmem:[%s4558] sm:$0xf] %v4556
      %4560 = vst [vmem:[%s4558 + $0x4] sm:$0xf] %v4557
      %s4561 = scalar_lea.vmem [#allocation3], 32
      %v4562 = vld [vmem:[%s4561] sm:$0xf]
      %v4563 = vld [vmem:[%s4561 + $0x4] sm:$0xf]
      %v4564 = vld [vmem:[#allocation6] sm:$0xff]
      %v4565 = vld [vmem:[#allocation6 + $0x8] sm:$0xff]
      %v4566 = vld [vmem:[#allocation6 + $0x10] sm:$0xff]
      %v4567 = vld [vmem:[#allocation6 + $0x18] sm:$0xff]
      %v4568 = vld [vmem:[#allocation6 + $0x20] sm:$0xff]
      %v4569 = vld [vmem:[#allocation6 + $0x28] sm:$0xff]
      %v4570 = vld [vmem:[#allocation6 + $0x30] sm:$0xff]
      %v4571 = vld [vmem:[#allocation6 + $0x38] sm:$0xff]
      %v4572 = vld [vmem:[#allocation6 + $0x40] sm:$0xff]
      %v4573 = vld [vmem:[#allocation6 + $0x48] sm:$0xff]
      %v4574 = vld [vmem:[#allocation6 + $0x50] sm:$0xff]
      %v4575 = vld [vmem:[#allocation6 + $0x58] sm:$0xff]
      %v4576 = vld [vmem:[#allocation6 + $0x60] sm:$0xff]
      %v4577 = vld [vmem:[#allocation6 + $0x68] sm:$0xff]
      %v4578 = vld [vmem:[#allocation6 + $0x70] sm:$0xff]
      %v4579 = vld [vmem:[#allocation6 + $0x78] sm:$0xff]
      %v4580 = vld [vmem:[#allocation6 + $0x80] sm:$0xff]
      %v4581 = vld [vmem:[#allocation6 + $0x88] sm:$0xff]
      %v4582 = vld [vmem:[#allocation6 + $0x90] sm:$0xff]
      %v4583 = vld [vmem:[#allocation6 + $0x98] sm:$0xff]
      %v4584 = vld [vmem:[#allocation6 + $0xa0] sm:$0xff]
      %v4585 = vld [vmem:[#allocation6 + $0xa8] sm:$0xff]
      %v4586 = vld [vmem:[#allocation6 + $0xb0] sm:$0xff]
      %v4587 = vld [vmem:[#allocation6 + $0xb8] sm:$0xff]
      %v4588 = vld [vmem:[#allocation6 + $0xc0] sm:$0xff]
      %v4589 = vld [vmem:[#allocation6 + $0xc8] sm:$0xff]
      %v4590 = vld [vmem:[#allocation6 + $0xd0] sm:$0xff]
      %v4591 = vld [vmem:[#allocation6 + $0xd8] sm:$0xff]
      %v4592 = vld [vmem:[#allocation6 + $0xe0] sm:$0xff]
      %v4593 = vld [vmem:[#allocation6 + $0xe8] sm:$0xff]
      %v4594 = vld [vmem:[#allocation6 + $0xf0] sm:$0xff]
      %v4595 = vld [vmem:[#allocation6 + $0xf8] sm:$0xff]
      %v4596 = vld [vmem:[#allocation8] sm:$0xff]
      %v4597 = vld [vmem:[#allocation8 + $0x8] sm:$0xff]
      %v4598 = vld [vmem:[#allocation8 + $0x10] sm:$0xff]
      %v4599 = vld [vmem:[#allocation8 + $0x18] sm:$0xff]
      %v4600 = vld [vmem:[#allocation8 + $0x20] sm:$0xff]
      %v4601 = vld [vmem:[#allocation8 + $0x28] sm:$0xff]
      %v4602 = vld [vmem:[#allocation8 + $0x30] sm:$0xff]
      %v4603 = vld [vmem:[#allocation8 + $0x38] sm:$0xff]
      %v4604 = vld [vmem:[#allocation8 + $0x40] sm:$0xff]
      %v4605 = vld [vmem:[#allocation8 + $0x48] sm:$0xff]
      %v4606 = vld [vmem:[#allocation8 + $0x50] sm:$0xff]
      %v4607 = vld [vmem:[#allocation8 + $0x58] sm:$0xff]
      %v4608 = vld [vmem:[#allocation8 + $0x60] sm:$0xff]
      %v4609 = vld [vmem:[#allocation8 + $0x68] sm:$0xff]
      %v4610 = vld [vmem:[#allocation8 + $0x70] sm:$0xff]
      %v4611 = vld [vmem:[#allocation8 + $0x78] sm:$0xff]
      %v4612 = vld [vmem:[#allocation8 + $0x80] sm:$0xff]
      %v4613 = vld [vmem:[#allocation8 + $0x88] sm:$0xff]
      %v4614 = vld [vmem:[#allocation8 + $0x90] sm:$0xff]
      %v4615 = vld [vmem:[#allocation8 + $0x98] sm:$0xff]
      %v4616 = vld [vmem:[#allocation8 + $0xa0] sm:$0xff]
      %v4617 = vld [vmem:[#allocation8 + $0xa8] sm:$0xff]
      %v4618 = vld [vmem:[#allocation8 + $0xb0] sm:$0xff]
      %v4619 = vld [vmem:[#allocation8 + $0xb8] sm:$0xff]
      %v4620 = vld [vmem:[#allocation8 + $0xc0] sm:$0xff]
      %v4621 = vld [vmem:[#allocation8 + $0xc8] sm:$0xff]
      %v4622 = vld [vmem:[#allocation8 + $0xd0] sm:$0xff]
      %v4623 = vld [vmem:[#allocation8 + $0xd8] sm:$0xff]
      %v4624 = vld [vmem:[#allocation8 + $0xe0] sm:$0xff]
      %v4625 = vld [vmem:[#allocation8 + $0xe8] sm:$0xff]
      %v4626 = vld [vmem:[#allocation8 + $0xf0] sm:$0xff]
      %v4627 = vld [vmem:[#allocation8 + $0xf8] sm:$0xff]
      %v4660 = vunpack.c.l.b16 %v4596
      %v4661 = vunpack.c.h.b16 %v4596
      %v4662 = vunpack.c.l.b16 %v4597
      %v4663 = vunpack.c.h.b16 %v4597
      %v4664 = vunpack.c.l.b16 %v4598
      %v4665 = vunpack.c.h.b16 %v4598
      %v4666 = vunpack.c.l.b16 %v4599
      %v4667 = vunpack.c.h.b16 %v4599
      %v4668 = vunpack.c.l.b16 %v4600
      %v4669 = vunpack.c.h.b16 %v4600
      %v4670 = vunpack.c.l.b16 %v4601
      %v4671 = vunpack.c.h.b16 %v4601
      %v4672 = vunpack.c.l.b16 %v4602
      %v4673 = vunpack.c.h.b16 %v4602
      %v4674 = vunpack.c.l.b16 %v4603
      %v4675 = vunpack.c.h.b16 %v4603
      %v4676 = vunpack.c.l.b16 %v4604
      %v4677 = vunpack.c.h.b16 %v4604
      %v4678 = vunpack.c.l.b16 %v4605
      %v4679 = vunpack.c.h.b16 %v4605
      %v4680 = vunpack.c.l.b16 %v4606
      %v4681 = vunpack.c.h.b16 %v4606
      %v4682 = vunpack.c.l.b16 %v4607
      %v4683 = vunpack.c.h.b16 %v4607
      %v4684 = vunpack.c.l.b16 %v4608
      %v4685 = vunpack.c.h.b16 %v4608
      %v4686 = vunpack.c.l.b16 %v4609
      %v4687 = vunpack.c.h.b16 %v4609
      %v4688 = vunpack.c.l.b16 %v4610
      %v4689 = vunpack.c.h.b16 %v4610
      %v4690 = vunpack.c.l.b16 %v4611
      %v4691 = vunpack.c.h.b16 %v4611
      %v4692 = vunpack.c.l.b16 %v4612
      %v4693 = vunpack.c.h.b16 %v4612
      %v4694 = vunpack.c.l.b16 %v4613
      %v4695 = vunpack.c.h.b16 %v4613
      %v4696 = vunpack.c.l.b16 %v4614
      %v4697 = vunpack.c.h.b16 %v4614
      %v4698 = vunpack.c.l.b16 %v4615
      %v4699 = vunpack.c.h.b16 %v4615
      %v4700 = vunpack.c.l.b16 %v4616
      %v4701 = vunpack.c.h.b16 %v4616
      %v4702 = vunpack.c.l.b16 %v4617
      %v4703 = vunpack.c.h.b16 %v4617
      %v4704 = vunpack.c.l.b16 %v4618
      %v4705 = vunpack.c.h.b16 %v4618
      %v4706 = vunpack.c.l.b16 %v4619
      %v4707 = vunpack.c.h.b16 %v4619
      %v4708 = vunpack.c.l.b16 %v4620
      %v4709 = vunpack.c.h.b16 %v4620
      %v4710 = vunpack.c.l.b16 %v4621
      %v4711 = vunpack.c.h.b16 %v4621
      %v4712 = vunpack.c.l.b16 %v4622
      %v4713 = vunpack.c.h.b16 %v4622
      %v4714 = vunpack.c.l.b16 %v4623
      %v4715 = vunpack.c.h.b16 %v4623
      %v4716 = vunpack.c.l.b16 %v4624
      %v4717 = vunpack.c.h.b16 %v4624
      %v4718 = vunpack.c.l.b16 %v4625
      %v4719 = vunpack.c.h.b16 %v4625
      %v4720 = vunpack.c.l.b16 %v4626
      %v4721 = vunpack.c.h.b16 %v4626
      %v4722 = vunpack.c.l.b16 %v4627
      %v4723 = vunpack.c.h.b16 %v4627
      %v4724 = vpack.c.b16 %v4664, %v4660
      %v4725 = vpack.c.b16 %v4665, %v4661
      %v4726 = vpack.c.b16 %v4666, %v4662
      %v4727 = vpack.c.b16 %v4667, %v4663
      %v4728 = vpack.c.b16 %v4672, %v4668
      %v4729 = vpack.c.b16 %v4673, %v4669
      %v4730 = vpack.c.b16 %v4674, %v4670
      %v4731 = vpack.c.b16 %v4675, %v4671
      %v4732 = vpack.c.b16 %v4680, %v4676
      %v4733 = vpack.c.b16 %v4681, %v4677
      %v4734 = vpack.c.b16 %v4682, %v4678
      %v4735 = vpack.c.b16 %v4683, %v4679
      %v4736 = vpack.c.b16 %v4688, %v4684
      %v4737 = vpack.c.b16 %v4689, %v4685
      %v4738 = vpack.c.b16 %v4690, %v4686
      %v4739 = vpack.c.b16 %v4691, %v4687
      %v4740 = vpack.c.b16 %v4696, %v4692
      %v4741 = vpack.c.b16 %v4697, %v4693
      %v4742 = vpack.c.b16 %v4698, %v4694
      %v4743 = vpack.c.b16 %v4699, %v4695
      %v4744 = vpack.c.b16 %v4704, %v4700
      %v4745 = vpack.c.b16 %v4705, %v4701
      %v4746 = vpack.c.b16 %v4706, %v4702
      %v4747 = vpack.c.b16 %v4707, %v4703
      %v4748 = vpack.c.b16 %v4712, %v4708
      %v4749 = vpack.c.b16 %v4713, %v4709
      %v4750 = vpack.c.b16 %v4714, %v4710
      %v4751 = vpack.c.b16 %v4715, %v4711
      %v4752 = vpack.c.b16 %v4720, %v4716
      %v4753 = vpack.c.b16 %v4721, %v4717
      %v4754 = vpack.c.b16 %v4722, %v4718
      %v4755 = vpack.c.b16 %v4723, %v4719
      %4788 = vmatpush.bf16.msra.mxu0 %v4752
      %4789 = vmatpush.bf16.msra.mxu0 %v4748
      %4790 = vmatpush.bf16.msra.mxu0 %v4744
      %4791 = vmatpush.bf16.msra.mxu0 %v4740
      %4792 = vmatpush.bf16.msra.mxu0 %v4736
      %4793 = vmatpush.bf16.msra.mxu0 %v4732
      %4794 = vmatpush.bf16.msra.mxu0 %v4728
      %4795 = vmatpush.bf16.msra.mxu0 %v4724
      %4796 = vmatmul.bf16.gmra.mxu0 %v4009
      %v4797 = vpop.f32.mrf.mxu0
      %v4798 = vadd.f32 0.0, %v4797
      %v4799 = vpop.f32.mrf.mxu0
      %v4800 = vadd.f32 0.0, %v4799
      %4801 = vdwg.mxu0
      %4802 = vmatpush.bf16.msra.mxu0 %v4753
      %4803 = vmatpush.bf16.msra.mxu0 %v4749
      %4804 = vmatpush.bf16.msra.mxu0 %v4745
      %4805 = vmatpush.bf16.msra.mxu0 %v4741
      %4806 = vmatpush.bf16.msra.mxu0 %v4737
      %4807 = vmatpush.bf16.msra.mxu0 %v4733
      %4808 = vmatpush.bf16.msra.mxu0 %v4729
      %4809 = vmatpush.bf16.msra.mxu0 %v4725
      %4810 = vmatmul.bf16.gmra.mxu0 %v4009
      %v4811 = vpop.f32.mrf.mxu0
      %v4812 = vadd.f32 0.0, %v4811
      %v4813 = vpop.f32.mrf.mxu0
      %v4814 = vadd.f32 0.0, %v4813
      %4815 = vdwg.mxu0
      %4816 = vmatpush.bf16.msra.mxu0 %v4754
      %4817 = vmatpush.bf16.msra.mxu0 %v4750
      %4818 = vmatpush.bf16.msra.mxu0 %v4746
      %4819 = vmatpush.bf16.msra.mxu0 %v4742
      %4820 = vmatpush.bf16.msra.mxu0 %v4738
      %4821 = vmatpush.bf16.msra.mxu0 %v4734
      %4822 = vmatpush.bf16.msra.mxu0 %v4730
      %4823 = vmatpush.bf16.msra.mxu0 %v4726
      %4824 = vmatmul.bf16.gmra.mxu0 %v4009
      %v4825 = vpop.f32.mrf.mxu0
      %v4826 = vadd.f32 0.0, %v4825
      %v4827 = vpop.f32.mrf.mxu0
      %v4828 = vadd.f32 0.0, %v4827
      %4829 = vdwg.mxu0
      %4830 = vmatpush.bf16.msra.mxu0 %v4755
      %4831 = vmatpush.bf16.msra.mxu0 %v4751
      %4832 = vmatpush.bf16.msra.mxu0 %v4747
      %4833 = vmatpush.bf16.msra.mxu0 %v4743
      %4834 = vmatpush.bf16.msra.mxu0 %v4739
      %4835 = vmatpush.bf16.msra.mxu0 %v4735
      %4836 = vmatpush.bf16.msra.mxu0 %v4731
      %4837 = vmatpush.bf16.msra.mxu0 %v4727
      %4838 = vmatmul.bf16.gmra.mxu0 %v4009
      %v4839 = vpop.f32.mrf.mxu0
      %v4840 = vadd.f32 0.0, %v4839
      %v4841 = vpop.f32.mrf.mxu0
      %v4842 = vadd.f32 0.0, %v4841
      %4843 = vdwg.mxu0
      %v4846 = vunpack.c.l.b16 %v4562
      %v4847 = vunpack.c.l.b16 %v4563
      %v4848 = vpack.c.b16 %v4847, %v4846
      %v4882 = vunpack.c.l.b16 %v4564
      %v4883 = vunpack.c.h.b16 %v4564
      %v4884 = vunpack.c.l.b16 %v4565
      %v4885 = vunpack.c.h.b16 %v4565
      %v4886 = vunpack.c.l.b16 %v4566
      %v4887 = vunpack.c.h.b16 %v4566
      %v4888 = vunpack.c.l.b16 %v4567
      %v4889 = vunpack.c.h.b16 %v4567
      %v4890 = vunpack.c.l.b16 %v4568
      %v4891 = vunpack.c.h.b16 %v4568
      %v4892 = vunpack.c.l.b16 %v4569
      %v4893 = vunpack.c.h.b16 %v4569
      %v4894 = vunpack.c.l.b16 %v4570
      %v4895 = vunpack.c.h.b16 %v4570
      %v4896 = vunpack.c.l.b16 %v4571
      %v4897 = vunpack.c.h.b16 %v4571
      %v4898 = vunpack.c.l.b16 %v4572
      %v4899 = vunpack.c.h.b16 %v4572
      %v4900 = vunpack.c.l.b16 %v4573
      %v4901 = vunpack.c.h.b16 %v4573
      %v4902 = vunpack.c.l.b16 %v4574
      %v4903 = vunpack.c.h.b16 %v4574
      %v4904 = vunpack.c.l.b16 %v4575
      %v4905 = vunpack.c.h.b16 %v4575
      %v4906 = vunpack.c.l.b16 %v4576
      %v4907 = vunpack.c.h.b16 %v4576
      %v4908 = vunpack.c.l.b16 %v4577
      %v4909 = vunpack.c.h.b16 %v4577
      %v4910 = vunpack.c.l.b16 %v4578
      %v4911 = vunpack.c.h.b16 %v4578
      %v4912 = vunpack.c.l.b16 %v4579
      %v4913 = vunpack.c.h.b16 %v4579
      %v4914 = vunpack.c.l.b16 %v4580
      %v4915 = vunpack.c.h.b16 %v4580
      %v4916 = vunpack.c.l.b16 %v4581
      %v4917 = vunpack.c.h.b16 %v4581
      %v4918 = vunpack.c.l.b16 %v4582
      %v4919 = vunpack.c.h.b16 %v4582
      %v4920 = vunpack.c.l.b16 %v4583
      %v4921 = vunpack.c.h.b16 %v4583
      %v4922 = vunpack.c.l.b16 %v4584
      %v4923 = vunpack.c.h.b16 %v4584
      %v4924 = vunpack.c.l.b16 %v4585
      %v4925 = vunpack.c.h.b16 %v4585
      %v4926 = vunpack.c.l.b16 %v4586
      %v4927 = vunpack.c.h.b16 %v4586
      %v4928 = vunpack.c.l.b16 %v4587
      %v4929 = vunpack.c.h.b16 %v4587
      %v4930 = vunpack.c.l.b16 %v4588
      %v4931 = vunpack.c.h.b16 %v4588
      %v4932 = vunpack.c.l.b16 %v4589
      %v4933 = vunpack.c.h.b16 %v4589
      %v4934 = vunpack.c.l.b16 %v4590
      %v4935 = vunpack.c.h.b16 %v4590
      %v4936 = vunpack.c.l.b16 %v4591
      %v4937 = vunpack.c.h.b16 %v4591
      %v4938 = vunpack.c.l.b16 %v4592
      %v4939 = vunpack.c.h.b16 %v4592
      %v4940 = vunpack.c.l.b16 %v4593
      %v4941 = vunpack.c.h.b16 %v4593
      %v4942 = vunpack.c.l.b16 %v4594
      %v4943 = vunpack.c.h.b16 %v4594
      %v4944 = vunpack.c.l.b16 %v4595
      %v4945 = vunpack.c.h.b16 %v4595
      %v4946 = vpack.c.b16 %v4886, %v4882
      %v4947 = vpack.c.b16 %v4887, %v4883
      %v4948 = vpack.c.b16 %v4888, %v4884
      %v4949 = vpack.c.b16 %v4889, %v4885
      %v4950 = vpack.c.b16 %v4894, %v4890
      %v4951 = vpack.c.b16 %v4895, %v4891
      %v4952 = vpack.c.b16 %v4896, %v4892
      %v4953 = vpack.c.b16 %v4897, %v4893
      %v4954 = vpack.c.b16 %v4902, %v4898
      %v4955 = vpack.c.b16 %v4903, %v4899
      %v4956 = vpack.c.b16 %v4904, %v4900
      %v4957 = vpack.c.b16 %v4905, %v4901
      %v4958 = vpack.c.b16 %v4910, %v4906
      %v4959 = vpack.c.b16 %v4911, %v4907
      %v4960 = vpack.c.b16 %v4912, %v4908
      %v4961 = vpack.c.b16 %v4913, %v4909
      %v4962 = vpack.c.b16 %v4918, %v4914
      %v4963 = vpack.c.b16 %v4919, %v4915
      %v4964 = vpack.c.b16 %v4920, %v4916
      %v4965 = vpack.c.b16 %v4921, %v4917
      %v4966 = vpack.c.b16 %v4926, %v4922
      %v4967 = vpack.c.b16 %v4927, %v4923
      %v4968 = vpack.c.b16 %v4928, %v4924
      %v4969 = vpack.c.b16 %v4929, %v4925
      %v4970 = vpack.c.b16 %v4934, %v4930
      %v4971 = vpack.c.b16 %v4935, %v4931
      %v4972 = vpack.c.b16 %v4936, %v4932
      %v4973 = vpack.c.b16 %v4937, %v4933
      %v4974 = vpack.c.b16 %v4942, %v4938
      %v4975 = vpack.c.b16 %v4943, %v4939
      %v4976 = vpack.c.b16 %v4944, %v4940
      %v4977 = vpack.c.b16 %v4945, %v4941
      %5010 = vmatpush.bf16.msra.mxu0 %v4974
      %5011 = vmatpush.bf16.msra.mxu0 %v4970
      %5012 = vmatpush.bf16.msra.mxu0 %v4966
      %5013 = vmatpush.bf16.msra.mxu0 %v4962
      %5014 = vmatpush.bf16.msra.mxu0 %v4958
      %5015 = vmatpush.bf16.msra.mxu0 %v4954
      %5016 = vmatpush.bf16.msra.mxu0 %v4950
      %5017 = vmatpush.bf16.msra.mxu0 %v4946
      %5018 = vmatmul.bf16.gmra.mxu0 %v4848
      %v5019 = vpop.f32.mrf.mxu0
      %v5020 = vadd.f32 %v4798, %v5019
      %v5021 = vpop.f32.mrf.mxu0
      %v5022 = vadd.f32 %v4800, %v5021
      %5023 = vdwg.mxu0
      %5024 = vmatpush.bf16.msra.mxu0 %v4975
      %5025 = vmatpush.bf16.msra.mxu0 %v4971
      %5026 = vmatpush.bf16.msra.mxu0 %v4967
      %5027 = vmatpush.bf16.msra.mxu0 %v4963
      %5028 = vmatpush.bf16.msra.mxu0 %v4959
      %5029 = vmatpush.bf16.msra.mxu0 %v4955
      %5030 = vmatpush.bf16.msra.mxu0 %v4951
      %5031 = vmatpush.bf16.msra.mxu0 %v4947
      %5032 = vmatmul.bf16.gmra.mxu0 %v4848
      %v5033 = vpop.f32.mrf.mxu0
      %v5034 = vadd.f32 %v4812, %v5033
      %v5035 = vpop.f32.mrf.mxu0
      %v5036 = vadd.f32 %v4814, %v5035
      %5037 = vdwg.mxu0
      %5038 = vmatpush.bf16.msra.mxu0 %v4976
      %5039 = vmatpush.bf16.msra.mxu0 %v4972
      %5040 = vmatpush.bf16.msra.mxu0 %v4968
      %5041 = vmatpush.bf16.msra.mxu0 %v4964
      %5042 = vmatpush.bf16.msra.mxu0 %v4960
      %5043 = vmatpush.bf16.msra.mxu0 %v4956
      %5044 = vmatpush.bf16.msra.mxu0 %v4952
      %5045 = vmatpush.bf16.msra.mxu0 %v4948
      %5046 = vmatmul.bf16.gmra.mxu0 %v4848
      %v5047 = vpop.f32.mrf.mxu0
      %v5048 = vadd.f32 %v4826, %v5047
      %v5049 = vpop.f32.mrf.mxu0
      %v5050 = vadd.f32 %v4828, %v5049
      %5051 = vdwg.mxu0
      %5052 = vmatpush.bf16.msra.mxu0 %v4977
      %5053 = vmatpush.bf16.msra.mxu0 %v4973
      %5054 = vmatpush.bf16.msra.mxu0 %v4969
      %5055 = vmatpush.bf16.msra.mxu0 %v4965
      %5056 = vmatpush.bf16.msra.mxu0 %v4961
      %5057 = vmatpush.bf16.msra.mxu0 %v4957
      %5058 = vmatpush.bf16.msra.mxu0 %v4953
      %5059 = vmatpush.bf16.msra.mxu0 %v4949
      %5060 = vmatmul.bf16.gmra.mxu0 %v4848
      %v5061 = vpop.f32.mrf.mxu0
      %v5062 = vadd.f32 %v4840, %v5061
      %v5063 = vpop.f32.mrf.mxu0
      %v5064 = vadd.f32 %v4842, %v5063
      %5065 = vdwg.mxu0
      %v5066 = vadd.f32 %v5020, %v147
      %v5067 = vadd.f32 %v5034, %v148
      %v5068 = vadd.f32 %v5048, %v149
      %v5069 = vadd.f32 %v5062, %v150
      %v5070 = vadd.f32 %v5022, %v147
      %v5071 = vadd.f32 %v5036, %v148
      %v5072 = vadd.f32 %v5050, %v149
      %v5073 = vadd.f32 %v5064, %v150
      %v5074 = vmul.f32 %v5066, 0.5
      %v5075 = vmul.f32 %v5070, 0.5
      %v5076 = vtanh.pop %v5074
      %v5077 = vtanh.pop %v5075
      %v5078 = vmul.f32 %v5076, 0.5
      %v5079 = vmul.f32 %v5077, 0.5
      %v5080 = vadd.f32 %v5078, 0.5
      %v5081 = vadd.f32 %v5079, 0.5
      %v5082 = vmul.f32 %v5067, 0.5
      %v5083 = vmul.f32 %v5071, 0.5
      %v5084 = vtanh.pop %v5082
      %v5085 = vtanh.pop %v5083
      %v5086 = vmul.f32 %v5084, 0.5
      %v5087 = vmul.f32 %v5085, 0.5
      %v5088 = vadd.f32 %v5086, 0.5
      %v5089 = vadd.f32 %v5087, 0.5
      %v5090 = vtanh.pop %v5068
      %v5091 = vtanh.pop %v5072
      %v5092 = vmul.f32 %v5069, 0.5
      %v5093 = vmul.f32 %v5073, 0.5
      %v5094 = vtanh.pop %v5092
      %v5095 = vtanh.pop %v5093
      %v5096 = vmul.f32 %v5094, 0.5
      %v5097 = vmul.f32 %v5095, 0.5
      %v5098 = vadd.f32 %v5096, 0.5
      %v5099 = vadd.f32 %v5097, 0.5
      %v5100 = vmul.f32 %v5088, %v4003
      %v5101 = vmul.f32 %v5089, %v4004
      %v5102 = vmul.f32 %v5080, %v5090
      %v5103 = vmul.f32 %v5081, %v5091
      %v5104 = vadd.f32 %v5100, %v5102
      %v5105 = vadd.f32 %v5101, %v5103
      %v5106 = vtanh.pop %v5104
      %v5107 = vtanh.pop %v5105
      %v5108 = vmul.f32 %v5098, %v5106
      %v5109 = vmul.f32 %v5099, %v5107
      %v5110 = vpack.c.bf16 %v5109, %v5108
      %v5111 = vld [vmem:[#allocation11] sm:$0xff]
      %v5112 = vld [vmem:[#allocation11 + $0x8] sm:$0xff]
      %v5113 = vld [vmem:[#allocation11 + $0x10] sm:$0xff]
      %v5114 = vld [vmem:[#allocation11 + $0x18] sm:$0xff]
      %v5115 = vld [vmem:[#allocation11 + $0x20] sm:$0xff]
      %v5116 = vld [vmem:[#allocation11 + $0x28] sm:$0xff]
      %v5117 = vld [vmem:[#allocation11 + $0x30] sm:$0xff]
      %v5118 = vld [vmem:[#allocation11 + $0x38] sm:$0xff]
      %v5119 = vld [vmem:[#allocation11 + $0x40] sm:$0xff]
      %v5120 = vld [vmem:[#allocation11 + $0x48] sm:$0xff]
      %v5121 = vld [vmem:[#allocation11 + $0x50] sm:$0xff]
      %v5122 = vld [vmem:[#allocation11 + $0x58] sm:$0xff]
      %v5123 = vld [vmem:[#allocation11 + $0x60] sm:$0xff]
      %v5124 = vld [vmem:[#allocation11 + $0x68] sm:$0xff]
      %v5125 = vld [vmem:[#allocation11 + $0x70] sm:$0xff]
      %v5126 = vld [vmem:[#allocation11 + $0x78] sm:$0xff]
      %v5127 = vld [vmem:[#allocation11 + $0x80] sm:$0xff]
      %v5128 = vld [vmem:[#allocation11 + $0x88] sm:$0xff]
      %v5129 = vld [vmem:[#allocation11 + $0x90] sm:$0xff]
      %v5130 = vld [vmem:[#allocation11 + $0x98] sm:$0xff]
      %v5131 = vld [vmem:[#allocation11 + $0xa0] sm:$0xff]
      %v5132 = vld [vmem:[#allocation11 + $0xa8] sm:$0xff]
      %v5133 = vld [vmem:[#allocation11 + $0xb0] sm:$0xff]
      %v5134 = vld [vmem:[#allocation11 + $0xb8] sm:$0xff]
      %v5135 = vld [vmem:[#allocation11 + $0xc0] sm:$0xff]
      %v5136 = vld [vmem:[#allocation11 + $0xc8] sm:$0xff]
      %v5137 = vld [vmem:[#allocation11 + $0xd0] sm:$0xff]
      %v5138 = vld [vmem:[#allocation11 + $0xd8] sm:$0xff]
      %v5139 = vld [vmem:[#allocation11 + $0xe0] sm:$0xff]
      %v5140 = vld [vmem:[#allocation11 + $0xe8] sm:$0xff]
      %v5141 = vld [vmem:[#allocation11 + $0xf0] sm:$0xff]
      %v5142 = vld [vmem:[#allocation11 + $0xf8] sm:$0xff]
      %v5143 = vld [vmem:[#allocation12] sm:$0xff]
      %v5144 = vld [vmem:[#allocation12 + $0x8] sm:$0xff]
      %v5145 = vld [vmem:[#allocation12 + $0x10] sm:$0xff]
      %v5146 = vld [vmem:[#allocation12 + $0x18] sm:$0xff]
      %v5147 = vld [vmem:[#allocation12 + $0x20] sm:$0xff]
      %v5148 = vld [vmem:[#allocation12 + $0x28] sm:$0xff]
      %v5149 = vld [vmem:[#allocation12 + $0x30] sm:$0xff]
      %v5150 = vld [vmem:[#allocation12 + $0x38] sm:$0xff]
      %v5151 = vld [vmem:[#allocation12 + $0x40] sm:$0xff]
      %v5152 = vld [vmem:[#allocation12 + $0x48] sm:$0xff]
      %v5153 = vld [vmem:[#allocation12 + $0x50] sm:$0xff]
      %v5154 = vld [vmem:[#allocation12 + $0x58] sm:$0xff]
      %v5155 = vld [vmem:[#allocation12 + $0x60] sm:$0xff]
      %v5156 = vld [vmem:[#allocation12 + $0x68] sm:$0xff]
      %v5157 = vld [vmem:[#allocation12 + $0x70] sm:$0xff]
      %v5158 = vld [vmem:[#allocation12 + $0x78] sm:$0xff]
      %v5159 = vld [vmem:[#allocation12 + $0x80] sm:$0xff]
      %v5160 = vld [vmem:[#allocation12 + $0x88] sm:$0xff]
      %v5161 = vld [vmem:[#allocation12 + $0x90] sm:$0xff]
      %v5162 = vld [vmem:[#allocation12 + $0x98] sm:$0xff]
      %v5163 = vld [vmem:[#allocation12 + $0xa0] sm:$0xff]
      %v5164 = vld [vmem:[#allocation12 + $0xa8] sm:$0xff]
      %v5165 = vld [vmem:[#allocation12 + $0xb0] sm:$0xff]
      %v5166 = vld [vmem:[#allocation12 + $0xb8] sm:$0xff]
      %v5167 = vld [vmem:[#allocation12 + $0xc0] sm:$0xff]
      %v5168 = vld [vmem:[#allocation12 + $0xc8] sm:$0xff]
      %v5169 = vld [vmem:[#allocation12 + $0xd0] sm:$0xff]
      %v5170 = vld [vmem:[#allocation12 + $0xd8] sm:$0xff]
      %v5171 = vld [vmem:[#allocation12 + $0xe0] sm:$0xff]
      %v5172 = vld [vmem:[#allocation12 + $0xe8] sm:$0xff]
      %v5173 = vld [vmem:[#allocation12 + $0xf0] sm:$0xff]
      %v5174 = vld [vmem:[#allocation12 + $0xf8] sm:$0xff]
      %v5177 = vunpack.c.l.b16 %v4556
      %v5178 = vunpack.c.l.b16 %v4557
      %v5179 = vpack.c.b16 %v5178, %v5177
      %v5213 = vunpack.c.l.b16 %v5143
      %v5214 = vunpack.c.h.b16 %v5143
      %v5215 = vunpack.c.l.b16 %v5144
      %v5216 = vunpack.c.h.b16 %v5144
      %v5217 = vunpack.c.l.b16 %v5145
      %v5218 = vunpack.c.h.b16 %v5145
      %v5219 = vunpack.c.l.b16 %v5146
      %v5220 = vunpack.c.h.b16 %v5146
      %v5221 = vunpack.c.l.b16 %v5147
      %v5222 = vunpack.c.h.b16 %v5147
      %v5223 = vunpack.c.l.b16 %v5148
      %v5224 = vunpack.c.h.b16 %v5148
      %v5225 = vunpack.c.l.b16 %v5149
      %v5226 = vunpack.c.h.b16 %v5149
      %v5227 = vunpack.c.l.b16 %v5150
      %v5228 = vunpack.c.h.b16 %v5150
      %v5229 = vunpack.c.l.b16 %v5151
      %v5230 = vunpack.c.h.b16 %v5151
      %v5231 = vunpack.c.l.b16 %v5152
      %v5232 = vunpack.c.h.b16 %v5152
      %v5233 = vunpack.c.l.b16 %v5153
      %v5234 = vunpack.c.h.b16 %v5153
      %v5235 = vunpack.c.l.b16 %v5154
      %v5236 = vunpack.c.h.b16 %v5154
      %v5237 = vunpack.c.l.b16 %v5155
      %v5238 = vunpack.c.h.b16 %v5155
      %v5239 = vunpack.c.l.b16 %v5156
      %v5240 = vunpack.c.h.b16 %v5156
      %v5241 = vunpack.c.l.b16 %v5157
      %v5242 = vunpack.c.h.b16 %v5157
      %v5243 = vunpack.c.l.b16 %v5158
      %v5244 = vunpack.c.h.b16 %v5158
      %v5245 = vunpack.c.l.b16 %v5159
      %v5246 = vunpack.c.h.b16 %v5159
      %v5247 = vunpack.c.l.b16 %v5160
      %v5248 = vunpack.c.h.b16 %v5160
      %v5249 = vunpack.c.l.b16 %v5161
      %v5250 = vunpack.c.h.b16 %v5161
      %v5251 = vunpack.c.l.b16 %v5162
      %v5252 = vunpack.c.h.b16 %v5162
      %v5253 = vunpack.c.l.b16 %v5163
      %v5254 = vunpack.c.h.b16 %v5163
      %v5255 = vunpack.c.l.b16 %v5164
      %v5256 = vunpack.c.h.b16 %v5164
      %v5257 = vunpack.c.l.b16 %v5165
      %v5258 = vunpack.c.h.b16 %v5165
      %v5259 = vunpack.c.l.b16 %v5166
      %v5260 = vunpack.c.h.b16 %v5166
      %v5261 = vunpack.c.l.b16 %v5167
      %v5262 = vunpack.c.h.b16 %v5167
      %v5263 = vunpack.c.l.b16 %v5168
      %v5264 = vunpack.c.h.b16 %v5168
      %v5265 = vunpack.c.l.b16 %v5169
      %v5266 = vunpack.c.h.b16 %v5169
      %v5267 = vunpack.c.l.b16 %v5170
      %v5268 = vunpack.c.h.b16 %v5170
      %v5269 = vunpack.c.l.b16 %v5171
      %v5270 = vunpack.c.h.b16 %v5171
      %v5271 = vunpack.c.l.b16 %v5172
      %v5272 = vunpack.c.h.b16 %v5172
      %v5273 = vunpack.c.l.b16 %v5173
      %v5274 = vunpack.c.h.b16 %v5173
      %v5275 = vunpack.c.l.b16 %v5174
      %v5276 = vunpack.c.h.b16 %v5174
      %v5277 = vpack.c.b16 %v5217, %v5213
      %v5278 = vpack.c.b16 %v5218, %v5214
      %v5279 = vpack.c.b16 %v5219, %v5215
      %v5280 = vpack.c.b16 %v5220, %v5216
      %v5281 = vpack.c.b16 %v5225, %v5221
      %v5282 = vpack.c.b16 %v5226, %v5222
      %v5283 = vpack.c.b16 %v5227, %v5223
      %v5284 = vpack.c.b16 %v5228, %v5224
      %v5285 = vpack.c.b16 %v5233, %v5229
      %v5286 = vpack.c.b16 %v5234, %v5230
      %v5287 = vpack.c.b16 %v5235, %v5231
      %v5288 = vpack.c.b16 %v5236, %v5232
      %v5289 = vpack.c.b16 %v5241, %v5237
      %v5290 = vpack.c.b16 %v5242, %v5238
      %v5291 = vpack.c.b16 %v5243, %v5239
      %v5292 = vpack.c.b16 %v5244, %v5240
      %v5293 = vpack.c.b16 %v5249, %v5245
      %v5294 = vpack.c.b16 %v5250, %v5246
      %v5295 = vpack.c.b16 %v5251, %v5247
      %v5296 = vpack.c.b16 %v5252, %v5248
      %v5297 = vpack.c.b16 %v5257, %v5253
      %v5298 = vpack.c.b16 %v5258, %v5254
      %v5299 = vpack.c.b16 %v5259, %v5255
      %v5300 = vpack.c.b16 %v5260, %v5256
      %v5301 = vpack.c.b16 %v5265, %v5261
      %v5302 = vpack.c.b16 %v5266, %v5262
      %v5303 = vpack.c.b16 %v5267, %v5263
      %v5304 = vpack.c.b16 %v5268, %v5264
      %v5305 = vpack.c.b16 %v5273, %v5269
      %v5306 = vpack.c.b16 %v5274, %v5270
      %v5307 = vpack.c.b16 %v5275, %v5271
      %v5308 = vpack.c.b16 %v5276, %v5272
      %5341 = vmatpush.bf16.msra.mxu0 %v5305
      %5342 = vmatpush.bf16.msra.mxu0 %v5301
      %5343 = vmatpush.bf16.msra.mxu0 %v5297
      %5344 = vmatpush.bf16.msra.mxu0 %v5293
      %5345 = vmatpush.bf16.msra.mxu0 %v5289
      %5346 = vmatpush.bf16.msra.mxu0 %v5285
      %5347 = vmatpush.bf16.msra.mxu0 %v5281
      %5348 = vmatpush.bf16.msra.mxu0 %v5277
      %5349 = vmatmul.bf16.gmra.mxu0 %v5179
      %v5350 = vpop.f32.mrf.mxu0
      %v5351 = vadd.f32 0.0, %v5350
      %v5352 = vpop.f32.mrf.mxu0
      %v5353 = vadd.f32 0.0, %v5352
      %5354 = vdwg.mxu0
      %5355 = vmatpush.bf16.msra.mxu0 %v5306
      %5356 = vmatpush.bf16.msra.mxu0 %v5302
      %5357 = vmatpush.bf16.msra.mxu0 %v5298
      %5358 = vmatpush.bf16.msra.mxu0 %v5294
      %5359 = vmatpush.bf16.msra.mxu0 %v5290
      %5360 = vmatpush.bf16.msra.mxu0 %v5286
      %5361 = vmatpush.bf16.msra.mxu0 %v5282
      %5362 = vmatpush.bf16.msra.mxu0 %v5278
      %5363 = vmatmul.bf16.gmra.mxu0 %v5179
      %v5364 = vpop.f32.mrf.mxu0
      %v5365 = vadd.f32 0.0, %v5364
      %v5366 = vpop.f32.mrf.mxu0
      %v5367 = vadd.f32 0.0, %v5366
      %5368 = vdwg.mxu0
      %5369 = vmatpush.bf16.msra.mxu0 %v5307
      %5370 = vmatpush.bf16.msra.mxu0 %v5303
      %5371 = vmatpush.bf16.msra.mxu0 %v5299
      %5372 = vmatpush.bf16.msra.mxu0 %v5295
      %5373 = vmatpush.bf16.msra.mxu0 %v5291
      %5374 = vmatpush.bf16.msra.mxu0 %v5287
      %5375 = vmatpush.bf16.msra.mxu0 %v5283
      %5376 = vmatpush.bf16.msra.mxu0 %v5279
      %5377 = vmatmul.bf16.gmra.mxu0 %v5179
      %v5378 = vpop.f32.mrf.mxu0
      %v5379 = vadd.f32 0.0, %v5378
      %v5380 = vpop.f32.mrf.mxu0
      %v5381 = vadd.f32 0.0, %v5380
      %5382 = vdwg.mxu0
      %5383 = vmatpush.bf16.msra.mxu0 %v5308
      %5384 = vmatpush.bf16.msra.mxu0 %v5304
      %5385 = vmatpush.bf16.msra.mxu0 %v5300
      %5386 = vmatpush.bf16.msra.mxu0 %v5296
      %5387 = vmatpush.bf16.msra.mxu0 %v5292
      %5388 = vmatpush.bf16.msra.mxu0 %v5288
      %5389 = vmatpush.bf16.msra.mxu0 %v5284
      %5390 = vmatpush.bf16.msra.mxu0 %v5280
      %5391 = vmatmul.bf16.gmra.mxu0 %v5179
      %v5392 = vpop.f32.mrf.mxu0
      %v5393 = vadd.f32 0.0, %v5392
      %v5394 = vpop.f32.mrf.mxu0
      %v5395 = vadd.f32 0.0, %v5394
      %5396 = vdwg.mxu0
      %v5429 = vunpack.c.l.b16 %v5111
      %v5430 = vunpack.c.h.b16 %v5111
      %v5431 = vunpack.c.l.b16 %v5112
      %v5432 = vunpack.c.h.b16 %v5112
      %v5433 = vunpack.c.l.b16 %v5113
      %v5434 = vunpack.c.h.b16 %v5113
      %v5435 = vunpack.c.l.b16 %v5114
      %v5436 = vunpack.c.h.b16 %v5114
      %v5437 = vunpack.c.l.b16 %v5115
      %v5438 = vunpack.c.h.b16 %v5115
      %v5439 = vunpack.c.l.b16 %v5116
      %v5440 = vunpack.c.h.b16 %v5116
      %v5441 = vunpack.c.l.b16 %v5117
      %v5442 = vunpack.c.h.b16 %v5117
      %v5443 = vunpack.c.l.b16 %v5118
      %v5444 = vunpack.c.h.b16 %v5118
      %v5445 = vunpack.c.l.b16 %v5119
      %v5446 = vunpack.c.h.b16 %v5119
      %v5447 = vunpack.c.l.b16 %v5120
      %v5448 = vunpack.c.h.b16 %v5120
      %v5449 = vunpack.c.l.b16 %v5121
      %v5450 = vunpack.c.h.b16 %v5121
      %v5451 = vunpack.c.l.b16 %v5122
      %v5452 = vunpack.c.h.b16 %v5122
      %v5453 = vunpack.c.l.b16 %v5123
      %v5454 = vunpack.c.h.b16 %v5123
      %v5455 = vunpack.c.l.b16 %v5124
      %v5456 = vunpack.c.h.b16 %v5124
      %v5457 = vunpack.c.l.b16 %v5125
      %v5458 = vunpack.c.h.b16 %v5125
      %v5459 = vunpack.c.l.b16 %v5126
      %v5460 = vunpack.c.h.b16 %v5126
      %v5461 = vunpack.c.l.b16 %v5127
      %v5462 = vunpack.c.h.b16 %v5127
      %v5463 = vunpack.c.l.b16 %v5128
      %v5464 = vunpack.c.h.b16 %v5128
      %v5465 = vunpack.c.l.b16 %v5129
      %v5466 = vunpack.c.h.b16 %v5129
      %v5467 = vunpack.c.l.b16 %v5130
      %v5468 = vunpack.c.h.b16 %v5130
      %v5469 = vunpack.c.l.b16 %v5131
      %v5470 = vunpack.c.h.b16 %v5131
      %v5471 = vunpack.c.l.b16 %v5132
      %v5472 = vunpack.c.h.b16 %v5132
      %v5473 = vunpack.c.l.b16 %v5133
      %v5474 = vunpack.c.h.b16 %v5133
      %v5475 = vunpack.c.l.b16 %v5134
      %v5476 = vunpack.c.h.b16 %v5134
      %v5477 = vunpack.c.l.b16 %v5135
      %v5478 = vunpack.c.h.b16 %v5135
      %v5479 = vunpack.c.l.b16 %v5136
      %v5480 = vunpack.c.h.b16 %v5136
      %v5481 = vunpack.c.l.b16 %v5137
      %v5482 = vunpack.c.h.b16 %v5137
      %v5483 = vunpack.c.l.b16 %v5138
      %v5484 = vunpack.c.h.b16 %v5138
      %v5485 = vunpack.c.l.b16 %v5139
      %v5486 = vunpack.c.h.b16 %v5139
      %v5487 = vunpack.c.l.b16 %v5140
      %v5488 = vunpack.c.h.b16 %v5140
      %v5489 = vunpack.c.l.b16 %v5141
      %v5490 = vunpack.c.h.b16 %v5141
      %v5491 = vunpack.c.l.b16 %v5142
      %v5492 = vunpack.c.h.b16 %v5142
      %v5493 = vpack.c.b16 %v5433, %v5429
      %v5494 = vpack.c.b16 %v5434, %v5430
      %v5495 = vpack.c.b16 %v5435, %v5431
      %v5496 = vpack.c.b16 %v5436, %v5432
      %v5497 = vpack.c.b16 %v5441, %v5437
      %v5498 = vpack.c.b16 %v5442, %v5438
      %v5499 = vpack.c.b16 %v5443, %v5439
      %v5500 = vpack.c.b16 %v5444, %v5440
      %v5501 = vpack.c.b16 %v5449, %v5445
      %v5502 = vpack.c.b16 %v5450, %v5446
      %v5503 = vpack.c.b16 %v5451, %v5447
      %v5504 = vpack.c.b16 %v5452, %v5448
      %v5505 = vpack.c.b16 %v5457, %v5453
      %v5506 = vpack.c.b16 %v5458, %v5454
      %v5507 = vpack.c.b16 %v5459, %v5455
      %v5508 = vpack.c.b16 %v5460, %v5456
      %v5509 = vpack.c.b16 %v5465, %v5461
      %v5510 = vpack.c.b16 %v5466, %v5462
      %v5511 = vpack.c.b16 %v5467, %v5463
      %v5512 = vpack.c.b16 %v5468, %v5464
      %v5513 = vpack.c.b16 %v5473, %v5469
      %v5514 = vpack.c.b16 %v5474, %v5470
      %v5515 = vpack.c.b16 %v5475, %v5471
      %v5516 = vpack.c.b16 %v5476, %v5472
      %v5517 = vpack.c.b16 %v5481, %v5477
      %v5518 = vpack.c.b16 %v5482, %v5478
      %v5519 = vpack.c.b16 %v5483, %v5479
      %v5520 = vpack.c.b16 %v5484, %v5480
      %v5521 = vpack.c.b16 %v5489, %v5485
      %v5522 = vpack.c.b16 %v5490, %v5486
      %v5523 = vpack.c.b16 %v5491, %v5487
      %v5524 = vpack.c.b16 %v5492, %v5488
      %5557 = vmatpush.bf16.msra.mxu0 %v5521
      %5558 = vmatpush.bf16.msra.mxu0 %v5517
      %5559 = vmatpush.bf16.msra.mxu0 %v5513
      %5560 = vmatpush.bf16.msra.mxu0 %v5509
      %5561 = vmatpush.bf16.msra.mxu0 %v5505
      %5562 = vmatpush.bf16.msra.mxu0 %v5501
      %5563 = vmatpush.bf16.msra.mxu0 %v5497
      %5564 = vmatpush.bf16.msra.mxu0 %v5493
      %5565 = vmatmul.bf16.gmra.mxu0 %v5110
      %v5566 = vpop.f32.mrf.mxu0
      %v5567 = vadd.f32 %v5351, %v5566
      %v5568 = vpop.f32.mrf.mxu0
      %v5569 = vadd.f32 %v5353, %v5568
      %5570 = vdwg.mxu0
      %5571 = vmatpush.bf16.msra.mxu0 %v5522
      %5572 = vmatpush.bf16.msra.mxu0 %v5518
      %5573 = vmatpush.bf16.msra.mxu0 %v5514
      %5574 = vmatpush.bf16.msra.mxu0 %v5510
      %5575 = vmatpush.bf16.msra.mxu0 %v5506
      %5576 = vmatpush.bf16.msra.mxu0 %v5502
      %5577 = vmatpush.bf16.msra.mxu0 %v5498
      %5578 = vmatpush.bf16.msra.mxu0 %v5494
      %5579 = vmatmul.bf16.gmra.mxu0 %v5110
      %v5580 = vpop.f32.mrf.mxu0
      %v5581 = vadd.f32 %v5365, %v5580
      %v5582 = vpop.f32.mrf.mxu0
      %v5583 = vadd.f32 %v5367, %v5582
      %5584 = vdwg.mxu0
      %5585 = vmatpush.bf16.msra.mxu0 %v5523
      %5586 = vmatpush.bf16.msra.mxu0 %v5519
      %5587 = vmatpush.bf16.msra.mxu0 %v5515
      %5588 = vmatpush.bf16.msra.mxu0 %v5511
      %5589 = vmatpush.bf16.msra.mxu0 %v5507
      %5590 = vmatpush.bf16.msra.mxu0 %v5503
      %5591 = vmatpush.bf16.msra.mxu0 %v5499
      %5592 = vmatpush.bf16.msra.mxu0 %v5495
      %5593 = vmatmul.bf16.gmra.mxu0 %v5110
      %v5594 = vpop.f32.mrf.mxu0
      %v5595 = vadd.f32 %v5379, %v5594
      %v5596 = vpop.f32.mrf.mxu0
      %v5597 = vadd.f32 %v5381, %v5596
      %5598 = vdwg.mxu0
      %5599 = vmatpush.bf16.msra.mxu0 %v5524
      %5600 = vmatpush.bf16.msra.mxu0 %v5520
      %5601 = vmatpush.bf16.msra.mxu0 %v5516
      %5602 = vmatpush.bf16.msra.mxu0 %v5512
      %5603 = vmatpush.bf16.msra.mxu0 %v5508
      %5604 = vmatpush.bf16.msra.mxu0 %v5504
      %5605 = vmatpush.bf16.msra.mxu0 %v5500
      %5606 = vmatpush.bf16.msra.mxu0 %v5496
      %5607 = vmatmul.bf16.gmra.mxu0 %v5110
      %v5608 = vpop.f32.mrf.mxu0
      %v5609 = vadd.f32 %v5393, %v5608
      %v5610 = vpop.f32.mrf.mxu0
      %v5611 = vadd.f32 %v5395, %v5610
      %5612 = vdwg.mxu0
      %v5613 = vadd.f32 %v5567, %v157
      %v5614 = vadd.f32 %v5581, %v158
      %v5615 = vadd.f32 %v5595, %v159
      %v5616 = vadd.f32 %v5609, %v160
      %v5617 = vadd.f32 %v5569, %v157
      %v5618 = vadd.f32 %v5583, %v158
      %v5619 = vadd.f32 %v5597, %v159
      %v5620 = vadd.f32 %v5611, %v160
      %v5621 = vmul.f32 %v5613, 0.5
      %v5622 = vmul.f32 %v5617, 0.5
      %v5623 = vtanh.pop %v5621
      %v5624 = vtanh.pop %v5622
      %v5625 = vmul.f32 %v5623, 0.5
      %v5626 = vmul.f32 %v5624, 0.5
      %v5627 = vadd.f32 %v5625, 0.5
      %v5628 = vadd.f32 %v5626, 0.5
      %v5629 = vmul.f32 %v5614, 0.5
      %v5630 = vmul.f32 %v5618, 0.5
      %v5631 = vtanh.pop %v5629
      %v5632 = vtanh.pop %v5630
      %v5633 = vmul.f32 %v5631, 0.5
      %v5634 = vmul.f32 %v5632, 0.5
      %v5635 = vadd.f32 %v5633, 0.5
      %v5636 = vadd.f32 %v5634, 0.5
      %v5637 = vtanh.pop %v5615
      %v5638 = vtanh.pop %v5619
      %v5639 = vmul.f32 %v5616, 0.5
      %v5640 = vmul.f32 %v5620, 0.5
      %v5641 = vtanh.pop %v5639
      %v5642 = vtanh.pop %v5640
      %v5643 = vmul.f32 %v5641, 0.5
      %v5644 = vmul.f32 %v5642, 0.5
      %v5645 = vadd.f32 %v5643, 0.5
      %v5646 = vadd.f32 %v5644, 0.5
      %v5647 = vmul.f32 %v5635, %v4550
      %v5648 = vmul.f32 %v5636, %v4551
      %v5649 = vmul.f32 %v5627, %v5637
      %v5650 = vmul.f32 %v5628, %v5638
      %v5651 = vadd.f32 %v5647, %v5649
      %v5652 = vadd.f32 %v5648, %v5650
      %v5653 = vtanh.pop %v5651
      %v5654 = vtanh.pop %v5652
      %v5655 = vmul.f32 %v5645, %v5653
      %v5656 = vmul.f32 %v5646, %v5654
      %v5657 = vpack.c.bf16 %v5655, %v5655
      %v5658 = vpack.c.bf16 %v5656, %v5656
      %s5659 = scalar_lea.vmem [#allocation2], 32
      %5660 = vst [vmem:[%s5659] sm:$0xf] %v5657
      %5661 = vst [vmem:[%s5659 + $0x4] sm:$0xf] %v5658
      %s5662 = scalar_lea.vmem [#allocation3], 40
      %v5663 = vld [vmem:[%s5662] sm:$0xf]
      %v5664 = vld [vmem:[%s5662 + $0x4] sm:$0xf]
      %v5665 = vld [vmem:[#allocation6] sm:$0xff]
      %v5666 = vld [vmem:[#allocation6 + $0x8] sm:$0xff]
      %v5667 = vld [vmem:[#allocation6 + $0x10] sm:$0xff]
      %v5668 = vld [vmem:[#allocation6 + $0x18] sm:$0xff]
      %v5669 = vld [vmem:[#allocation6 + $0x20] sm:$0xff]
      %v5670 = vld [vmem:[#allocation6 + $0x28] sm:$0xff]
      %v5671 = vld [vmem:[#allocation6 + $0x30] sm:$0xff]
      %v5672 = vld [vmem:[#allocation6 + $0x38] sm:$0xff]
      %v5673 = vld [vmem:[#allocation6 + $0x40] sm:$0xff]
      %v5674 = vld [vmem:[#allocation6 + $0x48] sm:$0xff]
      %v5675 = vld [vmem:[#allocation6 + $0x50] sm:$0xff]
      %v5676 = vld [vmem:[#allocation6 + $0x58] sm:$0xff]
      %v5677 = vld [vmem:[#allocation6 + $0x60] sm:$0xff]
      %v5678 = vld [vmem:[#allocation6 + $0x68] sm:$0xff]
      %v5679 = vld [vmem:[#allocation6 + $0x70] sm:$0xff]
      %v5680 = vld [vmem:[#allocation6 + $0x78] sm:$0xff]
      %v5681 = vld [vmem:[#allocation6 + $0x80] sm:$0xff]
      %v5682 = vld [vmem:[#allocation6 + $0x88] sm:$0xff]
      %v5683 = vld [vmem:[#allocation6 + $0x90] sm:$0xff]
      %v5684 = vld [vmem:[#allocation6 + $0x98] sm:$0xff]
      %v5685 = vld [vmem:[#allocation6 + $0xa0] sm:$0xff]
      %v5686 = vld [vmem:[#allocation6 + $0xa8] sm:$0xff]
      %v5687 = vld [vmem:[#allocation6 + $0xb0] sm:$0xff]
      %v5688 = vld [vmem:[#allocation6 + $0xb8] sm:$0xff]
      %v5689 = vld [vmem:[#allocation6 + $0xc0] sm:$0xff]
      %v5690 = vld [vmem:[#allocation6 + $0xc8] sm:$0xff]
      %v5691 = vld [vmem:[#allocation6 + $0xd0] sm:$0xff]
      %v5692 = vld [vmem:[#allocation6 + $0xd8] sm:$0xff]
      %v5693 = vld [vmem:[#allocation6 + $0xe0] sm:$0xff]
      %v5694 = vld [vmem:[#allocation6 + $0xe8] sm:$0xff]
      %v5695 = vld [vmem:[#allocation6 + $0xf0] sm:$0xff]
      %v5696 = vld [vmem:[#allocation6 + $0xf8] sm:$0xff]
      %v5697 = vld [vmem:[#allocation8] sm:$0xff]
      %v5698 = vld [vmem:[#allocation8 + $0x8] sm:$0xff]
      %v5699 = vld [vmem:[#allocation8 + $0x10] sm:$0xff]
      %v5700 = vld [vmem:[#allocation8 + $0x18] sm:$0xff]
      %v5701 = vld [vmem:[#allocation8 + $0x20] sm:$0xff]
      %v5702 = vld [vmem:[#allocation8 + $0x28] sm:$0xff]
      %v5703 = vld [vmem:[#allocation8 + $0x30] sm:$0xff]
      %v5704 = vld [vmem:[#allocation8 + $0x38] sm:$0xff]
      %v5705 = vld [vmem:[#allocation8 + $0x40] sm:$0xff]
      %v5706 = vld [vmem:[#allocation8 + $0x48] sm:$0xff]
      %v5707 = vld [vmem:[#allocation8 + $0x50] sm:$0xff]
      %v5708 = vld [vmem:[#allocation8 + $0x58] sm:$0xff]
      %v5709 = vld [vmem:[#allocation8 + $0x60] sm:$0xff]
      %v5710 = vld [vmem:[#allocation8 + $0x68] sm:$0xff]
      %v5711 = vld [vmem:[#allocation8 + $0x70] sm:$0xff]
      %v5712 = vld [vmem:[#allocation8 + $0x78] sm:$0xff]
      %v5713 = vld [vmem:[#allocation8 + $0x80] sm:$0xff]
      %v5714 = vld [vmem:[#allocation8 + $0x88] sm:$0xff]
      %v5715 = vld [vmem:[#allocation8 + $0x90] sm:$0xff]
      %v5716 = vld [vmem:[#allocation8 + $0x98] sm:$0xff]
      %v5717 = vld [vmem:[#allocation8 + $0xa0] sm:$0xff]
      %v5718 = vld [vmem:[#allocation8 + $0xa8] sm:$0xff]
      %v5719 = vld [vmem:[#allocation8 + $0xb0] sm:$0xff]
      %v5720 = vld [vmem:[#allocation8 + $0xb8] sm:$0xff]
      %v5721 = vld [vmem:[#allocation8 + $0xc0] sm:$0xff]
      %v5722 = vld [vmem:[#allocation8 + $0xc8] sm:$0xff]
      %v5723 = vld [vmem:[#allocation8 + $0xd0] sm:$0xff]
      %v5724 = vld [vmem:[#allocation8 + $0xd8] sm:$0xff]
      %v5725 = vld [vmem:[#allocation8 + $0xe0] sm:$0xff]
      %v5726 = vld [vmem:[#allocation8 + $0xe8] sm:$0xff]
      %v5727 = vld [vmem:[#allocation8 + $0xf0] sm:$0xff]
      %v5728 = vld [vmem:[#allocation8 + $0xf8] sm:$0xff]
      %v5761 = vunpack.c.l.b16 %v5697
      %v5762 = vunpack.c.h.b16 %v5697
      %v5763 = vunpack.c.l.b16 %v5698
      %v5764 = vunpack.c.h.b16 %v5698
      %v5765 = vunpack.c.l.b16 %v5699
      %v5766 = vunpack.c.h.b16 %v5699
      %v5767 = vunpack.c.l.b16 %v5700
      %v5768 = vunpack.c.h.b16 %v5700
      %v5769 = vunpack.c.l.b16 %v5701
      %v5770 = vunpack.c.h.b16 %v5701
      %v5771 = vunpack.c.l.b16 %v5702
      %v5772 = vunpack.c.h.b16 %v5702
      %v5773 = vunpack.c.l.b16 %v5703
      %v5774 = vunpack.c.h.b16 %v5703
      %v5775 = vunpack.c.l.b16 %v5704
      %v5776 = vunpack.c.h.b16 %v5704
      %v5777 = vunpack.c.l.b16 %v5705
      %v5778 = vunpack.c.h.b16 %v5705
      %v5779 = vunpack.c.l.b16 %v5706
      %v5780 = vunpack.c.h.b16 %v5706
      %v5781 = vunpack.c.l.b16 %v5707
      %v5782 = vunpack.c.h.b16 %v5707
      %v5783 = vunpack.c.l.b16 %v5708
      %v5784 = vunpack.c.h.b16 %v5708
      %v5785 = vunpack.c.l.b16 %v5709
      %v5786 = vunpack.c.h.b16 %v5709
      %v5787 = vunpack.c.l.b16 %v5710
      %v5788 = vunpack.c.h.b16 %v5710
      %v5789 = vunpack.c.l.b16 %v5711
      %v5790 = vunpack.c.h.b16 %v5711
      %v5791 = vunpack.c.l.b16 %v5712
      %v5792 = vunpack.c.h.b16 %v5712
      %v5793 = vunpack.c.l.b16 %v5713
      %v5794 = vunpack.c.h.b16 %v5713
      %v5795 = vunpack.c.l.b16 %v5714
      %v5796 = vunpack.c.h.b16 %v5714
      %v5797 = vunpack.c.l.b16 %v5715
      %v5798 = vunpack.c.h.b16 %v5715
      %v5799 = vunpack.c.l.b16 %v5716
      %v5800 = vunpack.c.h.b16 %v5716
      %v5801 = vunpack.c.l.b16 %v5717
      %v5802 = vunpack.c.h.b16 %v5717
      %v5803 = vunpack.c.l.b16 %v5718
      %v5804 = vunpack.c.h.b16 %v5718
      %v5805 = vunpack.c.l.b16 %v5719
      %v5806 = vunpack.c.h.b16 %v5719
      %v5807 = vunpack.c.l.b16 %v5720
      %v5808 = vunpack.c.h.b16 %v5720
      %v5809 = vunpack.c.l.b16 %v5721
      %v5810 = vunpack.c.h.b16 %v5721
      %v5811 = vunpack.c.l.b16 %v5722
      %v5812 = vunpack.c.h.b16 %v5722
      %v5813 = vunpack.c.l.b16 %v5723
      %v5814 = vunpack.c.h.b16 %v5723
      %v5815 = vunpack.c.l.b16 %v5724
      %v5816 = vunpack.c.h.b16 %v5724
      %v5817 = vunpack.c.l.b16 %v5725
      %v5818 = vunpack.c.h.b16 %v5725
      %v5819 = vunpack.c.l.b16 %v5726
      %v5820 = vunpack.c.h.b16 %v5726
      %v5821 = vunpack.c.l.b16 %v5727
      %v5822 = vunpack.c.h.b16 %v5727
      %v5823 = vunpack.c.l.b16 %v5728
      %v5824 = vunpack.c.h.b16 %v5728
      %v5825 = vpack.c.b16 %v5765, %v5761
      %v5826 = vpack.c.b16 %v5766, %v5762
      %v5827 = vpack.c.b16 %v5767, %v5763
      %v5828 = vpack.c.b16 %v5768, %v5764
      %v5829 = vpack.c.b16 %v5773, %v5769
      %v5830 = vpack.c.b16 %v5774, %v5770
      %v5831 = vpack.c.b16 %v5775, %v5771
      %v5832 = vpack.c.b16 %v5776, %v5772
      %v5833 = vpack.c.b16 %v5781, %v5777
      %v5834 = vpack.c.b16 %v5782, %v5778
      %v5835 = vpack.c.b16 %v5783, %v5779
      %v5836 = vpack.c.b16 %v5784, %v5780
      %v5837 = vpack.c.b16 %v5789, %v5785
      %v5838 = vpack.c.b16 %v5790, %v5786
      %v5839 = vpack.c.b16 %v5791, %v5787
      %v5840 = vpack.c.b16 %v5792, %v5788
      %v5841 = vpack.c.b16 %v5797, %v5793
      %v5842 = vpack.c.b16 %v5798, %v5794
      %v5843 = vpack.c.b16 %v5799, %v5795
      %v5844 = vpack.c.b16 %v5800, %v5796
      %v5845 = vpack.c.b16 %v5805, %v5801
      %v5846 = vpack.c.b16 %v5806, %v5802
      %v5847 = vpack.c.b16 %v5807, %v5803
      %v5848 = vpack.c.b16 %v5808, %v5804
      %v5849 = vpack.c.b16 %v5813, %v5809
      %v5850 = vpack.c.b16 %v5814, %v5810
      %v5851 = vpack.c.b16 %v5815, %v5811
      %v5852 = vpack.c.b16 %v5816, %v5812
      %v5853 = vpack.c.b16 %v5821, %v5817
      %v5854 = vpack.c.b16 %v5822, %v5818
      %v5855 = vpack.c.b16 %v5823, %v5819
      %v5856 = vpack.c.b16 %v5824, %v5820
      %5889 = vmatpush.bf16.msra.mxu0 %v5853
      %5890 = vmatpush.bf16.msra.mxu0 %v5849
      %5891 = vmatpush.bf16.msra.mxu0 %v5845
      %5892 = vmatpush.bf16.msra.mxu0 %v5841
      %5893 = vmatpush.bf16.msra.mxu0 %v5837
      %5894 = vmatpush.bf16.msra.mxu0 %v5833
      %5895 = vmatpush.bf16.msra.mxu0 %v5829
      %5896 = vmatpush.bf16.msra.mxu0 %v5825
      %5897 = vmatmul.bf16.gmra.mxu0 %v5110
      %v5898 = vpop.f32.mrf.mxu0
      %v5899 = vadd.f32 0.0, %v5898
      %v5900 = vpop.f32.mrf.mxu0
      %v5901 = vadd.f32 0.0, %v5900
      %5902 = vdwg.mxu0
      %5903 = vmatpush.bf16.msra.mxu0 %v5854
      %5904 = vmatpush.bf16.msra.mxu0 %v5850
      %5905 = vmatpush.bf16.msra.mxu0 %v5846
      %5906 = vmatpush.bf16.msra.mxu0 %v5842
      %5907 = vmatpush.bf16.msra.mxu0 %v5838
      %5908 = vmatpush.bf16.msra.mxu0 %v5834
      %5909 = vmatpush.bf16.msra.mxu0 %v5830
      %5910 = vmatpush.bf16.msra.mxu0 %v5826
      %5911 = vmatmul.bf16.gmra.mxu0 %v5110
      %v5912 = vpop.f32.mrf.mxu0
      %v5913 = vadd.f32 0.0, %v5912
      %v5914 = vpop.f32.mrf.mxu0
      %v5915 = vadd.f32 0.0, %v5914
      %5916 = vdwg.mxu0
      %5917 = vmatpush.bf16.msra.mxu0 %v5855
      %5918 = vmatpush.bf16.msra.mxu0 %v5851
      %5919 = vmatpush.bf16.msra.mxu0 %v5847
      %5920 = vmatpush.bf16.msra.mxu0 %v5843
      %5921 = vmatpush.bf16.msra.mxu0 %v5839
      %5922 = vmatpush.bf16.msra.mxu0 %v5835
      %5923 = vmatpush.bf16.msra.mxu0 %v5831
      %5924 = vmatpush.bf16.msra.mxu0 %v5827
      %5925 = vmatmul.bf16.gmra.mxu0 %v5110
      %v5926 = vpop.f32.mrf.mxu0
      %v5927 = vadd.f32 0.0, %v5926
      %v5928 = vpop.f32.mrf.mxu0
      %v5929 = vadd.f32 0.0, %v5928
      %5930 = vdwg.mxu0
      %5931 = vmatpush.bf16.msra.mxu0 %v5856
      %5932 = vmatpush.bf16.msra.mxu0 %v5852
      %5933 = vmatpush.bf16.msra.mxu0 %v5848
      %5934 = vmatpush.bf16.msra.mxu0 %v5844
      %5935 = vmatpush.bf16.msra.mxu0 %v5840
      %5936 = vmatpush.bf16.msra.mxu0 %v5836
      %5937 = vmatpush.bf16.msra.mxu0 %v5832
      %5938 = vmatpush.bf16.msra.mxu0 %v5828
      %5939 = vmatmul.bf16.gmra.mxu0 %v5110
      %v5940 = vpop.f32.mrf.mxu0
      %v5941 = vadd.f32 0.0, %v5940
      %v5942 = vpop.f32.mrf.mxu0
      %v5943 = vadd.f32 0.0, %v5942
      %5944 = vdwg.mxu0
      %v5947 = vunpack.c.l.b16 %v5663
      %v5948 = vunpack.c.l.b16 %v5664
      %v5949 = vpack.c.b16 %v5948, %v5947
      %v5983 = vunpack.c.l.b16 %v5665
      %v5984 = vunpack.c.h.b16 %v5665
      %v5985 = vunpack.c.l.b16 %v5666
      %v5986 = vunpack.c.h.b16 %v5666
      %v5987 = vunpack.c.l.b16 %v5667
      %v5988 = vunpack.c.h.b16 %v5667
      %v5989 = vunpack.c.l.b16 %v5668
      %v5990 = vunpack.c.h.b16 %v5668
      %v5991 = vunpack.c.l.b16 %v5669
      %v5992 = vunpack.c.h.b16 %v5669
      %v5993 = vunpack.c.l.b16 %v5670
      %v5994 = vunpack.c.h.b16 %v5670
      %v5995 = vunpack.c.l.b16 %v5671
      %v5996 = vunpack.c.h.b16 %v5671
      %v5997 = vunpack.c.l.b16 %v5672
      %v5998 = vunpack.c.h.b16 %v5672
      %v5999 = vunpack.c.l.b16 %v5673
      %v6000 = vunpack.c.h.b16 %v5673
      %v6001 = vunpack.c.l.b16 %v5674
      %v6002 = vunpack.c.h.b16 %v5674
      %v6003 = vunpack.c.l.b16 %v5675
      %v6004 = vunpack.c.h.b16 %v5675
      %v6005 = vunpack.c.l.b16 %v5676
      %v6006 = vunpack.c.h.b16 %v5676
      %v6007 = vunpack.c.l.b16 %v5677
      %v6008 = vunpack.c.h.b16 %v5677
      %v6009 = vunpack.c.l.b16 %v5678
      %v6010 = vunpack.c.h.b16 %v5678
      %v6011 = vunpack.c.l.b16 %v5679
      %v6012 = vunpack.c.h.b16 %v5679
      %v6013 = vunpack.c.l.b16 %v5680
      %v6014 = vunpack.c.h.b16 %v5680
      %v6015 = vunpack.c.l.b16 %v5681
      %v6016 = vunpack.c.h.b16 %v5681
      %v6017 = vunpack.c.l.b16 %v5682
      %v6018 = vunpack.c.h.b16 %v5682
      %v6019 = vunpack.c.l.b16 %v5683
      %v6020 = vunpack.c.h.b16 %v5683
      %v6021 = vunpack.c.l.b16 %v5684
      %v6022 = vunpack.c.h.b16 %v5684
      %v6023 = vunpack.c.l.b16 %v5685
      %v6024 = vunpack.c.h.b16 %v5685
      %v6025 = vunpack.c.l.b16 %v5686
      %v6026 = vunpack.c.h.b16 %v5686
      %v6027 = vunpack.c.l.b16 %v5687
      %v6028 = vunpack.c.h.b16 %v5687
      %v6029 = vunpack.c.l.b16 %v5688
      %v6030 = vunpack.c.h.b16 %v5688
      %v6031 = vunpack.c.l.b16 %v5689
      %v6032 = vunpack.c.h.b16 %v5689
      %v6033 = vunpack.c.l.b16 %v5690
      %v6034 = vunpack.c.h.b16 %v5690
      %v6035 = vunpack.c.l.b16 %v5691
      %v6036 = vunpack.c.h.b16 %v5691
      %v6037 = vunpack.c.l.b16 %v5692
      %v6038 = vunpack.c.h.b16 %v5692
      %v6039 = vunpack.c.l.b16 %v5693
      %v6040 = vunpack.c.h.b16 %v5693
      %v6041 = vunpack.c.l.b16 %v5694
      %v6042 = vunpack.c.h.b16 %v5694
      %v6043 = vunpack.c.l.b16 %v5695
      %v6044 = vunpack.c.h.b16 %v5695
      %v6045 = vunpack.c.l.b16 %v5696
      %v6046 = vunpack.c.h.b16 %v5696
      %v6047 = vpack.c.b16 %v5987, %v5983
      %v6048 = vpack.c.b16 %v5988, %v5984
      %v6049 = vpack.c.b16 %v5989, %v5985
      %v6050 = vpack.c.b16 %v5990, %v5986
      %v6051 = vpack.c.b16 %v5995, %v5991
      %v6052 = vpack.c.b16 %v5996, %v5992
      %v6053 = vpack.c.b16 %v5997, %v5993
      %v6054 = vpack.c.b16 %v5998, %v5994
      %v6055 = vpack.c.b16 %v6003, %v5999
      %v6056 = vpack.c.b16 %v6004, %v6000
      %v6057 = vpack.c.b16 %v6005, %v6001
      %v6058 = vpack.c.b16 %v6006, %v6002
      %v6059 = vpack.c.b16 %v6011, %v6007
      %v6060 = vpack.c.b16 %v6012, %v6008
      %v6061 = vpack.c.b16 %v6013, %v6009
      %v6062 = vpack.c.b16 %v6014, %v6010
      %v6063 = vpack.c.b16 %v6019, %v6015
      %v6064 = vpack.c.b16 %v6020, %v6016
      %v6065 = vpack.c.b16 %v6021, %v6017
      %v6066 = vpack.c.b16 %v6022, %v6018
      %v6067 = vpack.c.b16 %v6027, %v6023
      %v6068 = vpack.c.b16 %v6028, %v6024
      %v6069 = vpack.c.b16 %v6029, %v6025
      %v6070 = vpack.c.b16 %v6030, %v6026
      %v6071 = vpack.c.b16 %v6035, %v6031
      %v6072 = vpack.c.b16 %v6036, %v6032
      %v6073 = vpack.c.b16 %v6037, %v6033
      %v6074 = vpack.c.b16 %v6038, %v6034
      %v6075 = vpack.c.b16 %v6043, %v6039
      %v6076 = vpack.c.b16 %v6044, %v6040
      %v6077 = vpack.c.b16 %v6045, %v6041
      %v6078 = vpack.c.b16 %v6046, %v6042
      %6111 = vmatpush.bf16.msra.mxu0 %v6075
      %6112 = vmatpush.bf16.msra.mxu0 %v6071
      %6113 = vmatpush.bf16.msra.mxu0 %v6067
      %6114 = vmatpush.bf16.msra.mxu0 %v6063
      %6115 = vmatpush.bf16.msra.mxu0 %v6059
      %6116 = vmatpush.bf16.msra.mxu0 %v6055
      %6117 = vmatpush.bf16.msra.mxu0 %v6051
      %6118 = vmatpush.bf16.msra.mxu0 %v6047
      %6119 = vmatmul.bf16.gmra.mxu0 %v5949
      %v6120 = vpop.f32.mrf.mxu0
      %v6121 = vadd.f32 %v5899, %v6120
      %v6122 = vpop.f32.mrf.mxu0
      %v6123 = vadd.f32 %v5901, %v6122
      %6124 = vdwg.mxu0
      %6125 = vmatpush.bf16.msra.mxu0 %v6076
      %6126 = vmatpush.bf16.msra.mxu0 %v6072
      %6127 = vmatpush.bf16.msra.mxu0 %v6068
      %6128 = vmatpush.bf16.msra.mxu0 %v6064
      %6129 = vmatpush.bf16.msra.mxu0 %v6060
      %6130 = vmatpush.bf16.msra.mxu0 %v6056
      %6131 = vmatpush.bf16.msra.mxu0 %v6052
      %6132 = vmatpush.bf16.msra.mxu0 %v6048
      %6133 = vmatmul.bf16.gmra.mxu0 %v5949
      %v6134 = vpop.f32.mrf.mxu0
      %v6135 = vadd.f32 %v5913, %v6134
      %v6136 = vpop.f32.mrf.mxu0
      %v6137 = vadd.f32 %v5915, %v6136
      %6138 = vdwg.mxu0
      %6139 = vmatpush.bf16.msra.mxu0 %v6077
      %6140 = vmatpush.bf16.msra.mxu0 %v6073
      %6141 = vmatpush.bf16.msra.mxu0 %v6069
      %6142 = vmatpush.bf16.msra.mxu0 %v6065
      %6143 = vmatpush.bf16.msra.mxu0 %v6061
      %6144 = vmatpush.bf16.msra.mxu0 %v6057
      %6145 = vmatpush.bf16.msra.mxu0 %v6053
      %6146 = vmatpush.bf16.msra.mxu0 %v6049
      %6147 = vmatmul.bf16.gmra.mxu0 %v5949
      %v6148 = vpop.f32.mrf.mxu0
      %v6149 = vadd.f32 %v5927, %v6148
      %v6150 = vpop.f32.mrf.mxu0
      %v6151 = vadd.f32 %v5929, %v6150
      %6152 = vdwg.mxu0
      %6153 = vmatpush.bf16.msra.mxu0 %v6078
      %6154 = vmatpush.bf16.msra.mxu0 %v6074
      %6155 = vmatpush.bf16.msra.mxu0 %v6070
      %6156 = vmatpush.bf16.msra.mxu0 %v6066
      %6157 = vmatpush.bf16.msra.mxu0 %v6062
      %6158 = vmatpush.bf16.msra.mxu0 %v6058
      %6159 = vmatpush.bf16.msra.mxu0 %v6054
      %6160 = vmatpush.bf16.msra.mxu0 %v6050
      %6161 = vmatmul.bf16.gmra.mxu0 %v5949
      %v6162 = vpop.f32.mrf.mxu0
      %v6163 = vadd.f32 %v5941, %v6162
      %v6164 = vpop.f32.mrf.mxu0
      %v6165 = vadd.f32 %v5943, %v6164
      %6166 = vdwg.mxu0
      %v6167 = vadd.f32 %v6121, %v147
      %v6168 = vadd.f32 %v6135, %v148
      %v6169 = vadd.f32 %v6149, %v149
      %v6170 = vadd.f32 %v6163, %v150
      %v6171 = vadd.f32 %v6123, %v147
      %v6172 = vadd.f32 %v6137, %v148
      %v6173 = vadd.f32 %v6151, %v149
      %v6174 = vadd.f32 %v6165, %v150
      %v6175 = vmul.f32 %v6167, 0.5
      %v6176 = vmul.f32 %v6171, 0.5
      %v6177 = vtanh.pop %v6175
      %v6178 = vtanh.pop %v6176
      %v6179 = vmul.f32 %v6177, 0.5
      %v6180 = vmul.f32 %v6178, 0.5
      %v6181 = vadd.f32 %v6179, 0.5
      %v6182 = vadd.f32 %v6180, 0.5
      %v6183 = vmul.f32 %v6168, 0.5
      %v6184 = vmul.f32 %v6172, 0.5
      %v6185 = vtanh.pop %v6183
      %v6186 = vtanh.pop %v6184
      %v6187 = vmul.f32 %v6185, 0.5
      %v6188 = vmul.f32 %v6186, 0.5
      %v6189 = vadd.f32 %v6187, 0.5
      %v6190 = vadd.f32 %v6188, 0.5
      %v6191 = vtanh.pop %v6169
      %v6192 = vtanh.pop %v6173
      %v6193 = vmul.f32 %v6170, 0.5
      %v6194 = vmul.f32 %v6174, 0.5
      %v6195 = vtanh.pop %v6193
      %v6196 = vtanh.pop %v6194
      %v6197 = vmul.f32 %v6195, 0.5
      %v6198 = vmul.f32 %v6196, 0.5
      %v6199 = vadd.f32 %v6197, 0.5
      %v6200 = vadd.f32 %v6198, 0.5
      %v6201 = vmul.f32 %v6189, %v5104
      %v6202 = vmul.f32 %v6190, %v5105
      %v6203 = vmul.f32 %v6181, %v6191
      %v6204 = vmul.f32 %v6182, %v6192
      %v6205 = vadd.f32 %v6201, %v6203
      %v6206 = vadd.f32 %v6202, %v6204
      %v6207 = vtanh.pop %v6205
      %v6208 = vtanh.pop %v6206
      %v6209 = vmul.f32 %v6199, %v6207
      %v6210 = vmul.f32 %v6200, %v6208
      %v6211 = vpack.c.bf16 %v6210, %v6209
      %v6212 = vld [vmem:[#allocation11] sm:$0xff]
      %v6213 = vld [vmem:[#allocation11 + $0x8] sm:$0xff]
      %v6214 = vld [vmem:[#allocation11 + $0x10] sm:$0xff]
      %v6215 = vld [vmem:[#allocation11 + $0x18] sm:$0xff]
      %v6216 = vld [vmem:[#allocation11 + $0x20] sm:$0xff]
      %v6217 = vld [vmem:[#allocation11 + $0x28] sm:$0xff]
      %v6218 = vld [vmem:[#allocation11 + $0x30] sm:$0xff]
      %v6219 = vld [vmem:[#allocation11 + $0x38] sm:$0xff]
      %v6220 = vld [vmem:[#allocation11 + $0x40] sm:$0xff]
      %v6221 = vld [vmem:[#allocation11 + $0x48] sm:$0xff]
      %v6222 = vld [vmem:[#allocation11 + $0x50] sm:$0xff]
      %v6223 = vld [vmem:[#allocation11 + $0x58] sm:$0xff]
      %v6224 = vld [vmem:[#allocation11 + $0x60] sm:$0xff]
      %v6225 = vld [vmem:[#allocation11 + $0x68] sm:$0xff]
      %v6226 = vld [vmem:[#allocation11 + $0x70] sm:$0xff]
      %v6227 = vld [vmem:[#allocation11 + $0x78] sm:$0xff]
      %v6228 = vld [vmem:[#allocation11 + $0x80] sm:$0xff]
      %v6229 = vld [vmem:[#allocation11 + $0x88] sm:$0xff]
      %v6230 = vld [vmem:[#allocation11 + $0x90] sm:$0xff]
      %v6231 = vld [vmem:[#allocation11 + $0x98] sm:$0xff]
      %v6232 = vld [vmem:[#allocation11 + $0xa0] sm:$0xff]
      %v6233 = vld [vmem:[#allocation11 + $0xa8] sm:$0xff]
      %v6234 = vld [vmem:[#allocation11 + $0xb0] sm:$0xff]
      %v6235 = vld [vmem:[#allocation11 + $0xb8] sm:$0xff]
      %v6236 = vld [vmem:[#allocation11 + $0xc0] sm:$0xff]
      %v6237 = vld [vmem:[#allocation11 + $0xc8] sm:$0xff]
      %v6238 = vld [vmem:[#allocation11 + $0xd0] sm:$0xff]
      %v6239 = vld [vmem:[#allocation11 + $0xd8] sm:$0xff]
      %v6240 = vld [vmem:[#allocation11 + $0xe0] sm:$0xff]
      %v6241 = vld [vmem:[#allocation11 + $0xe8] sm:$0xff]
      %v6242 = vld [vmem:[#allocation11 + $0xf0] sm:$0xff]
      %v6243 = vld [vmem:[#allocation11 + $0xf8] sm:$0xff]
      %v6244 = vld [vmem:[#allocation12] sm:$0xff]
      %v6245 = vld [vmem:[#allocation12 + $0x8] sm:$0xff]
      %v6246 = vld [vmem:[#allocation12 + $0x10] sm:$0xff]
      %v6247 = vld [vmem:[#allocation12 + $0x18] sm:$0xff]
      %v6248 = vld [vmem:[#allocation12 + $0x20] sm:$0xff]
      %v6249 = vld [vmem:[#allocation12 + $0x28] sm:$0xff]
      %v6250 = vld [vmem:[#allocation12 + $0x30] sm:$0xff]
      %v6251 = vld [vmem:[#allocation12 + $0x38] sm:$0xff]
      %v6252 = vld [vmem:[#allocation12 + $0x40] sm:$0xff]
      %v6253 = vld [vmem:[#allocation12 + $0x48] sm:$0xff]
      %v6254 = vld [vmem:[#allocation12 + $0x50] sm:$0xff]
      %v6255 = vld [vmem:[#allocation12 + $0x58] sm:$0xff]
      %v6256 = vld [vmem:[#allocation12 + $0x60] sm:$0xff]
      %v6257 = vld [vmem:[#allocation12 + $0x68] sm:$0xff]
      %v6258 = vld [vmem:[#allocation12 + $0x70] sm:$0xff]
      %v6259 = vld [vmem:[#allocation12 + $0x78] sm:$0xff]
      %v6260 = vld [vmem:[#allocation12 + $0x80] sm:$0xff]
      %v6261 = vld [vmem:[#allocation12 + $0x88] sm:$0xff]
      %v6262 = vld [vmem:[#allocation12 + $0x90] sm:$0xff]
      %v6263 = vld [vmem:[#allocation12 + $0x98] sm:$0xff]
      %v6264 = vld [vmem:[#allocation12 + $0xa0] sm:$0xff]
      %v6265 = vld [vmem:[#allocation12 + $0xa8] sm:$0xff]
      %v6266 = vld [vmem:[#allocation12 + $0xb0] sm:$0xff]
      %v6267 = vld [vmem:[#allocation12 + $0xb8] sm:$0xff]
      %v6268 = vld [vmem:[#allocation12 + $0xc0] sm:$0xff]
      %v6269 = vld [vmem:[#allocation12 + $0xc8] sm:$0xff]
      %v6270 = vld [vmem:[#allocation12 + $0xd0] sm:$0xff]
      %v6271 = vld [vmem:[#allocation12 + $0xd8] sm:$0xff]
      %v6272 = vld [vmem:[#allocation12 + $0xe0] sm:$0xff]
      %v6273 = vld [vmem:[#allocation12 + $0xe8] sm:$0xff]
      %v6274 = vld [vmem:[#allocation12 + $0xf0] sm:$0xff]
      %v6275 = vld [vmem:[#allocation12 + $0xf8] sm:$0xff]
      %v6278 = vunpack.c.l.b16 %v5657
      %v6279 = vunpack.c.l.b16 %v5658
      %v6280 = vpack.c.b16 %v6279, %v6278
      %v6314 = vunpack.c.l.b16 %v6244
      %v6315 = vunpack.c.h.b16 %v6244
      %v6316 = vunpack.c.l.b16 %v6245
      %v6317 = vunpack.c.h.b16 %v6245
      %v6318 = vunpack.c.l.b16 %v6246
      %v6319 = vunpack.c.h.b16 %v6246
      %v6320 = vunpack.c.l.b16 %v6247
      %v6321 = vunpack.c.h.b16 %v6247
      %v6322 = vunpack.c.l.b16 %v6248
      %v6323 = vunpack.c.h.b16 %v6248
      %v6324 = vunpack.c.l.b16 %v6249
      %v6325 = vunpack.c.h.b16 %v6249
      %v6326 = vunpack.c.l.b16 %v6250
      %v6327 = vunpack.c.h.b16 %v6250
      %v6328 = vunpack.c.l.b16 %v6251
      %v6329 = vunpack.c.h.b16 %v6251
      %v6330 = vunpack.c.l.b16 %v6252
      %v6331 = vunpack.c.h.b16 %v6252
      %v6332 = vunpack.c.l.b16 %v6253
      %v6333 = vunpack.c.h.b16 %v6253
      %v6334 = vunpack.c.l.b16 %v6254
      %v6335 = vunpack.c.h.b16 %v6254
      %v6336 = vunpack.c.l.b16 %v6255
      %v6337 = vunpack.c.h.b16 %v6255
      %v6338 = vunpack.c.l.b16 %v6256
      %v6339 = vunpack.c.h.b16 %v6256
      %v6340 = vunpack.c.l.b16 %v6257
      %v6341 = vunpack.c.h.b16 %v6257
      %v6342 = vunpack.c.l.b16 %v6258
      %v6343 = vunpack.c.h.b16 %v6258
      %v6344 = vunpack.c.l.b16 %v6259
      %v6345 = vunpack.c.h.b16 %v6259
      %v6346 = vunpack.c.l.b16 %v6260
      %v6347 = vunpack.c.h.b16 %v6260
      %v6348 = vunpack.c.l.b16 %v6261
      %v6349 = vunpack.c.h.b16 %v6261
      %v6350 = vunpack.c.l.b16 %v6262
      %v6351 = vunpack.c.h.b16 %v6262
      %v6352 = vunpack.c.l.b16 %v6263
      %v6353 = vunpack.c.h.b16 %v6263
      %v6354 = vunpack.c.l.b16 %v6264
      %v6355 = vunpack.c.h.b16 %v6264
      %v6356 = vunpack.c.l.b16 %v6265
      %v6357 = vunpack.c.h.b16 %v6265
      %v6358 = vunpack.c.l.b16 %v6266
      %v6359 = vunpack.c.h.b16 %v6266
      %v6360 = vunpack.c.l.b16 %v6267
      %v6361 = vunpack.c.h.b16 %v6267
      %v6362 = vunpack.c.l.b16 %v6268
      %v6363 = vunpack.c.h.b16 %v6268
      %v6364 = vunpack.c.l.b16 %v6269
      %v6365 = vunpack.c.h.b16 %v6269
      %v6366 = vunpack.c.l.b16 %v6270
      %v6367 = vunpack.c.h.b16 %v6270
      %v6368 = vunpack.c.l.b16 %v6271
      %v6369 = vunpack.c.h.b16 %v6271
      %v6370 = vunpack.c.l.b16 %v6272
      %v6371 = vunpack.c.h.b16 %v6272
      %v6372 = vunpack.c.l.b16 %v6273
      %v6373 = vunpack.c.h.b16 %v6273
      %v6374 = vunpack.c.l.b16 %v6274
      %v6375 = vunpack.c.h.b16 %v6274
      %v6376 = vunpack.c.l.b16 %v6275
      %v6377 = vunpack.c.h.b16 %v6275
      %v6378 = vpack.c.b16 %v6318, %v6314
      %v6379 = vpack.c.b16 %v6319, %v6315
      %v6380 = vpack.c.b16 %v6320, %v6316
      %v6381 = vpack.c.b16 %v6321, %v6317
      %v6382 = vpack.c.b16 %v6326, %v6322
      %v6383 = vpack.c.b16 %v6327, %v6323
      %v6384 = vpack.c.b16 %v6328, %v6324
      %v6385 = vpack.c.b16 %v6329, %v6325
      %v6386 = vpack.c.b16 %v6334, %v6330
      %v6387 = vpack.c.b16 %v6335, %v6331
      %v6388 = vpack.c.b16 %v6336, %v6332
      %v6389 = vpack.c.b16 %v6337, %v6333
      %v6390 = vpack.c.b16 %v6342, %v6338
      %v6391 = vpack.c.b16 %v6343, %v6339
      %v6392 = vpack.c.b16 %v6344, %v6340
      %v6393 = vpack.c.b16 %v6345, %v6341
      %v6394 = vpack.c.b16 %v6350, %v6346
      %v6395 = vpack.c.b16 %v6351, %v6347
      %v6396 = vpack.c.b16 %v6352, %v6348
      %v6397 = vpack.c.b16 %v6353, %v6349
      %v6398 = vpack.c.b16 %v6358, %v6354
      %v6399 = vpack.c.b16 %v6359, %v6355
      %v6400 = vpack.c.b16 %v6360, %v6356
      %v6401 = vpack.c.b16 %v6361, %v6357
      %v6402 = vpack.c.b16 %v6366, %v6362
      %v6403 = vpack.c.b16 %v6367, %v6363
      %v6404 = vpack.c.b16 %v6368, %v6364
      %v6405 = vpack.c.b16 %v6369, %v6365
      %v6406 = vpack.c.b16 %v6374, %v6370
      %v6407 = vpack.c.b16 %v6375, %v6371
      %v6408 = vpack.c.b16 %v6376, %v6372
      %v6409 = vpack.c.b16 %v6377, %v6373
      %6442 = vmatpush.bf16.msra.mxu0 %v6406
      %6443 = vmatpush.bf16.msra.mxu0 %v6402
      %6444 = vmatpush.bf16.msra.mxu0 %v6398
      %6445 = vmatpush.bf16.msra.mxu0 %v6394
      %6446 = vmatpush.bf16.msra.mxu0 %v6390
      %6447 = vmatpush.bf16.msra.mxu0 %v6386
      %6448 = vmatpush.bf16.msra.mxu0 %v6382
      %6449 = vmatpush.bf16.msra.mxu0 %v6378
      %6450 = vmatmul.bf16.gmra.mxu0 %v6280
      %v6451 = vpop.f32.mrf.mxu0
      %v6452 = vadd.f32 0.0, %v6451
      %v6453 = vpop.f32.mrf.mxu0
      %v6454 = vadd.f32 0.0, %v6453
      %6455 = vdwg.mxu0
      %6456 = vmatpush.bf16.msra.mxu0 %v6407
      %6457 = vmatpush.bf16.msra.mxu0 %v6403
      %6458 = vmatpush.bf16.msra.mxu0 %v6399
      %6459 = vmatpush.bf16.msra.mxu0 %v6395
      %6460 = vmatpush.bf16.msra.mxu0 %v6391
      %6461 = vmatpush.bf16.msra.mxu0 %v6387
      %6462 = vmatpush.bf16.msra.mxu0 %v6383
      %6463 = vmatpush.bf16.msra.mxu0 %v6379
      %6464 = vmatmul.bf16.gmra.mxu0 %v6280
      %v6465 = vpop.f32.mrf.mxu0
      %v6466 = vadd.f32 0.0, %v6465
      %v6467 = vpop.f32.mrf.mxu0
      %v6468 = vadd.f32 0.0, %v6467
      %6469 = vdwg.mxu0
      %6470 = vmatpush.bf16.msra.mxu0 %v6408
      %6471 = vmatpush.bf16.msra.mxu0 %v6404
      %6472 = vmatpush.bf16.msra.mxu0 %v6400
      %6473 = vmatpush.bf16.msra.mxu0 %v6396
      %6474 = vmatpush.bf16.msra.mxu0 %v6392
      %6475 = vmatpush.bf16.msra.mxu0 %v6388
      %6476 = vmatpush.bf16.msra.mxu0 %v6384
      %6477 = vmatpush.bf16.msra.mxu0 %v6380
      %6478 = vmatmul.bf16.gmra.mxu0 %v6280
      %v6479 = vpop.f32.mrf.mxu0
      %v6480 = vadd.f32 0.0, %v6479
      %v6481 = vpop.f32.mrf.mxu0
      %v6482 = vadd.f32 0.0, %v6481
      %6483 = vdwg.mxu0
      %6484 = vmatpush.bf16.msra.mxu0 %v6409
      %6485 = vmatpush.bf16.msra.mxu0 %v6405
      %6486 = vmatpush.bf16.msra.mxu0 %v6401
      %6487 = vmatpush.bf16.msra.mxu0 %v6397
      %6488 = vmatpush.bf16.msra.mxu0 %v6393
      %6489 = vmatpush.bf16.msra.mxu0 %v6389
      %6490 = vmatpush.bf16.msra.mxu0 %v6385
      %6491 = vmatpush.bf16.msra.mxu0 %v6381
      %6492 = vmatmul.bf16.gmra.mxu0 %v6280
      %v6493 = vpop.f32.mrf.mxu0
      %v6494 = vadd.f32 0.0, %v6493
      %v6495 = vpop.f32.mrf.mxu0
      %v6496 = vadd.f32 0.0, %v6495
      %6497 = vdwg.mxu0
      %v6530 = vunpack.c.l.b16 %v6212
      %v6531 = vunpack.c.h.b16 %v6212
      %v6532 = vunpack.c.l.b16 %v6213
      %v6533 = vunpack.c.h.b16 %v6213
      %v6534 = vunpack.c.l.b16 %v6214
      %v6535 = vunpack.c.h.b16 %v6214
      %v6536 = vunpack.c.l.b16 %v6215
      %v6537 = vunpack.c.h.b16 %v6215
      %v6538 = vunpack.c.l.b16 %v6216
      %v6539 = vunpack.c.h.b16 %v6216
      %v6540 = vunpack.c.l.b16 %v6217
      %v6541 = vunpack.c.h.b16 %v6217
      %v6542 = vunpack.c.l.b16 %v6218
      %v6543 = vunpack.c.h.b16 %v6218
      %v6544 = vunpack.c.l.b16 %v6219
      %v6545 = vunpack.c.h.b16 %v6219
      %v6546 = vunpack.c.l.b16 %v6220
      %v6547 = vunpack.c.h.b16 %v6220
      %v6548 = vunpack.c.l.b16 %v6221
      %v6549 = vunpack.c.h.b16 %v6221
      %v6550 = vunpack.c.l.b16 %v6222
      %v6551 = vunpack.c.h.b16 %v6222
      %v6552 = vunpack.c.l.b16 %v6223
      %v6553 = vunpack.c.h.b16 %v6223
      %v6554 = vunpack.c.l.b16 %v6224
      %v6555 = vunpack.c.h.b16 %v6224
      %v6556 = vunpack.c.l.b16 %v6225
      %v6557 = vunpack.c.h.b16 %v6225
      %v6558 = vunpack.c.l.b16 %v6226
      %v6559 = vunpack.c.h.b16 %v6226
      %v6560 = vunpack.c.l.b16 %v6227
      %v6561 = vunpack.c.h.b16 %v6227
      %v6562 = vunpack.c.l.b16 %v6228
      %v6563 = vunpack.c.h.b16 %v6228
      %v6564 = vunpack.c.l.b16 %v6229
      %v6565 = vunpack.c.h.b16 %v6229
      %v6566 = vunpack.c.l.b16 %v6230
      %v6567 = vunpack.c.h.b16 %v6230
      %v6568 = vunpack.c.l.b16 %v6231
      %v6569 = vunpack.c.h.b16 %v6231
      %v6570 = vunpack.c.l.b16 %v6232
      %v6571 = vunpack.c.h.b16 %v6232
      %v6572 = vunpack.c.l.b16 %v6233
      %v6573 = vunpack.c.h.b16 %v6233
      %v6574 = vunpack.c.l.b16 %v6234
      %v6575 = vunpack.c.h.b16 %v6234
      %v6576 = vunpack.c.l.b16 %v6235
      %v6577 = vunpack.c.h.b16 %v6235
      %v6578 = vunpack.c.l.b16 %v6236
      %v6579 = vunpack.c.h.b16 %v6236
      %v6580 = vunpack.c.l.b16 %v6237
      %v6581 = vunpack.c.h.b16 %v6237
      %v6582 = vunpack.c.l.b16 %v6238
      %v6583 = vunpack.c.h.b16 %v6238
      %v6584 = vunpack.c.l.b16 %v6239
      %v6585 = vunpack.c.h.b16 %v6239
      %v6586 = vunpack.c.l.b16 %v6240
      %v6587 = vunpack.c.h.b16 %v6240
      %v6588 = vunpack.c.l.b16 %v6241
      %v6589 = vunpack.c.h.b16 %v6241
      %v6590 = vunpack.c.l.b16 %v6242
      %v6591 = vunpack.c.h.b16 %v6242
      %v6592 = vunpack.c.l.b16 %v6243
      %v6593 = vunpack.c.h.b16 %v6243
      %v6594 = vpack.c.b16 %v6534, %v6530
      %v6595 = vpack.c.b16 %v6535, %v6531
      %v6596 = vpack.c.b16 %v6536, %v6532
      %v6597 = vpack.c.b16 %v6537, %v6533
      %v6598 = vpack.c.b16 %v6542, %v6538
      %v6599 = vpack.c.b16 %v6543, %v6539
      %v6600 = vpack.c.b16 %v6544, %v6540
      %v6601 = vpack.c.b16 %v6545, %v6541
      %v6602 = vpack.c.b16 %v6550, %v6546
      %v6603 = vpack.c.b16 %v6551, %v6547
      %v6604 = vpack.c.b16 %v6552, %v6548
      %v6605 = vpack.c.b16 %v6553, %v6549
      %v6606 = vpack.c.b16 %v6558, %v6554
      %v6607 = vpack.c.b16 %v6559, %v6555
      %v6608 = vpack.c.b16 %v6560, %v6556
      %v6609 = vpack.c.b16 %v6561, %v6557
      %v6610 = vpack.c.b16 %v6566, %v6562
      %v6611 = vpack.c.b16 %v6567, %v6563
      %v6612 = vpack.c.b16 %v6568, %v6564
      %v6613 = vpack.c.b16 %v6569, %v6565
      %v6614 = vpack.c.b16 %v6574, %v6570
      %v6615 = vpack.c.b16 %v6575, %v6571
      %v6616 = vpack.c.b16 %v6576, %v6572
      %v6617 = vpack.c.b16 %v6577, %v6573
      %v6618 = vpack.c.b16 %v6582, %v6578
      %v6619 = vpack.c.b16 %v6583, %v6579
      %v6620 = vpack.c.b16 %v6584, %v6580
      %v6621 = vpack.c.b16 %v6585, %v6581
      %v6622 = vpack.c.b16 %v6590, %v6586
      %v6623 = vpack.c.b16 %v6591, %v6587
      %v6624 = vpack.c.b16 %v6592, %v6588
      %v6625 = vpack.c.b16 %v6593, %v6589
      %6658 = vmatpush.bf16.msra.mxu0 %v6622
      %6659 = vmatpush.bf16.msra.mxu0 %v6618
      %6660 = vmatpush.bf16.msra.mxu0 %v6614
      %6661 = vmatpush.bf16.msra.mxu0 %v6610
      %6662 = vmatpush.bf16.msra.mxu0 %v6606
      %6663 = vmatpush.bf16.msra.mxu0 %v6602
      %6664 = vmatpush.bf16.msra.mxu0 %v6598
      %6665 = vmatpush.bf16.msra.mxu0 %v6594
      %6666 = vmatmul.bf16.gmra.mxu0 %v6211
      %v6667 = vpop.f32.mrf.mxu0
      %v6668 = vadd.f32 %v6452, %v6667
      %v6669 = vpop.f32.mrf.mxu0
      %v6670 = vadd.f32 %v6454, %v6669
      %6671 = vdwg.mxu0
      %6672 = vmatpush.bf16.msra.mxu0 %v6623
      %6673 = vmatpush.bf16.msra.mxu0 %v6619
      %6674 = vmatpush.bf16.msra.mxu0 %v6615
      %6675 = vmatpush.bf16.msra.mxu0 %v6611
      %6676 = vmatpush.bf16.msra.mxu0 %v6607
      %6677 = vmatpush.bf16.msra.mxu0 %v6603
      %6678 = vmatpush.bf16.msra.mxu0 %v6599
      %6679 = vmatpush.bf16.msra.mxu0 %v6595
      %6680 = vmatmul.bf16.gmra.mxu0 %v6211
      %v6681 = vpop.f32.mrf.mxu0
      %v6682 = vadd.f32 %v6466, %v6681
      %v6683 = vpop.f32.mrf.mxu0
      %v6684 = vadd.f32 %v6468, %v6683
      %6685 = vdwg.mxu0
      %6686 = vmatpush.bf16.msra.mxu0 %v6624
      %6687 = vmatpush.bf16.msra.mxu0 %v6620
      %6688 = vmatpush.bf16.msra.mxu0 %v6616
      %6689 = vmatpush.bf16.msra.mxu0 %v6612
      %6690 = vmatpush.bf16.msra.mxu0 %v6608
      %6691 = vmatpush.bf16.msra.mxu0 %v6604
      %6692 = vmatpush.bf16.msra.mxu0 %v6600
      %6693 = vmatpush.bf16.msra.mxu0 %v6596
      %6694 = vmatmul.bf16.gmra.mxu0 %v6211
      %v6695 = vpop.f32.mrf.mxu0
      %v6696 = vadd.f32 %v6480, %v6695
      %v6697 = vpop.f32.mrf.mxu0
      %v6698 = vadd.f32 %v6482, %v6697
      %6699 = vdwg.mxu0
      %6700 = vmatpush.bf16.msra.mxu0 %v6625
      %6701 = vmatpush.bf16.msra.mxu0 %v6621
      %6702 = vmatpush.bf16.msra.mxu0 %v6617
      %6703 = vmatpush.bf16.msra.mxu0 %v6613
      %6704 = vmatpush.bf16.msra.mxu0 %v6609
      %6705 = vmatpush.bf16.msra.mxu0 %v6605
      %6706 = vmatpush.bf16.msra.mxu0 %v6601
      %6707 = vmatpush.bf16.msra.mxu0 %v6597
      %6708 = vmatmul.bf16.gmra.mxu0 %v6211
      %v6709 = vpop.f32.mrf.mxu0
      %v6710 = vadd.f32 %v6494, %v6709
      %v6711 = vpop.f32.mrf.mxu0
      %v6712 = vadd.f32 %v6496, %v6711
      %6713 = vdwg.mxu0
      %v6714 = vadd.f32 %v6668, %v157
      %v6715 = vadd.f32 %v6682, %v158
      %v6716 = vadd.f32 %v6696, %v159
      %v6717 = vadd.f32 %v6710, %v160
      %v6718 = vadd.f32 %v6670, %v157
      %v6719 = vadd.f32 %v6684, %v158
      %v6720 = vadd.f32 %v6698, %v159
      %v6721 = vadd.f32 %v6712, %v160
      %v6722 = vmul.f32 %v6714, 0.5
      %v6723 = vmul.f32 %v6718, 0.5
      %v6724 = vtanh.pop %v6722
      %v6725 = vtanh.pop %v6723
      %v6726 = vmul.f32 %v6724, 0.5
      %v6727 = vmul.f32 %v6725, 0.5
      %v6728 = vadd.f32 %v6726, 0.5
      %v6729 = vadd.f32 %v6727, 0.5
      %v6730 = vmul.f32 %v6715, 0.5
      %v6731 = vmul.f32 %v6719, 0.5
      %v6732 = vtanh.pop %v6730
      %v6733 = vtanh.pop %v6731
      %v6734 = vmul.f32 %v6732, 0.5
      %v6735 = vmul.f32 %v6733, 0.5
      %v6736 = vadd.f32 %v6734, 0.5
      %v6737 = vadd.f32 %v6735, 0.5
      %v6738 = vtanh.pop %v6716
      %v6739 = vtanh.pop %v6720
      %v6740 = vmul.f32 %v6717, 0.5
      %v6741 = vmul.f32 %v6721, 0.5
      %v6742 = vtanh.pop %v6740
      %v6743 = vtanh.pop %v6741
      %v6744 = vmul.f32 %v6742, 0.5
      %v6745 = vmul.f32 %v6743, 0.5
      %v6746 = vadd.f32 %v6744, 0.5
      %v6747 = vadd.f32 %v6745, 0.5
      %v6748 = vmul.f32 %v6736, %v5651
      %v6749 = vmul.f32 %v6737, %v5652
      %v6750 = vmul.f32 %v6728, %v6738
      %v6751 = vmul.f32 %v6729, %v6739
      %v6752 = vadd.f32 %v6748, %v6750
      %v6753 = vadd.f32 %v6749, %v6751
      %v6754 = vtanh.pop %v6752
      %v6755 = vtanh.pop %v6753
      %v6756 = vmul.f32 %v6746, %v6754
      %v6757 = vmul.f32 %v6747, %v6755
      %v6758 = vpack.c.bf16 %v6756, %v6756
      %v6759 = vpack.c.bf16 %v6757, %v6757
      %s6760 = scalar_lea.vmem [#allocation2], 40
      %6761 = vst [vmem:[%s6760] sm:$0xf] %v6758
      %6762 = vst [vmem:[%s6760 + $0x4] sm:$0xf] %v6759
      %s6763 = scalar_lea.vmem [#allocation3], 48
      %v6764 = vld [vmem:[%s6763] sm:$0xf]
      %v6765 = vld [vmem:[%s6763 + $0x4] sm:$0xf]
      %v6766 = vld [vmem:[#allocation6] sm:$0xff]
      %v6767 = vld [vmem:[#allocation6 + $0x8] sm:$0xff]
      %v6768 = vld [vmem:[#allocation6 + $0x10] sm:$0xff]
      %v6769 = vld [vmem:[#allocation6 + $0x18] sm:$0xff]
      %v6770 = vld [vmem:[#allocation6 + $0x20] sm:$0xff]
      %v6771 = vld [vmem:[#allocation6 + $0x28] sm:$0xff]
      %v6772 = vld [vmem:[#allocation6 + $0x30] sm:$0xff]
      %v6773 = vld [vmem:[#allocation6 + $0x38] sm:$0xff]
      %v6774 = vld [vmem:[#allocation6 + $0x40] sm:$0xff]
      %v6775 = vld [vmem:[#allocation6 + $0x48] sm:$0xff]
      %v6776 = vld [vmem:[#allocation6 + $0x50] sm:$0xff]
      %v6777 = vld [vmem:[#allocation6 + $0x58] sm:$0xff]
      %v6778 = vld [vmem:[#allocation6 + $0x60] sm:$0xff]
      %v6779 = vld [vmem:[#allocation6 + $0x68] sm:$0xff]
      %v6780 = vld [vmem:[#allocation6 + $0x70] sm:$0xff]
      %v6781 = vld [vmem:[#allocation6 + $0x78] sm:$0xff]
      %v6782 = vld [vmem:[#allocation6 + $0x80] sm:$0xff]
      %v6783 = vld [vmem:[#allocation6 + $0x88] sm:$0xff]
      %v6784 = vld [vmem:[#allocation6 + $0x90] sm:$0xff]
      %v6785 = vld [vmem:[#allocation6 + $0x98] sm:$0xff]
      %v6786 = vld [vmem:[#allocation6 + $0xa0] sm:$0xff]
      %v6787 = vld [vmem:[#allocation6 + $0xa8] sm:$0xff]
      %v6788 = vld [vmem:[#allocation6 + $0xb0] sm:$0xff]
      %v6789 = vld [vmem:[#allocation6 + $0xb8] sm:$0xff]
      %v6790 = vld [vmem:[#allocation6 + $0xc0] sm:$0xff]
      %v6791 = vld [vmem:[#allocation6 + $0xc8] sm:$0xff]
      %v6792 = vld [vmem:[#allocation6 + $0xd0] sm:$0xff]
      %v6793 = vld [vmem:[#allocation6 + $0xd8] sm:$0xff]
      %v6794 = vld [vmem:[#allocation6 + $0xe0] sm:$0xff]
      %v6795 = vld [vmem:[#allocation6 + $0xe8] sm:$0xff]
      %v6796 = vld [vmem:[#allocation6 + $0xf0] sm:$0xff]
      %v6797 = vld [vmem:[#allocation6 + $0xf8] sm:$0xff]
      %v6798 = vld [vmem:[#allocation8] sm:$0xff]
      %v6799 = vld [vmem:[#allocation8 + $0x8] sm:$0xff]
      %v6800 = vld [vmem:[#allocation8 + $0x10] sm:$0xff]
      %v6801 = vld [vmem:[#allocation8 + $0x18] sm:$0xff]
      %v6802 = vld [vmem:[#allocation8 + $0x20] sm:$0xff]
      %v6803 = vld [vmem:[#allocation8 + $0x28] sm:$0xff]
      %v6804 = vld [vmem:[#allocation8 + $0x30] sm:$0xff]
      %v6805 = vld [vmem:[#allocation8 + $0x38] sm:$0xff]
      %v6806 = vld [vmem:[#allocation8 + $0x40] sm:$0xff]
      %v6807 = vld [vmem:[#allocation8 + $0x48] sm:$0xff]
      %v6808 = vld [vmem:[#allocation8 + $0x50] sm:$0xff]
      %v6809 = vld [vmem:[#allocation8 + $0x58] sm:$0xff]
      %v6810 = vld [vmem:[#allocation8 + $0x60] sm:$0xff]
      %v6811 = vld [vmem:[#allocation8 + $0x68] sm:$0xff]
      %v6812 = vld [vmem:[#allocation8 + $0x70] sm:$0xff]
      %v6813 = vld [vmem:[#allocation8 + $0x78] sm:$0xff]
      %v6814 = vld [vmem:[#allocation8 + $0x80] sm:$0xff]
      %v6815 = vld [vmem:[#allocation8 + $0x88] sm:$0xff]
      %v6816 = vld [vmem:[#allocation8 + $0x90] sm:$0xff]
      %v6817 = vld [vmem:[#allocation8 + $0x98] sm:$0xff]
      %v6818 = vld [vmem:[#allocation8 + $0xa0] sm:$0xff]
      %v6819 = vld [vmem:[#allocation8 + $0xa8] sm:$0xff]
      %v6820 = vld [vmem:[#allocation8 + $0xb0] sm:$0xff]
      %v6821 = vld [vmem:[#allocation8 + $0xb8] sm:$0xff]
      %v6822 = vld [vmem:[#allocation8 + $0xc0] sm:$0xff]
      %v6823 = vld [vmem:[#allocation8 + $0xc8] sm:$0xff]
      %v6824 = vld [vmem:[#allocation8 + $0xd0] sm:$0xff]
      %v6825 = vld [vmem:[#allocation8 + $0xd8] sm:$0xff]
      %v6826 = vld [vmem:[#allocation8 + $0xe0] sm:$0xff]
      %v6827 = vld [vmem:[#allocation8 + $0xe8] sm:$0xff]
      %v6828 = vld [vmem:[#allocation8 + $0xf0] sm:$0xff]
      %v6829 = vld [vmem:[#allocation8 + $0xf8] sm:$0xff]
      %v6862 = vunpack.c.l.b16 %v6798
      %v6863 = vunpack.c.h.b16 %v6798
      %v6864 = vunpack.c.l.b16 %v6799
      %v6865 = vunpack.c.h.b16 %v6799
      %v6866 = vunpack.c.l.b16 %v6800
      %v6867 = vunpack.c.h.b16 %v6800
      %v6868 = vunpack.c.l.b16 %v6801
      %v6869 = vunpack.c.h.b16 %v6801
      %v6870 = vunpack.c.l.b16 %v6802
      %v6871 = vunpack.c.h.b16 %v6802
      %v6872 = vunpack.c.l.b16 %v6803
      %v6873 = vunpack.c.h.b16 %v6803
      %v6874 = vunpack.c.l.b16 %v6804
      %v6875 = vunpack.c.h.b16 %v6804
      %v6876 = vunpack.c.l.b16 %v6805
      %v6877 = vunpack.c.h.b16 %v6805
      %v6878 = vunpack.c.l.b16 %v6806
      %v6879 = vunpack.c.h.b16 %v6806
      %v6880 = vunpack.c.l.b16 %v6807
      %v6881 = vunpack.c.h.b16 %v6807
      %v6882 = vunpack.c.l.b16 %v6808
      %v6883 = vunpack.c.h.b16 %v6808
      %v6884 = vunpack.c.l.b16 %v6809
      %v6885 = vunpack.c.h.b16 %v6809
      %v6886 = vunpack.c.l.b16 %v6810
      %v6887 = vunpack.c.h.b16 %v6810
      %v6888 = vunpack.c.l.b16 %v6811
      %v6889 = vunpack.c.h.b16 %v6811
      %v6890 = vunpack.c.l.b16 %v6812
      %v6891 = vunpack.c.h.b16 %v6812
      %v6892 = vunpack.c.l.b16 %v6813
      %v6893 = vunpack.c.h.b16 %v6813
      %v6894 = vunpack.c.l.b16 %v6814
      %v6895 = vunpack.c.h.b16 %v6814
      %v6896 = vunpack.c.l.b16 %v6815
      %v6897 = vunpack.c.h.b16 %v6815
      %v6898 = vunpack.c.l.b16 %v6816
      %v6899 = vunpack.c.h.b16 %v6816
      %v6900 = vunpack.c.l.b16 %v6817
      %v6901 = vunpack.c.h.b16 %v6817
      %v6902 = vunpack.c.l.b16 %v6818
      %v6903 = vunpack.c.h.b16 %v6818
      %v6904 = vunpack.c.l.b16 %v6819
      %v6905 = vunpack.c.h.b16 %v6819
      %v6906 = vunpack.c.l.b16 %v6820
      %v6907 = vunpack.c.h.b16 %v6820
      %v6908 = vunpack.c.l.b16 %v6821
      %v6909 = vunpack.c.h.b16 %v6821
      %v6910 = vunpack.c.l.b16 %v6822
      %v6911 = vunpack.c.h.b16 %v6822
      %v6912 = vunpack.c.l.b16 %v6823
      %v6913 = vunpack.c.h.b16 %v6823
      %v6914 = vunpack.c.l.b16 %v6824
      %v6915 = vunpack.c.h.b16 %v6824
      %v6916 = vunpack.c.l.b16 %v6825
      %v6917 = vunpack.c.h.b16 %v6825
      %v6918 = vunpack.c.l.b16 %v6826
      %v6919 = vunpack.c.h.b16 %v6826
      %v6920 = vunpack.c.l.b16 %v6827
      %v6921 = vunpack.c.h.b16 %v6827
      %v6922 = vunpack.c.l.b16 %v6828
      %v6923 = vunpack.c.h.b16 %v6828
      %v6924 = vunpack.c.l.b16 %v6829
      %v6925 = vunpack.c.h.b16 %v6829
      %v6926 = vpack.c.b16 %v6866, %v6862
      %v6927 = vpack.c.b16 %v6867, %v6863
      %v6928 = vpack.c.b16 %v6868, %v6864
      %v6929 = vpack.c.b16 %v6869, %v6865
      %v6930 = vpack.c.b16 %v6874, %v6870
      %v6931 = vpack.c.b16 %v6875, %v6871
      %v6932 = vpack.c.b16 %v6876, %v6872
      %v6933 = vpack.c.b16 %v6877, %v6873
      %v6934 = vpack.c.b16 %v6882, %v6878
      %v6935 = vpack.c.b16 %v6883, %v6879
      %v6936 = vpack.c.b16 %v6884, %v6880
      %v6937 = vpack.c.b16 %v6885, %v6881
      %v6938 = vpack.c.b16 %v6890, %v6886
      %v6939 = vpack.c.b16 %v6891, %v6887
      %v6940 = vpack.c.b16 %v6892, %v6888
      %v6941 = vpack.c.b16 %v6893, %v6889
      %v6942 = vpack.c.b16 %v6898, %v6894
      %v6943 = vpack.c.b16 %v6899, %v6895
      %v6944 = vpack.c.b16 %v6900, %v6896
      %v6945 = vpack.c.b16 %v6901, %v6897
      %v6946 = vpack.c.b16 %v6906, %v6902
      %v6947 = vpack.c.b16 %v6907, %v6903
      %v6948 = vpack.c.b16 %v6908, %v6904
      %v6949 = vpack.c.b16 %v6909, %v6905
      %v6950 = vpack.c.b16 %v6914, %v6910
      %v6951 = vpack.c.b16 %v6915, %v6911
      %v6952 = vpack.c.b16 %v6916, %v6912
      %v6953 = vpack.c.b16 %v6917, %v6913
      %v6954 = vpack.c.b16 %v6922, %v6918
      %v6955 = vpack.c.b16 %v6923, %v6919
      %v6956 = vpack.c.b16 %v6924, %v6920
      %v6957 = vpack.c.b16 %v6925, %v6921
      %6990 = vmatpush.bf16.msra.mxu0 %v6954
      %6991 = vmatpush.bf16.msra.mxu0 %v6950
      %6992 = vmatpush.bf16.msra.mxu0 %v6946
      %6993 = vmatpush.bf16.msra.mxu0 %v6942
      %6994 = vmatpush.bf16.msra.mxu0 %v6938
      %6995 = vmatpush.bf16.msra.mxu0 %v6934
      %6996 = vmatpush.bf16.msra.mxu0 %v6930
      %6997 = vmatpush.bf16.msra.mxu0 %v6926
      %6998 = vmatmul.bf16.gmra.mxu0 %v6211
      %v6999 = vpop.f32.mrf.mxu0
      %v7000 = vadd.f32 0.0, %v6999
      %v7001 = vpop.f32.mrf.mxu0
      %v7002 = vadd.f32 0.0, %v7001
      %7003 = vdwg.mxu0
      %7004 = vmatpush.bf16.msra.mxu0 %v6955
      %7005 = vmatpush.bf16.msra.mxu0 %v6951
      %7006 = vmatpush.bf16.msra.mxu0 %v6947
      %7007 = vmatpush.bf16.msra.mxu0 %v6943
      %7008 = vmatpush.bf16.msra.mxu0 %v6939
      %7009 = vmatpush.bf16.msra.mxu0 %v6935
      %7010 = vmatpush.bf16.msra.mxu0 %v6931
      %7011 = vmatpush.bf16.msra.mxu0 %v6927
      %7012 = vmatmul.bf16.gmra.mxu0 %v6211
      %v7013 = vpop.f32.mrf.mxu0
      %v7014 = vadd.f32 0.0, %v7013
      %v7015 = vpop.f32.mrf.mxu0
      %v7016 = vadd.f32 0.0, %v7015
      %7017 = vdwg.mxu0
      %7018 = vmatpush.bf16.msra.mxu0 %v6956
      %7019 = vmatpush.bf16.msra.mxu0 %v6952
      %7020 = vmatpush.bf16.msra.mxu0 %v6948
      %7021 = vmatpush.bf16.msra.mxu0 %v6944
      %7022 = vmatpush.bf16.msra.mxu0 %v6940
      %7023 = vmatpush.bf16.msra.mxu0 %v6936
      %7024 = vmatpush.bf16.msra.mxu0 %v6932
      %7025 = vmatpush.bf16.msra.mxu0 %v6928
      %7026 = vmatmul.bf16.gmra.mxu0 %v6211
      %v7027 = vpop.f32.mrf.mxu0
      %v7028 = vadd.f32 0.0, %v7027
      %v7029 = vpop.f32.mrf.mxu0
      %v7030 = vadd.f32 0.0, %v7029
      %7031 = vdwg.mxu0
      %7032 = vmatpush.bf16.msra.mxu0 %v6957
      %7033 = vmatpush.bf16.msra.mxu0 %v6953
      %7034 = vmatpush.bf16.msra.mxu0 %v6949
      %7035 = vmatpush.bf16.msra.mxu0 %v6945
      %7036 = vmatpush.bf16.msra.mxu0 %v6941
      %7037 = vmatpush.bf16.msra.mxu0 %v6937
      %7038 = vmatpush.bf16.msra.mxu0 %v6933
      %7039 = vmatpush.bf16.msra.mxu0 %v6929
      %7040 = vmatmul.bf16.gmra.mxu0 %v6211
      %v7041 = vpop.f32.mrf.mxu0
      %v7042 = vadd.f32 0.0, %v7041
      %v7043 = vpop.f32.mrf.mxu0
      %v7044 = vadd.f32 0.0, %v7043
      %7045 = vdwg.mxu0
      %v7048 = vunpack.c.l.b16 %v6764
      %v7049 = vunpack.c.l.b16 %v6765
      %v7050 = vpack.c.b16 %v7049, %v7048
      %v7084 = vunpack.c.l.b16 %v6766
      %v7085 = vunpack.c.h.b16 %v6766
      %v7086 = vunpack.c.l.b16 %v6767
      %v7087 = vunpack.c.h.b16 %v6767
      %v7088 = vunpack.c.l.b16 %v6768
      %v7089 = vunpack.c.h.b16 %v6768
      %v7090 = vunpack.c.l.b16 %v6769
      %v7091 = vunpack.c.h.b16 %v6769
      %v7092 = vunpack.c.l.b16 %v6770
      %v7093 = vunpack.c.h.b16 %v6770
      %v7094 = vunpack.c.l.b16 %v6771
      %v7095 = vunpack.c.h.b16 %v6771
      %v7096 = vunpack.c.l.b16 %v6772
      %v7097 = vunpack.c.h.b16 %v6772
      %v7098 = vunpack.c.l.b16 %v6773
      %v7099 = vunpack.c.h.b16 %v6773
      %v7100 = vunpack.c.l.b16 %v6774
      %v7101 = vunpack.c.h.b16 %v6774
      %v7102 = vunpack.c.l.b16 %v6775
      %v7103 = vunpack.c.h.b16 %v6775
      %v7104 = vunpack.c.l.b16 %v6776
      %v7105 = vunpack.c.h.b16 %v6776
      %v7106 = vunpack.c.l.b16 %v6777
      %v7107 = vunpack.c.h.b16 %v6777
      %v7108 = vunpack.c.l.b16 %v6778
      %v7109 = vunpack.c.h.b16 %v6778
      %v7110 = vunpack.c.l.b16 %v6779
      %v7111 = vunpack.c.h.b16 %v6779
      %v7112 = vunpack.c.l.b16 %v6780
      %v7113 = vunpack.c.h.b16 %v6780
      %v7114 = vunpack.c.l.b16 %v6781
      %v7115 = vunpack.c.h.b16 %v6781
      %v7116 = vunpack.c.l.b16 %v6782
      %v7117 = vunpack.c.h.b16 %v6782
      %v7118 = vunpack.c.l.b16 %v6783
      %v7119 = vunpack.c.h.b16 %v6783
      %v7120 = vunpack.c.l.b16 %v6784
      %v7121 = vunpack.c.h.b16 %v6784
      %v7122 = vunpack.c.l.b16 %v6785
      %v7123 = vunpack.c.h.b16 %v6785
      %v7124 = vunpack.c.l.b16 %v6786
      %v7125 = vunpack.c.h.b16 %v6786
      %v7126 = vunpack.c.l.b16 %v6787
      %v7127 = vunpack.c.h.b16 %v6787
      %v7128 = vunpack.c.l.b16 %v6788
      %v7129 = vunpack.c.h.b16 %v6788
      %v7130 = vunpack.c.l.b16 %v6789
      %v7131 = vunpack.c.h.b16 %v6789
      %v7132 = vunpack.c.l.b16 %v6790
      %v7133 = vunpack.c.h.b16 %v6790
      %v7134 = vunpack.c.l.b16 %v6791
      %v7135 = vunpack.c.h.b16 %v6791
      %v7136 = vunpack.c.l.b16 %v6792
      %v7137 = vunpack.c.h.b16 %v6792
      %v7138 = vunpack.c.l.b16 %v6793
      %v7139 = vunpack.c.h.b16 %v6793
      %v7140 = vunpack.c.l.b16 %v6794
      %v7141 = vunpack.c.h.b16 %v6794
      %v7142 = vunpack.c.l.b16 %v6795
      %v7143 = vunpack.c.h.b16 %v6795
      %v7144 = vunpack.c.l.b16 %v6796
      %v7145 = vunpack.c.h.b16 %v6796
      %v7146 = vunpack.c.l.b16 %v6797
      %v7147 = vunpack.c.h.b16 %v6797
      %v7148 = vpack.c.b16 %v7088, %v7084
      %v7149 = vpack.c.b16 %v7089, %v7085
      %v7150 = vpack.c.b16 %v7090, %v7086
      %v7151 = vpack.c.b16 %v7091, %v7087
      %v7152 = vpack.c.b16 %v7096, %v7092
      %v7153 = vpack.c.b16 %v7097, %v7093
      %v7154 = vpack.c.b16 %v7098, %v7094
      %v7155 = vpack.c.b16 %v7099, %v7095
      %v7156 = vpack.c.b16 %v7104, %v7100
      %v7157 = vpack.c.b16 %v7105, %v7101
      %v7158 = vpack.c.b16 %v7106, %v7102
      %v7159 = vpack.c.b16 %v7107, %v7103
      %v7160 = vpack.c.b16 %v7112, %v7108
      %v7161 = vpack.c.b16 %v7113, %v7109
      %v7162 = vpack.c.b16 %v7114, %v7110
      %v7163 = vpack.c.b16 %v7115, %v7111
      %v7164 = vpack.c.b16 %v7120, %v7116
      %v7165 = vpack.c.b16 %v7121, %v7117
      %v7166 = vpack.c.b16 %v7122, %v7118
      %v7167 = vpack.c.b16 %v7123, %v7119
      %v7168 = vpack.c.b16 %v7128, %v7124
      %v7169 = vpack.c.b16 %v7129, %v7125
      %v7170 = vpack.c.b16 %v7130, %v7126
      %v7171 = vpack.c.b16 %v7131, %v7127
      %v7172 = vpack.c.b16 %v7136, %v7132
      %v7173 = vpack.c.b16 %v7137, %v7133
      %v7174 = vpack.c.b16 %v7138, %v7134
      %v7175 = vpack.c.b16 %v7139, %v7135
      %v7176 = vpack.c.b16 %v7144, %v7140
      %v7177 = vpack.c.b16 %v7145, %v7141
      %v7178 = vpack.c.b16 %v7146, %v7142
      %v7179 = vpack.c.b16 %v7147, %v7143
      %7212 = vmatpush.bf16.msra.mxu0 %v7176
      %7213 = vmatpush.bf16.msra.mxu0 %v7172
      %7214 = vmatpush.bf16.msra.mxu0 %v7168
      %7215 = vmatpush.bf16.msra.mxu0 %v7164
      %7216 = vmatpush.bf16.msra.mxu0 %v7160
      %7217 = vmatpush.bf16.msra.mxu0 %v7156
      %7218 = vmatpush.bf16.msra.mxu0 %v7152
      %7219 = vmatpush.bf16.msra.mxu0 %v7148
      %7220 = vmatmul.bf16.gmra.mxu0 %v7050
      %v7221 = vpop.f32.mrf.mxu0
      %v7222 = vadd.f32 %v7000, %v7221
      %v7223 = vpop.f32.mrf.mxu0
      %v7224 = vadd.f32 %v7002, %v7223
      %7225 = vdwg.mxu0
      %7226 = vmatpush.bf16.msra.mxu0 %v7177
      %7227 = vmatpush.bf16.msra.mxu0 %v7173
      %7228 = vmatpush.bf16.msra.mxu0 %v7169
      %7229 = vmatpush.bf16.msra.mxu0 %v7165
      %7230 = vmatpush.bf16.msra.mxu0 %v7161
      %7231 = vmatpush.bf16.msra.mxu0 %v7157
      %7232 = vmatpush.bf16.msra.mxu0 %v7153
      %7233 = vmatpush.bf16.msra.mxu0 %v7149
      %7234 = vmatmul.bf16.gmra.mxu0 %v7050
      %v7235 = vpop.f32.mrf.mxu0
      %v7236 = vadd.f32 %v7014, %v7235
      %v7237 = vpop.f32.mrf.mxu0
      %v7238 = vadd.f32 %v7016, %v7237
      %7239 = vdwg.mxu0
      %7240 = vmatpush.bf16.msra.mxu0 %v7178
      %7241 = vmatpush.bf16.msra.mxu0 %v7174
      %7242 = vmatpush.bf16.msra.mxu0 %v7170
      %7243 = vmatpush.bf16.msra.mxu0 %v7166
      %7244 = vmatpush.bf16.msra.mxu0 %v7162
      %7245 = vmatpush.bf16.msra.mxu0 %v7158
      %7246 = vmatpush.bf16.msra.mxu0 %v7154
      %7247 = vmatpush.bf16.msra.mxu0 %v7150
      %7248 = vmatmul.bf16.gmra.mxu0 %v7050
      %v7249 = vpop.f32.mrf.mxu0
      %v7250 = vadd.f32 %v7028, %v7249
      %v7251 = vpop.f32.mrf.mxu0
      %v7252 = vadd.f32 %v7030, %v7251
      %7253 = vdwg.mxu0
      %7254 = vmatpush.bf16.msra.mxu0 %v7179
      %7255 = vmatpush.bf16.msra.mxu0 %v7175
      %7256 = vmatpush.bf16.msra.mxu0 %v7171
      %7257 = vmatpush.bf16.msra.mxu0 %v7167
      %7258 = vmatpush.bf16.msra.mxu0 %v7163
      %7259 = vmatpush.bf16.msra.mxu0 %v7159
      %7260 = vmatpush.bf16.msra.mxu0 %v7155
      %7261 = vmatpush.bf16.msra.mxu0 %v7151
      %7262 = vmatmul.bf16.gmra.mxu0 %v7050
      %v7263 = vpop.f32.mrf.mxu0
      %v7264 = vadd.f32 %v7042, %v7263
      %v7265 = vpop.f32.mrf.mxu0
      %v7266 = vadd.f32 %v7044, %v7265
      %7267 = vdwg.mxu0
      %v7268 = vadd.f32 %v7222, %v147
      %v7269 = vadd.f32 %v7236, %v148
      %v7270 = vadd.f32 %v7250, %v149
      %v7271 = vadd.f32 %v7264, %v150
      %v7272 = vadd.f32 %v7224, %v147
      %v7273 = vadd.f32 %v7238, %v148
      %v7274 = vadd.f32 %v7252, %v149
      %v7275 = vadd.f32 %v7266, %v150
      %v7276 = vmul.f32 %v7268, 0.5
      %v7277 = vmul.f32 %v7272, 0.5
      %v7278 = vtanh.pop %v7276
      %v7279 = vtanh.pop %v7277
      %v7280 = vmul.f32 %v7278, 0.5
      %v7281 = vmul.f32 %v7279, 0.5
      %v7282 = vadd.f32 %v7280, 0.5
      %v7283 = vadd.f32 %v7281, 0.5
      %v7284 = vmul.f32 %v7269, 0.5
      %v7285 = vmul.f32 %v7273, 0.5
      %v7286 = vtanh.pop %v7284
      %v7287 = vtanh.pop %v7285
      %v7288 = vmul.f32 %v7286, 0.5
      %v7289 = vmul.f32 %v7287, 0.5
      %v7290 = vadd.f32 %v7288, 0.5
      %v7291 = vadd.f32 %v7289, 0.5
      %v7292 = vtanh.pop %v7270
      %v7293 = vtanh.pop %v7274
      %v7294 = vmul.f32 %v7271, 0.5
      %v7295 = vmul.f32 %v7275, 0.5
      %v7296 = vtanh.pop %v7294
      %v7297 = vtanh.pop %v7295
      %v7298 = vmul.f32 %v7296, 0.5
      %v7299 = vmul.f32 %v7297, 0.5
      %v7300 = vadd.f32 %v7298, 0.5
      %v7301 = vadd.f32 %v7299, 0.5
      %v7302 = vmul.f32 %v7290, %v6205
      %v7303 = vmul.f32 %v7291, %v6206
      %v7304 = vmul.f32 %v7282, %v7292
      %v7305 = vmul.f32 %v7283, %v7293
      %v7306 = vadd.f32 %v7302, %v7304
      %v7307 = vadd.f32 %v7303, %v7305
      %v7308 = vtanh.pop %v7306
      %v7309 = vtanh.pop %v7307
      %v7310 = vmul.f32 %v7300, %v7308
      %v7311 = vmul.f32 %v7301, %v7309
      %v7312 = vpack.c.bf16 %v7311, %v7310
      %v7313 = vld [vmem:[#allocation11] sm:$0xff]
      %v7314 = vld [vmem:[#allocation11 + $0x8] sm:$0xff]
      %v7315 = vld [vmem:[#allocation11 + $0x10] sm:$0xff]
      %v7316 = vld [vmem:[#allocation11 + $0x18] sm:$0xff]
      %v7317 = vld [vmem:[#allocation11 + $0x20] sm:$0xff]
      %v7318 = vld [vmem:[#allocation11 + $0x28] sm:$0xff]
      %v7319 = vld [vmem:[#allocation11 + $0x30] sm:$0xff]
      %v7320 = vld [vmem:[#allocation11 + $0x38] sm:$0xff]
      %v7321 = vld [vmem:[#allocation11 + $0x40] sm:$0xff]
      %v7322 = vld [vmem:[#allocation11 + $0x48] sm:$0xff]
      %v7323 = vld [vmem:[#allocation11 + $0x50] sm:$0xff]
      %v7324 = vld [vmem:[#allocation11 + $0x58] sm:$0xff]
      %v7325 = vld [vmem:[#allocation11 + $0x60] sm:$0xff]
      %v7326 = vld [vmem:[#allocation11 + $0x68] sm:$0xff]
      %v7327 = vld [vmem:[#allocation11 + $0x70] sm:$0xff]
      %v7328 = vld [vmem:[#allocation11 + $0x78] sm:$0xff]
      %v7329 = vld [vmem:[#allocation11 + $0x80] sm:$0xff]
      %v7330 = vld [vmem:[#allocation11 + $0x88] sm:$0xff]
      %v7331 = vld [vmem:[#allocation11 + $0x90] sm:$0xff]
      %v7332 = vld [vmem:[#allocation11 + $0x98] sm:$0xff]
      %v7333 = vld [vmem:[#allocation11 + $0xa0] sm:$0xff]
      %v7334 = vld [vmem:[#allocation11 + $0xa8] sm:$0xff]
      %v7335 = vld [vmem:[#allocation11 + $0xb0] sm:$0xff]
      %v7336 = vld [vmem:[#allocation11 + $0xb8] sm:$0xff]
      %v7337 = vld [vmem:[#allocation11 + $0xc0] sm:$0xff]
      %v7338 = vld [vmem:[#allocation11 + $0xc8] sm:$0xff]
      %v7339 = vld [vmem:[#allocation11 + $0xd0] sm:$0xff]
      %v7340 = vld [vmem:[#allocation11 + $0xd8] sm:$0xff]
      %v7341 = vld [vmem:[#allocation11 + $0xe0] sm:$0xff]
      %v7342 = vld [vmem:[#allocation11 + $0xe8] sm:$0xff]
      %v7343 = vld [vmem:[#allocation11 + $0xf0] sm:$0xff]
      %v7344 = vld [vmem:[#allocation11 + $0xf8] sm:$0xff]
      %v7345 = vld [vmem:[#allocation12] sm:$0xff]
      %v7346 = vld [vmem:[#allocation12 + $0x8] sm:$0xff]
      %v7347 = vld [vmem:[#allocation12 + $0x10] sm:$0xff]
      %v7348 = vld [vmem:[#allocation12 + $0x18] sm:$0xff]
      %v7349 = vld [vmem:[#allocation12 + $0x20] sm:$0xff]
      %v7350 = vld [vmem:[#allocation12 + $0x28] sm:$0xff]
      %v7351 = vld [vmem:[#allocation12 + $0x30] sm:$0xff]
      %v7352 = vld [vmem:[#allocation12 + $0x38] sm:$0xff]
      %v7353 = vld [vmem:[#allocation12 + $0x40] sm:$0xff]
      %v7354 = vld [vmem:[#allocation12 + $0x48] sm:$0xff]
      %v7355 = vld [vmem:[#allocation12 + $0x50] sm:$0xff]
      %v7356 = vld [vmem:[#allocation12 + $0x58] sm:$0xff]
      %v7357 = vld [vmem:[#allocation12 + $0x60] sm:$0xff]
      %v7358 = vld [vmem:[#allocation12 + $0x68] sm:$0xff]
      %v7359 = vld [vmem:[#allocation12 + $0x70] sm:$0xff]
      %v7360 = vld [vmem:[#allocation12 + $0x78] sm:$0xff]
      %v7361 = vld [vmem:[#allocation12 + $0x80] sm:$0xff]
      %v7362 = vld [vmem:[#allocation12 + $0x88] sm:$0xff]
      %v7363 = vld [vmem:[#allocation12 + $0x90] sm:$0xff]
      %v7364 = vld [vmem:[#allocation12 + $0x98] sm:$0xff]
      %v7365 = vld [vmem:[#allocation12 + $0xa0] sm:$0xff]
      %v7366 = vld [vmem:[#allocation12 + $0xa8] sm:$0xff]
      %v7367 = vld [vmem:[#allocation12 + $0xb0] sm:$0xff]
      %v7368 = vld [vmem:[#allocation12 + $0xb8] sm:$0xff]
      %v7369 = vld [vmem:[#allocation12 + $0xc0] sm:$0xff]
      %v7370 = vld [vmem:[#allocation12 + $0xc8] sm:$0xff]
      %v7371 = vld [vmem:[#allocation12 + $0xd0] sm:$0xff]
      %v7372 = vld [vmem:[#allocation12 + $0xd8] sm:$0xff]
      %v7373 = vld [vmem:[#allocation12 + $0xe0] sm:$0xff]
      %v7374 = vld [vmem:[#allocation12 + $0xe8] sm:$0xff]
      %v7375 = vld [vmem:[#allocation12 + $0xf0] sm:$0xff]
      %v7376 = vld [vmem:[#allocation12 + $0xf8] sm:$0xff]
      %v7379 = vunpack.c.l.b16 %v6758
      %v7380 = vunpack.c.l.b16 %v6759
      %v7381 = vpack.c.b16 %v7380, %v7379
      %v7415 = vunpack.c.l.b16 %v7345
      %v7416 = vunpack.c.h.b16 %v7345
      %v7417 = vunpack.c.l.b16 %v7346
      %v7418 = vunpack.c.h.b16 %v7346
      %v7419 = vunpack.c.l.b16 %v7347
      %v7420 = vunpack.c.h.b16 %v7347
      %v7421 = vunpack.c.l.b16 %v7348
      %v7422 = vunpack.c.h.b16 %v7348
      %v7423 = vunpack.c.l.b16 %v7349
      %v7424 = vunpack.c.h.b16 %v7349
      %v7425 = vunpack.c.l.b16 %v7350
      %v7426 = vunpack.c.h.b16 %v7350
      %v7427 = vunpack.c.l.b16 %v7351
      %v7428 = vunpack.c.h.b16 %v7351
      %v7429 = vunpack.c.l.b16 %v7352
      %v7430 = vunpack.c.h.b16 %v7352
      %v7431 = vunpack.c.l.b16 %v7353
      %v7432 = vunpack.c.h.b16 %v7353
      %v7433 = vunpack.c.l.b16 %v7354
      %v7434 = vunpack.c.h.b16 %v7354
      %v7435 = vunpack.c.l.b16 %v7355
      %v7436 = vunpack.c.h.b16 %v7355
      %v7437 = vunpack.c.l.b16 %v7356
      %v7438 = vunpack.c.h.b16 %v7356
      %v7439 = vunpack.c.l.b16 %v7357
      %v7440 = vunpack.c.h.b16 %v7357
      %v7441 = vunpack.c.l.b16 %v7358
      %v7442 = vunpack.c.h.b16 %v7358
      %v7443 = vunpack.c.l.b16 %v7359
      %v7444 = vunpack.c.h.b16 %v7359
      %v7445 = vunpack.c.l.b16 %v7360
      %v7446 = vunpack.c.h.b16 %v7360
      %v7447 = vunpack.c.l.b16 %v7361
      %v7448 = vunpack.c.h.b16 %v7361
      %v7449 = vunpack.c.l.b16 %v7362
      %v7450 = vunpack.c.h.b16 %v7362
      %v7451 = vunpack.c.l.b16 %v7363
      %v7452 = vunpack.c.h.b16 %v7363
      %v7453 = vunpack.c.l.b16 %v7364
      %v7454 = vunpack.c.h.b16 %v7364
      %v7455 = vunpack.c.l.b16 %v7365
      %v7456 = vunpack.c.h.b16 %v7365
      %v7457 = vunpack.c.l.b16 %v7366
      %v7458 = vunpack.c.h.b16 %v7366
      %v7459 = vunpack.c.l.b16 %v7367
      %v7460 = vunpack.c.h.b16 %v7367
      %v7461 = vunpack.c.l.b16 %v7368
      %v7462 = vunpack.c.h.b16 %v7368
      %v7463 = vunpack.c.l.b16 %v7369
      %v7464 = vunpack.c.h.b16 %v7369
      %v7465 = vunpack.c.l.b16 %v7370
      %v7466 = vunpack.c.h.b16 %v7370
      %v7467 = vunpack.c.l.b16 %v7371
      %v7468 = vunpack.c.h.b16 %v7371
      %v7469 = vunpack.c.l.b16 %v7372
      %v7470 = vunpack.c.h.b16 %v7372
      %v7471 = vunpack.c.l.b16 %v7373
      %v7472 = vunpack.c.h.b16 %v7373
      %v7473 = vunpack.c.l.b16 %v7374
      %v7474 = vunpack.c.h.b16 %v7374
      %v7475 = vunpack.c.l.b16 %v7375
      %v7476 = vunpack.c.h.b16 %v7375
      %v7477 = vunpack.c.l.b16 %v7376
      %v7478 = vunpack.c.h.b16 %v7376
      %v7479 = vpack.c.b16 %v7419, %v7415
      %v7480 = vpack.c.b16 %v7420, %v7416
      %v7481 = vpack.c.b16 %v7421, %v7417
      %v7482 = vpack.c.b16 %v7422, %v7418
      %v7483 = vpack.c.b16 %v7427, %v7423
      %v7484 = vpack.c.b16 %v7428, %v7424
      %v7485 = vpack.c.b16 %v7429, %v7425
      %v7486 = vpack.c.b16 %v7430, %v7426
      %v7487 = vpack.c.b16 %v7435, %v7431
      %v7488 = vpack.c.b16 %v7436, %v7432
      %v7489 = vpack.c.b16 %v7437, %v7433
      %v7490 = vpack.c.b16 %v7438, %v7434
      %v7491 = vpack.c.b16 %v7443, %v7439
      %v7492 = vpack.c.b16 %v7444, %v7440
      %v7493 = vpack.c.b16 %v7445, %v7441
      %v7494 = vpack.c.b16 %v7446, %v7442
      %v7495 = vpack.c.b16 %v7451, %v7447
      %v7496 = vpack.c.b16 %v7452, %v7448
      %v7497 = vpack.c.b16 %v7453, %v7449
      %v7498 = vpack.c.b16 %v7454, %v7450
      %v7499 = vpack.c.b16 %v7459, %v7455
      %v7500 = vpack.c.b16 %v7460, %v7456
      %v7501 = vpack.c.b16 %v7461, %v7457
      %v7502 = vpack.c.b16 %v7462, %v7458
      %v7503 = vpack.c.b16 %v7467, %v7463
      %v7504 = vpack.c.b16 %v7468, %v7464
      %v7505 = vpack.c.b16 %v7469, %v7465
      %v7506 = vpack.c.b16 %v7470, %v7466
      %v7507 = vpack.c.b16 %v7475, %v7471
      %v7508 = vpack.c.b16 %v7476, %v7472
      %v7509 = vpack.c.b16 %v7477, %v7473
      %v7510 = vpack.c.b16 %v7478, %v7474
      %7543 = vmatpush.bf16.msra.mxu0 %v7507
      %7544 = vmatpush.bf16.msra.mxu0 %v7503
      %7545 = vmatpush.bf16.msra.mxu0 %v7499
      %7546 = vmatpush.bf16.msra.mxu0 %v7495
      %7547 = vmatpush.bf16.msra.mxu0 %v7491
      %7548 = vmatpush.bf16.msra.mxu0 %v7487
      %7549 = vmatpush.bf16.msra.mxu0 %v7483
      %7550 = vmatpush.bf16.msra.mxu0 %v7479
      %7551 = vmatmul.bf16.gmra.mxu0 %v7381
      %v7552 = vpop.f32.mrf.mxu0
      %v7553 = vadd.f32 0.0, %v7552
      %v7554 = vpop.f32.mrf.mxu0
      %v7555 = vadd.f32 0.0, %v7554
      %7556 = vdwg.mxu0
      %7557 = vmatpush.bf16.msra.mxu0 %v7508
      %7558 = vmatpush.bf16.msra.mxu0 %v7504
      %7559 = vmatpush.bf16.msra.mxu0 %v7500
      %7560 = vmatpush.bf16.msra.mxu0 %v7496
      %7561 = vmatpush.bf16.msra.mxu0 %v7492
      %7562 = vmatpush.bf16.msra.mxu0 %v7488
      %7563 = vmatpush.bf16.msra.mxu0 %v7484
      %7564 = vmatpush.bf16.msra.mxu0 %v7480
      %7565 = vmatmul.bf16.gmra.mxu0 %v7381
      %v7566 = vpop.f32.mrf.mxu0
      %v7567 = vadd.f32 0.0, %v7566
      %v7568 = vpop.f32.mrf.mxu0
      %v7569 = vadd.f32 0.0, %v7568
      %7570 = vdwg.mxu0
      %7571 = vmatpush.bf16.msra.mxu0 %v7509
      %7572 = vmatpush.bf16.msra.mxu0 %v7505
      %7573 = vmatpush.bf16.msra.mxu0 %v7501
      %7574 = vmatpush.bf16.msra.mxu0 %v7497
      %7575 = vmatpush.bf16.msra.mxu0 %v7493
      %7576 = vmatpush.bf16.msra.mxu0 %v7489
      %7577 = vmatpush.bf16.msra.mxu0 %v7485
      %7578 = vmatpush.bf16.msra.mxu0 %v7481
      %7579 = vmatmul.bf16.gmra.mxu0 %v7381
      %v7580 = vpop.f32.mrf.mxu0
      %v7581 = vadd.f32 0.0, %v7580
      %v7582 = vpop.f32.mrf.mxu0
      %v7583 = vadd.f32 0.0, %v7582
      %7584 = vdwg.mxu0
      %7585 = vmatpush.bf16.msra.mxu0 %v7510
      %7586 = vmatpush.bf16.msra.mxu0 %v7506
      %7587 = vmatpush.bf16.msra.mxu0 %v7502
      %7588 = vmatpush.bf16.msra.mxu0 %v7498
      %7589 = vmatpush.bf16.msra.mxu0 %v7494
      %7590 = vmatpush.bf16.msra.mxu0 %v7490
      %7591 = vmatpush.bf16.msra.mxu0 %v7486
      %7592 = vmatpush.bf16.msra.mxu0 %v7482
      %7593 = vmatmul.bf16.gmra.mxu0 %v7381
      %v7594 = vpop.f32.mrf.mxu0
      %v7595 = vadd.f32 0.0, %v7594
      %v7596 = vpop.f32.mrf.mxu0
      %v7597 = vadd.f32 0.0, %v7596
      %7598 = vdwg.mxu0
      %v7631 = vunpack.c.l.b16 %v7313
      %v7632 = vunpack.c.h.b16 %v7313
      %v7633 = vunpack.c.l.b16 %v7314
      %v7634 = vunpack.c.h.b16 %v7314
      %v7635 = vunpack.c.l.b16 %v7315
      %v7636 = vunpack.c.h.b16 %v7315
      %v7637 = vunpack.c.l.b16 %v7316
      %v7638 = vunpack.c.h.b16 %v7316
      %v7639 = vunpack.c.l.b16 %v7317
      %v7640 = vunpack.c.h.b16 %v7317
      %v7641 = vunpack.c.l.b16 %v7318
      %v7642 = vunpack.c.h.b16 %v7318
      %v7643 = vunpack.c.l.b16 %v7319
      %v7644 = vunpack.c.h.b16 %v7319
      %v7645 = vunpack.c.l.b16 %v7320
      %v7646 = vunpack.c.h.b16 %v7320
      %v7647 = vunpack.c.l.b16 %v7321
      %v7648 = vunpack.c.h.b16 %v7321
      %v7649 = vunpack.c.l.b16 %v7322
      %v7650 = vunpack.c.h.b16 %v7322
      %v7651 = vunpack.c.l.b16 %v7323
      %v7652 = vunpack.c.h.b16 %v7323
      %v7653 = vunpack.c.l.b16 %v7324
      %v7654 = vunpack.c.h.b16 %v7324
      %v7655 = vunpack.c.l.b16 %v7325
      %v7656 = vunpack.c.h.b16 %v7325
      %v7657 = vunpack.c.l.b16 %v7326
      %v7658 = vunpack.c.h.b16 %v7326
      %v7659 = vunpack.c.l.b16 %v7327
      %v7660 = vunpack.c.h.b16 %v7327
      %v7661 = vunpack.c.l.b16 %v7328
      %v7662 = vunpack.c.h.b16 %v7328
      %v7663 = vunpack.c.l.b16 %v7329
      %v7664 = vunpack.c.h.b16 %v7329
      %v7665 = vunpack.c.l.b16 %v7330
      %v7666 = vunpack.c.h.b16 %v7330
      %v7667 = vunpack.c.l.b16 %v7331
      %v7668 = vunpack.c.h.b16 %v7331
      %v7669 = vunpack.c.l.b16 %v7332
      %v7670 = vunpack.c.h.b16 %v7332
      %v7671 = vunpack.c.l.b16 %v7333
      %v7672 = vunpack.c.h.b16 %v7333
      %v7673 = vunpack.c.l.b16 %v7334
      %v7674 = vunpack.c.h.b16 %v7334
      %v7675 = vunpack.c.l.b16 %v7335
      %v7676 = vunpack.c.h.b16 %v7335
      %v7677 = vunpack.c.l.b16 %v7336
      %v7678 = vunpack.c.h.b16 %v7336
      %v7679 = vunpack.c.l.b16 %v7337
      %v7680 = vunpack.c.h.b16 %v7337
      %v7681 = vunpack.c.l.b16 %v7338
      %v7682 = vunpack.c.h.b16 %v7338
      %v7683 = vunpack.c.l.b16 %v7339
      %v7684 = vunpack.c.h.b16 %v7339
      %v7685 = vunpack.c.l.b16 %v7340
      %v7686 = vunpack.c.h.b16 %v7340
      %v7687 = vunpack.c.l.b16 %v7341
      %v7688 = vunpack.c.h.b16 %v7341
      %v7689 = vunpack.c.l.b16 %v7342
      %v7690 = vunpack.c.h.b16 %v7342
      %v7691 = vunpack.c.l.b16 %v7343
      %v7692 = vunpack.c.h.b16 %v7343
      %v7693 = vunpack.c.l.b16 %v7344
      %v7694 = vunpack.c.h.b16 %v7344
      %v7695 = vpack.c.b16 %v7635, %v7631
      %v7696 = vpack.c.b16 %v7636, %v7632
      %v7697 = vpack.c.b16 %v7637, %v7633
      %v7698 = vpack.c.b16 %v7638, %v7634
      %v7699 = vpack.c.b16 %v7643, %v7639
      %v7700 = vpack.c.b16 %v7644, %v7640
      %v7701 = vpack.c.b16 %v7645, %v7641
      %v7702 = vpack.c.b16 %v7646, %v7642
      %v7703 = vpack.c.b16 %v7651, %v7647
      %v7704 = vpack.c.b16 %v7652, %v7648
      %v7705 = vpack.c.b16 %v7653, %v7649
      %v7706 = vpack.c.b16 %v7654, %v7650
      %v7707 = vpack.c.b16 %v7659, %v7655
      %v7708 = vpack.c.b16 %v7660, %v7656
      %v7709 = vpack.c.b16 %v7661, %v7657
      %v7710 = vpack.c.b16 %v7662, %v7658
      %v7711 = vpack.c.b16 %v7667, %v7663
      %v7712 = vpack.c.b16 %v7668, %v7664
      %v7713 = vpack.c.b16 %v7669, %v7665
      %v7714 = vpack.c.b16 %v7670, %v7666
      %v7715 = vpack.c.b16 %v7675, %v7671
      %v7716 = vpack.c.b16 %v7676, %v7672
      %v7717 = vpack.c.b16 %v7677, %v7673
      %v7718 = vpack.c.b16 %v7678, %v7674
      %v7719 = vpack.c.b16 %v7683, %v7679
      %v7720 = vpack.c.b16 %v7684, %v7680
      %v7721 = vpack.c.b16 %v7685, %v7681
      %v7722 = vpack.c.b16 %v7686, %v7682
      %v7723 = vpack.c.b16 %v7691, %v7687
      %v7724 = vpack.c.b16 %v7692, %v7688
      %v7725 = vpack.c.b16 %v7693, %v7689
      %v7726 = vpack.c.b16 %v7694, %v7690
      %7759 = vmatpush.bf16.msra.mxu0 %v7723
      %7760 = vmatpush.bf16.msra.mxu0 %v7719
      %7761 = vmatpush.bf16.msra.mxu0 %v7715
      %7762 = vmatpush.bf16.msra.mxu0 %v7711
      %7763 = vmatpush.bf16.msra.mxu0 %v7707
      %7764 = vmatpush.bf16.msra.mxu0 %v7703
      %7765 = vmatpush.bf16.msra.mxu0 %v7699
      %7766 = vmatpush.bf16.msra.mxu0 %v7695
      %7767 = vmatmul.bf16.gmra.mxu0 %v7312
      %v7768 = vpop.f32.mrf.mxu0
      %v7769 = vadd.f32 %v7553, %v7768
      %v7770 = vpop.f32.mrf.mxu0
      %v7771 = vadd.f32 %v7555, %v7770
      %7772 = vdwg.mxu0
      %7773 = vmatpush.bf16.msra.mxu0 %v7724
      %7774 = vmatpush.bf16.msra.mxu0 %v7720
      %7775 = vmatpush.bf16.msra.mxu0 %v7716
      %7776 = vmatpush.bf16.msra.mxu0 %v7712
      %7777 = vmatpush.bf16.msra.mxu0 %v7708
      %7778 = vmatpush.bf16.msra.mxu0 %v7704
      %7779 = vmatpush.bf16.msra.mxu0 %v7700
      %7780 = vmatpush.bf16.msra.mxu0 %v7696
      %7781 = vmatmul.bf16.gmra.mxu0 %v7312
      %v7782 = vpop.f32.mrf.mxu0
      %v7783 = vadd.f32 %v7567, %v7782
      %v7784 = vpop.f32.mrf.mxu0
      %v7785 = vadd.f32 %v7569, %v7784
      %7786 = vdwg.mxu0
      %7787 = vmatpush.bf16.msra.mxu0 %v7725
      %7788 = vmatpush.bf16.msra.mxu0 %v7721
      %7789 = vmatpush.bf16.msra.mxu0 %v7717
      %7790 = vmatpush.bf16.msra.mxu0 %v7713
      %7791 = vmatpush.bf16.msra.mxu0 %v7709
      %7792 = vmatpush.bf16.msra.mxu0 %v7705
      %7793 = vmatpush.bf16.msra.mxu0 %v7701
      %7794 = vmatpush.bf16.msra.mxu0 %v7697
      %7795 = vmatmul.bf16.gmra.mxu0 %v7312
      %v7796 = vpop.f32.mrf.mxu0
      %v7797 = vadd.f32 %v7581, %v7796
      %v7798 = vpop.f32.mrf.mxu0
      %v7799 = vadd.f32 %v7583, %v7798
      %7800 = vdwg.mxu0
      %7801 = vmatpush.bf16.msra.mxu0 %v7726
      %7802 = vmatpush.bf16.msra.mxu0 %v7722
      %7803 = vmatpush.bf16.msra.mxu0 %v7718
      %7804 = vmatpush.bf16.msra.mxu0 %v7714
      %7805 = vmatpush.bf16.msra.mxu0 %v7710
      %7806 = vmatpush.bf16.msra.mxu0 %v7706
      %7807 = vmatpush.bf16.msra.mxu0 %v7702
      %7808 = vmatpush.bf16.msra.mxu0 %v7698
      %7809 = vmatmul.bf16.gmra.mxu0 %v7312
      %v7810 = vpop.f32.mrf.mxu0
      %v7811 = vadd.f32 %v7595, %v7810
      %v7812 = vpop.f32.mrf.mxu0
      %v7813 = vadd.f32 %v7597, %v7812
      %7814 = vdwg.mxu0
      %v7815 = vadd.f32 %v7769, %v157
      %v7816 = vadd.f32 %v7783, %v158
      %v7817 = vadd.f32 %v7797, %v159
      %v7818 = vadd.f32 %v7811, %v160
      %v7819 = vadd.f32 %v7771, %v157
      %v7820 = vadd.f32 %v7785, %v158
      %v7821 = vadd.f32 %v7799, %v159
      %v7822 = vadd.f32 %v7813, %v160
      %v7823 = vmul.f32 %v7815, 0.5
      %v7824 = vmul.f32 %v7819, 0.5
      %v7825 = vtanh.pop %v7823
      %v7826 = vtanh.pop %v7824
      %v7827 = vmul.f32 %v7825, 0.5
      %v7828 = vmul.f32 %v7826, 0.5
      %v7829 = vadd.f32 %v7827, 0.5
      %v7830 = vadd.f32 %v7828, 0.5
      %v7831 = vmul.f32 %v7816, 0.5
      %v7832 = vmul.f32 %v7820, 0.5
      %v7833 = vtanh.pop %v7831
      %v7834 = vtanh.pop %v7832
      %v7835 = vmul.f32 %v7833, 0.5
      %v7836 = vmul.f32 %v7834, 0.5
      %v7837 = vadd.f32 %v7835, 0.5
      %v7838 = vadd.f32 %v7836, 0.5
      %v7839 = vtanh.pop %v7817
      %v7840 = vtanh.pop %v7821
      %v7841 = vmul.f32 %v7818, 0.5
      %v7842 = vmul.f32 %v7822, 0.5
      %v7843 = vtanh.pop %v7841
      %v7844 = vtanh.pop %v7842
      %v7845 = vmul.f32 %v7843, 0.5
      %v7846 = vmul.f32 %v7844, 0.5
      %v7847 = vadd.f32 %v7845, 0.5
      %v7848 = vadd.f32 %v7846, 0.5
      %v7849 = vmul.f32 %v7837, %v6752
      %v7850 = vmul.f32 %v7838, %v6753
      %v7851 = vmul.f32 %v7829, %v7839
      %v7852 = vmul.f32 %v7830, %v7840
      %v7853 = vadd.f32 %v7849, %v7851
      %v7854 = vadd.f32 %v7850, %v7852
      %v7855 = vtanh.pop %v7853
      %v7856 = vtanh.pop %v7854
      %v7857 = vmul.f32 %v7847, %v7855
      %v7858 = vmul.f32 %v7848, %v7856
      %v7859 = vpack.c.bf16 %v7857, %v7857
      %v7860 = vpack.c.bf16 %v7858, %v7858
      %s7861 = scalar_lea.vmem [#allocation2], 48
      %7862 = vst [vmem:[%s7861] sm:$0xf] %v7859
      %7863 = vst [vmem:[%s7861 + $0x4] sm:$0xf] %v7860
      %s7864 = scalar_lea.vmem [#allocation3], 56
      %v7865 = vld [vmem:[%s7864] sm:$0xf]
      %v7866 = vld [vmem:[%s7864 + $0x4] sm:$0xf]
      %v7867 = vld [vmem:[#allocation6] sm:$0xff]
      %v7868 = vld [vmem:[#allocation6 + $0x8] sm:$0xff]
      %v7869 = vld [vmem:[#allocation6 + $0x10] sm:$0xff]
      %v7870 = vld [vmem:[#allocation6 + $0x18] sm:$0xff]
      %v7871 = vld [vmem:[#allocation6 + $0x20] sm:$0xff]
      %v7872 = vld [vmem:[#allocation6 + $0x28] sm:$0xff]
      %v7873 = vld [vmem:[#allocation6 + $0x30] sm:$0xff]
      %v7874 = vld [vmem:[#allocation6 + $0x38] sm:$0xff]
      %v7875 = vld [vmem:[#allocation6 + $0x40] sm:$0xff]
      %v7876 = vld [vmem:[#allocation6 + $0x48] sm:$0xff]
      %v7877 = vld [vmem:[#allocation6 + $0x50] sm:$0xff]
      %v7878 = vld [vmem:[#allocation6 + $0x58] sm:$0xff]
      %v7879 = vld [vmem:[#allocation6 + $0x60] sm:$0xff]
      %v7880 = vld [vmem:[#allocation6 + $0x68] sm:$0xff]
      %v7881 = vld [vmem:[#allocation6 + $0x70] sm:$0xff]
      %v7882 = vld [vmem:[#allocation6 + $0x78] sm:$0xff]
      %v7883 = vld [vmem:[#allocation6 + $0x80] sm:$0xff]
      %v7884 = vld [vmem:[#allocation6 + $0x88] sm:$0xff]
      %v7885 = vld [vmem:[#allocation6 + $0x90] sm:$0xff]
      %v7886 = vld [vmem:[#allocation6 + $0x98] sm:$0xff]
      %v7887 = vld [vmem:[#allocation6 + $0xa0] sm:$0xff]
      %v7888 = vld [vmem:[#allocation6 + $0xa8] sm:$0xff]
      %v7889 = vld [vmem:[#allocation6 + $0xb0] sm:$0xff]
      %v7890 = vld [vmem:[#allocation6 + $0xb8] sm:$0xff]
      %v7891 = vld [vmem:[#allocation6 + $0xc0] sm:$0xff]
      %v7892 = vld [vmem:[#allocation6 + $0xc8] sm:$0xff]
      %v7893 = vld [vmem:[#allocation6 + $0xd0] sm:$0xff]
      %v7894 = vld [vmem:[#allocation6 + $0xd8] sm:$0xff]
      %v7895 = vld [vmem:[#allocation6 + $0xe0] sm:$0xff]
      %v7896 = vld [vmem:[#allocation6 + $0xe8] sm:$0xff]
      %v7897 = vld [vmem:[#allocation6 + $0xf0] sm:$0xff]
      %v7898 = vld [vmem:[#allocation6 + $0xf8] sm:$0xff]
      %v7899 = vld [vmem:[#allocation8] sm:$0xff]
      %v7900 = vld [vmem:[#allocation8 + $0x8] sm:$0xff]
      %v7901 = vld [vmem:[#allocation8 + $0x10] sm:$0xff]
      %v7902 = vld [vmem:[#allocation8 + $0x18] sm:$0xff]
      %v7903 = vld [vmem:[#allocation8 + $0x20] sm:$0xff]
      %v7904 = vld [vmem:[#allocation8 + $0x28] sm:$0xff]
      %v7905 = vld [vmem:[#allocation8 + $0x30] sm:$0xff]
      %v7906 = vld [vmem:[#allocation8 + $0x38] sm:$0xff]
      %v7907 = vld [vmem:[#allocation8 + $0x40] sm:$0xff]
      %v7908 = vld [vmem:[#allocation8 + $0x48] sm:$0xff]
      %v7909 = vld [vmem:[#allocation8 + $0x50] sm:$0xff]
      %v7910 = vld [vmem:[#allocation8 + $0x58] sm:$0xff]
      %v7911 = vld [vmem:[#allocation8 + $0x60] sm:$0xff]
      %v7912 = vld [vmem:[#allocation8 + $0x68] sm:$0xff]
      %v7913 = vld [vmem:[#allocation8 + $0x70] sm:$0xff]
      %v7914 = vld [vmem:[#allocation8 + $0x78] sm:$0xff]
      %v7915 = vld [vmem:[#allocation8 + $0x80] sm:$0xff]
      %v7916 = vld [vmem:[#allocation8 + $0x88] sm:$0xff]
      %v7917 = vld [vmem:[#allocation8 + $0x90] sm:$0xff]
      %v7918 = vld [vmem:[#allocation8 + $0x98] sm:$0xff]
      %v7919 = vld [vmem:[#allocation8 + $0xa0] sm:$0xff]
      %v7920 = vld [vmem:[#allocation8 + $0xa8] sm:$0xff]
      %v7921 = vld [vmem:[#allocation8 + $0xb0] sm:$0xff]
      %v7922 = vld [vmem:[#allocation8 + $0xb8] sm:$0xff]
      %v7923 = vld [vmem:[#allocation8 + $0xc0] sm:$0xff]
      %v7924 = vld [vmem:[#allocation8 + $0xc8] sm:$0xff]
      %v7925 = vld [vmem:[#allocation8 + $0xd0] sm:$0xff]
      %v7926 = vld [vmem:[#allocation8 + $0xd8] sm:$0xff]
      %v7927 = vld [vmem:[#allocation8 + $0xe0] sm:$0xff]
      %v7928 = vld [vmem:[#allocation8 + $0xe8] sm:$0xff]
      %v7929 = vld [vmem:[#allocation8 + $0xf0] sm:$0xff]
      %v7930 = vld [vmem:[#allocation8 + $0xf8] sm:$0xff]
      %v7963 = vunpack.c.l.b16 %v7899
      %v7964 = vunpack.c.h.b16 %v7899
      %v7965 = vunpack.c.l.b16 %v7900
      %v7966 = vunpack.c.h.b16 %v7900
      %v7967 = vunpack.c.l.b16 %v7901
      %v7968 = vunpack.c.h.b16 %v7901
      %v7969 = vunpack.c.l.b16 %v7902
      %v7970 = vunpack.c.h.b16 %v7902
      %v7971 = vunpack.c.l.b16 %v7903
      %v7972 = vunpack.c.h.b16 %v7903
      %v7973 = vunpack.c.l.b16 %v7904
      %v7974 = vunpack.c.h.b16 %v7904
      %v7975 = vunpack.c.l.b16 %v7905
      %v7976 = vunpack.c.h.b16 %v7905
      %v7977 = vunpack.c.l.b16 %v7906
      %v7978 = vunpack.c.h.b16 %v7906
      %v7979 = vunpack.c.l.b16 %v7907
      %v7980 = vunpack.c.h.b16 %v7907
      %v7981 = vunpack.c.l.b16 %v7908
      %v7982 = vunpack.c.h.b16 %v7908
      %v7983 = vunpack.c.l.b16 %v7909
      %v7984 = vunpack.c.h.b16 %v7909
      %v7985 = vunpack.c.l.b16 %v7910
      %v7986 = vunpack.c.h.b16 %v7910
      %v7987 = vunpack.c.l.b16 %v7911
      %v7988 = vunpack.c.h.b16 %v7911
      %v7989 = vunpack.c.l.b16 %v7912
      %v7990 = vunpack.c.h.b16 %v7912
      %v7991 = vunpack.c.l.b16 %v7913
      %v7992 = vunpack.c.h.b16 %v7913
      %v7993 = vunpack.c.l.b16 %v7914
      %v7994 = vunpack.c.h.b16 %v7914
      %v7995 = vunpack.c.l.b16 %v7915
      %v7996 = vunpack.c.h.b16 %v7915
      %v7997 = vunpack.c.l.b16 %v7916
      %v7998 = vunpack.c.h.b16 %v7916
      %v7999 = vunpack.c.l.b16 %v7917
      %v8000 = vunpack.c.h.b16 %v7917
      %v8001 = vunpack.c.l.b16 %v7918
      %v8002 = vunpack.c.h.b16 %v7918
      %v8003 = vunpack.c.l.b16 %v7919
      %v8004 = vunpack.c.h.b16 %v7919
      %v8005 = vunpack.c.l.b16 %v7920
      %v8006 = vunpack.c.h.b16 %v7920
      %v8007 = vunpack.c.l.b16 %v7921
      %v8008 = vunpack.c.h.b16 %v7921
      %v8009 = vunpack.c.l.b16 %v7922
      %v8010 = vunpack.c.h.b16 %v7922
      %v8011 = vunpack.c.l.b16 %v7923
      %v8012 = vunpack.c.h.b16 %v7923
      %v8013 = vunpack.c.l.b16 %v7924
      %v8014 = vunpack.c.h.b16 %v7924
      %v8015 = vunpack.c.l.b16 %v7925
      %v8016 = vunpack.c.h.b16 %v7925
      %v8017 = vunpack.c.l.b16 %v7926
      %v8018 = vunpack.c.h.b16 %v7926
      %v8019 = vunpack.c.l.b16 %v7927
      %v8020 = vunpack.c.h.b16 %v7927
      %v8021 = vunpack.c.l.b16 %v7928
      %v8022 = vunpack.c.h.b16 %v7928
      %v8023 = vunpack.c.l.b16 %v7929
      %v8024 = vunpack.c.h.b16 %v7929
      %v8025 = vunpack.c.l.b16 %v7930
      %v8026 = vunpack.c.h.b16 %v7930
      %v8027 = vpack.c.b16 %v7967, %v7963
      %v8028 = vpack.c.b16 %v7968, %v7964
      %v8029 = vpack.c.b16 %v7969, %v7965
      %v8030 = vpack.c.b16 %v7970, %v7966
      %v8031 = vpack.c.b16 %v7975, %v7971
      %v8032 = vpack.c.b16 %v7976, %v7972
      %v8033 = vpack.c.b16 %v7977, %v7973
      %v8034 = vpack.c.b16 %v7978, %v7974
      %v8035 = vpack.c.b16 %v7983, %v7979
      %v8036 = vpack.c.b16 %v7984, %v7980
      %v8037 = vpack.c.b16 %v7985, %v7981
      %v8038 = vpack.c.b16 %v7986, %v7982
      %v8039 = vpack.c.b16 %v7991, %v7987
      %v8040 = vpack.c.b16 %v7992, %v7988
      %v8041 = vpack.c.b16 %v7993, %v7989
      %v8042 = vpack.c.b16 %v7994, %v7990
      %v8043 = vpack.c.b16 %v7999, %v7995
      %v8044 = vpack.c.b16 %v8000, %v7996
      %v8045 = vpack.c.b16 %v8001, %v7997
      %v8046 = vpack.c.b16 %v8002, %v7998
      %v8047 = vpack.c.b16 %v8007, %v8003
      %v8048 = vpack.c.b16 %v8008, %v8004
      %v8049 = vpack.c.b16 %v8009, %v8005
      %v8050 = vpack.c.b16 %v8010, %v8006
      %v8051 = vpack.c.b16 %v8015, %v8011
      %v8052 = vpack.c.b16 %v8016, %v8012
      %v8053 = vpack.c.b16 %v8017, %v8013
      %v8054 = vpack.c.b16 %v8018, %v8014
      %v8055 = vpack.c.b16 %v8023, %v8019
      %v8056 = vpack.c.b16 %v8024, %v8020
      %v8057 = vpack.c.b16 %v8025, %v8021
      %v8058 = vpack.c.b16 %v8026, %v8022
      %8091 = vmatpush.bf16.msra.mxu0 %v8055
      %8092 = vmatpush.bf16.msra.mxu0 %v8051
      %8093 = vmatpush.bf16.msra.mxu0 %v8047
      %8094 = vmatpush.bf16.msra.mxu0 %v8043
      %8095 = vmatpush.bf16.msra.mxu0 %v8039
      %8096 = vmatpush.bf16.msra.mxu0 %v8035
      %8097 = vmatpush.bf16.msra.mxu0 %v8031
      %8098 = vmatpush.bf16.msra.mxu0 %v8027
      %8099 = vmatmul.bf16.gmra.mxu0 %v7312
      %v8100 = vpop.f32.mrf.mxu0
      %v8101 = vadd.f32 0.0, %v8100
      %v8102 = vpop.f32.mrf.mxu0
      %v8103 = vadd.f32 0.0, %v8102
      %8104 = vdwg.mxu0
      %8105 = vmatpush.bf16.msra.mxu0 %v8056
      %8106 = vmatpush.bf16.msra.mxu0 %v8052
      %8107 = vmatpush.bf16.msra.mxu0 %v8048
      %8108 = vmatpush.bf16.msra.mxu0 %v8044
      %8109 = vmatpush.bf16.msra.mxu0 %v8040
      %8110 = vmatpush.bf16.msra.mxu0 %v8036
      %8111 = vmatpush.bf16.msra.mxu0 %v8032
      %8112 = vmatpush.bf16.msra.mxu0 %v8028
      %8113 = vmatmul.bf16.gmra.mxu0 %v7312
      %v8114 = vpop.f32.mrf.mxu0
      %v8115 = vadd.f32 0.0, %v8114
      %v8116 = vpop.f32.mrf.mxu0
      %v8117 = vadd.f32 0.0, %v8116
      %8118 = vdwg.mxu0
      %8119 = vmatpush.bf16.msra.mxu0 %v8057
      %8120 = vmatpush.bf16.msra.mxu0 %v8053
      %8121 = vmatpush.bf16.msra.mxu0 %v8049
      %8122 = vmatpush.bf16.msra.mxu0 %v8045
      %8123 = vmatpush.bf16.msra.mxu0 %v8041
      %8124 = vmatpush.bf16.msra.mxu0 %v8037
      %8125 = vmatpush.bf16.msra.mxu0 %v8033
      %8126 = vmatpush.bf16.msra.mxu0 %v8029
      %8127 = vmatmul.bf16.gmra.mxu0 %v7312
      %v8128 = vpop.f32.mrf.mxu0
      %v8129 = vadd.f32 0.0, %v8128
      %v8130 = vpop.f32.mrf.mxu0
      %v8131 = vadd.f32 0.0, %v8130
      %8132 = vdwg.mxu0
      %8133 = vmatpush.bf16.msra.mxu0 %v8058
      %8134 = vmatpush.bf16.msra.mxu0 %v8054
      %8135 = vmatpush.bf16.msra.mxu0 %v8050
      %8136 = vmatpush.bf16.msra.mxu0 %v8046
      %8137 = vmatpush.bf16.msra.mxu0 %v8042
      %8138 = vmatpush.bf16.msra.mxu0 %v8038
      %8139 = vmatpush.bf16.msra.mxu0 %v8034
      %8140 = vmatpush.bf16.msra.mxu0 %v8030
      %8141 = vmatmul.bf16.gmra.mxu0 %v7312
      %v8142 = vpop.f32.mrf.mxu0
      %v8143 = vadd.f32 0.0, %v8142
      %v8144 = vpop.f32.mrf.mxu0
      %v8145 = vadd.f32 0.0, %v8144
      %8146 = vdwg.mxu0
      %v8149 = vunpack.c.l.b16 %v7865
      %v8150 = vunpack.c.l.b16 %v7866
      %v8151 = vpack.c.b16 %v8150, %v8149
      %v8185 = vunpack.c.l.b16 %v7867
      %v8186 = vunpack.c.h.b16 %v7867
      %v8187 = vunpack.c.l.b16 %v7868
      %v8188 = vunpack.c.h.b16 %v7868
      %v8189 = vunpack.c.l.b16 %v7869
      %v8190 = vunpack.c.h.b16 %v7869
      %v8191 = vunpack.c.l.b16 %v7870
      %v8192 = vunpack.c.h.b16 %v7870
      %v8193 = vunpack.c.l.b16 %v7871
      %v8194 = vunpack.c.h.b16 %v7871
      %v8195 = vunpack.c.l.b16 %v7872
      %v8196 = vunpack.c.h.b16 %v7872
      %v8197 = vunpack.c.l.b16 %v7873
      %v8198 = vunpack.c.h.b16 %v7873
      %v8199 = vunpack.c.l.b16 %v7874
      %v8200 = vunpack.c.h.b16 %v7874
      %v8201 = vunpack.c.l.b16 %v7875
      %v8202 = vunpack.c.h.b16 %v7875
      %v8203 = vunpack.c.l.b16 %v7876
      %v8204 = vunpack.c.h.b16 %v7876
      %v8205 = vunpack.c.l.b16 %v7877
      %v8206 = vunpack.c.h.b16 %v7877
      %v8207 = vunpack.c.l.b16 %v7878
      %v8208 = vunpack.c.h.b16 %v7878
      %v8209 = vunpack.c.l.b16 %v7879
      %v8210 = vunpack.c.h.b16 %v7879
      %v8211 = vunpack.c.l.b16 %v7880
      %v8212 = vunpack.c.h.b16 %v7880
      %v8213 = vunpack.c.l.b16 %v7881
      %v8214 = vunpack.c.h.b16 %v7881
      %v8215 = vunpack.c.l.b16 %v7882
      %v8216 = vunpack.c.h.b16 %v7882
      %v8217 = vunpack.c.l.b16 %v7883
      %v8218 = vunpack.c.h.b16 %v7883
      %v8219 = vunpack.c.l.b16 %v7884
      %v8220 = vunpack.c.h.b16 %v7884
      %v8221 = vunpack.c.l.b16 %v7885
      %v8222 = vunpack.c.h.b16 %v7885
      %v8223 = vunpack.c.l.b16 %v7886
      %v8224 = vunpack.c.h.b16 %v7886
      %v8225 = vunpack.c.l.b16 %v7887
      %v8226 = vunpack.c.h.b16 %v7887
      %v8227 = vunpack.c.l.b16 %v7888
      %v8228 = vunpack.c.h.b16 %v7888
      %v8229 = vunpack.c.l.b16 %v7889
      %v8230 = vunpack.c.h.b16 %v7889
      %v8231 = vunpack.c.l.b16 %v7890
      %v8232 = vunpack.c.h.b16 %v7890
      %v8233 = vunpack.c.l.b16 %v7891
      %v8234 = vunpack.c.h.b16 %v7891
      %v8235 = vunpack.c.l.b16 %v7892
      %v8236 = vunpack.c.h.b16 %v7892
      %v8237 = vunpack.c.l.b16 %v7893
      %v8238 = vunpack.c.h.b16 %v7893
      %v8239 = vunpack.c.l.b16 %v7894
      %v8240 = vunpack.c.h.b16 %v7894
      %v8241 = vunpack.c.l.b16 %v7895
      %v8242 = vunpack.c.h.b16 %v7895
      %v8243 = vunpack.c.l.b16 %v7896
      %v8244 = vunpack.c.h.b16 %v7896
      %v8245 = vunpack.c.l.b16 %v7897
      %v8246 = vunpack.c.h.b16 %v7897
      %v8247 = vunpack.c.l.b16 %v7898
      %v8248 = vunpack.c.h.b16 %v7898
      %v8249 = vpack.c.b16 %v8189, %v8185
      %v8250 = vpack.c.b16 %v8190, %v8186
      %v8251 = vpack.c.b16 %v8191, %v8187
      %v8252 = vpack.c.b16 %v8192, %v8188
      %v8253 = vpack.c.b16 %v8197, %v8193
      %v8254 = vpack.c.b16 %v8198, %v8194
      %v8255 = vpack.c.b16 %v8199, %v8195
      %v8256 = vpack.c.b16 %v8200, %v8196
      %v8257 = vpack.c.b16 %v8205, %v8201
      %v8258 = vpack.c.b16 %v8206, %v8202
      %v8259 = vpack.c.b16 %v8207, %v8203
      %v8260 = vpack.c.b16 %v8208, %v8204
      %v8261 = vpack.c.b16 %v8213, %v8209
      %v8262 = vpack.c.b16 %v8214, %v8210
      %v8263 = vpack.c.b16 %v8215, %v8211
      %v8264 = vpack.c.b16 %v8216, %v8212
      %v8265 = vpack.c.b16 %v8221, %v8217
      %v8266 = vpack.c.b16 %v8222, %v8218
      %v8267 = vpack.c.b16 %v8223, %v8219
      %v8268 = vpack.c.b16 %v8224, %v8220
      %v8269 = vpack.c.b16 %v8229, %v8225
      %v8270 = vpack.c.b16 %v8230, %v8226
      %v8271 = vpack.c.b16 %v8231, %v8227
      %v8272 = vpack.c.b16 %v8232, %v8228
      %v8273 = vpack.c.b16 %v8237, %v8233
      %v8274 = vpack.c.b16 %v8238, %v8234
      %v8275 = vpack.c.b16 %v8239, %v8235
      %v8276 = vpack.c.b16 %v8240, %v8236
      %v8277 = vpack.c.b16 %v8245, %v8241
      %v8278 = vpack.c.b16 %v8246, %v8242
      %v8279 = vpack.c.b16 %v8247, %v8243
      %v8280 = vpack.c.b16 %v8248, %v8244
      %8313 = vmatpush.bf16.msra.mxu0 %v8277
      %8314 = vmatpush.bf16.msra.mxu0 %v8273
      %8315 = vmatpush.bf16.msra.mxu0 %v8269
      %8316 = vmatpush.bf16.msra.mxu0 %v8265
      %8317 = vmatpush.bf16.msra.mxu0 %v8261
      %8318 = vmatpush.bf16.msra.mxu0 %v8257
      %8319 = vmatpush.bf16.msra.mxu0 %v8253
      %8320 = vmatpush.bf16.msra.mxu0 %v8249
      %8321 = vmatmul.bf16.gmra.mxu0 %v8151
      %v8322 = vpop.f32.mrf.mxu0
      %v8323 = vadd.f32 %v8101, %v8322
      %v8324 = vpop.f32.mrf.mxu0
      %v8325 = vadd.f32 %v8103, %v8324
      %8326 = vdwg.mxu0
      %8327 = vmatpush.bf16.msra.mxu0 %v8278
      %8328 = vmatpush.bf16.msra.mxu0 %v8274
      %8329 = vmatpush.bf16.msra.mxu0 %v8270
      %8330 = vmatpush.bf16.msra.mxu0 %v8266
      %8331 = vmatpush.bf16.msra.mxu0 %v8262
      %8332 = vmatpush.bf16.msra.mxu0 %v8258
      %8333 = vmatpush.bf16.msra.mxu0 %v8254
      %8334 = vmatpush.bf16.msra.mxu0 %v8250
      %8335 = vmatmul.bf16.gmra.mxu0 %v8151
      %v8336 = vpop.f32.mrf.mxu0
      %v8337 = vadd.f32 %v8115, %v8336
      %v8338 = vpop.f32.mrf.mxu0
      %v8339 = vadd.f32 %v8117, %v8338
      %8340 = vdwg.mxu0
      %8341 = vmatpush.bf16.msra.mxu0 %v8279
      %8342 = vmatpush.bf16.msra.mxu0 %v8275
      %8343 = vmatpush.bf16.msra.mxu0 %v8271
      %8344 = vmatpush.bf16.msra.mxu0 %v8267
      %8345 = vmatpush.bf16.msra.mxu0 %v8263
      %8346 = vmatpush.bf16.msra.mxu0 %v8259
      %8347 = vmatpush.bf16.msra.mxu0 %v8255
      %8348 = vmatpush.bf16.msra.mxu0 %v8251
      %8349 = vmatmul.bf16.gmra.mxu0 %v8151
      %v8350 = vpop.f32.mrf.mxu0
      %v8351 = vadd.f32 %v8129, %v8350
      %v8352 = vpop.f32.mrf.mxu0
      %v8353 = vadd.f32 %v8131, %v8352
      %8354 = vdwg.mxu0
      %8355 = vmatpush.bf16.msra.mxu0 %v8280
      %8356 = vmatpush.bf16.msra.mxu0 %v8276
      %8357 = vmatpush.bf16.msra.mxu0 %v8272
      %8358 = vmatpush.bf16.msra.mxu0 %v8268
      %8359 = vmatpush.bf16.msra.mxu0 %v8264
      %8360 = vmatpush.bf16.msra.mxu0 %v8260
      %8361 = vmatpush.bf16.msra.mxu0 %v8256
      %8362 = vmatpush.bf16.msra.mxu0 %v8252
      %8363 = vmatmul.bf16.gmra.mxu0 %v8151
      %v8364 = vpop.f32.mrf.mxu0
      %v8365 = vadd.f32 %v8143, %v8364
      %v8366 = vpop.f32.mrf.mxu0
      %v8367 = vadd.f32 %v8145, %v8366
      %8368 = vdwg.mxu0
      %v8369 = vadd.f32 %v8323, %v147
      %v8370 = vadd.f32 %v8337, %v148
      %v8371 = vadd.f32 %v8351, %v149
      %v8372 = vadd.f32 %v8365, %v150
      %v8373 = vadd.f32 %v8325, %v147
      %v8374 = vadd.f32 %v8339, %v148
      %v8375 = vadd.f32 %v8353, %v149
      %v8376 = vadd.f32 %v8367, %v150
      %v8377 = vmul.f32 %v8369, 0.5
      %v8378 = vmul.f32 %v8373, 0.5
      %v8379 = vtanh.pop %v8377
      %v8380 = vtanh.pop %v8378
      %v8381 = vmul.f32 %v8379, 0.5
      %v8382 = vmul.f32 %v8380, 0.5
      %v8383 = vadd.f32 %v8381, 0.5
      %v8384 = vadd.f32 %v8382, 0.5
      %v8385 = vmul.f32 %v8370, 0.5
      %v8386 = vmul.f32 %v8374, 0.5
      %v8387 = vtanh.pop %v8385
      %v8388 = vtanh.pop %v8386
      %v8389 = vmul.f32 %v8387, 0.5
      %v8390 = vmul.f32 %v8388, 0.5
      %v8391 = vadd.f32 %v8389, 0.5
      %v8392 = vadd.f32 %v8390, 0.5
      %v8393 = vtanh.pop %v8371
      %v8394 = vtanh.pop %v8375
      %v8395 = vmul.f32 %v8372, 0.5
      %v8396 = vmul.f32 %v8376, 0.5
      %v8397 = vtanh.pop %v8395
      %v8398 = vtanh.pop %v8396
      %v8399 = vmul.f32 %v8397, 0.5
      %v8400 = vmul.f32 %v8398, 0.5
      %v8401 = vadd.f32 %v8399, 0.5
      %v8402 = vadd.f32 %v8400, 0.5
      %v8403 = vmul.f32 %v8391, %v7306
      %v8404 = vmul.f32 %v8392, %v7307
      %v8405 = vmul.f32 %v8383, %v8393
      %v8406 = vmul.f32 %v8384, %v8394
      %v8407 = vadd.f32 %v8403, %v8405
      %v8408 = vadd.f32 %v8404, %v8406
      %v8409 = vtanh.pop %v8407
      %v8410 = vtanh.pop %v8408
      %v8411 = vmul.f32 %v8401, %v8409
      %v8412 = vmul.f32 %v8402, %v8410
      %v8413 = vpack.c.bf16 %v8412, %v8411
      %v8414 = vld [vmem:[#allocation11] sm:$0xff]
      %v8415 = vld [vmem:[#allocation11 + $0x8] sm:$0xff]
      %v8416 = vld [vmem:[#allocation11 + $0x10] sm:$0xff]
      %v8417 = vld [vmem:[#allocation11 + $0x18] sm:$0xff]
      %v8418 = vld [vmem:[#allocation11 + $0x20] sm:$0xff]
      %v8419 = vld [vmem:[#allocation11 + $0x28] sm:$0xff]
      %v8420 = vld [vmem:[#allocation11 + $0x30] sm:$0xff]
      %v8421 = vld [vmem:[#allocation11 + $0x38] sm:$0xff]
      %v8422 = vld [vmem:[#allocation11 + $0x40] sm:$0xff]
      %v8423 = vld [vmem:[#allocation11 + $0x48] sm:$0xff]
      %v8424 = vld [vmem:[#allocation11 + $0x50] sm:$0xff]
      %v8425 = vld [vmem:[#allocation11 + $0x58] sm:$0xff]
      %v8426 = vld [vmem:[#allocation11 + $0x60] sm:$0xff]
      %v8427 = vld [vmem:[#allocation11 + $0x68] sm:$0xff]
      %v8428 = vld [vmem:[#allocation11 + $0x70] sm:$0xff]
      %v8429 = vld [vmem:[#allocation11 + $0x78] sm:$0xff]
      %v8430 = vld [vmem:[#allocation11 + $0x80] sm:$0xff]
      %v8431 = vld [vmem:[#allocation11 + $0x88] sm:$0xff]
      %v8432 = vld [vmem:[#allocation11 + $0x90] sm:$0xff]
      %v8433 = vld [vmem:[#allocation11 + $0x98] sm:$0xff]
      %v8434 = vld [vmem:[#allocation11 + $0xa0] sm:$0xff]
      %v8435 = vld [vmem:[#allocation11 + $0xa8] sm:$0xff]
      %v8436 = vld [vmem:[#allocation11 + $0xb0] sm:$0xff]
      %v8437 = vld [vmem:[#allocation11 + $0xb8] sm:$0xff]
      %v8438 = vld [vmem:[#allocation11 + $0xc0] sm:$0xff]
      %v8439 = vld [vmem:[#allocation11 + $0xc8] sm:$0xff]
      %v8440 = vld [vmem:[#allocation11 + $0xd0] sm:$0xff]
      %v8441 = vld [vmem:[#allocation11 + $0xd8] sm:$0xff]
      %v8442 = vld [vmem:[#allocation11 + $0xe0] sm:$0xff]
      %v8443 = vld [vmem:[#allocation11 + $0xe8] sm:$0xff]
      %v8444 = vld [vmem:[#allocation11 + $0xf0] sm:$0xff]
      %v8445 = vld [vmem:[#allocation11 + $0xf8] sm:$0xff]
      %v8446 = vld [vmem:[#allocation12] sm:$0xff]
      %v8447 = vld [vmem:[#allocation12 + $0x8] sm:$0xff]
      %v8448 = vld [vmem:[#allocation12 + $0x10] sm:$0xff]
      %v8449 = vld [vmem:[#allocation12 + $0x18] sm:$0xff]
      %v8450 = vld [vmem:[#allocation12 + $0x20] sm:$0xff]
      %v8451 = vld [vmem:[#allocation12 + $0x28] sm:$0xff]
      %v8452 = vld [vmem:[#allocation12 + $0x30] sm:$0xff]
      %v8453 = vld [vmem:[#allocation12 + $0x38] sm:$0xff]
      %v8454 = vld [vmem:[#allocation12 + $0x40] sm:$0xff]
      %v8455 = vld [vmem:[#allocation12 + $0x48] sm:$0xff]
      %v8456 = vld [vmem:[#allocation12 + $0x50] sm:$0xff]
      %v8457 = vld [vmem:[#allocation12 + $0x58] sm:$0xff]
      %v8458 = vld [vmem:[#allocation12 + $0x60] sm:$0xff]
      %v8459 = vld [vmem:[#allocation12 + $0x68] sm:$0xff]
      %v8460 = vld [vmem:[#allocation12 + $0x70] sm:$0xff]
      %v8461 = vld [vmem:[#allocation12 + $0x78] sm:$0xff]
      %v8462 = vld [vmem:[#allocation12 + $0x80] sm:$0xff]
      %v8463 = vld [vmem:[#allocation12 + $0x88] sm:$0xff]
      %v8464 = vld [vmem:[#allocation12 + $0x90] sm:$0xff]
      %v8465 = vld [vmem:[#allocation12 + $0x98] sm:$0xff]
      %v8466 = vld [vmem:[#allocation12 + $0xa0] sm:$0xff]
      %v8467 = vld [vmem:[#allocation12 + $0xa8] sm:$0xff]
      %v8468 = vld [vmem:[#allocation12 + $0xb0] sm:$0xff]
      %v8469 = vld [vmem:[#allocation12 + $0xb8] sm:$0xff]
      %v8470 = vld [vmem:[#allocation12 + $0xc0] sm:$0xff]
      %v8471 = vld [vmem:[#allocation12 + $0xc8] sm:$0xff]
      %v8472 = vld [vmem:[#allocation12 + $0xd0] sm:$0xff]
      %v8473 = vld [vmem:[#allocation12 + $0xd8] sm:$0xff]
      %v8474 = vld [vmem:[#allocation12 + $0xe0] sm:$0xff]
      %v8475 = vld [vmem:[#allocation12 + $0xe8] sm:$0xff]
      %v8476 = vld [vmem:[#allocation12 + $0xf0] sm:$0xff]
      %v8477 = vld [vmem:[#allocation12 + $0xf8] sm:$0xff]
      %v8480 = vunpack.c.l.b16 %v7859
      %v8481 = vunpack.c.l.b16 %v7860
      %v8482 = vpack.c.b16 %v8481, %v8480
      %v8516 = vunpack.c.l.b16 %v8446
      %v8517 = vunpack.c.h.b16 %v8446
      %v8518 = vunpack.c.l.b16 %v8447
      %v8519 = vunpack.c.h.b16 %v8447
      %v8520 = vunpack.c.l.b16 %v8448
      %v8521 = vunpack.c.h.b16 %v8448
      %v8522 = vunpack.c.l.b16 %v8449
      %v8523 = vunpack.c.h.b16 %v8449
      %v8524 = vunpack.c.l.b16 %v8450
      %v8525 = vunpack.c.h.b16 %v8450
      %v8526 = vunpack.c.l.b16 %v8451
      %v8527 = vunpack.c.h.b16 %v8451
      %v8528 = vunpack.c.l.b16 %v8452
      %v8529 = vunpack.c.h.b16 %v8452
      %v8530 = vunpack.c.l.b16 %v8453
      %v8531 = vunpack.c.h.b16 %v8453
      %v8532 = vunpack.c.l.b16 %v8454
      %v8533 = vunpack.c.h.b16 %v8454
      %v8534 = vunpack.c.l.b16 %v8455
      %v8535 = vunpack.c.h.b16 %v8455
      %v8536 = vunpack.c.l.b16 %v8456
      %v8537 = vunpack.c.h.b16 %v8456
      %v8538 = vunpack.c.l.b16 %v8457
      %v8539 = vunpack.c.h.b16 %v8457
      %v8540 = vunpack.c.l.b16 %v8458
      %v8541 = vunpack.c.h.b16 %v8458
      %v8542 = vunpack.c.l.b16 %v8459
      %v8543 = vunpack.c.h.b16 %v8459
      %v8544 = vunpack.c.l.b16 %v8460
      %v8545 = vunpack.c.h.b16 %v8460
      %v8546 = vunpack.c.l.b16 %v8461
      %v8547 = vunpack.c.h.b16 %v8461
      %v8548 = vunpack.c.l.b16 %v8462
      %v8549 = vunpack.c.h.b16 %v8462
      %v8550 = vunpack.c.l.b16 %v8463
      %v8551 = vunpack.c.h.b16 %v8463
      %v8552 = vunpack.c.l.b16 %v8464
      %v8553 = vunpack.c.h.b16 %v8464
      %v8554 = vunpack.c.l.b16 %v8465
      %v8555 = vunpack.c.h.b16 %v8465
      %v8556 = vunpack.c.l.b16 %v8466
      %v8557 = vunpack.c.h.b16 %v8466
      %v8558 = vunpack.c.l.b16 %v8467
      %v8559 = vunpack.c.h.b16 %v8467
      %v8560 = vunpack.c.l.b16 %v8468
      %v8561 = vunpack.c.h.b16 %v8468
      %v8562 = vunpack.c.l.b16 %v8469
      %v8563 = vunpack.c.h.b16 %v8469
      %v8564 = vunpack.c.l.b16 %v8470
      %v8565 = vunpack.c.h.b16 %v8470
      %v8566 = vunpack.c.l.b16 %v8471
      %v8567 = vunpack.c.h.b16 %v8471
      %v8568 = vunpack.c.l.b16 %v8472
      %v8569 = vunpack.c.h.b16 %v8472
      %v8570 = vunpack.c.l.b16 %v8473
      %v8571 = vunpack.c.h.b16 %v8473
      %v8572 = vunpack.c.l.b16 %v8474
      %v8573 = vunpack.c.h.b16 %v8474
      %v8574 = vunpack.c.l.b16 %v8475
      %v8575 = vunpack.c.h.b16 %v8475
      %v8576 = vunpack.c.l.b16 %v8476
      %v8577 = vunpack.c.h.b16 %v8476
      %v8578 = vunpack.c.l.b16 %v8477
      %v8579 = vunpack.c.h.b16 %v8477
      %v8580 = vpack.c.b16 %v8520, %v8516
      %v8581 = vpack.c.b16 %v8521, %v8517
      %v8582 = vpack.c.b16 %v8522, %v8518
      %v8583 = vpack.c.b16 %v8523, %v8519
      %v8584 = vpack.c.b16 %v8528, %v8524
      %v8585 = vpack.c.b16 %v8529, %v8525
      %v8586 = vpack.c.b16 %v8530, %v8526
      %v8587 = vpack.c.b16 %v8531, %v8527
      %v8588 = vpack.c.b16 %v8536, %v8532
      %v8589 = vpack.c.b16 %v8537, %v8533
      %v8590 = vpack.c.b16 %v8538, %v8534
      %v8591 = vpack.c.b16 %v8539, %v8535
      %v8592 = vpack.c.b16 %v8544, %v8540
      %v8593 = vpack.c.b16 %v8545, %v8541
      %v8594 = vpack.c.b16 %v8546, %v8542
      %v8595 = vpack.c.b16 %v8547, %v8543
      %v8596 = vpack.c.b16 %v8552, %v8548
      %v8597 = vpack.c.b16 %v8553, %v8549
      %v8598 = vpack.c.b16 %v8554, %v8550
      %v8599 = vpack.c.b16 %v8555, %v8551
      %v8600 = vpack.c.b16 %v8560, %v8556
      %v8601 = vpack.c.b16 %v8561, %v8557
      %v8602 = vpack.c.b16 %v8562, %v8558
      %v8603 = vpack.c.b16 %v8563, %v8559
      %v8604 = vpack.c.b16 %v8568, %v8564
      %v8605 = vpack.c.b16 %v8569, %v8565
      %v8606 = vpack.c.b16 %v8570, %v8566
      %v8607 = vpack.c.b16 %v8571, %v8567
      %v8608 = vpack.c.b16 %v8576, %v8572
      %v8609 = vpack.c.b16 %v8577, %v8573
      %v8610 = vpack.c.b16 %v8578, %v8574
      %v8611 = vpack.c.b16 %v8579, %v8575
      %8644 = vmatpush.bf16.msra.mxu0 %v8608
      %8645 = vmatpush.bf16.msra.mxu0 %v8604
      %8646 = vmatpush.bf16.msra.mxu0 %v8600
      %8647 = vmatpush.bf16.msra.mxu0 %v8596
      %8648 = vmatpush.bf16.msra.mxu0 %v8592
      %8649 = vmatpush.bf16.msra.mxu0 %v8588
      %8650 = vmatpush.bf16.msra.mxu0 %v8584
      %8651 = vmatpush.bf16.msra.mxu0 %v8580
      %8652 = vmatmul.bf16.gmra.mxu0 %v8482
      %v8653 = vpop.f32.mrf.mxu0
      %v8654 = vadd.f32 0.0, %v8653
      %v8655 = vpop.f32.mrf.mxu0
      %v8656 = vadd.f32 0.0, %v8655
      %8657 = vdwg.mxu0
      %8658 = vmatpush.bf16.msra.mxu0 %v8609
      %8659 = vmatpush.bf16.msra.mxu0 %v8605
      %8660 = vmatpush.bf16.msra.mxu0 %v8601
      %8661 = vmatpush.bf16.msra.mxu0 %v8597
      %8662 = vmatpush.bf16.msra.mxu0 %v8593
      %8663 = vmatpush.bf16.msra.mxu0 %v8589
      %8664 = vmatpush.bf16.msra.mxu0 %v8585
      %8665 = vmatpush.bf16.msra.mxu0 %v8581
      %8666 = vmatmul.bf16.gmra.mxu0 %v8482
      %v8667 = vpop.f32.mrf.mxu0
      %v8668 = vadd.f32 0.0, %v8667
      %v8669 = vpop.f32.mrf.mxu0
      %v8670 = vadd.f32 0.0, %v8669
      %8671 = vdwg.mxu0
      %8672 = vmatpush.bf16.msra.mxu0 %v8610
      %8673 = vmatpush.bf16.msra.mxu0 %v8606
      %8674 = vmatpush.bf16.msra.mxu0 %v8602
      %8675 = vmatpush.bf16.msra.mxu0 %v8598
      %8676 = vmatpush.bf16.msra.mxu0 %v8594
      %8677 = vmatpush.bf16.msra.mxu0 %v8590
      %8678 = vmatpush.bf16.msra.mxu0 %v8586
      %8679 = vmatpush.bf16.msra.mxu0 %v8582
      %8680 = vmatmul.bf16.gmra.mxu0 %v8482
      %v8681 = vpop.f32.mrf.mxu0
      %v8682 = vadd.f32 0.0, %v8681
      %v8683 = vpop.f32.mrf.mxu0
      %v8684 = vadd.f32 0.0, %v8683
      %8685 = vdwg.mxu0
      %8686 = vmatpush.bf16.msra.mxu0 %v8611
      %8687 = vmatpush.bf16.msra.mxu0 %v8607
      %8688 = vmatpush.bf16.msra.mxu0 %v8603
      %8689 = vmatpush.bf16.msra.mxu0 %v8599
      %8690 = vmatpush.bf16.msra.mxu0 %v8595
      %8691 = vmatpush.bf16.msra.mxu0 %v8591
      %8692 = vmatpush.bf16.msra.mxu0 %v8587
      %8693 = vmatpush.bf16.msra.mxu0 %v8583
      %8694 = vmatmul.bf16.gmra.mxu0 %v8482
      %v8695 = vpop.f32.mrf.mxu0
      %v8696 = vadd.f32 0.0, %v8695
      %v8697 = vpop.f32.mrf.mxu0
      %v8698 = vadd.f32 0.0, %v8697
      %8699 = vdwg.mxu0
      %v8732 = vunpack.c.l.b16 %v8414
      %v8733 = vunpack.c.h.b16 %v8414
      %v8734 = vunpack.c.l.b16 %v8415
      %v8735 = vunpack.c.h.b16 %v8415
      %v8736 = vunpack.c.l.b16 %v8416
      %v8737 = vunpack.c.h.b16 %v8416
      %v8738 = vunpack.c.l.b16 %v8417
      %v8739 = vunpack.c.h.b16 %v8417
      %v8740 = vunpack.c.l.b16 %v8418
      %v8741 = vunpack.c.h.b16 %v8418
      %v8742 = vunpack.c.l.b16 %v8419
      %v8743 = vunpack.c.h.b16 %v8419
      %v8744 = vunpack.c.l.b16 %v8420
      %v8745 = vunpack.c.h.b16 %v8420
      %v8746 = vunpack.c.l.b16 %v8421
      %v8747 = vunpack.c.h.b16 %v8421
      %v8748 = vunpack.c.l.b16 %v8422
      %v8749 = vunpack.c.h.b16 %v8422
      %v8750 = vunpack.c.l.b16 %v8423
      %v8751 = vunpack.c.h.b16 %v8423
      %v8752 = vunpack.c.l.b16 %v8424
      %v8753 = vunpack.c.h.b16 %v8424
      %v8754 = vunpack.c.l.b16 %v8425
      %v8755 = vunpack.c.h.b16 %v8425
      %v8756 = vunpack.c.l.b16 %v8426
      %v8757 = vunpack.c.h.b16 %v8426
      %v8758 = vunpack.c.l.b16 %v8427
      %v8759 = vunpack.c.h.b16 %v8427
      %v8760 = vunpack.c.l.b16 %v8428
      %v8761 = vunpack.c.h.b16 %v8428
      %v8762 = vunpack.c.l.b16 %v8429
      %v8763 = vunpack.c.h.b16 %v8429
      %v8764 = vunpack.c.l.b16 %v8430
      %v8765 = vunpack.c.h.b16 %v8430
      %v8766 = vunpack.c.l.b16 %v8431
      %v8767 = vunpack.c.h.b16 %v8431
      %v8768 = vunpack.c.l.b16 %v8432
      %v8769 = vunpack.c.h.b16 %v8432
      %v8770 = vunpack.c.l.b16 %v8433
      %v8771 = vunpack.c.h.b16 %v8433
      %v8772 = vunpack.c.l.b16 %v8434
      %v8773 = vunpack.c.h.b16 %v8434
      %v8774 = vunpack.c.l.b16 %v8435
      %v8775 = vunpack.c.h.b16 %v8435
      %v8776 = vunpack.c.l.b16 %v8436
      %v8777 = vunpack.c.h.b16 %v8436
      %v8778 = vunpack.c.l.b16 %v8437
      %v8779 = vunpack.c.h.b16 %v8437
      %v8780 = vunpack.c.l.b16 %v8438
      %v8781 = vunpack.c.h.b16 %v8438
      %v8782 = vunpack.c.l.b16 %v8439
      %v8783 = vunpack.c.h.b16 %v8439
      %v8784 = vunpack.c.l.b16 %v8440
      %v8785 = vunpack.c.h.b16 %v8440
      %v8786 = vunpack.c.l.b16 %v8441
      %v8787 = vunpack.c.h.b16 %v8441
      %v8788 = vunpack.c.l.b16 %v8442
      %v8789 = vunpack.c.h.b16 %v8442
      %v8790 = vunpack.c.l.b16 %v8443
      %v8791 = vunpack.c.h.b16 %v8443
      %v8792 = vunpack.c.l.b16 %v8444
      %v8793 = vunpack.c.h.b16 %v8444
      %v8794 = vunpack.c.l.b16 %v8445
      %v8795 = vunpack.c.h.b16 %v8445
      %v8796 = vpack.c.b16 %v8736, %v8732
      %v8797 = vpack.c.b16 %v8737, %v8733
      %v8798 = vpack.c.b16 %v8738, %v8734
      %v8799 = vpack.c.b16 %v8739, %v8735
      %v8800 = vpack.c.b16 %v8744, %v8740
      %v8801 = vpack.c.b16 %v8745, %v8741
      %v8802 = vpack.c.b16 %v8746, %v8742
      %v8803 = vpack.c.b16 %v8747, %v8743
      %v8804 = vpack.c.b16 %v8752, %v8748
      %v8805 = vpack.c.b16 %v8753, %v8749
      %v8806 = vpack.c.b16 %v8754, %v8750
      %v8807 = vpack.c.b16 %v8755, %v8751
      %v8808 = vpack.c.b16 %v8760, %v8756
      %v8809 = vpack.c.b16 %v8761, %v8757
      %v8810 = vpack.c.b16 %v8762, %v8758
      %v8811 = vpack.c.b16 %v8763, %v8759
      %v8812 = vpack.c.b16 %v8768, %v8764
      %v8813 = vpack.c.b16 %v8769, %v8765
      %v8814 = vpack.c.b16 %v8770, %v8766
      %v8815 = vpack.c.b16 %v8771, %v8767
      %v8816 = vpack.c.b16 %v8776, %v8772
      %v8817 = vpack.c.b16 %v8777, %v8773
      %v8818 = vpack.c.b16 %v8778, %v8774
      %v8819 = vpack.c.b16 %v8779, %v8775
      %v8820 = vpack.c.b16 %v8784, %v8780
      %v8821 = vpack.c.b16 %v8785, %v8781
      %v8822 = vpack.c.b16 %v8786, %v8782
      %v8823 = vpack.c.b16 %v8787, %v8783
      %v8824 = vpack.c.b16 %v8792, %v8788
      %v8825 = vpack.c.b16 %v8793, %v8789
      %v8826 = vpack.c.b16 %v8794, %v8790
      %v8827 = vpack.c.b16 %v8795, %v8791
      %8860 = vmatpush.bf16.msra.mxu0 %v8824
      %8861 = vmatpush.bf16.msra.mxu0 %v8820
      %8862 = vmatpush.bf16.msra.mxu0 %v8816
      %8863 = vmatpush.bf16.msra.mxu0 %v8812
      %8864 = vmatpush.bf16.msra.mxu0 %v8808
      %8865 = vmatpush.bf16.msra.mxu0 %v8804
      %8866 = vmatpush.bf16.msra.mxu0 %v8800
      %8867 = vmatpush.bf16.msra.mxu0 %v8796
      %8868 = vmatmul.bf16.gmra.mxu0 %v8413
      %v8869 = vpop.f32.mrf.mxu0
      %v8870 = vadd.f32 %v8654, %v8869
      %v8871 = vpop.f32.mrf.mxu0
      %v8872 = vadd.f32 %v8656, %v8871
      %8873 = vdwg.mxu0
      %8874 = vmatpush.bf16.msra.mxu0 %v8825
      %8875 = vmatpush.bf16.msra.mxu0 %v8821
      %8876 = vmatpush.bf16.msra.mxu0 %v8817
      %8877 = vmatpush.bf16.msra.mxu0 %v8813
      %8878 = vmatpush.bf16.msra.mxu0 %v8809
      %8879 = vmatpush.bf16.msra.mxu0 %v8805
      %8880 = vmatpush.bf16.msra.mxu0 %v8801
      %8881 = vmatpush.bf16.msra.mxu0 %v8797
      %8882 = vmatmul.bf16.gmra.mxu0 %v8413
      %v8883 = vpop.f32.mrf.mxu0
      %v8884 = vadd.f32 %v8668, %v8883
      %v8885 = vpop.f32.mrf.mxu0
      %v8886 = vadd.f32 %v8670, %v8885
      %8887 = vdwg.mxu0
      %8888 = vmatpush.bf16.msra.mxu0 %v8826
      %8889 = vmatpush.bf16.msra.mxu0 %v8822
      %8890 = vmatpush.bf16.msra.mxu0 %v8818
      %8891 = vmatpush.bf16.msra.mxu0 %v8814
      %8892 = vmatpush.bf16.msra.mxu0 %v8810
      %8893 = vmatpush.bf16.msra.mxu0 %v8806
      %8894 = vmatpush.bf16.msra.mxu0 %v8802
      %8895 = vmatpush.bf16.msra.mxu0 %v8798
      %8896 = vmatmul.bf16.gmra.mxu0 %v8413
      %v8897 = vpop.f32.mrf.mxu0
      %v8898 = vadd.f32 %v8682, %v8897
      %v8899 = vpop.f32.mrf.mxu0
      %v8900 = vadd.f32 %v8684, %v8899
      %8901 = vdwg.mxu0
      %8902 = vmatpush.bf16.msra.mxu0 %v8827
      %8903 = vmatpush.bf16.msra.mxu0 %v8823
      %8904 = vmatpush.bf16.msra.mxu0 %v8819
      %8905 = vmatpush.bf16.msra.mxu0 %v8815
      %8906 = vmatpush.bf16.msra.mxu0 %v8811
      %8907 = vmatpush.bf16.msra.mxu0 %v8807
      %8908 = vmatpush.bf16.msra.mxu0 %v8803
      %8909 = vmatpush.bf16.msra.mxu0 %v8799
      %8910 = vmatmul.bf16.gmra.mxu0 %v8413
      %v8911 = vpop.f32.mrf.mxu0
      %v8912 = vadd.f32 %v8696, %v8911
      %v8913 = vpop.f32.mrf.mxu0
      %v8914 = vadd.f32 %v8698, %v8913
      %8915 = vdwg.mxu0
      %v8916 = vadd.f32 %v8870, %v157
      %v8917 = vadd.f32 %v8884, %v158
      %v8918 = vadd.f32 %v8898, %v159
      %v8919 = vadd.f32 %v8912, %v160
      %v8920 = vadd.f32 %v8872, %v157
      %v8921 = vadd.f32 %v8886, %v158
      %v8922 = vadd.f32 %v8900, %v159
      %v8923 = vadd.f32 %v8914, %v160
      %v8924 = vmul.f32 %v8916, 0.5
      %v8925 = vmul.f32 %v8920, 0.5
      %v8926 = vtanh.pop %v8924
      %v8927 = vtanh.pop %v8925
      %v8928 = vmul.f32 %v8926, 0.5
      %v8929 = vmul.f32 %v8927, 0.5
      %v8930 = vadd.f32 %v8928, 0.5
      %v8931 = vadd.f32 %v8929, 0.5
      %v8932 = vmul.f32 %v8917, 0.5
      %v8933 = vmul.f32 %v8921, 0.5
      %v8934 = vtanh.pop %v8932
      %v8935 = vtanh.pop %v8933
      %v8936 = vmul.f32 %v8934, 0.5
      %v8937 = vmul.f32 %v8935, 0.5
      %v8938 = vadd.f32 %v8936, 0.5
      %v8939 = vadd.f32 %v8937, 0.5
      %v8940 = vtanh.pop %v8918
      %v8941 = vtanh.pop %v8922
      %v8942 = vmul.f32 %v8919, 0.5
      %v8943 = vmul.f32 %v8923, 0.5
      %v8944 = vtanh.pop %v8942
      %v8945 = vtanh.pop %v8943
      %v8946 = vmul.f32 %v8944, 0.5
      %v8947 = vmul.f32 %v8945, 0.5
      %v8948 = vadd.f32 %v8946, 0.5
      %v8949 = vadd.f32 %v8947, 0.5
      %v8950 = vmul.f32 %v8938, %v7853
      %v8951 = vmul.f32 %v8939, %v7854
      %v8952 = vmul.f32 %v8930, %v8940
      %v8953 = vmul.f32 %v8931, %v8941
      %v8954 = vadd.f32 %v8950, %v8952
      %v8955 = vadd.f32 %v8951, %v8953
      %v8956 = vtanh.pop %v8954
      %v8957 = vtanh.pop %v8955
      %v8958 = vmul.f32 %v8948, %v8956
      %v8959 = vmul.f32 %v8949, %v8957
      %v8960 = vpack.c.bf16 %v8958, %v8958
      %v8961 = vpack.c.bf16 %v8959, %v8959
      %s8962 = scalar_lea.vmem [#allocation2], 56
      %8963 = vst [vmem:[%s8962] sm:$0xf] %v8960
      %8964 = vst [vmem:[%s8962 + $0x4] sm:$0xf] %v8961
      %s8965 = scalar_lea.vmem [#allocation3], 64
      %v8966 = vld [vmem:[%s8965] sm:$0xf]
      %v8967 = vld [vmem:[%s8965 + $0x4] sm:$0xf]
      %v8968 = vld [vmem:[#allocation6] sm:$0xff]
      %v8969 = vld [vmem:[#allocation6 + $0x8] sm:$0xff]
      %v8970 = vld [vmem:[#allocation6 + $0x10] sm:$0xff]
      %v8971 = vld [vmem:[#allocation6 + $0x18] sm:$0xff]
      %v8972 = vld [vmem:[#allocation6 + $0x20] sm:$0xff]
      %v8973 = vld [vmem:[#allocation6 + $0x28] sm:$0xff]
      %v8974 = vld [vmem:[#allocation6 + $0x30] sm:$0xff]
      %v8975 = vld [vmem:[#allocation6 + $0x38] sm:$0xff]
      %v8976 = vld [vmem:[#allocation6 + $0x40] sm:$0xff]
      %v8977 = vld [vmem:[#allocation6 + $0x48] sm:$0xff]
      %v8978 = vld [vmem:[#allocation6 + $0x50] sm:$0xff]
      %v8979 = vld [vmem:[#allocation6 + $0x58] sm:$0xff]
      %v8980 = vld [vmem:[#allocation6 + $0x60] sm:$0xff]
      %v8981 = vld [vmem:[#allocation6 + $0x68] sm:$0xff]
      %v8982 = vld [vmem:[#allocation6 + $0x70] sm:$0xff]
      %v8983 = vld [vmem:[#allocation6 + $0x78] sm:$0xff]
      %v8984 = vld [vmem:[#allocation6 + $0x80] sm:$0xff]
      %v8985 = vld [vmem:[#allocation6 + $0x88] sm:$0xff]
      %v8986 = vld [vmem:[#allocation6 + $0x90] sm:$0xff]
      %v8987 = vld [vmem:[#allocation6 + $0x98] sm:$0xff]
      %v8988 = vld [vmem:[#allocation6 + $0xa0] sm:$0xff]
      %v8989 = vld [vmem:[#allocation6 + $0xa8] sm:$0xff]
      %v8990 = vld [vmem:[#allocation6 + $0xb0] sm:$0xff]
      %v8991 = vld [vmem:[#allocation6 + $0xb8] sm:$0xff]
      %v8992 = vld [vmem:[#allocation6 + $0xc0] sm:$0xff]
      %v8993 = vld [vmem:[#allocation6 + $0xc8] sm:$0xff]
      %v8994 = vld [vmem:[#allocation6 + $0xd0] sm:$0xff]
      %v8995 = vld [vmem:[#allocation6 + $0xd8] sm:$0xff]
      %v8996 = vld [vmem:[#allocation6 + $0xe0] sm:$0xff]
      %v8997 = vld [vmem:[#allocation6 + $0xe8] sm:$0xff]
      %v8998 = vld [vmem:[#allocation6 + $0xf0] sm:$0xff]
      %v8999 = vld [vmem:[#allocation6 + $0xf8] sm:$0xff]
      %v9000 = vld [vmem:[#allocation8] sm:$0xff]
      %v9001 = vld [vmem:[#allocation8 + $0x8] sm:$0xff]
      %v9002 = vld [vmem:[#allocation8 + $0x10] sm:$0xff]
      %v9003 = vld [vmem:[#allocation8 + $0x18] sm:$0xff]
      %v9004 = vld [vmem:[#allocation8 + $0x20] sm:$0xff]
      %v9005 = vld [vmem:[#allocation8 + $0x28] sm:$0xff]
      %v9006 = vld [vmem:[#allocation8 + $0x30] sm:$0xff]
      %v9007 = vld [vmem:[#allocation8 + $0x38] sm:$0xff]
      %v9008 = vld [vmem:[#allocation8 + $0x40] sm:$0xff]
      %v9009 = vld [vmem:[#allocation8 + $0x48] sm:$0xff]
      %v9010 = vld [vmem:[#allocation8 + $0x50] sm:$0xff]
      %v9011 = vld [vmem:[#allocation8 + $0x58] sm:$0xff]
      %v9012 = vld [vmem:[#allocation8 + $0x60] sm:$0xff]
      %v9013 = vld [vmem:[#allocation8 + $0x68] sm:$0xff]
      %v9014 = vld [vmem:[#allocation8 + $0x70] sm:$0xff]
      %v9015 = vld [vmem:[#allocation8 + $0x78] sm:$0xff]
      %v9016 = vld [vmem:[#allocation8 + $0x80] sm:$0xff]
      %v9017 = vld [vmem:[#allocation8 + $0x88] sm:$0xff]
      %v9018 = vld [vmem:[#allocation8 + $0x90] sm:$0xff]
      %v9019 = vld [vmem:[#allocation8 + $0x98] sm:$0xff]
      %v9020 = vld [vmem:[#allocation8 + $0xa0] sm:$0xff]
      %v9021 = vld [vmem:[#allocation8 + $0xa8] sm:$0xff]
      %v9022 = vld [vmem:[#allocation8 + $0xb0] sm:$0xff]
      %v9023 = vld [vmem:[#allocation8 + $0xb8] sm:$0xff]
      %v9024 = vld [vmem:[#allocation8 + $0xc0] sm:$0xff]
      %v9025 = vld [vmem:[#allocation8 + $0xc8] sm:$0xff]
      %v9026 = vld [vmem:[#allocation8 + $0xd0] sm:$0xff]
      %v9027 = vld [vmem:[#allocation8 + $0xd8] sm:$0xff]
      %v9028 = vld [vmem:[#allocation8 + $0xe0] sm:$0xff]
      %v9029 = vld [vmem:[#allocation8 + $0xe8] sm:$0xff]
      %v9030 = vld [vmem:[#allocation8 + $0xf0] sm:$0xff]
      %v9031 = vld [vmem:[#allocation8 + $0xf8] sm:$0xff]
      %v9064 = vunpack.c.l.b16 %v9000
      %v9065 = vunpack.c.h.b16 %v9000
      %v9066 = vunpack.c.l.b16 %v9001
      %v9067 = vunpack.c.h.b16 %v9001
      %v9068 = vunpack.c.l.b16 %v9002
      %v9069 = vunpack.c.h.b16 %v9002
      %v9070 = vunpack.c.l.b16 %v9003
      %v9071 = vunpack.c.h.b16 %v9003
      %v9072 = vunpack.c.l.b16 %v9004
      %v9073 = vunpack.c.h.b16 %v9004
      %v9074 = vunpack.c.l.b16 %v9005
      %v9075 = vunpack.c.h.b16 %v9005
      %v9076 = vunpack.c.l.b16 %v9006
      %v9077 = vunpack.c.h.b16 %v9006
      %v9078 = vunpack.c.l.b16 %v9007
      %v9079 = vunpack.c.h.b16 %v9007
      %v9080 = vunpack.c.l.b16 %v9008
      %v9081 = vunpack.c.h.b16 %v9008
      %v9082 = vunpack.c.l.b16 %v9009
      %v9083 = vunpack.c.h.b16 %v9009
      %v9084 = vunpack.c.l.b16 %v9010
      %v9085 = vunpack.c.h.b16 %v9010
      %v9086 = vunpack.c.l.b16 %v9011
      %v9087 = vunpack.c.h.b16 %v9011
      %v9088 = vunpack.c.l.b16 %v9012
      %v9089 = vunpack.c.h.b16 %v9012
      %v9090 = vunpack.c.l.b16 %v9013
      %v9091 = vunpack.c.h.b16 %v9013
      %v9092 = vunpack.c.l.b16 %v9014
      %v9093 = vunpack.c.h.b16 %v9014
      %v9094 = vunpack.c.l.b16 %v9015
      %v9095 = vunpack.c.h.b16 %v9015
      %v9096 = vunpack.c.l.b16 %v9016
      %v9097 = vunpack.c.h.b16 %v9016
      %v9098 = vunpack.c.l.b16 %v9017
      %v9099 = vunpack.c.h.b16 %v9017
      %v9100 = vunpack.c.l.b16 %v9018
      %v9101 = vunpack.c.h.b16 %v9018
      %v9102 = vunpack.c.l.b16 %v9019
      %v9103 = vunpack.c.h.b16 %v9019
      %v9104 = vunpack.c.l.b16 %v9020
      %v9105 = vunpack.c.h.b16 %v9020
      %v9106 = vunpack.c.l.b16 %v9021
      %v9107 = vunpack.c.h.b16 %v9021
      %v9108 = vunpack.c.l.b16 %v9022
      %v9109 = vunpack.c.h.b16 %v9022
      %v9110 = vunpack.c.l.b16 %v9023
      %v9111 = vunpack.c.h.b16 %v9023
      %v9112 = vunpack.c.l.b16 %v9024
      %v9113 = vunpack.c.h.b16 %v9024
      %v9114 = vunpack.c.l.b16 %v9025
      %v9115 = vunpack.c.h.b16 %v9025
      %v9116 = vunpack.c.l.b16 %v9026
      %v9117 = vunpack.c.h.b16 %v9026
      %v9118 = vunpack.c.l.b16 %v9027
      %v9119 = vunpack.c.h.b16 %v9027
      %v9120 = vunpack.c.l.b16 %v9028
      %v9121 = vunpack.c.h.b16 %v9028
      %v9122 = vunpack.c.l.b16 %v9029
      %v9123 = vunpack.c.h.b16 %v9029
      %v9124 = vunpack.c.l.b16 %v9030
      %v9125 = vunpack.c.h.b16 %v9030
      %v9126 = vunpack.c.l.b16 %v9031
      %v9127 = vunpack.c.h.b16 %v9031
      %v9128 = vpack.c.b16 %v9068, %v9064
      %v9129 = vpack.c.b16 %v9069, %v9065
      %v9130 = vpack.c.b16 %v9070, %v9066
      %v9131 = vpack.c.b16 %v9071, %v9067
      %v9132 = vpack.c.b16 %v9076, %v9072
      %v9133 = vpack.c.b16 %v9077, %v9073
      %v9134 = vpack.c.b16 %v9078, %v9074
      %v9135 = vpack.c.b16 %v9079, %v9075
      %v9136 = vpack.c.b16 %v9084, %v9080
      %v9137 = vpack.c.b16 %v9085, %v9081
      %v9138 = vpack.c.b16 %v9086, %v9082
      %v9139 = vpack.c.b16 %v9087, %v9083
      %v9140 = vpack.c.b16 %v9092, %v9088
      %v9141 = vpack.c.b16 %v9093, %v9089
      %v9142 = vpack.c.b16 %v9094, %v9090
      %v9143 = vpack.c.b16 %v9095, %v9091
      %v9144 = vpack.c.b16 %v9100, %v9096
      %v9145 = vpack.c.b16 %v9101, %v9097
      %v9146 = vpack.c.b16 %v9102, %v9098
      %v9147 = vpack.c.b16 %v9103, %v9099
      %v9148 = vpack.c.b16 %v9108, %v9104
      %v9149 = vpack.c.b16 %v9109, %v9105
      %v9150 = vpack.c.b16 %v9110, %v9106
      %v9151 = vpack.c.b16 %v9111, %v9107
      %v9152 = vpack.c.b16 %v9116, %v9112
      %v9153 = vpack.c.b16 %v9117, %v9113
      %v9154 = vpack.c.b16 %v9118, %v9114
      %v9155 = vpack.c.b16 %v9119, %v9115
      %v9156 = vpack.c.b16 %v9124, %v9120
      %v9157 = vpack.c.b16 %v9125, %v9121
      %v9158 = vpack.c.b16 %v9126, %v9122
      %v9159 = vpack.c.b16 %v9127, %v9123
      %9192 = vmatpush.bf16.msra.mxu0 %v9156
      %9193 = vmatpush.bf16.msra.mxu0 %v9152
      %9194 = vmatpush.bf16.msra.mxu0 %v9148
      %9195 = vmatpush.bf16.msra.mxu0 %v9144
      %9196 = vmatpush.bf16.msra.mxu0 %v9140
      %9197 = vmatpush.bf16.msra.mxu0 %v9136
      %9198 = vmatpush.bf16.msra.mxu0 %v9132
      %9199 = vmatpush.bf16.msra.mxu0 %v9128
      %9200 = vmatmul.bf16.gmra.mxu0 %v8413
      %v9201 = vpop.f32.mrf.mxu0
      %v9202 = vadd.f32 0.0, %v9201
      %v9203 = vpop.f32.mrf.mxu0
      %v9204 = vadd.f32 0.0, %v9203
      %9205 = vdwg.mxu0
      %9206 = vmatpush.bf16.msra.mxu0 %v9157
      %9207 = vmatpush.bf16.msra.mxu0 %v9153
      %9208 = vmatpush.bf16.msra.mxu0 %v9149
      %9209 = vmatpush.bf16.msra.mxu0 %v9145
      %9210 = vmatpush.bf16.msra.mxu0 %v9141
      %9211 = vmatpush.bf16.msra.mxu0 %v9137
      %9212 = vmatpush.bf16.msra.mxu0 %v9133
      %9213 = vmatpush.bf16.msra.mxu0 %v9129
      %9214 = vmatmul.bf16.gmra.mxu0 %v8413
      %v9215 = vpop.f32.mrf.mxu0
      %v9216 = vadd.f32 0.0, %v9215
      %v9217 = vpop.f32.mrf.mxu0
      %v9218 = vadd.f32 0.0, %v9217
      %9219 = vdwg.mxu0
      %9220 = vmatpush.bf16.msra.mxu0 %v9158
      %9221 = vmatpush.bf16.msra.mxu0 %v9154
      %9222 = vmatpush.bf16.msra.mxu0 %v9150
      %9223 = vmatpush.bf16.msra.mxu0 %v9146
      %9224 = vmatpush.bf16.msra.mxu0 %v9142
      %9225 = vmatpush.bf16.msra.mxu0 %v9138
      %9226 = vmatpush.bf16.msra.mxu0 %v9134
      %9227 = vmatpush.bf16.msra.mxu0 %v9130
      %9228 = vmatmul.bf16.gmra.mxu0 %v8413
      %v9229 = vpop.f32.mrf.mxu0
      %v9230 = vadd.f32 0.0, %v9229
      %v9231 = vpop.f32.mrf.mxu0
      %v9232 = vadd.f32 0.0, %v9231
      %9233 = vdwg.mxu0
      %9234 = vmatpush.bf16.msra.mxu0 %v9159
      %9235 = vmatpush.bf16.msra.mxu0 %v9155
      %9236 = vmatpush.bf16.msra.mxu0 %v9151
      %9237 = vmatpush.bf16.msra.mxu0 %v9147
      %9238 = vmatpush.bf16.msra.mxu0 %v9143
      %9239 = vmatpush.bf16.msra.mxu0 %v9139
      %9240 = vmatpush.bf16.msra.mxu0 %v9135
      %9241 = vmatpush.bf16.msra.mxu0 %v9131
      %9242 = vmatmul.bf16.gmra.mxu0 %v8413
      %v9243 = vpop.f32.mrf.mxu0
      %v9244 = vadd.f32 0.0, %v9243
      %v9245 = vpop.f32.mrf.mxu0
      %v9246 = vadd.f32 0.0, %v9245
      %9247 = vdwg.mxu0
      %v9250 = vunpack.c.l.b16 %v8966
      %v9251 = vunpack.c.l.b16 %v8967
      %v9252 = vpack.c.b16 %v9251, %v9250
      %v9286 = vunpack.c.l.b16 %v8968
      %v9287 = vunpack.c.h.b16 %v8968
      %v9288 = vunpack.c.l.b16 %v8969
      %v9289 = vunpack.c.h.b16 %v8969
      %v9290 = vunpack.c.l.b16 %v8970
      %v9291 = vunpack.c.h.b16 %v8970
      %v9292 = vunpack.c.l.b16 %v8971
      %v9293 = vunpack.c.h.b16 %v8971
      %v9294 = vunpack.c.l.b16 %v8972
      %v9295 = vunpack.c.h.b16 %v8972
      %v9296 = vunpack.c.l.b16 %v8973
      %v9297 = vunpack.c.h.b16 %v8973
      %v9298 = vunpack.c.l.b16 %v8974
      %v9299 = vunpack.c.h.b16 %v8974
      %v9300 = vunpack.c.l.b16 %v8975
      %v9301 = vunpack.c.h.b16 %v8975
      %v9302 = vunpack.c.l.b16 %v8976
      %v9303 = vunpack.c.h.b16 %v8976
      %v9304 = vunpack.c.l.b16 %v8977
      %v9305 = vunpack.c.h.b16 %v8977
      %v9306 = vunpack.c.l.b16 %v8978
      %v9307 = vunpack.c.h.b16 %v8978
      %v9308 = vunpack.c.l.b16 %v8979
      %v9309 = vunpack.c.h.b16 %v8979
      %v9310 = vunpack.c.l.b16 %v8980
      %v9311 = vunpack.c.h.b16 %v8980
      %v9312 = vunpack.c.l.b16 %v8981
      %v9313 = vunpack.c.h.b16 %v8981
      %v9314 = vunpack.c.l.b16 %v8982
      %v9315 = vunpack.c.h.b16 %v8982
      %v9316 = vunpack.c.l.b16 %v8983
      %v9317 = vunpack.c.h.b16 %v8983
      %v9318 = vunpack.c.l.b16 %v8984
      %v9319 = vunpack.c.h.b16 %v8984
      %v9320 = vunpack.c.l.b16 %v8985
      %v9321 = vunpack.c.h.b16 %v8985
      %v9322 = vunpack.c.l.b16 %v8986
      %v9323 = vunpack.c.h.b16 %v8986
      %v9324 = vunpack.c.l.b16 %v8987
      %v9325 = vunpack.c.h.b16 %v8987
      %v9326 = vunpack.c.l.b16 %v8988
      %v9327 = vunpack.c.h.b16 %v8988
      %v9328 = vunpack.c.l.b16 %v8989
      %v9329 = vunpack.c.h.b16 %v8989
      %v9330 = vunpack.c.l.b16 %v8990
      %v9331 = vunpack.c.h.b16 %v8990
      %v9332 = vunpack.c.l.b16 %v8991
      %v9333 = vunpack.c.h.b16 %v8991
      %v9334 = vunpack.c.l.b16 %v8992
      %v9335 = vunpack.c.h.b16 %v8992
      %v9336 = vunpack.c.l.b16 %v8993
      %v9337 = vunpack.c.h.b16 %v8993
      %v9338 = vunpack.c.l.b16 %v8994
      %v9339 = vunpack.c.h.b16 %v8994
      %v9340 = vunpack.c.l.b16 %v8995
      %v9341 = vunpack.c.h.b16 %v8995
      %v9342 = vunpack.c.l.b16 %v8996
      %v9343 = vunpack.c.h.b16 %v8996
      %v9344 = vunpack.c.l.b16 %v8997
      %v9345 = vunpack.c.h.b16 %v8997
      %v9346 = vunpack.c.l.b16 %v8998
      %v9347 = vunpack.c.h.b16 %v8998
      %v9348 = vunpack.c.l.b16 %v8999
      %v9349 = vunpack.c.h.b16 %v8999
      %v9350 = vpack.c.b16 %v9290, %v9286
      %v9351 = vpack.c.b16 %v9291, %v9287
      %v9352 = vpack.c.b16 %v9292, %v9288
      %v9353 = vpack.c.b16 %v9293, %v9289
      %v9354 = vpack.c.b16 %v9298, %v9294
      %v9355 = vpack.c.b16 %v9299, %v9295
      %v9356 = vpack.c.b16 %v9300, %v9296
      %v9357 = vpack.c.b16 %v9301, %v9297
      %v9358 = vpack.c.b16 %v9306, %v9302
      %v9359 = vpack.c.b16 %v9307, %v9303
      %v9360 = vpack.c.b16 %v9308, %v9304
      %v9361 = vpack.c.b16 %v9309, %v9305
      %v9362 = vpack.c.b16 %v9314, %v9310
      %v9363 = vpack.c.b16 %v9315, %v9311
      %v9364 = vpack.c.b16 %v9316, %v9312
      %v9365 = vpack.c.b16 %v9317, %v9313
      %v9366 = vpack.c.b16 %v9322, %v9318
      %v9367 = vpack.c.b16 %v9323, %v9319
      %v9368 = vpack.c.b16 %v9324, %v9320
      %v9369 = vpack.c.b16 %v9325, %v9321
      %v9370 = vpack.c.b16 %v9330, %v9326
      %v9371 = vpack.c.b16 %v9331, %v9327
      %v9372 = vpack.c.b16 %v9332, %v9328
      %v9373 = vpack.c.b16 %v9333, %v9329
      %v9374 = vpack.c.b16 %v9338, %v9334
      %v9375 = vpack.c.b16 %v9339, %v9335
      %v9376 = vpack.c.b16 %v9340, %v9336
      %v9377 = vpack.c.b16 %v9341, %v9337
      %v9378 = vpack.c.b16 %v9346, %v9342
      %v9379 = vpack.c.b16 %v9347, %v9343
      %v9380 = vpack.c.b16 %v9348, %v9344
      %v9381 = vpack.c.b16 %v9349, %v9345
      %9414 = vmatpush.bf16.msra.mxu0 %v9378
      %9415 = vmatpush.bf16.msra.mxu0 %v9374
      %9416 = vmatpush.bf16.msra.mxu0 %v9370
      %9417 = vmatpush.bf16.msra.mxu0 %v9366
      %9418 = vmatpush.bf16.msra.mxu0 %v9362
      %9419 = vmatpush.bf16.msra.mxu0 %v9358
      %9420 = vmatpush.bf16.msra.mxu0 %v9354
      %9421 = vmatpush.bf16.msra.mxu0 %v9350
      %9422 = vmatmul.bf16.gmra.mxu0 %v9252
      %v9423 = vpop.f32.mrf.mxu0
      %v9424 = vadd.f32 %v9202, %v9423
      %v9425 = vpop.f32.mrf.mxu0
      %v9426 = vadd.f32 %v9204, %v9425
      %9427 = vdwg.mxu0
      %9428 = vmatpush.bf16.msra.mxu0 %v9379
      %9429 = vmatpush.bf16.msra.mxu0 %v9375
      %9430 = vmatpush.bf16.msra.mxu0 %v9371
      %9431 = vmatpush.bf16.msra.mxu0 %v9367
      %9432 = vmatpush.bf16.msra.mxu0 %v9363
      %9433 = vmatpush.bf16.msra.mxu0 %v9359
      %9434 = vmatpush.bf16.msra.mxu0 %v9355
      %9435 = vmatpush.bf16.msra.mxu0 %v9351
      %9436 = vmatmul.bf16.gmra.mxu0 %v9252
      %v9437 = vpop.f32.mrf.mxu0
      %v9438 = vadd.f32 %v9216, %v9437
      %v9439 = vpop.f32.mrf.mxu0
      %v9440 = vadd.f32 %v9218, %v9439
      %9441 = vdwg.mxu0
      %9442 = vmatpush.bf16.msra.mxu0 %v9380
      %9443 = vmatpush.bf16.msra.mxu0 %v9376
      %9444 = vmatpush.bf16.msra.mxu0 %v9372
      %9445 = vmatpush.bf16.msra.mxu0 %v9368
      %9446 = vmatpush.bf16.msra.mxu0 %v9364
      %9447 = vmatpush.bf16.msra.mxu0 %v9360
      %9448 = vmatpush.bf16.msra.mxu0 %v9356
      %9449 = vmatpush.bf16.msra.mxu0 %v9352
      %9450 = vmatmul.bf16.gmra.mxu0 %v9252
      %v9451 = vpop.f32.mrf.mxu0
      %v9452 = vadd.f32 %v9230, %v9451
      %v9453 = vpop.f32.mrf.mxu0
      %v9454 = vadd.f32 %v9232, %v9453
      %9455 = vdwg.mxu0
      %9456 = vmatpush.bf16.msra.mxu0 %v9381
      %9457 = vmatpush.bf16.msra.mxu0 %v9377
      %9458 = vmatpush.bf16.msra.mxu0 %v9373
      %9459 = vmatpush.bf16.msra.mxu0 %v9369
      %9460 = vmatpush.bf16.msra.mxu0 %v9365
      %9461 = vmatpush.bf16.msra.mxu0 %v9361
      %9462 = vmatpush.bf16.msra.mxu0 %v9357
      %9463 = vmatpush.bf16.msra.mxu0 %v9353
      %9464 = vmatmul.bf16.gmra.mxu0 %v9252
      %v9465 = vpop.f32.mrf.mxu0
      %v9466 = vadd.f32 %v9244, %v9465
      %v9467 = vpop.f32.mrf.mxu0
      %v9468 = vadd.f32 %v9246, %v9467
      %9469 = vdwg.mxu0
      %v9470 = vadd.f32 %v9424, %v147
      %v9471 = vadd.f32 %v9438, %v148
      %v9472 = vadd.f32 %v9452, %v149
      %v9473 = vadd.f32 %v9466, %v150
      %v9474 = vadd.f32 %v9426, %v147
      %v9475 = vadd.f32 %v9440, %v148
      %v9476 = vadd.f32 %v9454, %v149
      %v9477 = vadd.f32 %v9468, %v150
      %v9478 = vmul.f32 %v9470, 0.5
      %v9479 = vmul.f32 %v9474, 0.5
      %v9480 = vtanh.pop %v9478
      %v9481 = vtanh.pop %v9479
      %v9482 = vmul.f32 %v9480, 0.5
      %v9483 = vmul.f32 %v9481, 0.5
      %v9484 = vadd.f32 %v9482, 0.5
      %v9485 = vadd.f32 %v9483, 0.5
      %v9486 = vmul.f32 %v9471, 0.5
      %v9487 = vmul.f32 %v9475, 0.5
      %v9488 = vtanh.pop %v9486
      %v9489 = vtanh.pop %v9487
      %v9490 = vmul.f32 %v9488, 0.5
      %v9491 = vmul.f32 %v9489, 0.5
      %v9492 = vadd.f32 %v9490, 0.5
      %v9493 = vadd.f32 %v9491, 0.5
      %v9494 = vtanh.pop %v9472
      %v9495 = vtanh.pop %v9476
      %v9496 = vmul.f32 %v9473, 0.5
      %v9497 = vmul.f32 %v9477, 0.5
      %v9498 = vtanh.pop %v9496
      %v9499 = vtanh.pop %v9497
      %v9500 = vmul.f32 %v9498, 0.5
      %v9501 = vmul.f32 %v9499, 0.5
      %v9502 = vadd.f32 %v9500, 0.5
      %v9503 = vadd.f32 %v9501, 0.5
      %v9504 = vmul.f32 %v9492, %v8407
      %v9505 = vmul.f32 %v9493, %v8408
      %v9506 = vmul.f32 %v9484, %v9494
      %v9507 = vmul.f32 %v9485, %v9495
      %v9508 = vadd.f32 %v9504, %v9506
      %v9509 = vadd.f32 %v9505, %v9507
      %v9510 = vtanh.pop %v9508
      %v9511 = vtanh.pop %v9509
      %v9512 = vmul.f32 %v9502, %v9510
      %v9513 = vmul.f32 %v9503, %v9511
      %v9514 = vpack.c.bf16 %v9513, %v9512
      %v9515 = vld [vmem:[#allocation11] sm:$0xff]
      %v9516 = vld [vmem:[#allocation11 + $0x8] sm:$0xff]
      %v9517 = vld [vmem:[#allocation11 + $0x10] sm:$0xff]
      %v9518 = vld [vmem:[#allocation11 + $0x18] sm:$0xff]
      %v9519 = vld [vmem:[#allocation11 + $0x20] sm:$0xff]
      %v9520 = vld [vmem:[#allocation11 + $0x28] sm:$0xff]
      %v9521 = vld [vmem:[#allocation11 + $0x30] sm:$0xff]
      %v9522 = vld [vmem:[#allocation11 + $0x38] sm:$0xff]
      %v9523 = vld [vmem:[#allocation11 + $0x40] sm:$0xff]
      %v9524 = vld [vmem:[#allocation11 + $0x48] sm:$0xff]
      %v9525 = vld [vmem:[#allocation11 + $0x50] sm:$0xff]
      %v9526 = vld [vmem:[#allocation11 + $0x58] sm:$0xff]
      %v9527 = vld [vmem:[#allocation11 + $0x60] sm:$0xff]
      %v9528 = vld [vmem:[#allocation11 + $0x68] sm:$0xff]
      %v9529 = vld [vmem:[#allocation11 + $0x70] sm:$0xff]
      %v9530 = vld [vmem:[#allocation11 + $0x78] sm:$0xff]
      %v9531 = vld [vmem:[#allocation11 + $0x80] sm:$0xff]
      %v9532 = vld [vmem:[#allocation11 + $0x88] sm:$0xff]
      %v9533 = vld [vmem:[#allocation11 + $0x90] sm:$0xff]
      %v9534 = vld [vmem:[#allocation11 + $0x98] sm:$0xff]
      %v9535 = vld [vmem:[#allocation11 + $0xa0] sm:$0xff]
      %v9536 = vld [vmem:[#allocation11 + $0xa8] sm:$0xff]
      %v9537 = vld [vmem:[#allocation11 + $0xb0] sm:$0xff]
      %v9538 = vld [vmem:[#allocation11 + $0xb8] sm:$0xff]
      %v9539 = vld [vmem:[#allocation11 + $0xc0] sm:$0xff]
      %v9540 = vld [vmem:[#allocation11 + $0xc8] sm:$0xff]
      %v9541 = vld [vmem:[#allocation11 + $0xd0] sm:$0xff]
      %v9542 = vld [vmem:[#allocation11 + $0xd8] sm:$0xff]
      %v9543 = vld [vmem:[#allocation11 + $0xe0] sm:$0xff]
      %v9544 = vld [vmem:[#allocation11 + $0xe8] sm:$0xff]
      %v9545 = vld [vmem:[#allocation11 + $0xf0] sm:$0xff]
      %v9546 = vld [vmem:[#allocation11 + $0xf8] sm:$0xff]
      %v9547 = vld [vmem:[#allocation12] sm:$0xff]
      %v9548 = vld [vmem:[#allocation12 + $0x8] sm:$0xff]
      %v9549 = vld [vmem:[#allocation12 + $0x10] sm:$0xff]
      %v9550 = vld [vmem:[#allocation12 + $0x18] sm:$0xff]
      %v9551 = vld [vmem:[#allocation12 + $0x20] sm:$0xff]
      %v9552 = vld [vmem:[#allocation12 + $0x28] sm:$0xff]
      %v9553 = vld [vmem:[#allocation12 + $0x30] sm:$0xff]
      %v9554 = vld [vmem:[#allocation12 + $0x38] sm:$0xff]
      %v9555 = vld [vmem:[#allocation12 + $0x40] sm:$0xff]
      %v9556 = vld [vmem:[#allocation12 + $0x48] sm:$0xff]
      %v9557 = vld [vmem:[#allocation12 + $0x50] sm:$0xff]
      %v9558 = vld [vmem:[#allocation12 + $0x58] sm:$0xff]
      %v9559 = vld [vmem:[#allocation12 + $0x60] sm:$0xff]
      %v9560 = vld [vmem:[#allocation12 + $0x68] sm:$0xff]
      %v9561 = vld [vmem:[#allocation12 + $0x70] sm:$0xff]
      %v9562 = vld [vmem:[#allocation12 + $0x78] sm:$0xff]
      %v9563 = vld [vmem:[#allocation12 + $0x80] sm:$0xff]
      %v9564 = vld [vmem:[#allocation12 + $0x88] sm:$0xff]
      %v9565 = vld [vmem:[#allocation12 + $0x90] sm:$0xff]
      %v9566 = vld [vmem:[#allocation12 + $0x98] sm:$0xff]
      %v9567 = vld [vmem:[#allocation12 + $0xa0] sm:$0xff]
      %v9568 = vld [vmem:[#allocation12 + $0xa8] sm:$0xff]
      %v9569 = vld [vmem:[#allocation12 + $0xb0] sm:$0xff]
      %v9570 = vld [vmem:[#allocation12 + $0xb8] sm:$0xff]
      %v9571 = vld [vmem:[#allocation12 + $0xc0] sm:$0xff]
      %v9572 = vld [vmem:[#allocation12 + $0xc8] sm:$0xff]
      %v9573 = vld [vmem:[#allocation12 + $0xd0] sm:$0xff]
      %v9574 = vld [vmem:[#allocation12 + $0xd8] sm:$0xff]
      %v9575 = vld [vmem:[#allocation12 + $0xe0] sm:$0xff]
      %v9576 = vld [vmem:[#allocation12 + $0xe8] sm:$0xff]
      %v9577 = vld [vmem:[#allocation12 + $0xf0] sm:$0xff]
      %v9578 = vld [vmem:[#allocation12 + $0xf8] sm:$0xff]
      %v9581 = vunpack.c.l.b16 %v8960
      %v9582 = vunpack.c.l.b16 %v8961
      %v9583 = vpack.c.b16 %v9582, %v9581
      %v9617 = vunpack.c.l.b16 %v9547
      %v9618 = vunpack.c.h.b16 %v9547
      %v9619 = vunpack.c.l.b16 %v9548
      %v9620 = vunpack.c.h.b16 %v9548
      %v9621 = vunpack.c.l.b16 %v9549
      %v9622 = vunpack.c.h.b16 %v9549
      %v9623 = vunpack.c.l.b16 %v9550
      %v9624 = vunpack.c.h.b16 %v9550
      %v9625 = vunpack.c.l.b16 %v9551
      %v9626 = vunpack.c.h.b16 %v9551
      %v9627 = vunpack.c.l.b16 %v9552
      %v9628 = vunpack.c.h.b16 %v9552
      %v9629 = vunpack.c.l.b16 %v9553
      %v9630 = vunpack.c.h.b16 %v9553
      %v9631 = vunpack.c.l.b16 %v9554
      %v9632 = vunpack.c.h.b16 %v9554
      %v9633 = vunpack.c.l.b16 %v9555
      %v9634 = vunpack.c.h.b16 %v9555
      %v9635 = vunpack.c.l.b16 %v9556
      %v9636 = vunpack.c.h.b16 %v9556
      %v9637 = vunpack.c.l.b16 %v9557
      %v9638 = vunpack.c.h.b16 %v9557
      %v9639 = vunpack.c.l.b16 %v9558
      %v9640 = vunpack.c.h.b16 %v9558
      %v9641 = vunpack.c.l.b16 %v9559
      %v9642 = vunpack.c.h.b16 %v9559
      %v9643 = vunpack.c.l.b16 %v9560
      %v9644 = vunpack.c.h.b16 %v9560
      %v9645 = vunpack.c.l.b16 %v9561
      %v9646 = vunpack.c.h.b16 %v9561
      %v9647 = vunpack.c.l.b16 %v9562
      %v9648 = vunpack.c.h.b16 %v9562
      %v9649 = vunpack.c.l.b16 %v9563
      %v9650 = vunpack.c.h.b16 %v9563
      %v9651 = vunpack.c.l.b16 %v9564
      %v9652 = vunpack.c.h.b16 %v9564
      %v9653 = vunpack.c.l.b16 %v9565
      %v9654 = vunpack.c.h.b16 %v9565
      %v9655 = vunpack.c.l.b16 %v9566
      %v9656 = vunpack.c.h.b16 %v9566
      %v9657 = vunpack.c.l.b16 %v9567
      %v9658 = vunpack.c.h.b16 %v9567
      %v9659 = vunpack.c.l.b16 %v9568
      %v9660 = vunpack.c.h.b16 %v9568
      %v9661 = vunpack.c.l.b16 %v9569
      %v9662 = vunpack.c.h.b16 %v9569
      %v9663 = vunpack.c.l.b16 %v9570
      %v9664 = vunpack.c.h.b16 %v9570
      %v9665 = vunpack.c.l.b16 %v9571
      %v9666 = vunpack.c.h.b16 %v9571
      %v9667 = vunpack.c.l.b16 %v9572
      %v9668 = vunpack.c.h.b16 %v9572
      %v9669 = vunpack.c.l.b16 %v9573
      %v9670 = vunpack.c.h.b16 %v9573
      %v9671 = vunpack.c.l.b16 %v9574
      %v9672 = vunpack.c.h.b16 %v9574
      %v9673 = vunpack.c.l.b16 %v9575
      %v9674 = vunpack.c.h.b16 %v9575
      %v9675 = vunpack.c.l.b16 %v9576
      %v9676 = vunpack.c.h.b16 %v9576
      %v9677 = vunpack.c.l.b16 %v9577
      %v9678 = vunpack.c.h.b16 %v9577
      %v9679 = vunpack.c.l.b16 %v9578
      %v9680 = vunpack.c.h.b16 %v9578
      %v9681 = vpack.c.b16 %v9621, %v9617
      %v9682 = vpack.c.b16 %v9622, %v9618
      %v9683 = vpack.c.b16 %v9623, %v9619
      %v9684 = vpack.c.b16 %v9624, %v9620
      %v9685 = vpack.c.b16 %v9629, %v9625
      %v9686 = vpack.c.b16 %v9630, %v9626
      %v9687 = vpack.c.b16 %v9631, %v9627
      %v9688 = vpack.c.b16 %v9632, %v9628
      %v9689 = vpack.c.b16 %v9637, %v9633
      %v9690 = vpack.c.b16 %v9638, %v9634
      %v9691 = vpack.c.b16 %v9639, %v9635
      %v9692 = vpack.c.b16 %v9640, %v9636
      %v9693 = vpack.c.b16 %v9645, %v9641
      %v9694 = vpack.c.b16 %v9646, %v9642
      %v9695 = vpack.c.b16 %v9647, %v9643
      %v9696 = vpack.c.b16 %v9648, %v9644
      %v9697 = vpack.c.b16 %v9653, %v9649
      %v9698 = vpack.c.b16 %v9654, %v9650
      %v9699 = vpack.c.b16 %v9655, %v9651
      %v9700 = vpack.c.b16 %v9656, %v9652
      %v9701 = vpack.c.b16 %v9661, %v9657
      %v9702 = vpack.c.b16 %v9662, %v9658
      %v9703 = vpack.c.b16 %v9663, %v9659
      %v9704 = vpack.c.b16 %v9664, %v9660
      %v9705 = vpack.c.b16 %v9669, %v9665
      %v9706 = vpack.c.b16 %v9670, %v9666
      %v9707 = vpack.c.b16 %v9671, %v9667
      %v9708 = vpack.c.b16 %v9672, %v9668
      %v9709 = vpack.c.b16 %v9677, %v9673
      %v9710 = vpack.c.b16 %v9678, %v9674
      %v9711 = vpack.c.b16 %v9679, %v9675
      %v9712 = vpack.c.b16 %v9680, %v9676
      %9745 = vmatpush.bf16.msra.mxu0 %v9709
      %9746 = vmatpush.bf16.msra.mxu0 %v9705
      %9747 = vmatpush.bf16.msra.mxu0 %v9701
      %9748 = vmatpush.bf16.msra.mxu0 %v9697
      %9749 = vmatpush.bf16.msra.mxu0 %v9693
      %9750 = vmatpush.bf16.msra.mxu0 %v9689
      %9751 = vmatpush.bf16.msra.mxu0 %v9685
      %9752 = vmatpush.bf16.msra.mxu0 %v9681
      %9753 = vmatmul.bf16.gmra.mxu0 %v9583
      %v9754 = vpop.f32.mrf.mxu0
      %v9755 = vadd.f32 0.0, %v9754
      %v9756 = vpop.f32.mrf.mxu0
      %v9757 = vadd.f32 0.0, %v9756
      %9758 = vdwg.mxu0
      %9759 = vmatpush.bf16.msra.mxu0 %v9710
      %9760 = vmatpush.bf16.msra.mxu0 %v9706
      %9761 = vmatpush.bf16.msra.mxu0 %v9702
      %9762 = vmatpush.bf16.msra.mxu0 %v9698
      %9763 = vmatpush.bf16.msra.mxu0 %v9694
      %9764 = vmatpush.bf16.msra.mxu0 %v9690
      %9765 = vmatpush.bf16.msra.mxu0 %v9686
      %9766 = vmatpush.bf16.msra.mxu0 %v9682
      %9767 = vmatmul.bf16.gmra.mxu0 %v9583
      %v9768 = vpop.f32.mrf.mxu0
      %v9769 = vadd.f32 0.0, %v9768
      %v9770 = vpop.f32.mrf.mxu0
      %v9771 = vadd.f32 0.0, %v9770
      %9772 = vdwg.mxu0
      %9773 = vmatpush.bf16.msra.mxu0 %v9711
      %9774 = vmatpush.bf16.msra.mxu0 %v9707
      %9775 = vmatpush.bf16.msra.mxu0 %v9703
      %9776 = vmatpush.bf16.msra.mxu0 %v9699
      %9777 = vmatpush.bf16.msra.mxu0 %v9695
      %9778 = vmatpush.bf16.msra.mxu0 %v9691
      %9779 = vmatpush.bf16.msra.mxu0 %v9687
      %9780 = vmatpush.bf16.msra.mxu0 %v9683
      %9781 = vmatmul.bf16.gmra.mxu0 %v9583
      %v9782 = vpop.f32.mrf.mxu0
      %v9783 = vadd.f32 0.0, %v9782
      %v9784 = vpop.f32.mrf.mxu0
      %v9785 = vadd.f32 0.0, %v9784
      %9786 = vdwg.mxu0
      %9787 = vmatpush.bf16.msra.mxu0 %v9712
      %9788 = vmatpush.bf16.msra.mxu0 %v9708
      %9789 = vmatpush.bf16.msra.mxu0 %v9704
      %9790 = vmatpush.bf16.msra.mxu0 %v9700
      %9791 = vmatpush.bf16.msra.mxu0 %v9696
      %9792 = vmatpush.bf16.msra.mxu0 %v9692
      %9793 = vmatpush.bf16.msra.mxu0 %v9688
      %9794 = vmatpush.bf16.msra.mxu0 %v9684
      %9795 = vmatmul.bf16.gmra.mxu0 %v9583
      %v9796 = vpop.f32.mrf.mxu0
      %v9797 = vadd.f32 0.0, %v9796
      %v9798 = vpop.f32.mrf.mxu0
      %v9799 = vadd.f32 0.0, %v9798
      %9800 = vdwg.mxu0
      %v9833 = vunpack.c.l.b16 %v9515
      %v9834 = vunpack.c.h.b16 %v9515
      %v9835 = vunpack.c.l.b16 %v9516
      %v9836 = vunpack.c.h.b16 %v9516
      %v9837 = vunpack.c.l.b16 %v9517
      %v9838 = vunpack.c.h.b16 %v9517
      %v9839 = vunpack.c.l.b16 %v9518
      %v9840 = vunpack.c.h.b16 %v9518
      %v9841 = vunpack.c.l.b16 %v9519
      %v9842 = vunpack.c.h.b16 %v9519
      %v9843 = vunpack.c.l.b16 %v9520
      %v9844 = vunpack.c.h.b16 %v9520
      %v9845 = vunpack.c.l.b16 %v9521
      %v9846 = vunpack.c.h.b16 %v9521
      %v9847 = vunpack.c.l.b16 %v9522
      %v9848 = vunpack.c.h.b16 %v9522
      %v9849 = vunpack.c.l.b16 %v9523
      %v9850 = vunpack.c.h.b16 %v9523
      %v9851 = vunpack.c.l.b16 %v9524
      %v9852 = vunpack.c.h.b16 %v9524
      %v9853 = vunpack.c.l.b16 %v9525
      %v9854 = vunpack.c.h.b16 %v9525
      %v9855 = vunpack.c.l.b16 %v9526
      %v9856 = vunpack.c.h.b16 %v9526
      %v9857 = vunpack.c.l.b16 %v9527
      %v9858 = vunpack.c.h.b16 %v9527
      %v9859 = vunpack.c.l.b16 %v9528
      %v9860 = vunpack.c.h.b16 %v9528
      %v9861 = vunpack.c.l.b16 %v9529
      %v9862 = vunpack.c.h.b16 %v9529
      %v9863 = vunpack.c.l.b16 %v9530
      %v9864 = vunpack.c.h.b16 %v9530
      %v9865 = vunpack.c.l.b16 %v9531
      %v9866 = vunpack.c.h.b16 %v9531
      %v9867 = vunpack.c.l.b16 %v9532
      %v9868 = vunpack.c.h.b16 %v9532
      %v9869 = vunpack.c.l.b16 %v9533
      %v9870 = vunpack.c.h.b16 %v9533
      %v9871 = vunpack.c.l.b16 %v9534
      %v9872 = vunpack.c.h.b16 %v9534
      %v9873 = vunpack.c.l.b16 %v9535
      %v9874 = vunpack.c.h.b16 %v9535
      %v9875 = vunpack.c.l.b16 %v9536
      %v9876 = vunpack.c.h.b16 %v9536
      %v9877 = vunpack.c.l.b16 %v9537
      %v9878 = vunpack.c.h.b16 %v9537
      %v9879 = vunpack.c.l.b16 %v9538
      %v9880 = vunpack.c.h.b16 %v9538
      %v9881 = vunpack.c.l.b16 %v9539
      %v9882 = vunpack.c.h.b16 %v9539
      %v9883 = vunpack.c.l.b16 %v9540
      %v9884 = vunpack.c.h.b16 %v9540
      %v9885 = vunpack.c.l.b16 %v9541
      %v9886 = vunpack.c.h.b16 %v9541
      %v9887 = vunpack.c.l.b16 %v9542
      %v9888 = vunpack.c.h.b16 %v9542
      %v9889 = vunpack.c.l.b16 %v9543
      %v9890 = vunpack.c.h.b16 %v9543
      %v9891 = vunpack.c.l.b16 %v9544
      %v9892 = vunpack.c.h.b16 %v9544
      %v9893 = vunpack.c.l.b16 %v9545
      %v9894 = vunpack.c.h.b16 %v9545
      %v9895 = vunpack.c.l.b16 %v9546
      %v9896 = vunpack.c.h.b16 %v9546
      %v9897 = vpack.c.b16 %v9837, %v9833
      %v9898 = vpack.c.b16 %v9838, %v9834
      %v9899 = vpack.c.b16 %v9839, %v9835
      %v9900 = vpack.c.b16 %v9840, %v9836
      %v9901 = vpack.c.b16 %v9845, %v9841
      %v9902 = vpack.c.b16 %v9846, %v9842
      %v9903 = vpack.c.b16 %v9847, %v9843
      %v9904 = vpack.c.b16 %v9848, %v9844
      %v9905 = vpack.c.b16 %v9853, %v9849
      %v9906 = vpack.c.b16 %v9854, %v9850
      %v9907 = vpack.c.b16 %v9855, %v9851
      %v9908 = vpack.c.b16 %v9856, %v9852
      %v9909 = vpack.c.b16 %v9861, %v9857
      %v9910 = vpack.c.b16 %v9862, %v9858
      %v9911 = vpack.c.b16 %v9863, %v9859
      %v9912 = vpack.c.b16 %v9864, %v9860
      %v9913 = vpack.c.b16 %v9869, %v9865
      %v9914 = vpack.c.b16 %v9870, %v9866
      %v9915 = vpack.c.b16 %v9871, %v9867
      %v9916 = vpack.c.b16 %v9872, %v9868
      %v9917 = vpack.c.b16 %v9877, %v9873
      %v9918 = vpack.c.b16 %v9878, %v9874
      %v9919 = vpack.c.b16 %v9879, %v9875
      %v9920 = vpack.c.b16 %v9880, %v9876
      %v9921 = vpack.c.b16 %v9885, %v9881
      %v9922 = vpack.c.b16 %v9886, %v9882
      %v9923 = vpack.c.b16 %v9887, %v9883
      %v9924 = vpack.c.b16 %v9888, %v9884
      %v9925 = vpack.c.b16 %v9893, %v9889
      %v9926 = vpack.c.b16 %v9894, %v9890
      %v9927 = vpack.c.b16 %v9895, %v9891
      %v9928 = vpack.c.b16 %v9896, %v9892
      %9961 = vmatpush.bf16.msra.mxu0 %v9925
      %9962 = vmatpush.bf16.msra.mxu0 %v9921
      %9963 = vmatpush.bf16.msra.mxu0 %v9917
      %9964 = vmatpush.bf16.msra.mxu0 %v9913
      %9965 = vmatpush.bf16.msra.mxu0 %v9909
      %9966 = vmatpush.bf16.msra.mxu0 %v9905
      %9967 = vmatpush.bf16.msra.mxu0 %v9901
      %9968 = vmatpush.bf16.msra.mxu0 %v9897
      %9969 = vmatmul.bf16.gmra.mxu0 %v9514
      %v9970 = vpop.f32.mrf.mxu0
      %v9971 = vadd.f32 %v9755, %v9970
      %v9972 = vpop.f32.mrf.mxu0
      %v9973 = vadd.f32 %v9757, %v9972
      %9974 = vdwg.mxu0
      %9975 = vmatpush.bf16.msra.mxu0 %v9926
      %9976 = vmatpush.bf16.msra.mxu0 %v9922
      %9977 = vmatpush.bf16.msra.mxu0 %v9918
      %9978 = vmatpush.bf16.msra.mxu0 %v9914
      %9979 = vmatpush.bf16.msra.mxu0 %v9910
      %9980 = vmatpush.bf16.msra.mxu0 %v9906
      %9981 = vmatpush.bf16.msra.mxu0 %v9902
      %9982 = vmatpush.bf16.msra.mxu0 %v9898
      %9983 = vmatmul.bf16.gmra.mxu0 %v9514
      %v9984 = vpop.f32.mrf.mxu0
      %v9985 = vadd.f32 %v9769, %v9984
      %v9986 = vpop.f32.mrf.mxu0
      %v9987 = vadd.f32 %v9771, %v9986
      %9988 = vdwg.mxu0
      %9989 = vmatpush.bf16.msra.mxu0 %v9927
      %9990 = vmatpush.bf16.msra.mxu0 %v9923
      %9991 = vmatpush.bf16.msra.mxu0 %v9919
      %9992 = vmatpush.bf16.msra.mxu0 %v9915
      %9993 = vmatpush.bf16.msra.mxu0 %v9911
      %9994 = vmatpush.bf16.msra.mxu0 %v9907
      %9995 = vmatpush.bf16.msra.mxu0 %v9903
      %9996 = vmatpush.bf16.msra.mxu0 %v9899
      %9997 = vmatmul.bf16.gmra.mxu0 %v9514
      %v9998 = vpop.f32.mrf.mxu0
      %v9999 = vadd.f32 %v9783, %v9998
      %v10000 = vpop.f32.mrf.mxu0
      %v10001 = vadd.f32 %v9785, %v10000
      %10002 = vdwg.mxu0
      %10003 = vmatpush.bf16.msra.mxu0 %v9928
      %10004 = vmatpush.bf16.msra.mxu0 %v9924
      %10005 = vmatpush.bf16.msra.mxu0 %v9920
      %10006 = vmatpush.bf16.msra.mxu0 %v9916
      %10007 = vmatpush.bf16.msra.mxu0 %v9912
      %10008 = vmatpush.bf16.msra.mxu0 %v9908
      %10009 = vmatpush.bf16.msra.mxu0 %v9904
      %10010 = vmatpush.bf16.msra.mxu0 %v9900
      %10011 = vmatmul.bf16.gmra.mxu0 %v9514
      %v10012 = vpop.f32.mrf.mxu0
      %v10013 = vadd.f32 %v9797, %v10012
      %v10014 = vpop.f32.mrf.mxu0
      %v10015 = vadd.f32 %v9799, %v10014
      %10016 = vdwg.mxu0
      %v10017 = vadd.f32 %v9971, %v157
      %v10018 = vadd.f32 %v9985, %v158
      %v10019 = vadd.f32 %v9999, %v159
      %v10020 = vadd.f32 %v10013, %v160
      %v10021 = vadd.f32 %v9973, %v157
      %v10022 = vadd.f32 %v9987, %v158
      %v10023 = vadd.f32 %v10001, %v159
      %v10024 = vadd.f32 %v10015, %v160
      %v10025 = vmul.f32 %v10017, 0.5
      %v10026 = vmul.f32 %v10021, 0.5
      %v10027 = vtanh.pop %v10025
      %v10028 = vtanh.pop %v10026
      %v10029 = vmul.f32 %v10027, 0.5
      %v10030 = vmul.f32 %v10028, 0.5
      %v10031 = vadd.f32 %v10029, 0.5
      %v10032 = vadd.f32 %v10030, 0.5
      %v10033 = vmul.f32 %v10018, 0.5
      %v10034 = vmul.f32 %v10022, 0.5
      %v10035 = vtanh.pop %v10033
      %v10036 = vtanh.pop %v10034
      %v10037 = vmul.f32 %v10035, 0.5
      %v10038 = vmul.f32 %v10036, 0.5
      %v10039 = vadd.f32 %v10037, 0.5
      %v10040 = vadd.f32 %v10038, 0.5
      %v10041 = vtanh.pop %v10019
      %v10042 = vtanh.pop %v10023
      %v10043 = vmul.f32 %v10020, 0.5
      %v10044 = vmul.f32 %v10024, 0.5
      %v10045 = vtanh.pop %v10043
      %v10046 = vtanh.pop %v10044
      %v10047 = vmul.f32 %v10045, 0.5
      %v10048 = vmul.f32 %v10046, 0.5
      %v10049 = vadd.f32 %v10047, 0.5
      %v10050 = vadd.f32 %v10048, 0.5
      %v10051 = vmul.f32 %v10039, %v8954
      %v10052 = vmul.f32 %v10040, %v8955
      %v10053 = vmul.f32 %v10031, %v10041
      %v10054 = vmul.f32 %v10032, %v10042
      %v10055 = vadd.f32 %v10051, %v10053
      %v10056 = vadd.f32 %v10052, %v10054
      %v10057 = vtanh.pop %v10055
      %v10058 = vtanh.pop %v10056
      %v10059 = vmul.f32 %v10049, %v10057
      %v10060 = vmul.f32 %v10050, %v10058
      %v10061 = vpack.c.bf16 %v10059, %v10059
      %v10062 = vpack.c.bf16 %v10060, %v10060
      %s10063 = scalar_lea.vmem [#allocation2], 64
      %10064 = vst [vmem:[%s10063] sm:$0xf] %v10061
      %10065 = vst [vmem:[%s10063 + $0x4] sm:$0xf] %v10062
    $region69: #{tpu_custom_call.1} parent=1 // pred_fallthru
      _
    %v10066 = vld [vmem:[#allocation2] sm:$0xf]
    %v10067 = vld [vmem:[#allocation2 + $0x4] sm:$0xf]
    %v10068 = vld [vmem:[#allocation2 + $0x8] sm:$0xf]
    %v10069 = vld [vmem:[#allocation2 + $0xc] sm:$0xf]
    %v10070 = vld [vmem:[#allocation2 + $0x10] sm:$0xf]
    %v10071 = vld [vmem:[#allocation2 + $0x14] sm:$0xf]
    %v10072 = vld [vmem:[#allocation2 + $0x18] sm:$0xf]
    %v10073 = vld [vmem:[#allocation2 + $0x1c] sm:$0xf]
    %v10074 = vld [vmem:[#allocation2 + $0x20] sm:$0xf]
    %v10075 = vld [vmem:[#allocation2 + $0x24] sm:$0xf]
    %v10076 = vld [vmem:[#allocation2 + $0x28] sm:$0xf]
    %v10077 = vld [vmem:[#allocation2 + $0x2c] sm:$0xf]
    %v10078 = vld [vmem:[#allocation2 + $0x30] sm:$0xf]
    %v10079 = vld [vmem:[#allocation2 + $0x34] sm:$0xf]
    %v10080 = vld [vmem:[#allocation2 + $0x38] sm:$0xf]
    %v10081 = vld [vmem:[#allocation2 + $0x3c] sm:$0xf]
    %v10082 = vld [vmem:[#allocation2 + $0x40] sm:$0xf]
    %v10083 = vld [vmem:[#allocation2 + $0x44] sm:$0xf]
    %v10084 = vld [vmem:[#allocation14] sm:$0xf]
    %v10085 = vld [vmem:[#allocation14 + $0x4] sm:$0xf]
    %v10086 = vld [vmem:[#allocation14 + $0x8] sm:$0xf]
    %v10087 = vld [vmem:[#allocation14 + $0xc] sm:$0xf]
    %v10088 = vld [vmem:[#allocation14 + $0x10] sm:$0xf]
    %v10089 = vld [vmem:[#allocation14 + $0x14] sm:$0xf]
    %v10090 = vld [vmem:[#allocation14 + $0x18] sm:$0xf]
    %v10091 = vld [vmem:[#allocation14 + $0x1c] sm:$0xf]
    %v10092 = vld [vmem:[#allocation14 + $0x20] sm:$0xf]
    %v10093 = vld [vmem:[#allocation14 + $0x24] sm:$0xf]
    %v10094 = vld [vmem:[#allocation14 + $0x28] sm:$0xf]
    %v10095 = vld [vmem:[#allocation14 + $0x2c] sm:$0xf]
    %v10096 = vld [vmem:[#allocation14 + $0x30] sm:$0xf]
    %v10097 = vld [vmem:[#allocation14 + $0x34] sm:$0xf]
    %v10098 = vld [vmem:[#allocation14 + $0x38] sm:$0xf]
    %v10099 = vld [vmem:[#allocation14 + $0x3c] sm:$0xf]
    %v10100 = vld [vmem:[%s8] sm:$0x1]
    %v10102 = vperm.slane %v10100, 0
    %v10122 = vunpack.c.l.b16 %v10066
    %v10123 = vunpack.c.l.b16 %v10067
    %v10124 = vunpack.c.l.b16 %v10068
    %v10125 = vunpack.c.l.b16 %v10069
    %v10126 = vunpack.c.l.b16 %v10070
    %v10127 = vunpack.c.l.b16 %v10071
    %v10128 = vunpack.c.l.b16 %v10072
    %v10129 = vunpack.c.l.b16 %v10073
    %v10130 = vunpack.c.l.b16 %v10074
    %v10131 = vunpack.c.l.b16 %v10075
    %v10132 = vunpack.c.l.b16 %v10076
    %v10133 = vunpack.c.l.b16 %v10077
    %v10134 = vunpack.c.l.b16 %v10078
    %v10135 = vunpack.c.l.b16 %v10079
    %v10136 = vunpack.c.l.b16 %v10080
    %v10137 = vunpack.c.l.b16 %v10081
    %v10138 = vunpack.c.l.b16 %v10082
    %v10139 = vunpack.c.l.b16 %v10083
    %v10140 = vpack.c.b16 %v10123, %v10122
    %v10141 = vpack.c.b16 %v10125, %v10124
    %v10142 = vpack.c.b16 %v10127, %v10126
    %v10143 = vpack.c.b16 %v10129, %v10128
    %v10144 = vpack.c.b16 %v10131, %v10130
    %v10145 = vpack.c.b16 %v10133, %v10132
    %v10146 = vpack.c.b16 %v10135, %v10134
    %v10147 = vpack.c.b16 %v10137, %v10136
    %v10148 = vpack.c.b16 %v10139, %v10138
    %v10174 = vunpack.c.l.b16 %v10084
    %v10175 = vunpack.c.l.b16 %v10085
    %v10176 = vunpack.c.l.b16 %v10086
    %v10177 = vunpack.c.l.b16 %v10087
    %v10178 = vunpack.c.l.b16 %v10088
    %v10179 = vunpack.c.l.b16 %v10089
    %v10180 = vunpack.c.l.b16 %v10090
    %v10181 = vunpack.c.l.b16 %v10091
    %v10182 = vunpack.c.l.b16 %v10092
    %v10183 = vunpack.c.l.b16 %v10093
    %v10184 = vunpack.c.l.b16 %v10094
    %v10185 = vunpack.c.l.b16 %v10095
    %v10186 = vunpack.c.l.b16 %v10096
    %v10187 = vunpack.c.l.b16 %v10097
    %v10188 = vunpack.c.l.b16 %v10098
    %v10189 = vunpack.c.l.b16 %v10099
    %v10190 = vpack.c.b16 %v10175, %v10174
    %v10191 = vpack.c.b16 %v10177, %v10176
    %v10192 = vpack.c.b16 %v10179, %v10178
    %v10193 = vpack.c.b16 %v10181, %v10180
    %v10194 = vpack.c.b16 %v10183, %v10182
    %v10195 = vpack.c.b16 %v10185, %v10184
    %v10196 = vpack.c.b16 %v10187, %v10186
    %v10197 = vpack.c.b16 %v10189, %v10188
    %10206 = vmatpush.bf16.msra.mxu0 %v10197
    %10207 = vmatpush.bf16.msra.mxu0 %v10196
    %10208 = vmatpush.bf16.msra.mxu0 %v10195
    %10209 = vmatpush.bf16.msra.mxu0 %v10194
    %10210 = vmatpush.bf16.msra.mxu0 %v10193
    %10211 = vmatpush.bf16.msra.mxu0 %v10192
    %10212 = vmatpush.bf16.msra.mxu0 %v10191
    %10213 = vmatpush.bf16.msra.mxu0 %v10190
    %10214 = vmatmul.bf16.gmra.mxu0 %v10140
    %v10215 = vpop.f32.mrf.mxu0
    %v10216 = vadd.f32 %v10102, %v10215
    %v10217 = vpop.f32.mrf.mxu0
    %v10218 = vadd.f32 %v10102, %v10217
    %10219 = vmatmul.bf16.gmra.mxu0 %v10141
    %v10220 = vpop.f32.mrf.mxu0
    %v10221 = vadd.f32 %v10102, %v10220
    %v10222 = vpop.f32.mrf.mxu0
    %v10223 = vadd.f32 %v10102, %v10222
    %10224 = vmatmul.bf16.gmra.mxu0 %v10142
    %v10225 = vpop.f32.mrf.mxu0
    %v10226 = vadd.f32 %v10102, %v10225
    %v10227 = vpop.f32.mrf.mxu0
    %v10228 = vadd.f32 %v10102, %v10227
    %10229 = vmatmul.bf16.gmra.mxu0 %v10143
    %v10230 = vpop.f32.mrf.mxu0
    %v10231 = vadd.f32 %v10102, %v10230
    %v10232 = vpop.f32.mrf.mxu0
    %v10233 = vadd.f32 %v10102, %v10232
    %10234 = vmatmul.bf16.gmra.mxu0 %v10144
    %v10235 = vpop.f32.mrf.mxu0
    %v10236 = vadd.f32 %v10102, %v10235
    %v10237 = vpop.f32.mrf.mxu0
    %v10238 = vadd.f32 %v10102, %v10237
    %10239 = vmatmul.bf16.gmra.mxu0 %v10145
    %v10240 = vpop.f32.mrf.mxu0
    %v10241 = vadd.f32 %v10102, %v10240
    %v10242 = vpop.f32.mrf.mxu0
    %v10243 = vadd.f32 %v10102, %v10242
    %10244 = vmatmul.bf16.gmra.mxu0 %v10146
    %v10245 = vpop.f32.mrf.mxu0
    %v10246 = vadd.f32 %v10102, %v10245
    %v10247 = vpop.f32.mrf.mxu0
    %v10248 = vadd.f32 %v10102, %v10247
    %10249 = vmatmul.bf16.gmra.mxu0 %v10147
    %v10250 = vpop.f32.mrf.mxu0
    %v10251 = vadd.f32 %v10102, %v10250
    %v10252 = vpop.f32.mrf.mxu0
    %v10253 = vadd.f32 %v10102, %v10252
    %10254 = vmatmul.bf16.gmra.mxu0 %v10148
    %v10255 = vpop.f32.mrf.mxu0
    %v10256 = vadd.f32 %v10102, %v10255
    %v10257 = vpop.f32.mrf.mxu0
    %v10258 = vadd.f32 %v10102, %v10257
    %10259 = vdwg.mxu0
    %10260 = vst [vmem:[#allocation15] sm:$0xff] %v10216
    %10261 = vst [vmem:[#allocation15 + $0x8] sm:$0xff] %v10218
    %10262 = vst [vmem:[#allocation15 + $0x10] sm:$0xff] %v10221
    %10263 = vst [vmem:[#allocation15 + $0x18] sm:$0xff] %v10223
    %10264 = vst [vmem:[#allocation15 + $0x20] sm:$0xff] %v10226
    %10265 = vst [vmem:[#allocation15 + $0x28] sm:$0xff] %v10228
    %10266 = vst [vmem:[#allocation15 + $0x30] sm:$0xff] %v10231
    %10267 = vst [vmem:[#allocation15 + $0x38] sm:$0xff] %v10233
    %10268 = vst [vmem:[#allocation15 + $0x40] sm:$0xff] %v10236
    %10269 = vst [vmem:[#allocation15 + $0x48] sm:$0xff] %v10238
    %10270 = vst [vmem:[#allocation15 + $0x50] sm:$0xff] %v10241
    %10271 = vst [vmem:[#allocation15 + $0x58] sm:$0xff] %v10243
    %10272 = vst [vmem:[#allocation15 + $0x60] sm:$0xff] %v10246
    %10273 = vst [vmem:[#allocation15 + $0x68] sm:$0xff] %v10248
    %10274 = vst [vmem:[#allocation15 + $0x70] sm:$0xff] %v10251
    %10275 = vst [vmem:[#allocation15 + $0x78] sm:$0xff] %v10253
    %10276 = vst [vmem:[#allocation15 + $0x80] sm:$0xff] %v10256
    %10277 = vst [vmem:[#allocation15 + $0x88] sm:$0xff] %v10258
    // Predicated region
    $region70: #{tpu_custom_call.1} parent=1 // pred_check
      _
    $region71: #{tpu_custom_call.1} parent=1 // pred_check_branch
      %10279 = sbr.rel (0) target = $region73
    $region72: #{tpu_custom_call.1} parent=1 // pred_region
      %10281 = vsyncadd [#allocation5], 0
      %s10282 = sshll.u32 [#allocation15], 4
      %s10283 = int_to_ptr.vmem [resolvable:$true] %s10282
      %s10284 = sshll.u32 %s9, 4
      %s10285 = int_to_ptr.hbm [resolvable:$true] %s10284
      %10290 = dma.vmem_to_hbm [thread:$0]  %s10283, 2304, %s10285, [#allocation5], 128, 128, 8
    $region73: #{tpu_custom_call.1} parent=1 // pred_fallthru
      _
    // Predicated region
    $region74: #{tpu_custom_call.1} parent=1 // pred_check
      _
    $region75: #{tpu_custom_call.1} parent=1 // pred_check_branch
      %10292 = sbr.rel (0) target = $region77
    $region76: #{tpu_custom_call.1} parent=1 // pred_region
      %10294 = dma.done [#allocation5], 2304
    $region77: #{tpu_custom_call.1} parent=1 // pred_fallthru
      _
    %10295 = vsyncpa [#allocation4], 1
    %10296 = vsyncpa [#allocation7], 1
    %10297 = vsyncpa [#allocation10], 1
    %10298 = vsyncpa [#allocation13], 1
    %10299 = vsyncpa [#allocation5], 1

</llo_original>
